<compile_context>
chip_gen: v6e
topology: v6e:2x2x1
jax: 0.10.0
libtpu: 0.0.40
codegen_flags: <defaults>
</compile_context>

<pallas_src>
import numpy as np

import jax
import jax.numpy as jnp
from jax.experimental import pallas as pl
from jax.experimental.pallas import tpu as pltpu


# Fixed geometry implied by the module (fc1 = Linear(16 * 7 * 7, .)) -> 1x28x28 input.
_H = 28            # input spatial size
_C1, _C2 = 8, 16   # conv1 / conv2 output channels
_H2, _H4 = _H // 2, _H // 4           # 14, 7
_L1 = _H2 * _C1    # 112 lanes: (pooled col j, conv1 channel) after pool-1
_L2 = _H4 * _C2    # 112 lanes: (pooled col j2, conv2 channel) after pool-2
_NB = 256          # per-kh lane block in the banded conv matrices (even@+0, odd@+128)
_HP1 = _H + 4      # H-padded, 8-row-aligned conv1 input rows (32)
_HP2 = _H2 + 2     # H-padded conv2 input rows (16, already 8-aligned)


# ----------------------------------------------------------------------------
# Fused kernel: one batch chunk per grid step, everything resident in VMEM.
# ----------------------------------------------------------------------------
def _cnn_fused_kernel(x_ref, m1_ref, b1_ref, m2_ref, b2_ref, wf_ref, bf_ref,
                      o_ref, ap1, y1s, ap2, y2s):
    TB = x_ref.shape[0]
    nc = o_ref.shape[2]
    f32 = jnp.float32
    bf16 = jnp.bfloat16

    # ---- conv1 input: zero only the H-pad border rows, copy the data rows --------
    ap1[:, 0:1, :] = jnp.zeros((TB, 1, _H), f32)
    ap1[:, _H + 1:_HP1, :] = jnp.zeros((TB, _HP1 - _H - 1, _H), f32)
    ap1[:, 1:_H + 1, :] = x_ref[...]

    # ---- conv1: ONE banded matmul on the MXU -------------------------------------
    # (TB*32, 28) is a free reshape because _HP1 is a multiple of 8.
    a1 = ap1[...].reshape(TB * _HP1, _H).astype(bf16)
    z1 = jnp.dot(a1, m1_ref[...], preferred_element_type=f32)      # (TB*32, 768)
    z1 = z1.reshape(TB, _HP1, 3 * _NB)
    # y1[b, h, :] = sum_kh z1[b, h + kh, kh-block];  even / odd output columns live
    # in separate 128-aligned lane blocks so the pool column-max is elementwise.
    half = _NB // 2
    ev = (z1[:, 0:_H, 0:_L1]
          + z1[:, 1:_H + 1, _NB:_NB + _L1]
          + z1[:, 2:_H + 2, 2 * _NB:2 * _NB + _L1])
    od = (z1[:, 0:_H, half:half + _L1]
          + z1[:, 1:_H + 1, _NB + half:_NB + half + _L1]
          + z1[:, 2:_H + 2, 2 * _NB + half:2 * _NB + half + _L1])
    y1s[...] = jnp.maximum(ev, od)                                 # col-pooled, pre-bias

    # ---- maxpool rows (two strided loads) + bias + relu (commute with max) -------
    p1 = jnp.maximum(y1s[:, pl.ds(0, _H2, 2), :], y1s[:, pl.ds(1, _H2, 2), :])
    p1 = jnp.maximum(p1 + b1_ref[...], 0.0)                        # (TB, 14, 112)

    # ---- conv2 input: zero only the H-pad border rows -----------------------------
    ap2[:, 0:1, :] = jnp.zeros((TB, 1, _L1), f32)
    ap2[:, _H2 + 1:_HP2, :] = jnp.zeros((TB, 1, _L1), f32)
    ap2[:, 1:_H2 + 1, :] = p1

    # ---- conv2: ONE banded matmul --------------------------------------------------
    a2 = ap2[...].reshape(TB * _HP2, _L1).astype(bf16)
    z2 = jnp.dot(a2, m2_ref[...], preferred_element_type=f32)      # (TB*16, 768)
    z2 = z2.reshape(TB, _HP2, 3 * _NB)
    ev2 = (z2[:, 0:_H2, 0:_L2]
           + z2[:, 1:_H2 + 1, _NB:_NB + _L2]
           + z2[:, 2:_H2 + 2, 2 * _NB:2 * _NB + _L2])
    od2 = (z2[:, 0:_H2, half:half + _L2]
           + z2[:, 1:_H2 + 1, _NB + half:_NB + half + _L2]
           + z2[:, 2:_H2 + 2, 2 * _NB + half:2 * _NB + half + _L2])
    y2s[...] = jnp.maximum(ev2, od2)

    p2 = jnp.maximum(y2s[:, pl.ds(0, _H4, 2), :], y2s[:, pl.ds(1, _H4, 2), :])
    p2 = jnp.maximum(p2 + b2_ref[...], 0.0)                        # (TB, 7, 112)

    # ---- fc: contract the 7 pooled rows directly against the permuted fc weight ---
    # (no flatten scratch; the PyTorch (C,H,W) flatten order is a host-side row
    #  permutation of wf).
    acc = jnp.zeros((TB, nc), f32)
    for i in range(_H4):
        acc = acc + jnp.dot(p2[:, i, :], wf_ref[i * _L2:(i + 1) * _L2, :],
                            preferred_element_type=f32)
    o_ref[:, 0, :] = (acc + bf_ref[...]).astype(o_ref.dtype)


# ----------------------------------------------------------------------------
# Parameter init (PyTorch layouts) + one-time layout prep for the kernel.
# ----------------------------------------------------------------------------
def init_params(key, in_channel=1, num_classes=10):
    ks = jax.random.split(key, 6)
    s = 0.1
    return {
        "conv1_w": s * jax.random.normal(ks[0], (_C1, in_channel, 3, 3), jnp.float32),
        "conv1_b": s * jax.random.normal(ks[1], (_C1,), jnp.float32),
        "conv2_w": s * jax.random.normal(ks[2], (_C2, _C1, 3, 3), jnp.float32),
        "conv2_b": s * jax.random.normal(ks[3], (_C2,), jnp.float32),
        "fc_w": s * jax.random.normal(ks[4], (num_classes, _C2 * _H4 * _H4), jnp.float32),
        "fc_b": s * jax.random.normal(ks[5], (num_classes,), jnp.float32),
    }


def prepare_params(params):
    """One-time host-side layout prep (all weight shuffling out of the forward).

    Each 3x3 conv becomes a banded matrix so the kernel does ONE lane-dense MXU
    matmul per conv:
      * per kernel-row kh the matrix maps one H-padded input row (W * Cin values)
        to every output column of that row; the kw taps and the W zero padding are
        folded into the band structure;
      * even / odd output columns are emitted into separate 128-aligned lane blocks
        so maxpool's column max needs no lane shuffles in the kernel;
      * the fc weight is row-permuted from PyTorch's (C, H, W) flatten order to the
        kernel's (pooled-row, pooled-col, channel) layout.
    """
    c1w = np.asarray(params["conv1_w"], np.float32)      # (8, 1, 3, 3)
    c1b = np.asarray(params["conv1_b"], np.float32)
    c2w = np.asarray(params["conv2_w"], np.float32)      # (16, 8, 3, 3)
    c2b = np.asarray(params["conv2_b"], np.float32)
    fcw = np.asarray(params["fc_w"], np.float32)         # (10, 784)
    fcb = np.asarray(params["fc_b"], np.float32)
    nc = fcw.shape[0]
    half = _NB // 2

    m1 = np.zeros((_H, 3 * _NB), np.float32)
    for kh in range(3):
        for kw in range(3):
            for wo in range(_H):                          # conv1 output column
                wi = wo + kw - 1                          # input column (padding = 1)
                if 0 <= wi < _H:
                    j, par = divmod(wo, 2)                # pooled column / parity
                    col = kh * _NB + par * half + j * _C1
                    m1[wi, col:col + _C1] = c1w[:, 0, kh, kw]

    m2 = np.zeros((_L1, 3 * _NB), np.float32)
    for kh in range(3):
        for kw in range(3):
            for wo in range(_H2):                         # conv2 output column
                wi = wo + kw - 1
                if 0 <= wi < _H2:
                    j, par = divmod(wo, 2)
                    col = kh * _NB + par * half + j * _C2
                    m2[wi * _C1:(wi + 1) * _C1, col:col + _C2] = c2w[:, :, kh, kw].T

    # fc rows: PyTorch flatten index c*49 + i*7 + j  ->  kernel index i*112 + j*16 + c
    wf = (fcw.reshape(nc, _C2, _H4, _H4).transpose(2, 3, 1, 0)
          .reshape(_H4 * _H4 * _C2, nc))

    return {
        "m1": jnp.asarray(m1, jnp.bfloat16),
        "b1": jnp.asarray(np.tile(c1b, _H2).reshape(1, _L1), jnp.float32),
        "m2": jnp.asarray(m2, jnp.bfloat16),
        "b2": jnp.asarray(np.tile(c2b, _H4).reshape(1, _L2), jnp.float32),
        "wf": jnp.asarray(wf, jnp.float32),
        "bf": jnp.asarray(fcb.reshape(1, nc), jnp.float32),
    }


# ----------------------------------------------------------------------------
# Forward pass (single pallas_call).
# ----------------------------------------------------------------------------
def _pick_block_batch(n):
    """Largest power-of-two batch chunk <= 32 dividing n, with >= 2 grid steps when
    possible (so 'parallel' batch sharding can use both TensorCores on v7x)."""
    tb = 1
    for cand in (32, 16, 8, 4, 2):
        if n % cand == 0:
            tb = cand
            break
    if tb > 1 and n // tb < 2:
        tb //= 2
    return tb


def cnn_forward(x_nchw, kparams):
    n, cin, h, w = x_nchw.shape
    assert cin == 1 and h == _H and w == _H, "module geometry is 1x28x28 (fc1 = 16*7*7)"
    nc = kparams["bf"].shape[1]

    # Drop the size-1 channel dim: each (TB, 28, 28) block is one contiguous DMA.
    x = x_nchw.reshape(n, h, w)

    tb = _pick_block_batch(n)
    grid = (n // tb,)

    out = pl.pallas_call(
        _cnn_fused_kernel,
        out_shape=jax.ShapeDtypeStruct((n, 1, nc), jnp.float32),
        grid=grid,
        in_specs=[
            pl.BlockSpec((tb, h, w), lambda i: (i, 0, 0)),        # images
            pl.BlockSpec((_H, 3 * _NB), lambda i: (0, 0)),        # conv1 banded weight
            pl.BlockSpec((1, _L1), lambda i: (0, 0)),             # conv1 bias per lane
            pl.BlockSpec((_L1, 3 * _NB), lambda i: (0, 0)),       # conv2 banded weight
            pl.BlockSpec((1, _L2), lambda i: (0, 0)),             # conv2 bias per lane
            pl.BlockSpec((_H4 * _L2, nc), lambda i: (0, 0)),      # permuted fc weight
            pl.BlockSpec((1, nc), lambda i: (0, 0)),              # fc bias
        ],
        out_specs=pl.BlockSpec((tb, 1, nc), lambda i: (i, 0, 0)),
        scratch_shapes=[
            pltpu.VMEM((tb, _HP1, _H), jnp.float32),    # H-padded conv1 input
            pltpu.VMEM((tb, _H, _L1), jnp.float32),     # conv1 output, column-pooled
            pltpu.VMEM((tb, _HP2, _L1), jnp.float32),   # H-padded conv2 input
            pltpu.VMEM((tb, _H2, _L2), jnp.float32),    # conv2 output, column-pooled
        ],
        compiler_params=pltpu.CompilerParams(
            dimension_semantics=("parallel",),
            vmem_limit_bytes=32 * 1024 * 1024),
    )(x, kparams["m1"], kparams["b1"], kparams["m2"], kparams["b2"],
      kparams["wf"], kparams["bf"])
    return out.reshape(n, nc)


# ----------------------------------------------------------------------------
# Pure-XLA reference (mirrors the PyTorch module exactly, f32).
# ----------------------------------------------------------------------------
def cnn_reference(x, params):
    dn = ("NCHW", "OIHW", "NCHW")
    y = jax.lax.conv_general_dilated(x, params["conv1_w"], (1, 1), "SAME",
                                     dimension_numbers=dn)
    y = jax.nn.relu(y + params["conv1_b"].reshape(1, -1, 1, 1))
    y = jax.lax.reduce_window(y, -jnp.inf, jax.lax.max, (1, 1, 2, 2), (1, 1, 2, 2), "VALID")
    y = jax.lax.conv_general_dilated(y, params["conv2_w"], (1, 1), "SAME",
                                     dimension_numbers=dn)
    y = jax.nn.relu(y + params["conv2_b"].reshape(1, -1, 1, 1))
    y = jax.lax.reduce_window(y, -jnp.inf, jax.lax.max, (1, 1, 2, 2), (1, 1, 2, 2), "VALID")
    flat = y.reshape(y.shape[0], -1)                      # PyTorch NCHW flatten order
    return flat @ params["fc_w"].T + params["fc_b"]


if __name__ == "__main__":
    key = jax.random.PRNGKey(0)
    kx, kp = jax.random.split(key)
    # 28x28 spatial is implied by fc1 = Linear(16*7*7, 10); batch 64 -> two grid
    # steps of 32 images each (exercises the pipelined / megacore-parallel path).
    x = jax.random.normal(kx, (64, 1, 28, 28), jnp.float32)
    params = init_params(kp)
    kparams = prepare_params(params)

    logits = jax.jit(cnn_forward)(x, kparams)
    jax.block_until_ready(logits)
    assert logits.shape == (64, 10)

    ref = cnn_reference(x, params)
    err = float(jnp.max(jnp.abs(logits - ref)))
    assert jnp.allclose(logits, ref, atol=5e-2, rtol=5e-2), f"max abs err {err}"
    print("KERNEL_OK")
</pallas_src>

<mosaic_0001>
module attributes {stable_mosaic.version = 11 : i64} {
  func.func @_cnn_fused_kernel(%arg0: i32, %arg1: memref<32x28x28xf32, #tpu.memory_space<vmem>>, %arg2: memref<28x768xbf16, #tpu.memory_space<vmem>>, %arg3: memref<1x112xf32, #tpu.memory_space<vmem>>, %arg4: memref<112x768xbf16, #tpu.memory_space<vmem>>, %arg5: memref<1x112xf32, #tpu.memory_space<vmem>>, %arg6: memref<784x10xf32, #tpu.memory_space<vmem>>, %arg7: memref<1x10xf32, #tpu.memory_space<vmem>>, %arg8: memref<32x1x10xf32, #tpu.memory_space<vmem>>, %arg9: memref<32x32x28xf32, #tpu.memory_space<vmem>>, %arg10: memref<32x28x112xf32, #tpu.memory_space<vmem>>, %arg11: memref<32x16x112xf32, #tpu.memory_space<vmem>>, %arg12: memref<32x14x112xf32, #tpu.memory_space<vmem>>) attributes {dimension_semantics = [#tpu.dimension_semantics<parallel>], iteration_bounds = array<i64: 2>, scalar_prefetch = 0 : i64, scratch_operands = 4 : i64, tpu.core_type = #tpu.core_type<tc>, window_params = [{transform_indices = @transform_0, window_bounds = array<i64: 32, 28, 28>}, {pipeline_mode = #tpu.pipeline_mode<synchronous>, transform_indices = @transform_1, window_bounds = array<i64: 28, 768>}, {pipeline_mode = #tpu.pipeline_mode<synchronous>, transform_indices = @transform_2, window_bounds = array<i64: 1, 112>}, {pipeline_mode = #tpu.pipeline_mode<synchronous>, transform_indices = @transform_3, window_bounds = array<i64: 112, 768>}, {pipeline_mode = #tpu.pipeline_mode<synchronous>, transform_indices = @transform_4, window_bounds = array<i64: 1, 112>}, {pipeline_mode = #tpu.pipeline_mode<synchronous>, transform_indices = @transform_5, window_bounds = array<i64: 784, 10>}, {pipeline_mode = #tpu.pipeline_mode<synchronous>, transform_indices = @transform_6, window_bounds = array<i64: 1, 10>}, {transform_indices = @transform_7, window_bounds = array<i64: 32, 1, 10>}]} {
    %cst = arith.constant 0.000000e+00 : f32
    %0 = vector.broadcast %cst : f32 to vector<32x1x28xf32>
    %c0 = arith.constant 0 : index
    %c0_0 = arith.constant 0 : index
    %c0_1 = arith.constant 0 : index
    %1 = vector.load %arg9[%c0, %c0_0, %c0_1] : memref<32x32x28xf32, #tpu.memory_space<vmem>>, vector<32x1x28xf32>
    tpu.vector_store %arg9[%c0, %c0_0, %c0_1], %0 {strides = array<i32>} : memref<32x32x28xf32, #tpu.memory_space<vmem>>, vector<32x1x28xf32>,
    %cst_2 = arith.constant 0.000000e+00 : f32
    %2 = vector.broadcast %cst_2 : f32 to vector<32x3x28xf32>
    %c0_3 = arith.constant 0 : index
    %c29 = arith.constant 29 : index
    %c0_4 = arith.constant 0 : index
    %3 = vector.load %arg9[%c0_3, %c29, %c0_4] : memref<32x32x28xf32, #tpu.memory_space<vmem>>, vector<32x3x28xf32>
    tpu.vector_store %arg9[%c0_3, %c29, %c0_4], %2 {strides = array<i32>} : memref<32x32x28xf32, #tpu.memory_space<vmem>>, vector<32x3x28xf32>,
    %c0_5 = arith.constant 0 : index
    %c0_6 = arith.constant 0 : index
    %c0_7 = arith.constant 0 : index
    %4 = vector.load %arg1[%c0_5, %c0_6, %c0_7] : memref<32x28x28xf32, #tpu.memory_space<vmem>>, vector<32x28x28xf32>
    %c0_8 = arith.constant 0 : index
    %c1 = arith.constant 1 : index
    %c0_9 = arith.constant 0 : index
    %5 = vector.load %arg9[%c0_8, %c1, %c0_9] : memref<32x32x28xf32, #tpu.memory_space<vmem>>, vector<32x28x28xf32>
    tpu.vector_store %arg9[%c0_8, %c1, %c0_9], %4 {strides = array<i32>} : memref<32x32x28xf32, #tpu.memory_space<vmem>>, vector<32x28x28xf32>,
    %c0_10 = arith.constant 0 : index
    %c0_11 = arith.constant 0 : index
    %c0_12 = arith.constant 0 : index
    %6 = vector.load %arg9[%c0_10, %c0_11, %c0_12] : memref<32x32x28xf32, #tpu.memory_space<vmem>>, vector<32x32x28xf32>
    %7 = vector.shape_cast %6 : vector<32x32x28xf32> to vector<1024x28xf32>
    %8 = arith.truncf %7 : vector<1024x28xf32> to vector<1024x28xbf16>
    %c0_13 = arith.constant 0 : index
    %c0_14 = arith.constant 0 : index
    %9 = vector.load %arg2[%c0_13, %c0_14] : memref<28x768xbf16, #tpu.memory_space<vmem>>, vector<28x768xbf16>
    %cst_15 = arith.constant dense<0.000000e+00> : vector<1024x768xf32>
    %10 = tpu.matmul %8, %9, %cst_15 {dimension_numbers = #tpu.dot_dimension_numbers<[1], [0], [0], [1], [0, 0, 1, 1], [], []>} : vector<1024x28xbf16>, vector<28x768xbf16>, vector<1024x768xf32> -> vector<1024x768xf32>
    %11 = vector.shape_cast %10 : vector<1024x768xf32> to vector<32x32x768xf32>
    %12 = vector.extract_strided_slice %11 {offsets = [0, 0, 0], sizes = [32, 28, 112], strides = [1, 1, 1]} : vector<32x32x768xf32> to vector<32x28x112xf32>
    %13 = vector.extract_strided_slice %11 {offsets = [0, 1, 256], sizes = [32, 28, 112], strides = [1, 1, 1]} : vector<32x32x768xf32> to vector<32x28x112xf32>
    %14 = arith.addf %12, %13 : vector<32x28x112xf32>
    %15 = vector.extract_strided_slice %11 {offsets = [0, 2, 512], sizes = [32, 28, 112], strides = [1, 1, 1]} : vector<32x32x768xf32> to vector<32x28x112xf32>
    %16 = arith.addf %14, %15 : vector<32x28x112xf32>
    %17 = vector.extract_strided_slice %11 {offsets = [0, 0, 128], sizes = [32, 28, 112], strides = [1, 1, 1]} : vector<32x32x768xf32> to vector<32x28x112xf32>
    %18 = vector.extract_strided_slice %11 {offsets = [0, 1, 384], sizes = [32, 28, 112], strides = [1, 1, 1]} : vector<32x32x768xf32> to vector<32x28x112xf32>
    %19 = arith.addf %17, %18 : vector<32x28x112xf32>
    %20 = vector.extract_strided_slice %11 {offsets = [0, 2, 640], sizes = [32, 28, 112], strides = [1, 1, 1]} : vector<32x32x768xf32> to vector<32x28x112xf32>
    %21 = arith.addf %19, %20 : vector<32x28x112xf32>
    %22 = arith.maximumf %16, %21 : vector<32x28x112xf32>
    %c0_16 = arith.constant 0 : index
    %c0_17 = arith.constant 0 : index
    %c0_18 = arith.constant 0 : index
    %23 = vector.load %arg10[%c0_16, %c0_17, %c0_18] : memref<32x28x112xf32, #tpu.memory_space<vmem>>, vector<32x28x112xf32>
    tpu.vector_store %arg10[%c0_16, %c0_17, %c0_18], %22 {strides = array<i32>} : memref<32x28x112xf32, #tpu.memory_space<vmem>>, vector<32x28x112xf32>,
    %c0_19 = arith.constant 0 : index
    %c0_20 = arith.constant 0 : index
    %c0_21 = arith.constant 0 : index
    %24 = tpu.strided_load %arg10[%c0_19, %c0_20, %c0_21] {strides = array<i32: 1, 2, 1>} : memref<32x28x112xf32, #tpu.memory_space<vmem>>, vector<32x14x112xf32>
    %c0_22 = arith.constant 0 : index
    %c1_23 = arith.constant 1 : index
    %c0_24 = arith.constant 0 : index
    %25 = tpu.strided_load %arg10[%c0_22, %c1_23, %c0_24] {strides = array<i32: 1, 2, 1>} : memref<32x28x112xf32, #tpu.memory_space<vmem>>, vector<32x14x112xf32>
    %26 = arith.maximumf %24, %25 : vector<32x14x112xf32>
    %c0_25 = arith.constant 0 : index
    %c0_26 = arith.constant 0 : index
    %27 = vector.load %arg3[%c0_25, %c0_26] : memref<1x112xf32, #tpu.memory_space<vmem>>, vector<1x112xf32>
    %28 = vector.shape_cast %27 : vector<1x112xf32> to vector<1x1x112xf32>
    %29 = vector.broadcast %28 : vector<1x1x112xf32> to vector<32x14x112xf32>
    %30 = arith.addf %26, %29 : vector<32x14x112xf32>
    %cst_27 = arith.constant 0.000000e+00 : f32
    %31 = vector.broadcast %cst_27 : f32 to vector<32x14x112xf32>
    %32 = arith.maximumf %30, %31 : vector<32x14x112xf32>
    %cst_28 = arith.constant 0.000000e+00 : f32
    %33 = vector.broadcast %cst_28 : f32 to vector<32x1x112xf32>
    %c0_29 = arith.constant 0 : index
    %c0_30 = arith.constant 0 : index
    %c0_31 = arith.constant 0 : index
    %34 = vector.load %arg11[%c0_29, %c0_30, %c0_31] : memref<32x16x112xf32, #tpu.memory_space<vmem>>, vector<32x1x112xf32>
    tpu.vector_store %arg11[%c0_29, %c0_30, %c0_31], %33 {strides = array<i32>} : memref<32x16x112xf32, #tpu.memory_space<vmem>>, vector<32x1x112xf32>,
    %cst_32 = arith.constant 0.000000e+00 : f32
    %35 = vector.broadcast %cst_32 : f32 to vector<32x1x112xf32>
    %c0_33 = arith.constant 0 : index
    %c15 = arith.constant 15 : index
    %c0_34 = arith.constant 0 : index
    %36 = vector.load %arg11[%c0_33, %c15, %c0_34] : memref<32x16x112xf32, #tpu.memory_space<vmem>>, vector<32x1x112xf32>
    tpu.vector_store %arg11[%c0_33, %c15, %c0_34], %35 {strides = array<i32>} : memref<32x16x112xf32, #tpu.memory_space<vmem>>, vector<32x1x112xf32>,
    %c0_35 = arith.constant 0 : index
    %c1_36 = arith.constant 1 : index
    %c0_37 = arith.constant 0 : index
    %37 = vector.load %arg11[%c0_35, %c1_36, %c0_37] : memref<32x16x112xf32, #tpu.memory_space<vmem>>, vector<32x14x112xf32>
    tpu.vector_store %arg11[%c0_35, %c1_36, %c0_37], %32 {strides = array<i32>} : memref<32x16x112xf32, #tpu.memory_space<vmem>>, vector<32x14x112xf32>,
    %c0_38 = arith.constant 0 : index
    %c0_39 = arith.constant 0 : index
    %c0_40 = arith.constant 0 : index
    %38 = vector.load %arg11[%c0_38, %c0_39, %c0_40] : memref<32x16x112xf32, #tpu.memory_space<vmem>>, vector<32x16x112xf32>
    %39 = vector.shape_cast %38 : vector<32x16x112xf32> to vector<512x112xf32>
    %40 = arith.truncf %39 : vector<512x112xf32> to vector<512x112xbf16>
    %c0_41 = arith.constant 0 : index
    %c0_42 = arith.constant 0 : index
    %41 = vector.load %arg4[%c0_41, %c0_42] : memref<112x768xbf16, #tpu.memory_space<vmem>>, vector<112x768xbf16>
    %cst_43 = arith.constant dense<0.000000e+00> : vector<512x768xf32>
    %42 = tpu.matmul %40, %41, %cst_43 {dimension_numbers = #tpu.dot_dimension_numbers<[1], [0], [0], [1], [0, 0, 1, 1], [], []>} : vector<512x112xbf16>, vector<112x768xbf16>, vector<512x768xf32> -> vector<512x768xf32>
    %43 = vector.shape_cast %42 : vector<512x768xf32> to vector<32x16x768xf32>
    %44 = vector.extract_strided_slice %43 {offsets = [0, 0, 0], sizes = [32, 14, 112], strides = [1, 1, 1]} : vector<32x16x768xf32> to vector<32x14x112xf32>
    %45 = vector.extract_strided_slice %43 {offsets = [0, 1, 256], sizes = [32, 14, 112], strides = [1, 1, 1]} : vector<32x16x768xf32> to vector<32x14x112xf32>
    %46 = arith.addf %44, %45 : vector<32x14x112xf32>
    %47 = vector.extract_strided_slice %43 {offsets = [0, 2, 512], sizes = [32, 14, 112], strides = [1, 1, 1]} : vector<32x16x768xf32> to vector<32x14x112xf32>
    %48 = arith.addf %46, %47 : vector<32x14x112xf32>
    %49 = vector.extract_strided_slice %43 {offsets = [0, 0, 128], sizes = [32, 14, 112], strides = [1, 1, 1]} : vector<32x16x768xf32> to vector<32x14x112xf32>
    %50 = vector.extract_strided_slice %43 {offsets = [0, 1, 384], sizes = [32, 14, 112], strides = [1, 1, 1]} : vector<32x16x768xf32> to vector<32x14x112xf32>
    %51 = arith.addf %49, %50 : vector<32x14x112xf32>
    %52 = vector.extract_strided_slice %43 {offsets = [0, 2, 640], sizes = [32, 14, 112], strides = [1, 1, 1]} : vector<32x16x768xf32> to vector<32x14x112xf32>
    %53 = arith.addf %51, %52 : vector<32x14x112xf32>
    %54 = arith.maximumf %48, %53 : vector<32x14x112xf32>
    %c0_44 = arith.constant 0 : index
    %c0_45 = arith.constant 0 : index
    %c0_46 = arith.constant 0 : index
    %55 = vector.load %arg12[%c0_44, %c0_45, %c0_46] : memref<32x14x112xf32, #tpu.memory_space<vmem>>, vector<32x14x112xf32>
    tpu.vector_store %arg12[%c0_44, %c0_45, %c0_46], %54 {strides = array<i32>} : memref<32x14x112xf32, #tpu.memory_space<vmem>>, vector<32x14x112xf32>,
    %c0_47 = arith.constant 0 : index
    %c0_48 = arith.constant 0 : index
    %c0_49 = arith.constant 0 : index
    %56 = tpu.strided_load %arg12[%c0_47, %c0_48, %c0_49] {strides = array<i32: 1, 2, 1>} : memref<32x14x112xf32, #tpu.memory_space<vmem>>, vector<32x7x112xf32>
    %c0_50 = arith.constant 0 : index
    %c1_51 = arith.constant 1 : index
    %c0_52 = arith.constant 0 : index
    %57 = tpu.strided_load %arg12[%c0_50, %c1_51, %c0_52] {strides = array<i32: 1, 2, 1>} : memref<32x14x112xf32, #tpu.memory_space<vmem>>, vector<32x7x112xf32>
    %58 = arith.maximumf %56, %57 : vector<32x7x112xf32>
    %c0_53 = arith.constant 0 : index
    %c0_54 = arith.constant 0 : index
    %59 = vector.load %arg5[%c0_53, %c0_54] : memref<1x112xf32, #tpu.memory_space<vmem>>, vector<1x112xf32>
    %60 = vector.shape_cast %59 : vector<1x112xf32> to vector<1x1x112xf32>
    %61 = vector.broadcast %60 : vector<1x1x112xf32> to vector<32x7x112xf32>
    %62 = arith.addf %58, %61 : vector<32x7x112xf32>
    %cst_55 = arith.constant 0.000000e+00 : f32
    %63 = vector.broadcast %cst_55 : f32 to vector<32x7x112xf32>
    %64 = arith.maximumf %62, %63 : vector<32x7x112xf32>
    %cst_56 = arith.constant 0.000000e+00 : f32
    %65 = vector.broadcast %cst_56 : f32 to vector<32x10xf32>
    %66 = vector.extract_strided_slice %64 {offsets = [0, 0, 0], sizes = [32, 1, 112], strides = [1, 1, 1]} : vector<32x7x112xf32> to vector<32x1x112xf32>
    %67 = vector.shape_cast %66 : vector<32x1x112xf32> to vector<32x112xf32>
    %c0_57 = arith.constant 0 : index
    %c0_58 = arith.constant 0 : index
    %68 = vector.load %arg6[%c0_57, %c0_58] : memref<784x10xf32, #tpu.memory_space<vmem>>, vector<112x10xf32>
    %cst_59 = arith.constant dense<0.000000e+00> : vector<32x10xf32>
    %69 = tpu.matmul %67, %68, %cst_59 {dimension_numbers = #tpu.dot_dimension_numbers<[1], [0], [0], [1], [0, 0, 1, 1], [], []>} : vector<32x112xf32>, vector<112x10xf32>, vector<32x10xf32> -> vector<32x10xf32>
    %70 = arith.addf %65, %69 : vector<32x10xf32>
    %71 = vector.extract_strided_slice %64 {offsets = [0, 1, 0], sizes = [32, 1, 112], strides = [1, 1, 1]} : vector<32x7x112xf32> to vector<32x1x112xf32>
    %72 = vector.shape_cast %71 : vector<32x1x112xf32> to vector<32x112xf32>
    %c112 = arith.constant 112 : index
    %c0_60 = arith.constant 0 : index
    %73 = vector.load %arg6[%c112, %c0_60] : memref<784x10xf32, #tpu.memory_space<vmem>>, vector<112x10xf32>
    %cst_61 = arith.constant dense<0.000000e+00> : vector<32x10xf32>
    %74 = tpu.matmul %72, %73, %cst_61 {dimension_numbers = #tpu.dot_dimension_numbers<[1], [0], [0], [1], [0, 0, 1, 1], [], []>} : vector<32x112xf32>, vector<112x10xf32>, vector<32x10xf32> -> vector<32x10xf32>
    %75 = arith.addf %70, %74 : vector<32x10xf32>
    %76 = vector.extract_strided_slice %64 {offsets = [0, 2, 0], sizes = [32, 1, 112], strides = [1, 1, 1]} : vector<32x7x112xf32> to vector<32x1x112xf32>
    %77 = vector.shape_cast %76 : vector<32x1x112xf32> to vector<32x112xf32>
    %c224 = arith.constant 224 : index
    %c0_62 = arith.constant 0 : index
    %78 = vector.load %arg6[%c224, %c0_62] : memref<784x10xf32, #tpu.memory_space<vmem>>, vector<112x10xf32>
    %cst_63 = arith.constant dense<0.000000e+00> : vector<32x10xf32>
    %79 = tpu.matmul %77, %78, %cst_63 {dimension_numbers = #tpu.dot_dimension_numbers<[1], [0], [0], [1], [0, 0, 1, 1], [], []>} : vector<32x112xf32>, vector<112x10xf32>, vector<32x10xf32> -> vector<32x10xf32>
    %80 = arith.addf %75, %79 : vector<32x10xf32>
    %81 = vector.extract_strided_slice %64 {offsets = [0, 3, 0], sizes = [32, 1, 112], strides = [1, 1, 1]} : vector<32x7x112xf32> to vector<32x1x112xf32>
    %82 = vector.shape_cast %81 : vector<32x1x112xf32> to vector<32x112xf32>
    %c336 = arith.constant 336 : index
    %c0_64 = arith.constant 0 : index
    %83 = vector.load %arg6[%c336, %c0_64] : memref<784x10xf32, #tpu.memory_space<vmem>>, vector<112x10xf32>
    %cst_65 = arith.constant dense<0.000000e+00> : vector<32x10xf32>
    %84 = tpu.matmul %82, %83, %cst_65 {dimension_numbers = #tpu.dot_dimension_numbers<[1], [0], [0], [1], [0, 0, 1, 1], [], []>} : vector<32x112xf32>, vector<112x10xf32>, vector<32x10xf32> -> vector<32x10xf32>
    %85 = arith.addf %80, %84 : vector<32x10xf32>
    %86 = vector.extract_strided_slice %64 {offsets = [0, 4, 0], sizes = [32, 1, 112], strides = [1, 1, 1]} : vector<32x7x112xf32> to vector<32x1x112xf32>
    %87 = vector.shape_cast %86 : vector<32x1x112xf32> to vector<32x112xf32>
    %c448 = arith.constant 448 : index
    %c0_66 = arith.constant 0 : index
    %88 = vector.load %arg6[%c448, %c0_66] : memref<784x10xf32, #tpu.memory_space<vmem>>, vector<112x10xf32>
    %cst_67 = arith.constant dense<0.000000e+00> : vector<32x10xf32>
    %89 = tpu.matmul %87, %88, %cst_67 {dimension_numbers = #tpu.dot_dimension_numbers<[1], [0], [0], [1], [0, 0, 1, 1], [], []>} : vector<32x112xf32>, vector<112x10xf32>, vector<32x10xf32> -> vector<32x10xf32>
    %90 = arith.addf %85, %89 : vector<32x10xf32>
    %91 = vector.extract_strided_slice %64 {offsets = [0, 5, 0], sizes = [32, 1, 112], strides = [1, 1, 1]} : vector<32x7x112xf32> to vector<32x1x112xf32>
    %92 = vector.shape_cast %91 : vector<32x1x112xf32> to vector<32x112xf32>
    %c560 = arith.constant 560 : index
    %c0_68 = arith.constant 0 : index
    %93 = vector.load %arg6[%c560, %c0_68] : memref<784x10xf32, #tpu.memory_space<vmem>>, vector<112x10xf32>
    %cst_69 = arith.constant dense<0.000000e+00> : vector<32x10xf32>
    %94 = tpu.matmul %92, %93, %cst_69 {dimension_numbers = #tpu.dot_dimension_numbers<[1], [0], [0], [1], [0, 0, 1, 1], [], []>} : vector<32x112xf32>, vector<112x10xf32>, vector<32x10xf32> -> vector<32x10xf32>
    %95 = arith.addf %90, %94 : vector<32x10xf32>
    %96 = vector.extract_strided_slice %64 {offsets = [0, 6, 0], sizes = [32, 1, 112], strides = [1, 1, 1]} : vector<32x7x112xf32> to vector<32x1x112xf32>
    %97 = vector.shape_cast %96 : vector<32x1x112xf32> to vector<32x112xf32>
    %c672 = arith.constant 672 : index
    %c0_70 = arith.constant 0 : index
    %98 = vector.load %arg6[%c672, %c0_70] : memref<784x10xf32, #tpu.memory_space<vmem>>, vector<112x10xf32>
    %cst_71 = arith.constant dense<0.000000e+00> : vector<32x10xf32>
    %99 = tpu.matmul %97, %98, %cst_71 {dimension_numbers = #tpu.dot_dimension_numbers<[1], [0], [0], [1], [0, 0, 1, 1], [], []>} : vector<32x112xf32>, vector<112x10xf32>, vector<32x10xf32> -> vector<32x10xf32>
    %100 = arith.addf %95, %99 : vector<32x10xf32>
    %c0_72 = arith.constant 0 : index
    %c0_73 = arith.constant 0 : index
    %101 = vector.load %arg7[%c0_72, %c0_73] : memref<1x10xf32, #tpu.memory_space<vmem>>, vector<1x10xf32>
    %102 = vector.broadcast %101 : vector<1x10xf32> to vector<32x10xf32>
    %103 = arith.addf %100, %102 : vector<32x10xf32>
    %c0_74 = arith.constant 0 : index
    %c0_75 = arith.constant 0 : index
    %c0_76 = arith.constant 0 : index
    %104 = vector.load %arg8[%c0_74, %c0_75, %c0_76] : memref<32x1x10xf32, #tpu.memory_space<vmem>>, vector<32x1x10xf32>
    %105 = vector.shape_cast %104 : vector<32x1x10xf32> to vector<32x10xf32>
    %106 = vector.shape_cast %103 : vector<32x10xf32> to vector<32x1x10xf32>
    tpu.vector_store %arg8[%c0_74, %c0_75, %c0_76], %106 {strides = array<i32>} : memref<32x1x10xf32, #tpu.memory_space<vmem>>, vector<32x1x10xf32>,
    return
  }
  func.func @transform_0(%arg0: i32) -> (i32, i32, i32) {
    %c0_i32 = arith.constant 0 : i32
    %c0_i32_0 = arith.constant 0 : i32
    %c0_i32_1 = arith.constant 0 : i32
    return %arg0, %c0_i32, %c0_i32_0 : i32, i32, i32
  }
  func.func @transform_1(%arg0: i32) -> (i32, i32) {
    %c0_i32 = arith.constant 0 : i32
    %c0_i32_0 = arith.constant 0 : i32
    %c0_i32_1 = arith.constant 0 : i32
    return %c0_i32, %c0_i32_0 : i32, i32
  }
  func.func @transform_2(%arg0: i32) -> (i32, i32) {
    %c0_i32 = arith.constant 0 : i32
    %c0_i32_0 = arith.constant 0 : i32
    %c0_i32_1 = arith.constant 0 : i32
    return %c0_i32, %c0_i32_0 : i32, i32
  }
  func.func @transform_3(%arg0: i32) -> (i32, i32) {
    %c0_i32 = arith.constant 0 : i32
    %c0_i32_0 = arith.constant 0 : i32
    %c0_i32_1 = arith.constant 0 : i32
    return %c0_i32, %c0_i32_0 : i32, i32
  }
  func.func @transform_4(%arg0: i32) -> (i32, i32) {
    %c0_i32 = arith.constant 0 : i32
    %c0_i32_0 = arith.constant 0 : i32
    %c0_i32_1 = arith.constant 0 : i32
    return %c0_i32, %c0_i32_0 : i32, i32
  }
  func.func @transform_5(%arg0: i32) -> (i32, i32) {
    %c0_i32 = arith.constant 0 : i32
    %c0_i32_0 = arith.constant 0 : i32
    %c0_i32_1 = arith.constant 0 : i32
    return %c0_i32, %c0_i32_0 : i32, i32
  }
  func.func @transform_6(%arg0: i32) -> (i32, i32) {
    %c0_i32 = arith.constant 0 : i32
    %c0_i32_0 = arith.constant 0 : i32
    %c0_i32_1 = arith.constant 0 : i32
    return %c0_i32, %c0_i32_0 : i32, i32
  }
  func.func @transform_7(%arg0: i32) -> (i32, i32, i32) {
    %c0_i32 = arith.constant 0 : i32
    %c0_i32_0 = arith.constant 0 : i32
    %c0_i32_1 = arith.constant 0 : i32
    return %arg0, %c0_i32, %c0_i32_0 : i32, i32, i32
  }
}

</mosaic_0001>

<llo_original>
// kernel: cnn_forward.1
$region0: #{cnn_forward.1}
  #allocation0 [shape = 'u32[]', space=smem, size = 0x4, offset = 0x4, fixed_abs, tag = 'smem constant byte address 0x4 - core index']
  #allocation1 [shape = 'u32[144,128]{1,0:T(1,128)}', space=vmem, size = 0x12000, scoped, tag = 'internal scratch']
  #allocation2 [shape = 'f32[32,32,28]{2,1,0:T(8,128)}', space=vmem, size = 0x80000, scoped, tag = 'scratch operand']
  #allocation3 [shape = 'f32[32,28,112]{2,1,0:T(8,128)}', space=vmem, size = 0x80000, scoped, tag = 'scratch operand']
  #allocation4 [shape = 'f32[32,16,112]{2,1,0:T(8,128)}', space=vmem, size = 0x40000, scoped, tag = 'scratch operand']
  #allocation5 [shape = 'f32[32,14,112]{2,1,0:T(8,128)}', space=vmem, size = 0x40000, scoped, tag = 'scratch operand']
  %s0 = inlined_call_operand.vmem [shape: f32[64,28,28], index: 0, kind: input, shape index: {}]
  %s1 = inlined_call_operand.vmem [shape: bf16[28,768], index: 1, kind: input, shape index: {}]
  %s2 = inlined_call_operand.vmem [shape: f32[1,112], index: 2, kind: input, shape index: {}]
  %s3 = inlined_call_operand.vmem [shape: bf16[112,768], index: 3, kind: input, shape index: {}]
  %s4 = inlined_call_operand.vmem [shape: f32[1,112], index: 4, kind: input, shape index: {}]
  %s5 = inlined_call_operand.vmem [shape: f32[784,10], index: 5, kind: input, shape index: {}]
  %s6 = inlined_call_operand.vmem [shape: f32[1,10], index: 6, kind: input, shape index: {}]
  %s7 = inlined_call_operand.vmem [shape: f32[64,1,10], index: 7, kind: output, shape index: {}]
  %s8 = sld [smem:[#allocation0]]
  $region61: #{cnn_forward.1} parent=0
    _
  %s10 = ssub.s32 1, %s8
  %s11 = scalar_select 0, %s10, %s8
  loop: start=0, step=1, limit=4
  $region2: #{cnn_forward.1} parent=0 // loop_pre_header
    _
  $region3: #{cnn_forward.1} parent=0 // loop_header
    %s13 = sphi 0, %s17
    %p14 = scmp.ge.s32.totalorder %s13, 4
    %s23 = sphi 0, %s25
    %s26 = sphi 0, %s23
    %s27 = sphi 0, %s26
    %s43 = sphi 0, %s27
    %s47 = sphi 0, %s47
    %s49 = sphi 0, %s47
    %s50 = sphi 0, %s49
    %s64 = sphi 0, %s50
    %s68 = sphi 0, %s68
    %s70 = sphi 0, %s68
    %s71 = sphi 0, %s70
    %s85 = sphi 0, %s71
    %s89 = sphi 0, %s89
    %s91 = sphi 0, %s89
    %s92 = sphi 0, %s91
    %s106 = sphi 0, %s92
    %s110 = sphi 0, %s110
    %s112 = sphi 0, %s110
    %s113 = sphi 0, %s112
    %s127 = sphi 0, %s113
    %s131 = sphi 0, %s131
    %s133 = sphi 0, %s131
    %s134 = sphi 0, %s133
    %s148 = sphi 0, %s134
    %s152 = sphi 0, %s152
    %s154 = sphi 0, %s152
    %s155 = sphi 0, %s154
    %s169 = sphi 0, %s155
    %s175 = sphi 0, %s177
    %s178 = sphi 0, %s175
    %s179 = sphi 0, %s178
    %s195 = sphi 0, %s179
  $region4: #{cnn_forward.1} parent=0 // loop_header_branch
    %16 = sbr.rel (%p14) target = $region8
  $region5: #{cnn_forward.1} parent=0 // loop_body
    %s18 = ssub.s32 %s13, 1
    %s19 = ssub.s32 %s13, 2
    %s20 = sadd.s32 %s13, 1
    %s21 = ssub.s32 %s13, %s20
    %p22 = scmp.eq.s32.totalorder %s21, 0
    %s24 = sadd.s32 %s23, 1
    %s25 = scalar_select %p22, %s23, %s24
    %p28 = pneg %p22
    %p29 = scmp.eq.s32.totalorder %s13, 1
    %p30 = por %p28, %p29
    %p31 = scmp.ne.s32.totalorder %s23, %s26
    %p32 = scmp.eq.s32.totalorder %s13, 0
    %p33 = por %p31, %p32
    %p34 = scmp.ne.s32.totalorder %s23, %s26
    %p35 = scmp.eq.s32.totalorder %s18, 1
    %p36 = por %p34, %p35
    %p37 = scmp.ne.s32.totalorder %s26, %s27
    %p38 = scmp.eq.s32.totalorder %s18, 0
    %p39 = por %p37, %p38
    %p40 = scmp.ne.s32.totalorder %s26, %s27
    %p41 = scmp.eq.s32.totalorder %s19, 1
    %p42 = por %p40, %p41
    %p44 = scmp.ne.s32.totalorder %s27, %s43
    %p45 = scmp.eq.s32.totalorder %s19, 0
    %p46 = por %p44, %p45
    %s48 = sadd.s32 %s47, 1
    %p51 = scmp.eq.s32.totalorder %s13, 1
    %p52 = scmp.ne.s32.totalorder %s47, %s49
    %p53 = scmp.eq.s32.totalorder %s13, 0
    %p54 = por %p52, %p53
    %p55 = scmp.ne.s32.totalorder %s47, %s49
    %p56 = scmp.eq.s32.totalorder %s18, 1
    %p57 = por %p55, %p56
    %p58 = scmp.ne.s32.totalorder %s49, %s50
    %p59 = scmp.eq.s32.totalorder %s18, 0
    %p60 = por %p58, %p59
    %p61 = scmp.ne.s32.totalorder %s49, %s50
    %p62 = scmp.eq.s32.totalorder %s19, 1
    %p63 = por %p61, %p62
    %p65 = scmp.ne.s32.totalorder %s50, %s64
    %p66 = scmp.eq.s32.totalorder %s19, 0
    %p67 = por %p65, %p66
    %s69 = sadd.s32 %s68, 1
    %p72 = scmp.eq.s32.totalorder %s13, 1
    %p73 = scmp.ne.s32.totalorder %s68, %s70
    %p74 = scmp.eq.s32.totalorder %s13, 0
    %p75 = por %p73, %p74
    %p76 = scmp.ne.s32.totalorder %s68, %s70
    %p77 = scmp.eq.s32.totalorder %s18, 1
    %p78 = por %p76, %p77
    %p79 = scmp.ne.s32.totalorder %s70, %s71
    %p80 = scmp.eq.s32.totalorder %s18, 0
    %p81 = por %p79, %p80
    %p82 = scmp.ne.s32.totalorder %s70, %s71
    %p83 = scmp.eq.s32.totalorder %s19, 1
    %p84 = por %p82, %p83
    %p86 = scmp.ne.s32.totalorder %s71, %s85
    %p87 = scmp.eq.s32.totalorder %s19, 0
    %p88 = por %p86, %p87
    %s90 = sadd.s32 %s89, 1
    %p93 = scmp.eq.s32.totalorder %s13, 1
    %p94 = scmp.ne.s32.totalorder %s89, %s91
    %p95 = scmp.eq.s32.totalorder %s13, 0
    %p96 = por %p94, %p95
    %p97 = scmp.ne.s32.totalorder %s89, %s91
    %p98 = scmp.eq.s32.totalorder %s18, 1
    %p99 = por %p97, %p98
    %p100 = scmp.ne.s32.totalorder %s91, %s92
    %p101 = scmp.eq.s32.totalorder %s18, 0
    %p102 = por %p100, %p101
    %p103 = scmp.ne.s32.totalorder %s91, %s92
    %p104 = scmp.eq.s32.totalorder %s19, 1
    %p105 = por %p103, %p104
    %p107 = scmp.ne.s32.totalorder %s92, %s106
    %p108 = scmp.eq.s32.totalorder %s19, 0
    %p109 = por %p107, %p108
    %s111 = sadd.s32 %s110, 1
    %p114 = scmp.eq.s32.totalorder %s13, 1
    %p115 = scmp.ne.s32.totalorder %s110, %s112
    %p116 = scmp.eq.s32.totalorder %s13, 0
    %p117 = por %p115, %p116
    %p118 = scmp.ne.s32.totalorder %s110, %s112
    %p119 = scmp.eq.s32.totalorder %s18, 1
    %p120 = por %p118, %p119
    %p121 = scmp.ne.s32.totalorder %s112, %s113
    %p122 = scmp.eq.s32.totalorder %s18, 0
    %p123 = por %p121, %p122
    %p124 = scmp.ne.s32.totalorder %s112, %s113
    %p125 = scmp.eq.s32.totalorder %s19, 1
    %p126 = por %p124, %p125
    %p128 = scmp.ne.s32.totalorder %s113, %s127
    %p129 = scmp.eq.s32.totalorder %s19, 0
    %p130 = por %p128, %p129
    %s132 = sadd.s32 %s131, 1
    %p135 = scmp.eq.s32.totalorder %s13, 1
    %p136 = scmp.ne.s32.totalorder %s131, %s133
    %p137 = scmp.eq.s32.totalorder %s13, 0
    %p138 = por %p136, %p137
    %p139 = scmp.ne.s32.totalorder %s131, %s133
    %p140 = scmp.eq.s32.totalorder %s18, 1
    %p141 = por %p139, %p140
    %p142 = scmp.ne.s32.totalorder %s133, %s134
    %p143 = scmp.eq.s32.totalorder %s18, 0
    %p144 = por %p142, %p143
    %p145 = scmp.ne.s32.totalorder %s133, %s134
    %p146 = scmp.eq.s32.totalorder %s19, 1
    %p147 = por %p145, %p146
    %p149 = scmp.ne.s32.totalorder %s134, %s148
    %p150 = scmp.eq.s32.totalorder %s19, 0
    %p151 = por %p149, %p150
    %s153 = sadd.s32 %s152, 1
    %p156 = scmp.eq.s32.totalorder %s13, 1
    %p157 = scmp.ne.s32.totalorder %s152, %s154
    %p158 = scmp.eq.s32.totalorder %s13, 0
    %p159 = por %p157, %p158
    %p160 = scmp.ne.s32.totalorder %s152, %s154
    %p161 = scmp.eq.s32.totalorder %s18, 1
    %p162 = por %p160, %p161
    %p163 = scmp.ne.s32.totalorder %s154, %s155
    %p164 = scmp.eq.s32.totalorder %s18, 0
    %p165 = por %p163, %p164
    %p166 = scmp.ne.s32.totalorder %s154, %s155
    %p167 = scmp.eq.s32.totalorder %s19, 1
    %p168 = por %p166, %p167
    %p170 = scmp.ne.s32.totalorder %s155, %s169
    %p171 = scmp.eq.s32.totalorder %s19, 0
    %p172 = por %p170, %p171
    %s173 = ssub.s32 %s13, %s20
    %p174 = scmp.eq.s32.totalorder %s173, 0
    %s176 = sadd.s32 %s175, 1
    %s177 = scalar_select %p174, %s175, %s176
    %p180 = pneg %p174
    %p181 = scmp.eq.s32.totalorder %s13, 1
    %p182 = por %p180, %p181
    %p183 = scmp.ne.s32.totalorder %s175, %s178
    %p184 = scmp.eq.s32.totalorder %s13, 0
    %p185 = por %p183, %p184
    %p186 = scmp.ne.s32.totalorder %s175, %s178
    %p187 = scmp.eq.s32.totalorder %s18, 1
    %p188 = por %p186, %p187
    %p189 = scmp.ne.s32.totalorder %s178, %s179
    %p190 = scmp.eq.s32.totalorder %s18, 0
    %p191 = por %p189, %p190
    %p192 = scmp.ne.s32.totalorder %s178, %s179
    %p193 = scmp.eq.s32.totalorder %s19, 1
    %p194 = por %p192, %p193
    %p196 = scmp.ne.s32.totalorder %s179, %s195
    %p197 = scmp.eq.s32.totalorder %s19, 0
    %p198 = por %p196, %p197
    %p199 = scmp.le.s32.totalorder 1, %s13
    %p200 = scmp.lt.s32.totalorder %s13, 3
    %p201 = pnand %p199, %p200
    %p202 = pneg %p201
    // Predicated region
    $region9: #{cnn_forward.1} parent=5 // pred_check
      _
    $region10: #{cnn_forward.1} parent=5 // pred_check_branch
      %204 = sbr.rel (%p201) target = $region12
    $region11: #{cnn_forward.1} parent=5 // pred_region
      %s205 = ssub.s32 %s13, 1
      // Predicated region
      $region13: #{cnn_forward.1} parent=11 // pred_check
        %p206 = pneg %p60
      $region14: #{cnn_forward.1} parent=11 // pred_check_branch
        %208 = sbr.rel (%p206) target = $region16
      $region15: #{cnn_forward.1} parent=11 // pred_region
        _
      $region16: #{cnn_forward.1} parent=11 // pred_fallthru
        _
      // Predicated region
      $region17: #{cnn_forward.1} parent=11 // pred_check
        %p209 = pneg %p81
      $region18: #{cnn_forward.1} parent=11 // pred_check_branch
        %211 = sbr.rel (%p209) target = $region20
      $region19: #{cnn_forward.1} parent=11 // pred_region
        _
      $region20: #{cnn_forward.1} parent=11 // pred_fallthru
        _
      // Predicated region
      $region21: #{cnn_forward.1} parent=11 // pred_check
        %p212 = pneg %p102
      $region22: #{cnn_forward.1} parent=11 // pred_check_branch
        %214 = sbr.rel (%p212) target = $region24
      $region23: #{cnn_forward.1} parent=11 // pred_region
        _
      $region24: #{cnn_forward.1} parent=11 // pred_fallthru
        _
      // Predicated region
      $region25: #{cnn_forward.1} parent=11 // pred_check
        %p215 = pneg %p123
      $region26: #{cnn_forward.1} parent=11 // pred_check_branch
        %217 = sbr.rel (%p215) target = $region28
      $region27: #{cnn_forward.1} parent=11 // pred_region
        _
      $region28: #{cnn_forward.1} parent=11 // pred_fallthru
        _
      // Predicated region
      $region29: #{cnn_forward.1} parent=11 // pred_check
        %p218 = pneg %p144
      $region30: #{cnn_forward.1} parent=11 // pred_check_branch
        %220 = sbr.rel (%p218) target = $region32
      $region31: #{cnn_forward.1} parent=11 // pred_region
        _
      $region32: #{cnn_forward.1} parent=11 // pred_fallthru
        _
      // Predicated region
      $region33: #{cnn_forward.1} parent=11 // pred_check
        %p221 = pneg %p165
      $region34: #{cnn_forward.1} parent=11 // pred_check_branch
        %223 = sbr.rel (%p221) target = $region36
      $region35: #{cnn_forward.1} parent=11 // pred_region
        _
      $region36: #{cnn_forward.1} parent=11 // pred_fallthru
        _
    $region12: #{cnn_forward.1} parent=5 // pred_fallthru
      _
    %p224 = scmp.lt.s32.totalorder %s13, 2
    // Predicated region
    $region37: #{cnn_forward.1} parent=5 // pred_check
      %p225 = pneg %p224
    $region38: #{cnn_forward.1} parent=5 // pred_check_branch
      %227 = sbr.rel (%p225) target = $region40
    $region39: #{cnn_forward.1} parent=5 // pred_region
      // Predicated region
      $region41: #{cnn_forward.1} parent=39 // pred_check
        %p228 = pneg %p33
      $region42: #{cnn_forward.1} parent=39 // pred_check_branch
        %230 = sbr.rel (%p228) target = $region44
      $region43: #{cnn_forward.1} parent=39 // pred_region
        %s231 = smul.u32 32, %s13
        %p232 = scmp.lt.s32.totalorder %s231, 63
        %s233 = scalar_select %p232, %s231, 63
        %s234 = smul.addr %s233, 4
        %s235 = smul.addr %s234, 8
        %s236 = scalar_lea.vmem %s0, %s235
        %s237 = smul.u32 32, %s13
      $region44: #{cnn_forward.1} parent=39 // pred_fallthru
        _
    $region40: #{cnn_forward.1} parent=5 // pred_fallthru
      _
    %p238 = scmp.le.s32.totalorder 1, %s13
    %p239 = scmp.lt.s32.totalorder %s13, 3
    %p240 = pnand %p238, %p239
    %p241 = pneg %p240
    // Predicated region
    $region45: #{cnn_forward.1} parent=5 // pred_check
      _
    $region46: #{cnn_forward.1} parent=5 // pred_check_branch
      %243 = sbr.rel (%p240) target = $region48
    $region47: #{cnn_forward.1} parent=5 // pred_region
      %s244 = ssub.s32 %s13, 1
      %s245 = smul.u32 32, %s18
      %p246 = scmp.lt.s32.totalorder %s245, 63
      %s247 = scalar_select %p246, %s245, 63
      %s248 = smul.addr %s247, 4
      %s249 = smul.addr %s248, 8
      %s250 = scalar_lea.vmem %s0, %s249
      %p251 = pneg %p39
      %p252 = pneg %p36
      %p253 = pneg %p60
      %p254 = pneg %p57
      %p255 = pneg %p81
      %p256 = pneg %p78
      %p257 = pneg %p102
      %p258 = pneg %p99
      %p259 = pneg %p123
      %p260 = pneg %p120
      %p261 = pneg %p144
      %p262 = pneg %p141
      %p263 = pneg %p165
      %p264 = pneg %p162
      %p265 = pneg %p191
      %p266 = pneg %p188
      %s267 = smul.u32 32, %s18
      %p268 = scmp.lt.s32.totalorder %s267, 63
      %s269 = scalar_select %p268, %s267, 63
      %s270 = scalar_lea.vmem %s7, %s269
      %s271 = smul.u32 32, %s18
      %p272 = scmp.lt.s32.totalorder %s271, 63
      %s273 = scalar_select %p272, %s271, 63
      %s274 = smul.addr %s273, 4
      %s275 = smul.addr %s274, 8
      %s276 = scalar_lea.vmem %s0, %s275
      %s277 = smul.u32 32, %s18
      %s278 = smul.u32 32, %s18
      %p279 = scmp.lt.s32.totalorder %s278, 63
      %s280 = scalar_select %p279, %s278, 63
      %s281 = scalar_lea.vmem %s7, %s280
      %s282 = smul.u32 32, %s18
      %vm284 = vcmask 221184
      %285 = vst.msk [vmem:[#allocation2] sm:$0x1] %vm284, 0.0
      %286 = vst.msk [vmem:[#allocation2 + $0x20] sm:$0x1] %vm284, 0.0
      %287 = vst.msk [vmem:[#allocation2 + $0x40] sm:$0x1] %vm284, 0.0
      %288 = vst.msk [vmem:[#allocation2 + $0x60] sm:$0x1] %vm284, 0.0
      %289 = vst.msk [vmem:[#allocation2 + $0x80] sm:$0x1] %vm284, 0.0
      %290 = vst.msk [vmem:[#allocation2 + $0xa0] sm:$0x1] %vm284, 0.0
      %291 = vst.msk [vmem:[#allocation2 + $0xc0] sm:$0x1] %vm284, 0.0
      %292 = vst.msk [vmem:[#allocation2 + $0xe0] sm:$0x1] %vm284, 0.0
      %293 = vst.msk [vmem:[#allocation2 + $0x100] sm:$0x1] %vm284, 0.0
      %294 = vst.msk [vmem:[#allocation2 + $0x120] sm:$0x1] %vm284, 0.0
      %295 = vst.msk [vmem:[#allocation2 + $0x140] sm:$0x1] %vm284, 0.0
      %296 = vst.msk [vmem:[#allocation2 + $0x160] sm:$0x1] %vm284, 0.0
      %297 = vst.msk [vmem:[#allocation2 + $0x180] sm:$0x1] %vm284, 0.0
      %298 = vst.msk [vmem:[#allocation2 + $0x1a0] sm:$0x1] %vm284, 0.0
      %299 = vst.msk [vmem:[#allocation2 + $0x1c0] sm:$0x1] %vm284, 0.0
      %300 = vst.msk [vmem:[#allocation2 + $0x1e0] sm:$0x1] %vm284, 0.0
      %301 = vst.msk [vmem:[#allocation2 + $0x200] sm:$0x1] %vm284, 0.0
      %302 = vst.msk [vmem:[#allocation2 + $0x220] sm:$0x1] %vm284, 0.0
      %303 = vst.msk [vmem:[#allocation2 + $0x240] sm:$0x1] %vm284, 0.0
      %304 = vst.msk [vmem:[#allocation2 + $0x260] sm:$0x1] %vm284, 0.0
      %305 = vst.msk [vmem:[#allocation2 + $0x280] sm:$0x1] %vm284, 0.0
      %306 = vst.msk [vmem:[#allocation2 + $0x2a0] sm:$0x1] %vm284, 0.0
      %307 = vst.msk [vmem:[#allocation2 + $0x2c0] sm:$0x1] %vm284, 0.0
      %308 = vst.msk [vmem:[#allocation2 + $0x2e0] sm:$0x1] %vm284, 0.0
      %309 = vst.msk [vmem:[#allocation2 + $0x300] sm:$0x1] %vm284, 0.0
      %310 = vst.msk [vmem:[#allocation2 + $0x320] sm:$0x1] %vm284, 0.0
      %311 = vst.msk [vmem:[#allocation2 + $0x340] sm:$0x1] %vm284, 0.0
      %312 = vst.msk [vmem:[#allocation2 + $0x360] sm:$0x1] %vm284, 0.0
      %313 = vst.msk [vmem:[#allocation2 + $0x380] sm:$0x1] %vm284, 0.0
      %314 = vst.msk [vmem:[#allocation2 + $0x3a0] sm:$0x1] %vm284, 0.0
      %315 = vst.msk [vmem:[#allocation2 + $0x3c0] sm:$0x1] %vm284, 0.0
      %316 = vst.msk [vmem:[#allocation2 + $0x3e0] sm:$0x1] %vm284, 0.0
      %vm317 = vcmask 223232
      %318 = vst.msk [vmem:[#allocation2 + $0x1d] sm:$0x7] %vm317, 0.0
      %319 = vst.msk [vmem:[#allocation2 + $0x3d] sm:$0x7] %vm317, 0.0
      %320 = vst.msk [vmem:[#allocation2 + $0x5d] sm:$0x7] %vm317, 0.0
      %321 = vst.msk [vmem:[#allocation2 + $0x7d] sm:$0x7] %vm317, 0.0
      %322 = vst.msk [vmem:[#allocation2 + $0x9d] sm:$0x7] %vm317, 0.0
      %323 = vst.msk [vmem:[#allocation2 + $0xbd] sm:$0x7] %vm317, 0.0
      %324 = vst.msk [vmem:[#allocation2 + $0xdd] sm:$0x7] %vm317, 0.0
      %325 = vst.msk [vmem:[#allocation2 + $0xfd] sm:$0x7] %vm317, 0.0
      %326 = vst.msk [vmem:[#allocation2 + $0x11d] sm:$0x7] %vm317, 0.0
      %327 = vst.msk [vmem:[#allocation2 + $0x13d] sm:$0x7] %vm317, 0.0
      %328 = vst.msk [vmem:[#allocation2 + $0x15d] sm:$0x7] %vm317, 0.0
      %329 = vst.msk [vmem:[#allocation2 + $0x17d] sm:$0x7] %vm317, 0.0
      %330 = vst.msk [vmem:[#allocation2 + $0x19d] sm:$0x7] %vm317, 0.0
      %331 = vst.msk [vmem:[#allocation2 + $0x1bd] sm:$0x7] %vm317, 0.0
      %332 = vst.msk [vmem:[#allocation2 + $0x1dd] sm:$0x7] %vm317, 0.0
      %333 = vst.msk [vmem:[#allocation2 + $0x1fd] sm:$0x7] %vm317, 0.0
      %334 = vst.msk [vmem:[#allocation2 + $0x21d] sm:$0x7] %vm317, 0.0
      %335 = vst.msk [vmem:[#allocation2 + $0x23d] sm:$0x7] %vm317, 0.0
      %336 = vst.msk [vmem:[#allocation2 + $0x25d] sm:$0x7] %vm317, 0.0
      %337 = vst.msk [vmem:[#allocation2 + $0x27d] sm:$0x7] %vm317, 0.0
      %338 = vst.msk [vmem:[#allocation2 + $0x29d] sm:$0x7] %vm317, 0.0
      %339 = vst.msk [vmem:[#allocation2 + $0x2bd] sm:$0x7] %vm317, 0.0
      %340 = vst.msk [vmem:[#allocation2 + $0x2dd] sm:$0x7] %vm317, 0.0
      %341 = vst.msk [vmem:[#allocation2 + $0x2fd] sm:$0x7] %vm317, 0.0
      %342 = vst.msk [vmem:[#allocation2 + $0x31d] sm:$0x7] %vm317, 0.0
      %343 = vst.msk [vmem:[#allocation2 + $0x33d] sm:$0x7] %vm317, 0.0
      %344 = vst.msk [vmem:[#allocation2 + $0x35d] sm:$0x7] %vm317, 0.0
      %345 = vst.msk [vmem:[#allocation2 + $0x37d] sm:$0x7] %vm317, 0.0
      %346 = vst.msk [vmem:[#allocation2 + $0x39d] sm:$0x7] %vm317, 0.0
      %347 = vst.msk [vmem:[#allocation2 + $0x3bd] sm:$0x7] %vm317, 0.0
      %348 = vst.msk [vmem:[#allocation2 + $0x3dd] sm:$0x7] %vm317, 0.0
      %349 = vst.msk [vmem:[#allocation2 + $0x3fd] sm:$0x7] %vm317, 0.0
      %v350 = vld [vmem:[%s276] sm:$0xff]
      %v351 = vld [vmem:[%s276 + $0x8] sm:$0xff]
      %v352 = vld [vmem:[%s276 + $0x10] sm:$0xff]
      %v353 = vld [vmem:[%s276 + $0x18] sm:$0xf]
      %v354 = vld [vmem:[%s276 + $0x20] sm:$0xff]
      %v355 = vld [vmem:[%s276 + $0x28] sm:$0xff]
      %v356 = vld [vmem:[%s276 + $0x30] sm:$0xff]
      %v357 = vld [vmem:[%s276 + $0x38] sm:$0xf]
      %v358 = vld [vmem:[%s276 + $0x40] sm:$0xff]
      %v359 = vld [vmem:[%s276 + $0x48] sm:$0xff]
      %v360 = vld [vmem:[%s276 + $0x50] sm:$0xff]
      %v361 = vld [vmem:[%s276 + $0x58] sm:$0xf]
      %v362 = vld [vmem:[%s276 + $0x60] sm:$0xff]
      %v363 = vld [vmem:[%s276 + $0x68] sm:$0xff]
      %v364 = vld [vmem:[%s276 + $0x70] sm:$0xff]
      %v365 = vld [vmem:[%s276 + $0x78] sm:$0xf]
      %v366 = vld [vmem:[%s276 + $0x80] sm:$0xff]
      %v367 = vld [vmem:[%s276 + $0x88] sm:$0xff]
      %v368 = vld [vmem:[%s276 + $0x90] sm:$0xff]
      %v369 = vld [vmem:[%s276 + $0x98] sm:$0xf]
      %v370 = vld [vmem:[%s276 + $0xa0] sm:$0xff]
      %v371 = vld [vmem:[%s276 + $0xa8] sm:$0xff]
      %v372 = vld [vmem:[%s276 + $0xb0] sm:$0xff]
      %v373 = vld [vmem:[%s276 + $0xb8] sm:$0xf]
      %v374 = vld [vmem:[%s276 + $0xc0] sm:$0xff]
      %v375 = vld [vmem:[%s276 + $0xc8] sm:$0xff]
      %v376 = vld [vmem:[%s276 + $0xd0] sm:$0xff]
      %v377 = vld [vmem:[%s276 + $0xd8] sm:$0xf]
      %v378 = vld [vmem:[%s276 + $0xe0] sm:$0xff]
      %v379 = vld [vmem:[%s276 + $0xe8] sm:$0xff]
      %v380 = vld [vmem:[%s276 + $0xf0] sm:$0xff]
      %v381 = vld [vmem:[%s276 + $0xf8] sm:$0xf]
      %v382 = vld [vmem:[%s276 + $0x100] sm:$0xff]
      %v383 = vld [vmem:[%s276 + $0x108] sm:$0xff]
      %v384 = vld [vmem:[%s276 + $0x110] sm:$0xff]
      %v385 = vld [vmem:[%s276 + $0x118] sm:$0xf]
      %v386 = vld [vmem:[%s276 + $0x120] sm:$0xff]
      %v387 = vld [vmem:[%s276 + $0x128] sm:$0xff]
      %v388 = vld [vmem:[%s276 + $0x130] sm:$0xff]
      %v389 = vld [vmem:[%s276 + $0x138] sm:$0xf]
      %v390 = vld [vmem:[%s276 + $0x140] sm:$0xff]
      %v391 = vld [vmem:[%s276 + $0x148] sm:$0xff]
      %v392 = vld [vmem:[%s276 + $0x150] sm:$0xff]
      %v393 = vld [vmem:[%s276 + $0x158] sm:$0xf]
      %v394 = vld [vmem:[%s276 + $0x160] sm:$0xff]
      %v395 = vld [vmem:[%s276 + $0x168] sm:$0xff]
      %v396 = vld [vmem:[%s276 + $0x170] sm:$0xff]
      %v397 = vld [vmem:[%s276 + $0x178] sm:$0xf]
      %v398 = vld [vmem:[%s276 + $0x180] sm:$0xff]
      %v399 = vld [vmem:[%s276 + $0x188] sm:$0xff]
      %v400 = vld [vmem:[%s276 + $0x190] sm:$0xff]
      %v401 = vld [vmem:[%s276 + $0x198] sm:$0xf]
      %v402 = vld [vmem:[%s276 + $0x1a0] sm:$0xff]
      %v403 = vld [vmem:[%s276 + $0x1a8] sm:$0xff]
      %v404 = vld [vmem:[%s276 + $0x1b0] sm:$0xff]
      %v405 = vld [vmem:[%s276 + $0x1b8] sm:$0xf]
      %v406 = vld [vmem:[%s276 + $0x1c0] sm:$0xff]
      %v407 = vld [vmem:[%s276 + $0x1c8] sm:$0xff]
      %v408 = vld [vmem:[%s276 + $0x1d0] sm:$0xff]
      %v409 = vld [vmem:[%s276 + $0x1d8] sm:$0xf]
      %v410 = vld [vmem:[%s276 + $0x1e0] sm:$0xff]
      %v411 = vld [vmem:[%s276 + $0x1e8] sm:$0xff]
      %v412 = vld [vmem:[%s276 + $0x1f0] sm:$0xff]
      %v413 = vld [vmem:[%s276 + $0x1f8] sm:$0xf]
      %v414 = vld [vmem:[%s276 + $0x200] sm:$0xff]
      %v415 = vld [vmem:[%s276 + $0x208] sm:$0xff]
      %v416 = vld [vmem:[%s276 + $0x210] sm:$0xff]
      %v417 = vld [vmem:[%s276 + $0x218] sm:$0xf]
      %v418 = vld [vmem:[%s276 + $0x220] sm:$0xff]
      %v419 = vld [vmem:[%s276 + $0x228] sm:$0xff]
      %v420 = vld [vmem:[%s276 + $0x230] sm:$0xff]
      %v421 = vld [vmem:[%s276 + $0x238] sm:$0xf]
      %v422 = vld [vmem:[%s276 + $0x240] sm:$0xff]
      %v423 = vld [vmem:[%s276 + $0x248] sm:$0xff]
      %v424 = vld [vmem:[%s276 + $0x250] sm:$0xff]
      %v425 = vld [vmem:[%s276 + $0x258] sm:$0xf]
      %v426 = vld [vmem:[%s276 + $0x260] sm:$0xff]
      %v427 = vld [vmem:[%s276 + $0x268] sm:$0xff]
      %v428 = vld [vmem:[%s276 + $0x270] sm:$0xff]
      %v429 = vld [vmem:[%s276 + $0x278] sm:$0xf]
      %v430 = vld [vmem:[%s276 + $0x280] sm:$0xff]
      %v431 = vld [vmem:[%s276 + $0x288] sm:$0xff]
      %v432 = vld [vmem:[%s276 + $0x290] sm:$0xff]
      %v433 = vld [vmem:[%s276 + $0x298] sm:$0xf]
      %v434 = vld [vmem:[%s276 + $0x2a0] sm:$0xff]
      %v435 = vld [vmem:[%s276 + $0x2a8] sm:$0xff]
      %v436 = vld [vmem:[%s276 + $0x2b0] sm:$0xff]
      %v437 = vld [vmem:[%s276 + $0x2b8] sm:$0xf]
      %v438 = vld [vmem:[%s276 + $0x2c0] sm:$0xff]
      %v439 = vld [vmem:[%s276 + $0x2c8] sm:$0xff]
      %v440 = vld [vmem:[%s276 + $0x2d0] sm:$0xff]
      %v441 = vld [vmem:[%s276 + $0x2d8] sm:$0xf]
      %v442 = vld [vmem:[%s276 + $0x2e0] sm:$0xff]
      %v443 = vld [vmem:[%s276 + $0x2e8] sm:$0xff]
      %v444 = vld [vmem:[%s276 + $0x2f0] sm:$0xff]
      %v445 = vld [vmem:[%s276 + $0x2f8] sm:$0xf]
      %v446 = vld [vmem:[%s276 + $0x300] sm:$0xff]
      %v447 = vld [vmem:[%s276 + $0x308] sm:$0xff]
      %v448 = vld [vmem:[%s276 + $0x310] sm:$0xff]
      %v449 = vld [vmem:[%s276 + $0x318] sm:$0xf]
      %v450 = vld [vmem:[%s276 + $0x320] sm:$0xff]
      %v451 = vld [vmem:[%s276 + $0x328] sm:$0xff]
      %v452 = vld [vmem:[%s276 + $0x330] sm:$0xff]
      %v453 = vld [vmem:[%s276 + $0x338] sm:$0xf]
      %v454 = vld [vmem:[%s276 + $0x340] sm:$0xff]
      %v455 = vld [vmem:[%s276 + $0x348] sm:$0xff]
      %v456 = vld [vmem:[%s276 + $0x350] sm:$0xff]
      %v457 = vld [vmem:[%s276 + $0x358] sm:$0xf]
      %v458 = vld [vmem:[%s276 + $0x360] sm:$0xff]
      %v459 = vld [vmem:[%s276 + $0x368] sm:$0xff]
      %v460 = vld [vmem:[%s276 + $0x370] sm:$0xff]
      %v461 = vld [vmem:[%s276 + $0x378] sm:$0xf]
      %v462 = vld [vmem:[%s276 + $0x380] sm:$0xff]
      %v463 = vld [vmem:[%s276 + $0x388] sm:$0xff]
      %v464 = vld [vmem:[%s276 + $0x390] sm:$0xff]
      %v465 = vld [vmem:[%s276 + $0x398] sm:$0xf]
      %v466 = vld [vmem:[%s276 + $0x3a0] sm:$0xff]
      %v467 = vld [vmem:[%s276 + $0x3a8] sm:$0xff]
      %v468 = vld [vmem:[%s276 + $0x3b0] sm:$0xff]
      %v469 = vld [vmem:[%s276 + $0x3b8] sm:$0xf]
      %v470 = vld [vmem:[%s276 + $0x3c0] sm:$0xff]
      %v471 = vld [vmem:[%s276 + $0x3c8] sm:$0xff]
      %v472 = vld [vmem:[%s276 + $0x3d0] sm:$0xff]
      %v473 = vld [vmem:[%s276 + $0x3d8] sm:$0xf]
      %v474 = vld [vmem:[%s276 + $0x3e0] sm:$0xff]
      %v475 = vld [vmem:[%s276 + $0x3e8] sm:$0xff]
      %v476 = vld [vmem:[%s276 + $0x3f0] sm:$0xff]
      %v477 = vld [vmem:[%s276 + $0x3f8] sm:$0xf]
      %vm478 = vcmask 228352
      %479 = vst.msk [vmem:[#allocation2 + $0x1] sm:$0xff] %vm478, %v350
      %480 = vst.msk [vmem:[#allocation2 + $0x9] sm:$0xff] %vm478, %v351
      %481 = vst.msk [vmem:[#allocation2 + $0x11] sm:$0xff] %vm478, %v352
      %vm482 = vcmask 224256
      %483 = vst.msk [vmem:[#allocation2 + $0x19] sm:$0xf] %vm482, %v353
      %484 = vst.msk [vmem:[#allocation2 + $0x21] sm:$0xff] %vm478, %v354
      %485 = vst.msk [vmem:[#allocation2 + $0x29] sm:$0xff] %vm478, %v355
      %486 = vst.msk [vmem:[#allocation2 + $0x31] sm:$0xff] %vm478, %v356
      %487 = vst.msk [vmem:[#allocation2 + $0x39] sm:$0xf] %vm482, %v357
      %488 = vst.msk [vmem:[#allocation2 + $0x41] sm:$0xff] %vm478, %v358
      %489 = vst.msk [vmem:[#allocation2 + $0x49] sm:$0xff] %vm478, %v359
      %490 = vst.msk [vmem:[#allocation2 + $0x51] sm:$0xff] %vm478, %v360
      %491 = vst.msk [vmem:[#allocation2 + $0x59] sm:$0xf] %vm482, %v361
      %492 = vst.msk [vmem:[#allocation2 + $0x61] sm:$0xff] %vm478, %v362
      %493 = vst.msk [vmem:[#allocation2 + $0x69] sm:$0xff] %vm478, %v363
      %494 = vst.msk [vmem:[#allocation2 + $0x71] sm:$0xff] %vm478, %v364
      %495 = vst.msk [vmem:[#allocation2 + $0x79] sm:$0xf] %vm482, %v365
      %496 = vst.msk [vmem:[#allocation2 + $0x81] sm:$0xff] %vm478, %v366
      %497 = vst.msk [vmem:[#allocation2 + $0x89] sm:$0xff] %vm478, %v367
      %498 = vst.msk [vmem:[#allocation2 + $0x91] sm:$0xff] %vm478, %v368
      %499 = vst.msk [vmem:[#allocation2 + $0x99] sm:$0xf] %vm482, %v369
      %500 = vst.msk [vmem:[#allocation2 + $0xa1] sm:$0xff] %vm478, %v370
      %501 = vst.msk [vmem:[#allocation2 + $0xa9] sm:$0xff] %vm478, %v371
      %502 = vst.msk [vmem:[#allocation2 + $0xb1] sm:$0xff] %vm478, %v372
      %503 = vst.msk [vmem:[#allocation2 + $0xb9] sm:$0xf] %vm482, %v373
      %504 = vst.msk [vmem:[#allocation2 + $0xc1] sm:$0xff] %vm478, %v374
      %505 = vst.msk [vmem:[#allocation2 + $0xc9] sm:$0xff] %vm478, %v375
      %506 = vst.msk [vmem:[#allocation2 + $0xd1] sm:$0xff] %vm478, %v376
      %507 = vst.msk [vmem:[#allocation2 + $0xd9] sm:$0xf] %vm482, %v377
      %508 = vst.msk [vmem:[#allocation2 + $0xe1] sm:$0xff] %vm478, %v378
      %509 = vst.msk [vmem:[#allocation2 + $0xe9] sm:$0xff] %vm478, %v379
      %510 = vst.msk [vmem:[#allocation2 + $0xf1] sm:$0xff] %vm478, %v380
      %511 = vst.msk [vmem:[#allocation2 + $0xf9] sm:$0xf] %vm482, %v381
      %512 = vst.msk [vmem:[#allocation2 + $0x101] sm:$0xff] %vm478, %v382
      %513 = vst.msk [vmem:[#allocation2 + $0x109] sm:$0xff] %vm478, %v383
      %514 = vst.msk [vmem:[#allocation2 + $0x111] sm:$0xff] %vm478, %v384
      %515 = vst.msk [vmem:[#allocation2 + $0x119] sm:$0xf] %vm482, %v385
      %516 = vst.msk [vmem:[#allocation2 + $0x121] sm:$0xff] %vm478, %v386
      %517 = vst.msk [vmem:[#allocation2 + $0x129] sm:$0xff] %vm478, %v387
      %518 = vst.msk [vmem:[#allocation2 + $0x131] sm:$0xff] %vm478, %v388
      %519 = vst.msk [vmem:[#allocation2 + $0x139] sm:$0xf] %vm482, %v389
      %520 = vst.msk [vmem:[#allocation2 + $0x141] sm:$0xff] %vm478, %v390
      %521 = vst.msk [vmem:[#allocation2 + $0x149] sm:$0xff] %vm478, %v391
      %522 = vst.msk [vmem:[#allocation2 + $0x151] sm:$0xff] %vm478, %v392
      %523 = vst.msk [vmem:[#allocation2 + $0x159] sm:$0xf] %vm482, %v393
      %524 = vst.msk [vmem:[#allocation2 + $0x161] sm:$0xff] %vm478, %v394
      %525 = vst.msk [vmem:[#allocation2 + $0x169] sm:$0xff] %vm478, %v395
      %526 = vst.msk [vmem:[#allocation2 + $0x171] sm:$0xff] %vm478, %v396
      %527 = vst.msk [vmem:[#allocation2 + $0x179] sm:$0xf] %vm482, %v397
      %528 = vst.msk [vmem:[#allocation2 + $0x181] sm:$0xff] %vm478, %v398
      %529 = vst.msk [vmem:[#allocation2 + $0x189] sm:$0xff] %vm478, %v399
      %530 = vst.msk [vmem:[#allocation2 + $0x191] sm:$0xff] %vm478, %v400
      %531 = vst.msk [vmem:[#allocation2 + $0x199] sm:$0xf] %vm482, %v401
      %532 = vst.msk [vmem:[#allocation2 + $0x1a1] sm:$0xff] %vm478, %v402
      %533 = vst.msk [vmem:[#allocation2 + $0x1a9] sm:$0xff] %vm478, %v403
      %534 = vst.msk [vmem:[#allocation2 + $0x1b1] sm:$0xff] %vm478, %v404
      %535 = vst.msk [vmem:[#allocation2 + $0x1b9] sm:$0xf] %vm482, %v405
      %536 = vst.msk [vmem:[#allocation2 + $0x1c1] sm:$0xff] %vm478, %v406
      %537 = vst.msk [vmem:[#allocation2 + $0x1c9] sm:$0xff] %vm478, %v407
      %538 = vst.msk [vmem:[#allocation2 + $0x1d1] sm:$0xff] %vm478, %v408
      %539 = vst.msk [vmem:[#allocation2 + $0x1d9] sm:$0xf] %vm482, %v409
      %540 = vst.msk [vmem:[#allocation2 + $0x1e1] sm:$0xff] %vm478, %v410
      %541 = vst.msk [vmem:[#allocation2 + $0x1e9] sm:$0xff] %vm478, %v411
      %542 = vst.msk [vmem:[#allocation2 + $0x1f1] sm:$0xff] %vm478, %v412
      %543 = vst.msk [vmem:[#allocation2 + $0x1f9] sm:$0xf] %vm482, %v413
      %544 = vst.msk [vmem:[#allocation2 + $0x201] sm:$0xff] %vm478, %v414
      %545 = vst.msk [vmem:[#allocation2 + $0x209] sm:$0xff] %vm478, %v415
      %546 = vst.msk [vmem:[#allocation2 + $0x211] sm:$0xff] %vm478, %v416
      %547 = vst.msk [vmem:[#allocation2 + $0x219] sm:$0xf] %vm482, %v417
      %548 = vst.msk [vmem:[#allocation2 + $0x221] sm:$0xff] %vm478, %v418
      %549 = vst.msk [vmem:[#allocation2 + $0x229] sm:$0xff] %vm478, %v419
      %550 = vst.msk [vmem:[#allocation2 + $0x231] sm:$0xff] %vm478, %v420
      %551 = vst.msk [vmem:[#allocation2 + $0x239] sm:$0xf] %vm482, %v421
      %552 = vst.msk [vmem:[#allocation2 + $0x241] sm:$0xff] %vm478, %v422
      %553 = vst.msk [vmem:[#allocation2 + $0x249] sm:$0xff] %vm478, %v423
      %554 = vst.msk [vmem:[#allocation2 + $0x251] sm:$0xff] %vm478, %v424
      %555 = vst.msk [vmem:[#allocation2 + $0x259] sm:$0xf] %vm482, %v425
      %556 = vst.msk [vmem:[#allocation2 + $0x261] sm:$0xff] %vm478, %v426
      %557 = vst.msk [vmem:[#allocation2 + $0x269] sm:$0xff] %vm478, %v427
      %558 = vst.msk [vmem:[#allocation2 + $0x271] sm:$0xff] %vm478, %v428
      %559 = vst.msk [vmem:[#allocation2 + $0x279] sm:$0xf] %vm482, %v429
      %560 = vst.msk [vmem:[#allocation2 + $0x281] sm:$0xff] %vm478, %v430
      %561 = vst.msk [vmem:[#allocation2 + $0x289] sm:$0xff] %vm478, %v431
      %562 = vst.msk [vmem:[#allocation2 + $0x291] sm:$0xff] %vm478, %v432
      %563 = vst.msk [vmem:[#allocation2 + $0x299] sm:$0xf] %vm482, %v433
      %564 = vst.msk [vmem:[#allocation2 + $0x2a1] sm:$0xff] %vm478, %v434
      %565 = vst.msk [vmem:[#allocation2 + $0x2a9] sm:$0xff] %vm478, %v435
      %566 = vst.msk [vmem:[#allocation2 + $0x2b1] sm:$0xff] %vm478, %v436
      %567 = vst.msk [vmem:[#allocation2 + $0x2b9] sm:$0xf] %vm482, %v437
      %568 = vst.msk [vmem:[#allocation2 + $0x2c1] sm:$0xff] %vm478, %v438
      %569 = vst.msk [vmem:[#allocation2 + $0x2c9] sm:$0xff] %vm478, %v439
      %570 = vst.msk [vmem:[#allocation2 + $0x2d1] sm:$0xff] %vm478, %v440
      %571 = vst.msk [vmem:[#allocation2 + $0x2d9] sm:$0xf] %vm482, %v441
      %572 = vst.msk [vmem:[#allocation2 + $0x2e1] sm:$0xff] %vm478, %v442
      %573 = vst.msk [vmem:[#allocation2 + $0x2e9] sm:$0xff] %vm478, %v443
      %574 = vst.msk [vmem:[#allocation2 + $0x2f1] sm:$0xff] %vm478, %v444
      %575 = vst.msk [vmem:[#allocation2 + $0x2f9] sm:$0xf] %vm482, %v445
      %576 = vst.msk [vmem:[#allocation2 + $0x301] sm:$0xff] %vm478, %v446
      %577 = vst.msk [vmem:[#allocation2 + $0x309] sm:$0xff] %vm478, %v447
      %578 = vst.msk [vmem:[#allocation2 + $0x311] sm:$0xff] %vm478, %v448
      %579 = vst.msk [vmem:[#allocation2 + $0x319] sm:$0xf] %vm482, %v449
      %580 = vst.msk [vmem:[#allocation2 + $0x321] sm:$0xff] %vm478, %v450
      %581 = vst.msk [vmem:[#allocation2 + $0x329] sm:$0xff] %vm478, %v451
      %582 = vst.msk [vmem:[#allocation2 + $0x331] sm:$0xff] %vm478, %v452
      %583 = vst.msk [vmem:[#allocation2 + $0x339] sm:$0xf] %vm482, %v453
      %584 = vst.msk [vmem:[#allocation2 + $0x341] sm:$0xff] %vm478, %v454
      %585 = vst.msk [vmem:[#allocation2 + $0x349] sm:$0xff] %vm478, %v455
      %586 = vst.msk [vmem:[#allocation2 + $0x351] sm:$0xff] %vm478, %v456
      %587 = vst.msk [vmem:[#allocation2 + $0x359] sm:$0xf] %vm482, %v457
      %588 = vst.msk [vmem:[#allocation2 + $0x361] sm:$0xff] %vm478, %v458
      %589 = vst.msk [vmem:[#allocation2 + $0x369] sm:$0xff] %vm478, %v459
      %590 = vst.msk [vmem:[#allocation2 + $0x371] sm:$0xff] %vm478, %v460
      %591 = vst.msk [vmem:[#allocation2 + $0x379] sm:$0xf] %vm482, %v461
      %592 = vst.msk [vmem:[#allocation2 + $0x381] sm:$0xff] %vm478, %v462
      %593 = vst.msk [vmem:[#allocation2 + $0x389] sm:$0xff] %vm478, %v463
      %594 = vst.msk [vmem:[#allocation2 + $0x391] sm:$0xff] %vm478, %v464
      %595 = vst.msk [vmem:[#allocation2 + $0x399] sm:$0xf] %vm482, %v465
      %596 = vst.msk [vmem:[#allocation2 + $0x3a1] sm:$0xff] %vm478, %v466
      %597 = vst.msk [vmem:[#allocation2 + $0x3a9] sm:$0xff] %vm478, %v467
      %598 = vst.msk [vmem:[#allocation2 + $0x3b1] sm:$0xff] %vm478, %v468
      %599 = vst.msk [vmem:[#allocation2 + $0x3b9] sm:$0xf] %vm482, %v469
      %600 = vst.msk [vmem:[#allocation2 + $0x3c1] sm:$0xff] %vm478, %v470
      %601 = vst.msk [vmem:[#allocation2 + $0x3c9] sm:$0xff] %vm478, %v471
      %602 = vst.msk [vmem:[#allocation2 + $0x3d1] sm:$0xff] %vm478, %v472
      %603 = vst.msk [vmem:[#allocation2 + $0x3d9] sm:$0xf] %vm482, %v473
      %604 = vst.msk [vmem:[#allocation2 + $0x3e1] sm:$0xff] %vm478, %v474
      %605 = vst.msk [vmem:[#allocation2 + $0x3e9] sm:$0xff] %vm478, %v475
      %606 = vst.msk [vmem:[#allocation2 + $0x3f1] sm:$0xff] %vm478, %v476
      %607 = vst.msk [vmem:[#allocation2 + $0x3f9] sm:$0xf] %vm482, %v477
      %v608 = vld [vmem:[#allocation2] sm:$0xff]
      %v609 = vld [vmem:[#allocation2 + $0x8] sm:$0xff]
      %v610 = vld [vmem:[#allocation2 + $0x10] sm:$0xff]
      %v611 = vld [vmem:[#allocation2 + $0x18] sm:$0xff]
      %v612 = vld [vmem:[#allocation2 + $0x20] sm:$0xff]
      %v613 = vld [vmem:[#allocation2 + $0x28] sm:$0xff]
      %v614 = vld [vmem:[#allocation2 + $0x30] sm:$0xff]
      %v615 = vld [vmem:[#allocation2 + $0x38] sm:$0xff]
      %v616 = vld [vmem:[#allocation2 + $0x40] sm:$0xff]
      %v617 = vld [vmem:[#allocation2 + $0x48] sm:$0xff]
      %v618 = vld [vmem:[#allocation2 + $0x50] sm:$0xff]
      %v619 = vld [vmem:[#allocation2 + $0x58] sm:$0xff]
      %v620 = vld [vmem:[#allocation2 + $0x60] sm:$0xff]
      %v621 = vld [vmem:[#allocation2 + $0x68] sm:$0xff]
      %v622 = vld [vmem:[#allocation2 + $0x70] sm:$0xff]
      %v623 = vld [vmem:[#allocation2 + $0x78] sm:$0xff]
      %v624 = vld [vmem:[#allocation2 + $0x80] sm:$0xff]
      %v625 = vld [vmem:[#allocation2 + $0x88] sm:$0xff]
      %v626 = vld [vmem:[#allocation2 + $0x90] sm:$0xff]
      %v627 = vld [vmem:[#allocation2 + $0x98] sm:$0xff]
      %v628 = vld [vmem:[#allocation2 + $0xa0] sm:$0xff]
      %v629 = vld [vmem:[#allocation2 + $0xa8] sm:$0xff]
      %v630 = vld [vmem:[#allocation2 + $0xb0] sm:$0xff]
      %v631 = vld [vmem:[#allocation2 + $0xb8] sm:$0xff]
      %v632 = vld [vmem:[#allocation2 + $0xc0] sm:$0xff]
      %v633 = vld [vmem:[#allocation2 + $0xc8] sm:$0xff]
      %v634 = vld [vmem:[#allocation2 + $0xd0] sm:$0xff]
      %v635 = vld [vmem:[#allocation2 + $0xd8] sm:$0xff]
      %v636 = vld [vmem:[#allocation2 + $0xe0] sm:$0xff]
      %v637 = vld [vmem:[#allocation2 + $0xe8] sm:$0xff]
      %v638 = vld [vmem:[#allocation2 + $0xf0] sm:$0xff]
      %v639 = vld [vmem:[#allocation2 + $0xf8] sm:$0xff]
      %v640 = vld [vmem:[#allocation2 + $0x100] sm:$0xff]
      %v641 = vld [vmem:[#allocation2 + $0x108] sm:$0xff]
      %v642 = vld [vmem:[#allocation2 + $0x110] sm:$0xff]
      %v643 = vld [vmem:[#allocation2 + $0x118] sm:$0xff]
      %v644 = vld [vmem:[#allocation2 + $0x120] sm:$0xff]
      %v645 = vld [vmem:[#allocation2 + $0x128] sm:$0xff]
      %v646 = vld [vmem:[#allocation2 + $0x130] sm:$0xff]
      %v647 = vld [vmem:[#allocation2 + $0x138] sm:$0xff]
      %v648 = vld [vmem:[#allocation2 + $0x140] sm:$0xff]
      %v649 = vld [vmem:[#allocation2 + $0x148] sm:$0xff]
      %v650 = vld [vmem:[#allocation2 + $0x150] sm:$0xff]
      %v651 = vld [vmem:[#allocation2 + $0x158] sm:$0xff]
      %v652 = vld [vmem:[#allocation2 + $0x160] sm:$0xff]
      %v653 = vld [vmem:[#allocation2 + $0x168] sm:$0xff]
      %v654 = vld [vmem:[#allocation2 + $0x170] sm:$0xff]
      %v655 = vld [vmem:[#allocation2 + $0x178] sm:$0xff]
      %v656 = vld [vmem:[#allocation2 + $0x180] sm:$0xff]
      %v657 = vld [vmem:[#allocation2 + $0x188] sm:$0xff]
      %v658 = vld [vmem:[#allocation2 + $0x190] sm:$0xff]
      %v659 = vld [vmem:[#allocation2 + $0x198] sm:$0xff]
      %v660 = vld [vmem:[#allocation2 + $0x1a0] sm:$0xff]
      %v661 = vld [vmem:[#allocation2 + $0x1a8] sm:$0xff]
      %v662 = vld [vmem:[#allocation2 + $0x1b0] sm:$0xff]
      %v663 = vld [vmem:[#allocation2 + $0x1b8] sm:$0xff]
      %v664 = vld [vmem:[#allocation2 + $0x1c0] sm:$0xff]
      %v665 = vld [vmem:[#allocation2 + $0x1c8] sm:$0xff]
      %v666 = vld [vmem:[#allocation2 + $0x1d0] sm:$0xff]
      %v667 = vld [vmem:[#allocation2 + $0x1d8] sm:$0xff]
      %v668 = vld [vmem:[#allocation2 + $0x1e0] sm:$0xff]
      %v669 = vld [vmem:[#allocation2 + $0x1e8] sm:$0xff]
      %v670 = vld [vmem:[#allocation2 + $0x1f0] sm:$0xff]
      %v671 = vld [vmem:[#allocation2 + $0x1f8] sm:$0xff]
      %v672 = vld [vmem:[#allocation2 + $0x200] sm:$0xff]
      %v673 = vld [vmem:[#allocation2 + $0x208] sm:$0xff]
      %v674 = vld [vmem:[#allocation2 + $0x210] sm:$0xff]
      %v675 = vld [vmem:[#allocation2 + $0x218] sm:$0xff]
      %v676 = vld [vmem:[#allocation2 + $0x220] sm:$0xff]
      %v677 = vld [vmem:[#allocation2 + $0x228] sm:$0xff]
      %v678 = vld [vmem:[#allocation2 + $0x230] sm:$0xff]
      %v679 = vld [vmem:[#allocation2 + $0x238] sm:$0xff]
      %v680 = vld [vmem:[#allocation2 + $0x240] sm:$0xff]
      %v681 = vld [vmem:[#allocation2 + $0x248] sm:$0xff]
      %v682 = vld [vmem:[#allocation2 + $0x250] sm:$0xff]
      %v683 = vld [vmem:[#allocation2 + $0x258] sm:$0xff]
      %v684 = vld [vmem:[#allocation2 + $0x260] sm:$0xff]
      %v685 = vld [vmem:[#allocation2 + $0x268] sm:$0xff]
      %v686 = vld [vmem:[#allocation2 + $0x270] sm:$0xff]
      %v687 = vld [vmem:[#allocation2 + $0x278] sm:$0xff]
      %v688 = vld [vmem:[#allocation2 + $0x280] sm:$0xff]
      %v689 = vld [vmem:[#allocation2 + $0x288] sm:$0xff]
      %v690 = vld [vmem:[#allocation2 + $0x290] sm:$0xff]
      %v691 = vld [vmem:[#allocation2 + $0x298] sm:$0xff]
      %v692 = vld [vmem:[#allocation2 + $0x2a0] sm:$0xff]
      %v693 = vld [vmem:[#allocation2 + $0x2a8] sm:$0xff]
      %v694 = vld [vmem:[#allocation2 + $0x2b0] sm:$0xff]
      %v695 = vld [vmem:[#allocation2 + $0x2b8] sm:$0xff]
      %v696 = vld [vmem:[#allocation2 + $0x2c0] sm:$0xff]
      %v697 = vld [vmem:[#allocation2 + $0x2c8] sm:$0xff]
      %v698 = vld [vmem:[#allocation2 + $0x2d0] sm:$0xff]
      %v699 = vld [vmem:[#allocation2 + $0x2d8] sm:$0xff]
      %v700 = vld [vmem:[#allocation2 + $0x2e0] sm:$0xff]
      %v701 = vld [vmem:[#allocation2 + $0x2e8] sm:$0xff]
      %v702 = vld [vmem:[#allocation2 + $0x2f0] sm:$0xff]
      %v703 = vld [vmem:[#allocation2 + $0x2f8] sm:$0xff]
      %v704 = vld [vmem:[#allocation2 + $0x300] sm:$0xff]
      %v705 = vld [vmem:[#allocation2 + $0x308] sm:$0xff]
      %v706 = vld [vmem:[#allocation2 + $0x310] sm:$0xff]
      %v707 = vld [vmem:[#allocation2 + $0x318] sm:$0xff]
      %v708 = vld [vmem:[#allocation2 + $0x320] sm:$0xff]
      %v709 = vld [vmem:[#allocation2 + $0x328] sm:$0xff]
      %v710 = vld [vmem:[#allocation2 + $0x330] sm:$0xff]
      %v711 = vld [vmem:[#allocation2 + $0x338] sm:$0xff]
      %v712 = vld [vmem:[#allocation2 + $0x340] sm:$0xff]
      %v713 = vld [vmem:[#allocation2 + $0x348] sm:$0xff]
      %v714 = vld [vmem:[#allocation2 + $0x350] sm:$0xff]
      %v715 = vld [vmem:[#allocation2 + $0x358] sm:$0xff]
      %v716 = vld [vmem:[#allocation2 + $0x360] sm:$0xff]
      %v717 = vld [vmem:[#allocation2 + $0x368] sm:$0xff]
      %v718 = vld [vmem:[#allocation2 + $0x370] sm:$0xff]
      %v719 = vld [vmem:[#allocation2 + $0x378] sm:$0xff]
      %v720 = vld [vmem:[#allocation2 + $0x380] sm:$0xff]
      %v721 = vld [vmem:[#allocation2 + $0x388] sm:$0xff]
      %v722 = vld [vmem:[#allocation2 + $0x390] sm:$0xff]
      %v723 = vld [vmem:[#allocation2 + $0x398] sm:$0xff]
      %v724 = vld [vmem:[#allocation2 + $0x3a0] sm:$0xff]
      %v725 = vld [vmem:[#allocation2 + $0x3a8] sm:$0xff]
      %v726 = vld [vmem:[#allocation2 + $0x3b0] sm:$0xff]
      %v727 = vld [vmem:[#allocation2 + $0x3b8] sm:$0xff]
      %v728 = vld [vmem:[#allocation2 + $0x3c0] sm:$0xff]
      %v729 = vld [vmem:[#allocation2 + $0x3c8] sm:$0xff]
      %v730 = vld [vmem:[#allocation2 + $0x3d0] sm:$0xff]
      %v731 = vld [vmem:[#allocation2 + $0x3d8] sm:$0xff]
      %v732 = vld [vmem:[#allocation2 + $0x3e0] sm:$0xff]
      %v733 = vld [vmem:[#allocation2 + $0x3e8] sm:$0xff]
      %v734 = vld [vmem:[#allocation2 + $0x3f0] sm:$0xff]
      %v735 = vld [vmem:[#allocation2 + $0x3f8] sm:$0xff]
      %v736 = vpack.c.bf16 %v609, %v608
      %v737 = vpack.c.bf16 %v611, %v610
      %v738 = vpack.c.bf16 %v613, %v612
      %v739 = vpack.c.bf16 %v615, %v614
      %v740 = vpack.c.bf16 %v617, %v616
      %v741 = vpack.c.bf16 %v619, %v618
      %v742 = vpack.c.bf16 %v621, %v620
      %v743 = vpack.c.bf16 %v623, %v622
      %v744 = vpack.c.bf16 %v625, %v624
      %v745 = vpack.c.bf16 %v627, %v626
      %v746 = vpack.c.bf16 %v629, %v628
      %v747 = vpack.c.bf16 %v631, %v630
      %v748 = vpack.c.bf16 %v633, %v632
      %v749 = vpack.c.bf16 %v635, %v634
      %v750 = vpack.c.bf16 %v637, %v636
      %v751 = vpack.c.bf16 %v639, %v638
      %v752 = vpack.c.bf16 %v641, %v640
      %v753 = vpack.c.bf16 %v643, %v642
      %v754 = vpack.c.bf16 %v645, %v644
      %v755 = vpack.c.bf16 %v647, %v646
      %v756 = vpack.c.bf16 %v649, %v648
      %v757 = vpack.c.bf16 %v651, %v650
      %v758 = vpack.c.bf16 %v653, %v652
      %v759 = vpack.c.bf16 %v655, %v654
      %v760 = vpack.c.bf16 %v657, %v656
      %v761 = vpack.c.bf16 %v659, %v658
      %v762 = vpack.c.bf16 %v661, %v660
      %v763 = vpack.c.bf16 %v663, %v662
      %v764 = vpack.c.bf16 %v665, %v664
      %v765 = vpack.c.bf16 %v667, %v666
      %v766 = vpack.c.bf16 %v669, %v668
      %v767 = vpack.c.bf16 %v671, %v670
      %v768 = vpack.c.bf16 %v673, %v672
      %v769 = vpack.c.bf16 %v675, %v674
      %v770 = vpack.c.bf16 %v677, %v676
      %v771 = vpack.c.bf16 %v679, %v678
      %v772 = vpack.c.bf16 %v681, %v680
      %v773 = vpack.c.bf16 %v683, %v682
      %v774 = vpack.c.bf16 %v685, %v684
      %v775 = vpack.c.bf16 %v687, %v686
      %v776 = vpack.c.bf16 %v689, %v688
      %v777 = vpack.c.bf16 %v691, %v690
      %v778 = vpack.c.bf16 %v693, %v692
      %v779 = vpack.c.bf16 %v695, %v694
      %v780 = vpack.c.bf16 %v697, %v696
      %v781 = vpack.c.bf16 %v699, %v698
      %v782 = vpack.c.bf16 %v701, %v700
      %v783 = vpack.c.bf16 %v703, %v702
      %v784 = vpack.c.bf16 %v705, %v704
      %v785 = vpack.c.bf16 %v707, %v706
      %v786 = vpack.c.bf16 %v709, %v708
      %v787 = vpack.c.bf16 %v711, %v710
      %v788 = vpack.c.bf16 %v713, %v712
      %v789 = vpack.c.bf16 %v715, %v714
      %v790 = vpack.c.bf16 %v717, %v716
      %v791 = vpack.c.bf16 %v719, %v718
      %v792 = vpack.c.bf16 %v721, %v720
      %v793 = vpack.c.bf16 %v723, %v722
      %v794 = vpack.c.bf16 %v725, %v724
      %v795 = vpack.c.bf16 %v727, %v726
      %v796 = vpack.c.bf16 %v729, %v728
      %v797 = vpack.c.bf16 %v731, %v730
      %v798 = vpack.c.bf16 %v733, %v732
      %v799 = vpack.c.bf16 %v735, %v734
      %v800 = vld [vmem:[%s1] sm:$0xff]
      %v801 = vld [vmem:[%s1 + $0x8] sm:$0xff]
      %v802 = vld [vmem:[%s1 + $0x10] sm:$0xff]
      %v803 = vld [vmem:[%s1 + $0x18] sm:$0xff]
      %v804 = vld [vmem:[%s1 + $0x20] sm:$0xff]
      %v805 = vld [vmem:[%s1 + $0x28] sm:$0xff]
      %v806 = vld [vmem:[%s1 + $0x30] sm:$0xff]
      %v807 = vld [vmem:[%s1 + $0x38] sm:$0xff]
      %v808 = vld [vmem:[%s1 + $0x40] sm:$0xff]
      %v809 = vld [vmem:[%s1 + $0x48] sm:$0x33]
      %v810 = vld [vmem:[%s1 + $0x50] sm:$0x33]
      %v811 = vld [vmem:[%s1 + $0x58] sm:$0x33]
      %v824 = vunpack.c.l.b16 %v800
      %v825 = vunpack.c.h.b16 %v800
      %v826 = vunpack.c.l.b16 %v801
      %v827 = vunpack.c.h.b16 %v801
      %v828 = vunpack.c.l.b16 %v802
      %v829 = vunpack.c.h.b16 %v802
      %v830 = vunpack.c.l.b16 %v803
      %v831 = vunpack.c.h.b16 %v803
      %v832 = vunpack.c.l.b16 %v804
      %v833 = vunpack.c.h.b16 %v804
      %v834 = vunpack.c.l.b16 %v805
      %v835 = vunpack.c.h.b16 %v805
      %v836 = vunpack.c.l.b16 %v806
      %v837 = vunpack.c.h.b16 %v806
      %v838 = vunpack.c.l.b16 %v807
      %v839 = vunpack.c.h.b16 %v807
      %v840 = vunpack.c.l.b16 %v808
      %v841 = vunpack.c.h.b16 %v808
      %v842 = vunpack.c.l.b16 %v809
      %v843 = vunpack.c.h.b16 %v809
      %v844 = vunpack.c.l.b16 %v810
      %v845 = vunpack.c.h.b16 %v810
      %v846 = vunpack.c.l.b16 %v811
      %v847 = vunpack.c.h.b16 %v811
      %v848 = vpack.c.b16 %v830, %v824
      %v849 = vpack.c.b16 %v831, %v825
      %v850 = vpack.c.b16 %v832, %v826
      %v851 = vpack.c.b16 %v833, %v827
      %v852 = vpack.c.b16 %v834, %v828
      %v853 = vpack.c.b16 %v835, %v829
      %v854 = vpack.c.b16 %v842, %v836
      %v855 = vpack.c.b16 %v843, %v837
      %v856 = vpack.c.b16 %v844, %v838
      %v857 = vpack.c.b16 %v845, %v839
      %v858 = vpack.c.b16 %v846, %v840
      %v859 = vpack.c.b16 %v847, %v841
      %v867 = vsel %vm478, %v736, 0
      %v870 = vsel %vm478, %v737, 0
      %v873 = vsel %vm478, %v738, 0
      %v876 = vsel %vm478, %v739, 0
      %v879 = vsel %vm478, %v740, 0
      %v882 = vsel %vm478, %v741, 0
      %v885 = vsel %vm478, %v742, 0
      %v888 = vsel %vm478, %v743, 0
      %v891 = vsel %vm478, %v744, 0
      %v894 = vsel %vm478, %v745, 0
      %v897 = vsel %vm478, %v746, 0
      %v900 = vsel %vm478, %v747, 0
      %v903 = vsel %vm478, %v748, 0
      %v906 = vsel %vm478, %v749, 0
      %v909 = vsel %vm478, %v750, 0
      %v912 = vsel %vm478, %v751, 0
      %v915 = vsel %vm478, %v752, 0
      %v918 = vsel %vm478, %v753, 0
      %v921 = vsel %vm478, %v754, 0
      %v924 = vsel %vm478, %v755, 0
      %v927 = vsel %vm478, %v756, 0
      %v930 = vsel %vm478, %v757, 0
      %v933 = vsel %vm478, %v758, 0
      %v936 = vsel %vm478, %v759, 0
      %v939 = vsel %vm478, %v760, 0
      %v942 = vsel %vm478, %v761, 0
      %v945 = vsel %vm478, %v762, 0
      %v948 = vsel %vm478, %v763, 0
      %v951 = vsel %vm478, %v764, 0
      %v954 = vsel %vm478, %v765, 0
      %v957 = vsel %vm478, %v766, 0
      %v960 = vsel %vm478, %v767, 0
      %v963 = vsel %vm478, %v768, 0
      %v966 = vsel %vm478, %v769, 0
      %v969 = vsel %vm478, %v770, 0
      %v972 = vsel %vm478, %v771, 0
      %v975 = vsel %vm478, %v772, 0
      %v978 = vsel %vm478, %v773, 0
      %v981 = vsel %vm478, %v774, 0
      %v984 = vsel %vm478, %v775, 0
      %v987 = vsel %vm478, %v776, 0
      %v990 = vsel %vm478, %v777, 0
      %v993 = vsel %vm478, %v778, 0
      %v996 = vsel %vm478, %v779, 0
      %v999 = vsel %vm478, %v780, 0
      %v1002 = vsel %vm478, %v781, 0
      %v1005 = vsel %vm478, %v782, 0
      %v1008 = vsel %vm478, %v783, 0
      %v1011 = vsel %vm478, %v784, 0
      %v1014 = vsel %vm478, %v785, 0
      %v1017 = vsel %vm478, %v786, 0
      %v1020 = vsel %vm478, %v787, 0
      %v1023 = vsel %vm478, %v788, 0
      %v1026 = vsel %vm478, %v789, 0
      %v1029 = vsel %vm478, %v790, 0
      %v1032 = vsel %vm478, %v791, 0
      %v1035 = vsel %vm478, %v792, 0
      %v1038 = vsel %vm478, %v793, 0
      %v1041 = vsel %vm478, %v794, 0
      %v1044 = vsel %vm478, %v795, 0
      %v1047 = vsel %vm478, %v796, 0
      %v1050 = vsel %vm478, %v797, 0
      %v1053 = vsel %vm478, %v798, 0
      %v1056 = vsel %vm478, %v799, 0
      %vm1058 = vcmask 1045504
      %v1060 = vsel %vm1058, %v854, 0
      %v1063 = vsel %vm1058, %v855, 0
      %v1066 = vsel %vm1058, %v856, 0
      %v1069 = vsel %vm1058, %v857, 0
      %v1072 = vsel %vm1058, %v858, 0
      %v1075 = vsel %vm1058, %v859, 0
      %1077 = vmatprep.subr.bf16.mxu0 0
      %1078 = vmatpush1.bf16.msra.mxu0 0
      %1079 = vmatprep.subr.bf16.mxu0 0
      %1080 = vmatpush1.bf16.msra.mxu0 0
      %1081 = vmatprep.subr.bf16.mxu0 0
      %1082 = vmatpush1.bf16.msra.mxu0 0
      %1083 = vmatprep.subr.bf16.mxu0 0
      %1084 = vmatpush1.bf16.msra.mxu0 0
      %1085 = vmatprep.subr.bf16.mxu0 0
      %1086 = vmatpush1.bf16.msra.mxu0 0
      %1087 = vmatprep.subr.bf16.mxu0 0
      %1088 = vmatpush1.bf16.msra.mxu0 0
      %1089 = vmatprep.subr.bf16.mxu0 %v1063
      %1090 = vmatpush1.bf16.msra.mxu0 %v1060
      %1091 = vmatprep.subr.bf16.mxu0 %v849
      %1092 = vmatpush1.bf16.msra.mxu0 %v848
      %1093 = vmatprep.subr.bf16.mxu0 0
      %1094 = vmatpush2.bf16.msra.mxu0 0
      %1095 = vmatprep.subr.bf16.mxu0 0
      %1096 = vmatpush2.bf16.msra.mxu0 0
      %1097 = vmatprep.subr.bf16.mxu0 0
      %1098 = vmatpush2.bf16.msra.mxu0 0
      %1099 = vmatprep.subr.bf16.mxu0 0
      %1100 = vmatpush2.bf16.msra.mxu0 0
      %1101 = vmatprep.subr.bf16.mxu0 0
      %1102 = vmatpush2.bf16.msra.mxu0 0
      %1103 = vmatprep.subr.bf16.mxu0 0
      %1104 = vmatpush2.bf16.msra.mxu0 0
      %1105 = vmatprep.subr.bf16.mxu0 0
      %1106 = vmatpush2.bf16.msra.mxu0 0
      %1107 = vmatprep.subr.bf16.mxu0 0
      %1108 = vmatpush2.bf16.msra.mxu0 0
      %1109 = vmatprep.mubr.bf16.mxu0 0
      %1110 = vmatmul.mubr.bf16.gmra.mxu0 %v867
      %v1111 = vpop.f32.mrf.mxu0
      %v1112 = vadd.f32 0.0, %v1111
      %v1113 = vpop.f32.mrf.mxu0
      %v1114 = vadd.f32 0.0, %v1113
      %v1115 = vpop.f32.mrf.mxu0
      %v1116 = vadd.f32 0.0, %v1115
      %v1117 = vpop.f32.mrf.mxu0
      %v1118 = vadd.f32 0.0, %v1117
      %1119 = vmatprep.mubr.bf16.mxu0 0
      %1120 = vmatmul.mubr.bf16.gmra.mxu0 %v870
      %v1121 = vpop.f32.mrf.mxu0
      %v1122 = vadd.f32 0.0, %v1121
      %v1123 = vpop.f32.mrf.mxu0
      %v1124 = vadd.f32 0.0, %v1123
      %v1125 = vpop.f32.mrf.mxu0
      %v1126 = vadd.f32 0.0, %v1125
      %v1127 = vpop.f32.mrf.mxu0
      %v1128 = vadd.f32 0.0, %v1127
      %1129 = vmatprep.mubr.bf16.mxu0 0
      %1130 = vmatmul.mubr.bf16.gmra.mxu0 %v873
      %v1131 = vpop.f32.mrf.mxu0
      %v1132 = vadd.f32 0.0, %v1131
      %v1133 = vpop.f32.mrf.mxu0
      %v1134 = vadd.f32 0.0, %v1133
      %v1135 = vpop.f32.mrf.mxu0
      %v1136 = vadd.f32 0.0, %v1135
      %v1137 = vpop.f32.mrf.mxu0
      %v1138 = vadd.f32 0.0, %v1137
      %1139 = vmatprep.mubr.bf16.mxu0 0
      %1140 = vmatmul.mubr.bf16.gmra.mxu0 %v876
      %v1141 = vpop.f32.mrf.mxu0
      %v1142 = vadd.f32 0.0, %v1141
      %v1143 = vpop.f32.mrf.mxu0
      %v1144 = vadd.f32 0.0, %v1143
      %v1145 = vpop.f32.mrf.mxu0
      %v1146 = vadd.f32 0.0, %v1145
      %v1147 = vpop.f32.mrf.mxu0
      %v1148 = vadd.f32 0.0, %v1147
      %1149 = vmatprep.mubr.bf16.mxu0 0
      %1150 = vmatmul.mubr.bf16.gmra.mxu0 %v879
      %v1151 = vpop.f32.mrf.mxu0
      %v1152 = vadd.f32 0.0, %v1151
      %v1153 = vpop.f32.mrf.mxu0
      %v1154 = vadd.f32 0.0, %v1153
      %v1155 = vpop.f32.mrf.mxu0
      %v1156 = vadd.f32 0.0, %v1155
      %v1157 = vpop.f32.mrf.mxu0
      %v1158 = vadd.f32 0.0, %v1157
      %1159 = vmatprep.mubr.bf16.mxu0 0
      %1160 = vmatmul.mubr.bf16.gmra.mxu0 %v882
      %v1161 = vpop.f32.mrf.mxu0
      %v1162 = vadd.f32 0.0, %v1161
      %v1163 = vpop.f32.mrf.mxu0
      %v1164 = vadd.f32 0.0, %v1163
      %v1165 = vpop.f32.mrf.mxu0
      %v1166 = vadd.f32 0.0, %v1165
      %v1167 = vpop.f32.mrf.mxu0
      %v1168 = vadd.f32 0.0, %v1167
      %1169 = vmatprep.mubr.bf16.mxu0 0
      %1170 = vmatmul.mubr.bf16.gmra.mxu0 %v885
      %v1171 = vpop.f32.mrf.mxu0
      %v1172 = vadd.f32 0.0, %v1171
      %v1173 = vpop.f32.mrf.mxu0
      %v1174 = vadd.f32 0.0, %v1173
      %v1175 = vpop.f32.mrf.mxu0
      %v1176 = vadd.f32 0.0, %v1175
      %v1177 = vpop.f32.mrf.mxu0
      %v1178 = vadd.f32 0.0, %v1177
      %1179 = vmatprep.mubr.bf16.mxu0 0
      %1180 = vmatmul.mubr.bf16.gmra.mxu0 %v888
      %v1181 = vpop.f32.mrf.mxu0
      %v1182 = vadd.f32 0.0, %v1181
      %v1183 = vpop.f32.mrf.mxu0
      %v1184 = vadd.f32 0.0, %v1183
      %v1185 = vpop.f32.mrf.mxu0
      %v1186 = vadd.f32 0.0, %v1185
      %v1187 = vpop.f32.mrf.mxu0
      %v1188 = vadd.f32 0.0, %v1187
      %1189 = vmatprep.mubr.bf16.mxu0 0
      %1190 = vmatmul.mubr.bf16.gmra.mxu0 %v891
      %v1191 = vpop.f32.mrf.mxu0
      %v1192 = vadd.f32 0.0, %v1191
      %v1193 = vpop.f32.mrf.mxu0
      %v1194 = vadd.f32 0.0, %v1193
      %v1195 = vpop.f32.mrf.mxu0
      %v1196 = vadd.f32 0.0, %v1195
      %v1197 = vpop.f32.mrf.mxu0
      %v1198 = vadd.f32 0.0, %v1197
      %1199 = vmatprep.mubr.bf16.mxu0 0
      %1200 = vmatmul.mubr.bf16.gmra.mxu0 %v894
      %v1201 = vpop.f32.mrf.mxu0
      %v1202 = vadd.f32 0.0, %v1201
      %v1203 = vpop.f32.mrf.mxu0
      %v1204 = vadd.f32 0.0, %v1203
      %v1205 = vpop.f32.mrf.mxu0
      %v1206 = vadd.f32 0.0, %v1205
      %v1207 = vpop.f32.mrf.mxu0
      %v1208 = vadd.f32 0.0, %v1207
      %1209 = vmatprep.mubr.bf16.mxu0 0
      %1210 = vmatmul.mubr.bf16.gmra.mxu0 %v897
      %v1211 = vpop.f32.mrf.mxu0
      %v1212 = vadd.f32 0.0, %v1211
      %v1213 = vpop.f32.mrf.mxu0
      %v1214 = vadd.f32 0.0, %v1213
      %v1215 = vpop.f32.mrf.mxu0
      %v1216 = vadd.f32 0.0, %v1215
      %v1217 = vpop.f32.mrf.mxu0
      %v1218 = vadd.f32 0.0, %v1217
      %1219 = vmatprep.mubr.bf16.mxu0 0
      %1220 = vmatmul.mubr.bf16.gmra.mxu0 %v900
      %v1221 = vpop.f32.mrf.mxu0
      %v1222 = vadd.f32 0.0, %v1221
      %v1223 = vpop.f32.mrf.mxu0
      %v1224 = vadd.f32 0.0, %v1223
      %v1225 = vpop.f32.mrf.mxu0
      %v1226 = vadd.f32 0.0, %v1225
      %v1227 = vpop.f32.mrf.mxu0
      %v1228 = vadd.f32 0.0, %v1227
      %1229 = vmatprep.mubr.bf16.mxu0 0
      %1230 = vmatmul.mubr.bf16.gmra.mxu0 %v903
      %v1231 = vpop.f32.mrf.mxu0
      %v1232 = vadd.f32 0.0, %v1231
      %v1233 = vpop.f32.mrf.mxu0
      %v1234 = vadd.f32 0.0, %v1233
      %v1235 = vpop.f32.mrf.mxu0
      %v1236 = vadd.f32 0.0, %v1235
      %v1237 = vpop.f32.mrf.mxu0
      %v1238 = vadd.f32 0.0, %v1237
      %1239 = vmatprep.mubr.bf16.mxu0 0
      %1240 = vmatmul.mubr.bf16.gmra.mxu0 %v906
      %v1241 = vpop.f32.mrf.mxu0
      %v1242 = vadd.f32 0.0, %v1241
      %v1243 = vpop.f32.mrf.mxu0
      %v1244 = vadd.f32 0.0, %v1243
      %v1245 = vpop.f32.mrf.mxu0
      %v1246 = vadd.f32 0.0, %v1245
      %v1247 = vpop.f32.mrf.mxu0
      %v1248 = vadd.f32 0.0, %v1247
      %1249 = vmatprep.mubr.bf16.mxu0 0
      %1250 = vmatmul.mubr.bf16.gmra.mxu0 %v909
      %v1251 = vpop.f32.mrf.mxu0
      %v1252 = vadd.f32 0.0, %v1251
      %v1253 = vpop.f32.mrf.mxu0
      %v1254 = vadd.f32 0.0, %v1253
      %v1255 = vpop.f32.mrf.mxu0
      %v1256 = vadd.f32 0.0, %v1255
      %v1257 = vpop.f32.mrf.mxu0
      %v1258 = vadd.f32 0.0, %v1257
      %1259 = vmatprep.mubr.bf16.mxu0 0
      %1260 = vmatmul.mubr.bf16.gmra.mxu0 %v912
      %v1261 = vpop.f32.mrf.mxu0
      %v1262 = vadd.f32 0.0, %v1261
      %v1263 = vpop.f32.mrf.mxu0
      %v1264 = vadd.f32 0.0, %v1263
      %v1265 = vpop.f32.mrf.mxu0
      %v1266 = vadd.f32 0.0, %v1265
      %v1267 = vpop.f32.mrf.mxu0
      %v1268 = vadd.f32 0.0, %v1267
      %1269 = vmatprep.mubr.bf16.mxu0 0
      %1270 = vmatmul.mubr.bf16.gmra.mxu0 %v915
      %v1271 = vpop.f32.mrf.mxu0
      %v1272 = vadd.f32 0.0, %v1271
      %v1273 = vpop.f32.mrf.mxu0
      %v1274 = vadd.f32 0.0, %v1273
      %v1275 = vpop.f32.mrf.mxu0
      %v1276 = vadd.f32 0.0, %v1275
      %v1277 = vpop.f32.mrf.mxu0
      %v1278 = vadd.f32 0.0, %v1277
      %1279 = vmatprep.mubr.bf16.mxu0 0
      %1280 = vmatmul.mubr.bf16.gmra.mxu0 %v918
      %v1281 = vpop.f32.mrf.mxu0
      %v1282 = vadd.f32 0.0, %v1281
      %v1283 = vpop.f32.mrf.mxu0
      %v1284 = vadd.f32 0.0, %v1283
      %v1285 = vpop.f32.mrf.mxu0
      %v1286 = vadd.f32 0.0, %v1285
      %v1287 = vpop.f32.mrf.mxu0
      %v1288 = vadd.f32 0.0, %v1287
      %1289 = vmatprep.mubr.bf16.mxu0 0
      %1290 = vmatmul.mubr.bf16.gmra.mxu0 %v921
      %v1291 = vpop.f32.mrf.mxu0
      %v1292 = vadd.f32 0.0, %v1291
      %v1293 = vpop.f32.mrf.mxu0
      %v1294 = vadd.f32 0.0, %v1293
      %v1295 = vpop.f32.mrf.mxu0
      %v1296 = vadd.f32 0.0, %v1295
      %v1297 = vpop.f32.mrf.mxu0
      %v1298 = vadd.f32 0.0, %v1297
      %1299 = vmatprep.mubr.bf16.mxu0 0
      %1300 = vmatmul.mubr.bf16.gmra.mxu0 %v924
      %v1301 = vpop.f32.mrf.mxu0
      %v1302 = vadd.f32 0.0, %v1301
      %v1303 = vpop.f32.mrf.mxu0
      %v1304 = vadd.f32 0.0, %v1303
      %v1305 = vpop.f32.mrf.mxu0
      %v1306 = vadd.f32 0.0, %v1305
      %v1307 = vpop.f32.mrf.mxu0
      %v1308 = vadd.f32 0.0, %v1307
      %1309 = vmatprep.mubr.bf16.mxu0 0
      %1310 = vmatmul.mubr.bf16.gmra.mxu0 %v927
      %v1311 = vpop.f32.mrf.mxu0
      %v1312 = vadd.f32 0.0, %v1311
      %v1313 = vpop.f32.mrf.mxu0
      %v1314 = vadd.f32 0.0, %v1313
      %v1315 = vpop.f32.mrf.mxu0
      %v1316 = vadd.f32 0.0, %v1315
      %v1317 = vpop.f32.mrf.mxu0
      %v1318 = vadd.f32 0.0, %v1317
      %1319 = vmatprep.mubr.bf16.mxu0 0
      %1320 = vmatmul.mubr.bf16.gmra.mxu0 %v930
      %v1321 = vpop.f32.mrf.mxu0
      %v1322 = vadd.f32 0.0, %v1321
      %v1323 = vpop.f32.mrf.mxu0
      %v1324 = vadd.f32 0.0, %v1323
      %v1325 = vpop.f32.mrf.mxu0
      %v1326 = vadd.f32 0.0, %v1325
      %v1327 = vpop.f32.mrf.mxu0
      %v1328 = vadd.f32 0.0, %v1327
      %1329 = vmatprep.mubr.bf16.mxu0 0
      %1330 = vmatmul.mubr.bf16.gmra.mxu0 %v933
      %v1331 = vpop.f32.mrf.mxu0
      %v1332 = vadd.f32 0.0, %v1331
      %v1333 = vpop.f32.mrf.mxu0
      %v1334 = vadd.f32 0.0, %v1333
      %v1335 = vpop.f32.mrf.mxu0
      %v1336 = vadd.f32 0.0, %v1335
      %v1337 = vpop.f32.mrf.mxu0
      %v1338 = vadd.f32 0.0, %v1337
      %1339 = vmatprep.mubr.bf16.mxu0 0
      %1340 = vmatmul.mubr.bf16.gmra.mxu0 %v936
      %v1341 = vpop.f32.mrf.mxu0
      %v1342 = vadd.f32 0.0, %v1341
      %v1343 = vpop.f32.mrf.mxu0
      %v1344 = vadd.f32 0.0, %v1343
      %v1345 = vpop.f32.mrf.mxu0
      %v1346 = vadd.f32 0.0, %v1345
      %v1347 = vpop.f32.mrf.mxu0
      %v1348 = vadd.f32 0.0, %v1347
      %1349 = vmatprep.mubr.bf16.mxu0 0
      %1350 = vmatmul.mubr.bf16.gmra.mxu0 %v939
      %v1351 = vpop.f32.mrf.mxu0
      %v1352 = vadd.f32 0.0, %v1351
      %v1353 = vpop.f32.mrf.mxu0
      %v1354 = vadd.f32 0.0, %v1353
      %v1355 = vpop.f32.mrf.mxu0
      %v1356 = vadd.f32 0.0, %v1355
      %v1357 = vpop.f32.mrf.mxu0
      %v1358 = vadd.f32 0.0, %v1357
      %1359 = vmatprep.mubr.bf16.mxu0 0
      %1360 = vmatmul.mubr.bf16.gmra.mxu0 %v942
      %v1361 = vpop.f32.mrf.mxu0
      %v1362 = vadd.f32 0.0, %v1361
      %v1363 = vpop.f32.mrf.mxu0
      %v1364 = vadd.f32 0.0, %v1363
      %v1365 = vpop.f32.mrf.mxu0
      %v1366 = vadd.f32 0.0, %v1365
      %v1367 = vpop.f32.mrf.mxu0
      %v1368 = vadd.f32 0.0, %v1367
      %1369 = vmatprep.mubr.bf16.mxu0 0
      %1370 = vmatmul.mubr.bf16.gmra.mxu0 %v945
      %v1371 = vpop.f32.mrf.mxu0
      %v1372 = vadd.f32 0.0, %v1371
      %v1373 = vpop.f32.mrf.mxu0
      %v1374 = vadd.f32 0.0, %v1373
      %v1375 = vpop.f32.mrf.mxu0
      %v1376 = vadd.f32 0.0, %v1375
      %v1377 = vpop.f32.mrf.mxu0
      %v1378 = vadd.f32 0.0, %v1377
      %1379 = vmatprep.mubr.bf16.mxu0 0
      %1380 = vmatmul.mubr.bf16.gmra.mxu0 %v948
      %v1381 = vpop.f32.mrf.mxu0
      %v1382 = vadd.f32 0.0, %v1381
      %v1383 = vpop.f32.mrf.mxu0
      %v1384 = vadd.f32 0.0, %v1383
      %v1385 = vpop.f32.mrf.mxu0
      %v1386 = vadd.f32 0.0, %v1385
      %v1387 = vpop.f32.mrf.mxu0
      %v1388 = vadd.f32 0.0, %v1387
      %1389 = vmatprep.mubr.bf16.mxu0 0
      %1390 = vmatmul.mubr.bf16.gmra.mxu0 %v951
      %v1391 = vpop.f32.mrf.mxu0
      %v1392 = vadd.f32 0.0, %v1391
      %v1393 = vpop.f32.mrf.mxu0
      %v1394 = vadd.f32 0.0, %v1393
      %v1395 = vpop.f32.mrf.mxu0
      %v1396 = vadd.f32 0.0, %v1395
      %v1397 = vpop.f32.mrf.mxu0
      %v1398 = vadd.f32 0.0, %v1397
      %1399 = vmatprep.mubr.bf16.mxu0 0
      %1400 = vmatmul.mubr.bf16.gmra.mxu0 %v954
      %v1401 = vpop.f32.mrf.mxu0
      %v1402 = vadd.f32 0.0, %v1401
      %v1403 = vpop.f32.mrf.mxu0
      %v1404 = vadd.f32 0.0, %v1403
      %v1405 = vpop.f32.mrf.mxu0
      %v1406 = vadd.f32 0.0, %v1405
      %v1407 = vpop.f32.mrf.mxu0
      %v1408 = vadd.f32 0.0, %v1407
      %1409 = vmatprep.mubr.bf16.mxu0 0
      %1410 = vmatmul.mubr.bf16.gmra.mxu0 %v957
      %v1411 = vpop.f32.mrf.mxu0
      %v1412 = vadd.f32 0.0, %v1411
      %v1413 = vpop.f32.mrf.mxu0
      %v1414 = vadd.f32 0.0, %v1413
      %v1415 = vpop.f32.mrf.mxu0
      %v1416 = vadd.f32 0.0, %v1415
      %v1417 = vpop.f32.mrf.mxu0
      %v1418 = vadd.f32 0.0, %v1417
      %1419 = vmatprep.mubr.bf16.mxu0 0
      %1420 = vmatmul.mubr.bf16.gmra.mxu0 %v960
      %v1421 = vpop.f32.mrf.mxu0
      %v1422 = vadd.f32 0.0, %v1421
      %v1423 = vpop.f32.mrf.mxu0
      %v1424 = vadd.f32 0.0, %v1423
      %v1425 = vpop.f32.mrf.mxu0
      %v1426 = vadd.f32 0.0, %v1425
      %v1427 = vpop.f32.mrf.mxu0
      %v1428 = vadd.f32 0.0, %v1427
      %1429 = vmatprep.mubr.bf16.mxu0 0
      %1430 = vmatmul.mubr.bf16.gmra.mxu0 %v963
      %v1431 = vpop.f32.mrf.mxu0
      %v1432 = vadd.f32 0.0, %v1431
      %v1433 = vpop.f32.mrf.mxu0
      %v1434 = vadd.f32 0.0, %v1433
      %v1435 = vpop.f32.mrf.mxu0
      %v1436 = vadd.f32 0.0, %v1435
      %v1437 = vpop.f32.mrf.mxu0
      %v1438 = vadd.f32 0.0, %v1437
      %1439 = vmatprep.mubr.bf16.mxu0 0
      %1440 = vmatmul.mubr.bf16.gmra.mxu0 %v966
      %v1441 = vpop.f32.mrf.mxu0
      %v1442 = vadd.f32 0.0, %v1441
      %v1443 = vpop.f32.mrf.mxu0
      %v1444 = vadd.f32 0.0, %v1443
      %v1445 = vpop.f32.mrf.mxu0
      %v1446 = vadd.f32 0.0, %v1445
      %v1447 = vpop.f32.mrf.mxu0
      %v1448 = vadd.f32 0.0, %v1447
      %1449 = vmatprep.mubr.bf16.mxu0 0
      %1450 = vmatmul.mubr.bf16.gmra.mxu0 %v969
      %v1451 = vpop.f32.mrf.mxu0
      %v1452 = vadd.f32 0.0, %v1451
      %v1453 = vpop.f32.mrf.mxu0
      %v1454 = vadd.f32 0.0, %v1453
      %v1455 = vpop.f32.mrf.mxu0
      %v1456 = vadd.f32 0.0, %v1455
      %v1457 = vpop.f32.mrf.mxu0
      %v1458 = vadd.f32 0.0, %v1457
      %1459 = vmatprep.mubr.bf16.mxu0 0
      %1460 = vmatmul.mubr.bf16.gmra.mxu0 %v972
      %v1461 = vpop.f32.mrf.mxu0
      %v1462 = vadd.f32 0.0, %v1461
      %v1463 = vpop.f32.mrf.mxu0
      %v1464 = vadd.f32 0.0, %v1463
      %v1465 = vpop.f32.mrf.mxu0
      %v1466 = vadd.f32 0.0, %v1465
      %v1467 = vpop.f32.mrf.mxu0
      %v1468 = vadd.f32 0.0, %v1467
      %1469 = vmatprep.mubr.bf16.mxu0 0
      %1470 = vmatmul.mubr.bf16.gmra.mxu0 %v975
      %v1471 = vpop.f32.mrf.mxu0
      %v1472 = vadd.f32 0.0, %v1471
      %v1473 = vpop.f32.mrf.mxu0
      %v1474 = vadd.f32 0.0, %v1473
      %v1475 = vpop.f32.mrf.mxu0
      %v1476 = vadd.f32 0.0, %v1475
      %v1477 = vpop.f32.mrf.mxu0
      %v1478 = vadd.f32 0.0, %v1477
      %1479 = vmatprep.mubr.bf16.mxu0 0
      %1480 = vmatmul.mubr.bf16.gmra.mxu0 %v978
      %v1481 = vpop.f32.mrf.mxu0
      %v1482 = vadd.f32 0.0, %v1481
      %v1483 = vpop.f32.mrf.mxu0
      %v1484 = vadd.f32 0.0, %v1483
      %v1485 = vpop.f32.mrf.mxu0
      %v1486 = vadd.f32 0.0, %v1485
      %v1487 = vpop.f32.mrf.mxu0
      %v1488 = vadd.f32 0.0, %v1487
      %1489 = vmatprep.mubr.bf16.mxu0 0
      %1490 = vmatmul.mubr.bf16.gmra.mxu0 %v981
      %v1491 = vpop.f32.mrf.mxu0
      %v1492 = vadd.f32 0.0, %v1491
      %v1493 = vpop.f32.mrf.mxu0
      %v1494 = vadd.f32 0.0, %v1493
      %v1495 = vpop.f32.mrf.mxu0
      %v1496 = vadd.f32 0.0, %v1495
      %v1497 = vpop.f32.mrf.mxu0
      %v1498 = vadd.f32 0.0, %v1497
      %1499 = vmatprep.mubr.bf16.mxu0 0
      %1500 = vmatmul.mubr.bf16.gmra.mxu0 %v984
      %v1501 = vpop.f32.mrf.mxu0
      %v1502 = vadd.f32 0.0, %v1501
      %v1503 = vpop.f32.mrf.mxu0
      %v1504 = vadd.f32 0.0, %v1503
      %v1505 = vpop.f32.mrf.mxu0
      %v1506 = vadd.f32 0.0, %v1505
      %v1507 = vpop.f32.mrf.mxu0
      %v1508 = vadd.f32 0.0, %v1507
      %1509 = vmatprep.mubr.bf16.mxu0 0
      %1510 = vmatmul.mubr.bf16.gmra.mxu0 %v987
      %v1511 = vpop.f32.mrf.mxu0
      %v1512 = vadd.f32 0.0, %v1511
      %v1513 = vpop.f32.mrf.mxu0
      %v1514 = vadd.f32 0.0, %v1513
      %v1515 = vpop.f32.mrf.mxu0
      %v1516 = vadd.f32 0.0, %v1515
      %v1517 = vpop.f32.mrf.mxu0
      %v1518 = vadd.f32 0.0, %v1517
      %1519 = vmatprep.mubr.bf16.mxu0 0
      %1520 = vmatmul.mubr.bf16.gmra.mxu0 %v990
      %v1521 = vpop.f32.mrf.mxu0
      %v1522 = vadd.f32 0.0, %v1521
      %v1523 = vpop.f32.mrf.mxu0
      %v1524 = vadd.f32 0.0, %v1523
      %v1525 = vpop.f32.mrf.mxu0
      %v1526 = vadd.f32 0.0, %v1525
      %v1527 = vpop.f32.mrf.mxu0
      %v1528 = vadd.f32 0.0, %v1527
      %1529 = vmatprep.mubr.bf16.mxu0 0
      %1530 = vmatmul.mubr.bf16.gmra.mxu0 %v993
      %v1531 = vpop.f32.mrf.mxu0
      %v1532 = vadd.f32 0.0, %v1531
      %v1533 = vpop.f32.mrf.mxu0
      %v1534 = vadd.f32 0.0, %v1533
      %v1535 = vpop.f32.mrf.mxu0
      %v1536 = vadd.f32 0.0, %v1535
      %v1537 = vpop.f32.mrf.mxu0
      %v1538 = vadd.f32 0.0, %v1537
      %1539 = vmatprep.mubr.bf16.mxu0 0
      %1540 = vmatmul.mubr.bf16.gmra.mxu0 %v996
      %v1541 = vpop.f32.mrf.mxu0
      %v1542 = vadd.f32 0.0, %v1541
      %v1543 = vpop.f32.mrf.mxu0
      %v1544 = vadd.f32 0.0, %v1543
      %v1545 = vpop.f32.mrf.mxu0
      %v1546 = vadd.f32 0.0, %v1545
      %v1547 = vpop.f32.mrf.mxu0
      %v1548 = vadd.f32 0.0, %v1547
      %1549 = vmatprep.mubr.bf16.mxu0 0
      %1550 = vmatmul.mubr.bf16.gmra.mxu0 %v999
      %v1551 = vpop.f32.mrf.mxu0
      %v1552 = vadd.f32 0.0, %v1551
      %v1553 = vpop.f32.mrf.mxu0
      %v1554 = vadd.f32 0.0, %v1553
      %v1555 = vpop.f32.mrf.mxu0
      %v1556 = vadd.f32 0.0, %v1555
      %v1557 = vpop.f32.mrf.mxu0
      %v1558 = vadd.f32 0.0, %v1557
      %1559 = vmatprep.mubr.bf16.mxu0 0
      %1560 = vmatmul.mubr.bf16.gmra.mxu0 %v1002
      %v1561 = vpop.f32.mrf.mxu0
      %v1562 = vadd.f32 0.0, %v1561
      %v1563 = vpop.f32.mrf.mxu0
      %v1564 = vadd.f32 0.0, %v1563
      %v1565 = vpop.f32.mrf.mxu0
      %v1566 = vadd.f32 0.0, %v1565
      %v1567 = vpop.f32.mrf.mxu0
      %v1568 = vadd.f32 0.0, %v1567
      %1569 = vmatprep.mubr.bf16.mxu0 0
      %1570 = vmatmul.mubr.bf16.gmra.mxu0 %v1005
      %v1571 = vpop.f32.mrf.mxu0
      %v1572 = vadd.f32 0.0, %v1571
      %v1573 = vpop.f32.mrf.mxu0
      %v1574 = vadd.f32 0.0, %v1573
      %v1575 = vpop.f32.mrf.mxu0
      %v1576 = vadd.f32 0.0, %v1575
      %v1577 = vpop.f32.mrf.mxu0
      %v1578 = vadd.f32 0.0, %v1577
      %1579 = vmatprep.mubr.bf16.mxu0 0
      %1580 = vmatmul.mubr.bf16.gmra.mxu0 %v1008
      %v1581 = vpop.f32.mrf.mxu0
      %v1582 = vadd.f32 0.0, %v1581
      %v1583 = vpop.f32.mrf.mxu0
      %v1584 = vadd.f32 0.0, %v1583
      %v1585 = vpop.f32.mrf.mxu0
      %v1586 = vadd.f32 0.0, %v1585
      %v1587 = vpop.f32.mrf.mxu0
      %v1588 = vadd.f32 0.0, %v1587
      %1589 = vmatprep.mubr.bf16.mxu0 0
      %1590 = vmatmul.mubr.bf16.gmra.mxu0 %v1011
      %v1591 = vpop.f32.mrf.mxu0
      %v1592 = vadd.f32 0.0, %v1591
      %v1593 = vpop.f32.mrf.mxu0
      %v1594 = vadd.f32 0.0, %v1593
      %v1595 = vpop.f32.mrf.mxu0
      %v1596 = vadd.f32 0.0, %v1595
      %v1597 = vpop.f32.mrf.mxu0
      %v1598 = vadd.f32 0.0, %v1597
      %1599 = vmatprep.mubr.bf16.mxu0 0
      %1600 = vmatmul.mubr.bf16.gmra.mxu0 %v1014
      %v1601 = vpop.f32.mrf.mxu0
      %v1602 = vadd.f32 0.0, %v1601
      %v1603 = vpop.f32.mrf.mxu0
      %v1604 = vadd.f32 0.0, %v1603
      %v1605 = vpop.f32.mrf.mxu0
      %v1606 = vadd.f32 0.0, %v1605
      %v1607 = vpop.f32.mrf.mxu0
      %v1608 = vadd.f32 0.0, %v1607
      %1609 = vmatprep.mubr.bf16.mxu0 0
      %1610 = vmatmul.mubr.bf16.gmra.mxu0 %v1017
      %v1611 = vpop.f32.mrf.mxu0
      %v1612 = vadd.f32 0.0, %v1611
      %v1613 = vpop.f32.mrf.mxu0
      %v1614 = vadd.f32 0.0, %v1613
      %v1615 = vpop.f32.mrf.mxu0
      %v1616 = vadd.f32 0.0, %v1615
      %v1617 = vpop.f32.mrf.mxu0
      %v1618 = vadd.f32 0.0, %v1617
      %1619 = vmatprep.mubr.bf16.mxu0 0
      %1620 = vmatmul.mubr.bf16.gmra.mxu0 %v1020
      %v1621 = vpop.f32.mrf.mxu0
      %v1622 = vadd.f32 0.0, %v1621
      %v1623 = vpop.f32.mrf.mxu0
      %v1624 = vadd.f32 0.0, %v1623
      %v1625 = vpop.f32.mrf.mxu0
      %v1626 = vadd.f32 0.0, %v1625
      %v1627 = vpop.f32.mrf.mxu0
      %v1628 = vadd.f32 0.0, %v1627
      %1629 = vmatprep.mubr.bf16.mxu0 0
      %1630 = vmatmul.mubr.bf16.gmra.mxu0 %v1023
      %v1631 = vpop.f32.mrf.mxu0
      %v1632 = vadd.f32 0.0, %v1631
      %v1633 = vpop.f32.mrf.mxu0
      %v1634 = vadd.f32 0.0, %v1633
      %v1635 = vpop.f32.mrf.mxu0
      %v1636 = vadd.f32 0.0, %v1635
      %v1637 = vpop.f32.mrf.mxu0
      %v1638 = vadd.f32 0.0, %v1637
      %1639 = vmatprep.mubr.bf16.mxu0 0
      %1640 = vmatmul.mubr.bf16.gmra.mxu0 %v1026
      %v1641 = vpop.f32.mrf.mxu0
      %v1642 = vadd.f32 0.0, %v1641
      %v1643 = vpop.f32.mrf.mxu0
      %v1644 = vadd.f32 0.0, %v1643
      %v1645 = vpop.f32.mrf.mxu0
      %v1646 = vadd.f32 0.0, %v1645
      %v1647 = vpop.f32.mrf.mxu0
      %v1648 = vadd.f32 0.0, %v1647
      %1649 = vmatprep.mubr.bf16.mxu0 0
      %1650 = vmatmul.mubr.bf16.gmra.mxu0 %v1029
      %v1651 = vpop.f32.mrf.mxu0
      %v1652 = vadd.f32 0.0, %v1651
      %v1653 = vpop.f32.mrf.mxu0
      %v1654 = vadd.f32 0.0, %v1653
      %v1655 = vpop.f32.mrf.mxu0
      %v1656 = vadd.f32 0.0, %v1655
      %v1657 = vpop.f32.mrf.mxu0
      %v1658 = vadd.f32 0.0, %v1657
      %1659 = vmatprep.mubr.bf16.mxu0 0
      %1660 = vmatmul.mubr.bf16.gmra.mxu0 %v1032
      %v1661 = vpop.f32.mrf.mxu0
      %v1662 = vadd.f32 0.0, %v1661
      %v1663 = vpop.f32.mrf.mxu0
      %v1664 = vadd.f32 0.0, %v1663
      %v1665 = vpop.f32.mrf.mxu0
      %v1666 = vadd.f32 0.0, %v1665
      %v1667 = vpop.f32.mrf.mxu0
      %v1668 = vadd.f32 0.0, %v1667
      %1669 = vmatprep.mubr.bf16.mxu0 0
      %1670 = vmatmul.mubr.bf16.gmra.mxu0 %v1035
      %v1671 = vpop.f32.mrf.mxu0
      %v1672 = vadd.f32 0.0, %v1671
      %v1673 = vpop.f32.mrf.mxu0
      %v1674 = vadd.f32 0.0, %v1673
      %v1675 = vpop.f32.mrf.mxu0
      %v1676 = vadd.f32 0.0, %v1675
      %v1677 = vpop.f32.mrf.mxu0
      %v1678 = vadd.f32 0.0, %v1677
      %1679 = vmatprep.mubr.bf16.mxu0 0
      %1680 = vmatmul.mubr.bf16.gmra.mxu0 %v1038
      %v1681 = vpop.f32.mrf.mxu0
      %v1682 = vadd.f32 0.0, %v1681
      %v1683 = vpop.f32.mrf.mxu0
      %v1684 = vadd.f32 0.0, %v1683
      %v1685 = vpop.f32.mrf.mxu0
      %v1686 = vadd.f32 0.0, %v1685
      %v1687 = vpop.f32.mrf.mxu0
      %v1688 = vadd.f32 0.0, %v1687
      %1689 = vmatprep.mubr.bf16.mxu0 0
      %1690 = vmatmul.mubr.bf16.gmra.mxu0 %v1041
      %v1691 = vpop.f32.mrf.mxu0
      %v1692 = vadd.f32 0.0, %v1691
      %v1693 = vpop.f32.mrf.mxu0
      %v1694 = vadd.f32 0.0, %v1693
      %v1695 = vpop.f32.mrf.mxu0
      %v1696 = vadd.f32 0.0, %v1695
      %v1697 = vpop.f32.mrf.mxu0
      %v1698 = vadd.f32 0.0, %v1697
      %1699 = vmatprep.mubr.bf16.mxu0 0
      %1700 = vmatmul.mubr.bf16.gmra.mxu0 %v1044
      %v1701 = vpop.f32.mrf.mxu0
      %v1702 = vadd.f32 0.0, %v1701
      %v1703 = vpop.f32.mrf.mxu0
      %v1704 = vadd.f32 0.0, %v1703
      %v1705 = vpop.f32.mrf.mxu0
      %v1706 = vadd.f32 0.0, %v1705
      %v1707 = vpop.f32.mrf.mxu0
      %v1708 = vadd.f32 0.0, %v1707
      %1709 = vmatprep.mubr.bf16.mxu0 0
      %1710 = vmatmul.mubr.bf16.gmra.mxu0 %v1047
      %v1711 = vpop.f32.mrf.mxu0
      %v1712 = vadd.f32 0.0, %v1711
      %v1713 = vpop.f32.mrf.mxu0
      %v1714 = vadd.f32 0.0, %v1713
      %v1715 = vpop.f32.mrf.mxu0
      %v1716 = vadd.f32 0.0, %v1715
      %v1717 = vpop.f32.mrf.mxu0
      %v1718 = vadd.f32 0.0, %v1717
      %1719 = vmatprep.mubr.bf16.mxu0 0
      %1720 = vmatmul.mubr.bf16.gmra.mxu0 %v1050
      %v1721 = vpop.f32.mrf.mxu0
      %v1722 = vadd.f32 0.0, %v1721
      %v1723 = vpop.f32.mrf.mxu0
      %v1724 = vadd.f32 0.0, %v1723
      %v1725 = vpop.f32.mrf.mxu0
      %v1726 = vadd.f32 0.0, %v1725
      %v1727 = vpop.f32.mrf.mxu0
      %v1728 = vadd.f32 0.0, %v1727
      %1729 = vmatprep.mubr.bf16.mxu0 0
      %1730 = vmatmul.mubr.bf16.gmra.mxu0 %v1053
      %v1731 = vpop.f32.mrf.mxu0
      %v1732 = vadd.f32 0.0, %v1731
      %v1733 = vpop.f32.mrf.mxu0
      %v1734 = vadd.f32 0.0, %v1733
      %v1735 = vpop.f32.mrf.mxu0
      %v1736 = vadd.f32 0.0, %v1735
      %v1737 = vpop.f32.mrf.mxu0
      %v1738 = vadd.f32 0.0, %v1737
      %1739 = vmatprep.mubr.bf16.mxu0 0
      %1740 = vmatmul.mubr.bf16.gmra.mxu0 %v1056
      %v1741 = vpop.f32.mrf.mxu0
      %v1742 = vadd.f32 0.0, %v1741
      %v1743 = vpop.f32.mrf.mxu0
      %v1744 = vadd.f32 0.0, %v1743
      %v1745 = vpop.f32.mrf.mxu0
      %v1746 = vadd.f32 0.0, %v1745
      %v1747 = vpop.f32.mrf.mxu0
      %v1748 = vadd.f32 0.0, %v1747
      %1749 = vdwg.mxu0
      %1750 = vmatprep.subr.bf16.mxu0 0
      %1751 = vmatpush1.bf16.msra.mxu0 0
      %1752 = vmatprep.subr.bf16.mxu0 0
      %1753 = vmatpush1.bf16.msra.mxu0 0
      %1754 = vmatprep.subr.bf16.mxu0 0
      %1755 = vmatpush1.bf16.msra.mxu0 0
      %1756 = vmatprep.subr.bf16.mxu0 0
      %1757 = vmatpush1.bf16.msra.mxu0 0
      %1758 = vmatprep.subr.bf16.mxu0 0
      %1759 = vmatpush1.bf16.msra.mxu0 0
      %1760 = vmatprep.subr.bf16.mxu0 0
      %1761 = vmatpush1.bf16.msra.mxu0 0
      %1762 = vmatprep.subr.bf16.mxu0 %v1069
      %1763 = vmatpush1.bf16.msra.mxu0 %v1066
      %1764 = vmatprep.subr.bf16.mxu0 %v851
      %1765 = vmatpush1.bf16.msra.mxu0 %v850
      %1766 = vmatprep.subr.bf16.mxu0 0
      %1767 = vmatpush2.bf16.msra.mxu0 0
      %1768 = vmatprep.subr.bf16.mxu0 0
      %1769 = vmatpush2.bf16.msra.mxu0 0
      %1770 = vmatprep.subr.bf16.mxu0 0
      %1771 = vmatpush2.bf16.msra.mxu0 0
      %1772 = vmatprep.subr.bf16.mxu0 0
      %1773 = vmatpush2.bf16.msra.mxu0 0
      %1774 = vmatprep.subr.bf16.mxu0 0
      %1775 = vmatpush2.bf16.msra.mxu0 0
      %1776 = vmatprep.subr.bf16.mxu0 0
      %1777 = vmatpush2.bf16.msra.mxu0 0
      %1778 = vmatprep.subr.bf16.mxu0 0
      %1779 = vmatpush2.bf16.msra.mxu0 0
      %1780 = vmatprep.subr.bf16.mxu0 0
      %1781 = vmatpush2.bf16.msra.mxu0 0
      %1782 = vmatprep.mubr.bf16.mxu0 0
      %1783 = vmatmul.mubr.bf16.gmra.mxu0 %v867
      %v1784 = vpop.f32.mrf.mxu0
      %v1785 = vadd.f32 0.0, %v1784
      %v1786 = vpop.f32.mrf.mxu0
      %v1787 = vadd.f32 0.0, %v1786
      %v1788 = vpop.f32.mrf.mxu0
      %v1789 = vadd.f32 0.0, %v1788
      %v1790 = vpop.f32.mrf.mxu0
      %v1791 = vadd.f32 0.0, %v1790
      %1792 = vmatprep.mubr.bf16.mxu0 0
      %1793 = vmatmul.mubr.bf16.gmra.mxu0 %v870
      %v1794 = vpop.f32.mrf.mxu0
      %v1795 = vadd.f32 0.0, %v1794
      %v1796 = vpop.f32.mrf.mxu0
      %v1797 = vadd.f32 0.0, %v1796
      %v1798 = vpop.f32.mrf.mxu0
      %v1799 = vadd.f32 0.0, %v1798
      %v1800 = vpop.f32.mrf.mxu0
      %v1801 = vadd.f32 0.0, %v1800
      %1802 = vmatprep.mubr.bf16.mxu0 0
      %1803 = vmatmul.mubr.bf16.gmra.mxu0 %v873
      %v1804 = vpop.f32.mrf.mxu0
      %v1805 = vadd.f32 0.0, %v1804
      %v1806 = vpop.f32.mrf.mxu0
      %v1807 = vadd.f32 0.0, %v1806
      %v1808 = vpop.f32.mrf.mxu0
      %v1809 = vadd.f32 0.0, %v1808
      %v1810 = vpop.f32.mrf.mxu0
      %v1811 = vadd.f32 0.0, %v1810
      %1812 = vmatprep.mubr.bf16.mxu0 0
      %1813 = vmatmul.mubr.bf16.gmra.mxu0 %v876
      %v1814 = vpop.f32.mrf.mxu0
      %v1815 = vadd.f32 0.0, %v1814
      %v1816 = vpop.f32.mrf.mxu0
      %v1817 = vadd.f32 0.0, %v1816
      %v1818 = vpop.f32.mrf.mxu0
      %v1819 = vadd.f32 0.0, %v1818
      %v1820 = vpop.f32.mrf.mxu0
      %v1821 = vadd.f32 0.0, %v1820
      %1822 = vmatprep.mubr.bf16.mxu0 0
      %1823 = vmatmul.mubr.bf16.gmra.mxu0 %v879
      %v1824 = vpop.f32.mrf.mxu0
      %v1825 = vadd.f32 0.0, %v1824
      %v1826 = vpop.f32.mrf.mxu0
      %v1827 = vadd.f32 0.0, %v1826
      %v1828 = vpop.f32.mrf.mxu0
      %v1829 = vadd.f32 0.0, %v1828
      %v1830 = vpop.f32.mrf.mxu0
      %v1831 = vadd.f32 0.0, %v1830
      %1832 = vmatprep.mubr.bf16.mxu0 0
      %1833 = vmatmul.mubr.bf16.gmra.mxu0 %v882
      %v1834 = vpop.f32.mrf.mxu0
      %v1835 = vadd.f32 0.0, %v1834
      %v1836 = vpop.f32.mrf.mxu0
      %v1837 = vadd.f32 0.0, %v1836
      %v1838 = vpop.f32.mrf.mxu0
      %v1839 = vadd.f32 0.0, %v1838
      %v1840 = vpop.f32.mrf.mxu0
      %v1841 = vadd.f32 0.0, %v1840
      %1842 = vmatprep.mubr.bf16.mxu0 0
      %1843 = vmatmul.mubr.bf16.gmra.mxu0 %v885
      %v1844 = vpop.f32.mrf.mxu0
      %v1845 = vadd.f32 0.0, %v1844
      %v1846 = vpop.f32.mrf.mxu0
      %v1847 = vadd.f32 0.0, %v1846
      %v1848 = vpop.f32.mrf.mxu0
      %v1849 = vadd.f32 0.0, %v1848
      %v1850 = vpop.f32.mrf.mxu0
      %v1851 = vadd.f32 0.0, %v1850
      %1852 = vmatprep.mubr.bf16.mxu0 0
      %1853 = vmatmul.mubr.bf16.gmra.mxu0 %v888
      %v1854 = vpop.f32.mrf.mxu0
      %v1855 = vadd.f32 0.0, %v1854
      %v1856 = vpop.f32.mrf.mxu0
      %v1857 = vadd.f32 0.0, %v1856
      %v1858 = vpop.f32.mrf.mxu0
      %v1859 = vadd.f32 0.0, %v1858
      %v1860 = vpop.f32.mrf.mxu0
      %v1861 = vadd.f32 0.0, %v1860
      %1862 = vmatprep.mubr.bf16.mxu0 0
      %1863 = vmatmul.mubr.bf16.gmra.mxu0 %v891
      %v1864 = vpop.f32.mrf.mxu0
      %v1865 = vadd.f32 0.0, %v1864
      %v1866 = vpop.f32.mrf.mxu0
      %v1867 = vadd.f32 0.0, %v1866
      %v1868 = vpop.f32.mrf.mxu0
      %v1869 = vadd.f32 0.0, %v1868
      %v1870 = vpop.f32.mrf.mxu0
      %v1871 = vadd.f32 0.0, %v1870
      %1872 = vmatprep.mubr.bf16.mxu0 0
      %1873 = vmatmul.mubr.bf16.gmra.mxu0 %v894
      %v1874 = vpop.f32.mrf.mxu0
      %v1875 = vadd.f32 0.0, %v1874
      %v1876 = vpop.f32.mrf.mxu0
      %v1877 = vadd.f32 0.0, %v1876
      %v1878 = vpop.f32.mrf.mxu0
      %v1879 = vadd.f32 0.0, %v1878
      %v1880 = vpop.f32.mrf.mxu0
      %v1881 = vadd.f32 0.0, %v1880
      %1882 = vmatprep.mubr.bf16.mxu0 0
      %1883 = vmatmul.mubr.bf16.gmra.mxu0 %v897
      %v1884 = vpop.f32.mrf.mxu0
      %v1885 = vadd.f32 0.0, %v1884
      %v1886 = vpop.f32.mrf.mxu0
      %v1887 = vadd.f32 0.0, %v1886
      %v1888 = vpop.f32.mrf.mxu0
      %v1889 = vadd.f32 0.0, %v1888
      %v1890 = vpop.f32.mrf.mxu0
      %v1891 = vadd.f32 0.0, %v1890
      %1892 = vmatprep.mubr.bf16.mxu0 0
      %1893 = vmatmul.mubr.bf16.gmra.mxu0 %v900
      %v1894 = vpop.f32.mrf.mxu0
      %v1895 = vadd.f32 0.0, %v1894
      %v1896 = vpop.f32.mrf.mxu0
      %v1897 = vadd.f32 0.0, %v1896
      %v1898 = vpop.f32.mrf.mxu0
      %v1899 = vadd.f32 0.0, %v1898
      %v1900 = vpop.f32.mrf.mxu0
      %v1901 = vadd.f32 0.0, %v1900
      %1902 = vmatprep.mubr.bf16.mxu0 0
      %1903 = vmatmul.mubr.bf16.gmra.mxu0 %v903
      %v1904 = vpop.f32.mrf.mxu0
      %v1905 = vadd.f32 0.0, %v1904
      %v1906 = vpop.f32.mrf.mxu0
      %v1907 = vadd.f32 0.0, %v1906
      %v1908 = vpop.f32.mrf.mxu0
      %v1909 = vadd.f32 0.0, %v1908
      %v1910 = vpop.f32.mrf.mxu0
      %v1911 = vadd.f32 0.0, %v1910
      %1912 = vmatprep.mubr.bf16.mxu0 0
      %1913 = vmatmul.mubr.bf16.gmra.mxu0 %v906
      %v1914 = vpop.f32.mrf.mxu0
      %v1915 = vadd.f32 0.0, %v1914
      %v1916 = vpop.f32.mrf.mxu0
      %v1917 = vadd.f32 0.0, %v1916
      %v1918 = vpop.f32.mrf.mxu0
      %v1919 = vadd.f32 0.0, %v1918
      %v1920 = vpop.f32.mrf.mxu0
      %v1921 = vadd.f32 0.0, %v1920
      %1922 = vmatprep.mubr.bf16.mxu0 0
      %1923 = vmatmul.mubr.bf16.gmra.mxu0 %v909
      %v1924 = vpop.f32.mrf.mxu0
      %v1925 = vadd.f32 0.0, %v1924
      %v1926 = vpop.f32.mrf.mxu0
      %v1927 = vadd.f32 0.0, %v1926
      %v1928 = vpop.f32.mrf.mxu0
      %v1929 = vadd.f32 0.0, %v1928
      %v1930 = vpop.f32.mrf.mxu0
      %v1931 = vadd.f32 0.0, %v1930
      %1932 = vmatprep.mubr.bf16.mxu0 0
      %1933 = vmatmul.mubr.bf16.gmra.mxu0 %v912
      %v1934 = vpop.f32.mrf.mxu0
      %v1935 = vadd.f32 0.0, %v1934
      %v1936 = vpop.f32.mrf.mxu0
      %v1937 = vadd.f32 0.0, %v1936
      %v1938 = vpop.f32.mrf.mxu0
      %v1939 = vadd.f32 0.0, %v1938
      %v1940 = vpop.f32.mrf.mxu0
      %v1941 = vadd.f32 0.0, %v1940
      %1942 = vmatprep.mubr.bf16.mxu0 0
      %1943 = vmatmul.mubr.bf16.gmra.mxu0 %v915
      %v1944 = vpop.f32.mrf.mxu0
      %v1945 = vadd.f32 0.0, %v1944
      %v1946 = vpop.f32.mrf.mxu0
      %v1947 = vadd.f32 0.0, %v1946
      %v1948 = vpop.f32.mrf.mxu0
      %v1949 = vadd.f32 0.0, %v1948
      %v1950 = vpop.f32.mrf.mxu0
      %v1951 = vadd.f32 0.0, %v1950
      %1952 = vmatprep.mubr.bf16.mxu0 0
      %1953 = vmatmul.mubr.bf16.gmra.mxu0 %v918
      %v1954 = vpop.f32.mrf.mxu0
      %v1955 = vadd.f32 0.0, %v1954
      %v1956 = vpop.f32.mrf.mxu0
      %v1957 = vadd.f32 0.0, %v1956
      %v1958 = vpop.f32.mrf.mxu0
      %v1959 = vadd.f32 0.0, %v1958
      %v1960 = vpop.f32.mrf.mxu0
      %v1961 = vadd.f32 0.0, %v1960
      %1962 = vmatprep.mubr.bf16.mxu0 0
      %1963 = vmatmul.mubr.bf16.gmra.mxu0 %v921
      %v1964 = vpop.f32.mrf.mxu0
      %v1965 = vadd.f32 0.0, %v1964
      %v1966 = vpop.f32.mrf.mxu0
      %v1967 = vadd.f32 0.0, %v1966
      %v1968 = vpop.f32.mrf.mxu0
      %v1969 = vadd.f32 0.0, %v1968
      %v1970 = vpop.f32.mrf.mxu0
      %v1971 = vadd.f32 0.0, %v1970
      %1972 = vmatprep.mubr.bf16.mxu0 0
      %1973 = vmatmul.mubr.bf16.gmra.mxu0 %v924
      %v1974 = vpop.f32.mrf.mxu0
      %v1975 = vadd.f32 0.0, %v1974
      %v1976 = vpop.f32.mrf.mxu0
      %v1977 = vadd.f32 0.0, %v1976
      %v1978 = vpop.f32.mrf.mxu0
      %v1979 = vadd.f32 0.0, %v1978
      %v1980 = vpop.f32.mrf.mxu0
      %v1981 = vadd.f32 0.0, %v1980
      %1982 = vmatprep.mubr.bf16.mxu0 0
      %1983 = vmatmul.mubr.bf16.gmra.mxu0 %v927
      %v1984 = vpop.f32.mrf.mxu0
      %v1985 = vadd.f32 0.0, %v1984
      %v1986 = vpop.f32.mrf.mxu0
      %v1987 = vadd.f32 0.0, %v1986
      %v1988 = vpop.f32.mrf.mxu0
      %v1989 = vadd.f32 0.0, %v1988
      %v1990 = vpop.f32.mrf.mxu0
      %v1991 = vadd.f32 0.0, %v1990
      %1992 = vmatprep.mubr.bf16.mxu0 0
      %1993 = vmatmul.mubr.bf16.gmra.mxu0 %v930
      %v1994 = vpop.f32.mrf.mxu0
      %v1995 = vadd.f32 0.0, %v1994
      %v1996 = vpop.f32.mrf.mxu0
      %v1997 = vadd.f32 0.0, %v1996
      %v1998 = vpop.f32.mrf.mxu0
      %v1999 = vadd.f32 0.0, %v1998
      %v2000 = vpop.f32.mrf.mxu0
      %v2001 = vadd.f32 0.0, %v2000
      %2002 = vmatprep.mubr.bf16.mxu0 0
      %2003 = vmatmul.mubr.bf16.gmra.mxu0 %v933
      %v2004 = vpop.f32.mrf.mxu0
      %v2005 = vadd.f32 0.0, %v2004
      %v2006 = vpop.f32.mrf.mxu0
      %v2007 = vadd.f32 0.0, %v2006
      %v2008 = vpop.f32.mrf.mxu0
      %v2009 = vadd.f32 0.0, %v2008
      %v2010 = vpop.f32.mrf.mxu0
      %v2011 = vadd.f32 0.0, %v2010
      %2012 = vmatprep.mubr.bf16.mxu0 0
      %2013 = vmatmul.mubr.bf16.gmra.mxu0 %v936
      %v2014 = vpop.f32.mrf.mxu0
      %v2015 = vadd.f32 0.0, %v2014
      %v2016 = vpop.f32.mrf.mxu0
      %v2017 = vadd.f32 0.0, %v2016
      %v2018 = vpop.f32.mrf.mxu0
      %v2019 = vadd.f32 0.0, %v2018
      %v2020 = vpop.f32.mrf.mxu0
      %v2021 = vadd.f32 0.0, %v2020
      %2022 = vmatprep.mubr.bf16.mxu0 0
      %2023 = vmatmul.mubr.bf16.gmra.mxu0 %v939
      %v2024 = vpop.f32.mrf.mxu0
      %v2025 = vadd.f32 0.0, %v2024
      %v2026 = vpop.f32.mrf.mxu0
      %v2027 = vadd.f32 0.0, %v2026
      %v2028 = vpop.f32.mrf.mxu0
      %v2029 = vadd.f32 0.0, %v2028
      %v2030 = vpop.f32.mrf.mxu0
      %v2031 = vadd.f32 0.0, %v2030
      %2032 = vmatprep.mubr.bf16.mxu0 0
      %2033 = vmatmul.mubr.bf16.gmra.mxu0 %v942
      %v2034 = vpop.f32.mrf.mxu0
      %v2035 = vadd.f32 0.0, %v2034
      %v2036 = vpop.f32.mrf.mxu0
      %v2037 = vadd.f32 0.0, %v2036
      %v2038 = vpop.f32.mrf.mxu0
      %v2039 = vadd.f32 0.0, %v2038
      %v2040 = vpop.f32.mrf.mxu0
      %v2041 = vadd.f32 0.0, %v2040
      %2042 = vmatprep.mubr.bf16.mxu0 0
      %2043 = vmatmul.mubr.bf16.gmra.mxu0 %v945
      %v2044 = vpop.f32.mrf.mxu0
      %v2045 = vadd.f32 0.0, %v2044
      %v2046 = vpop.f32.mrf.mxu0
      %v2047 = vadd.f32 0.0, %v2046
      %v2048 = vpop.f32.mrf.mxu0
      %v2049 = vadd.f32 0.0, %v2048
      %v2050 = vpop.f32.mrf.mxu0
      %v2051 = vadd.f32 0.0, %v2050
      %2052 = vmatprep.mubr.bf16.mxu0 0
      %2053 = vmatmul.mubr.bf16.gmra.mxu0 %v948
      %v2054 = vpop.f32.mrf.mxu0
      %v2055 = vadd.f32 0.0, %v2054
      %v2056 = vpop.f32.mrf.mxu0
      %v2057 = vadd.f32 0.0, %v2056
      %v2058 = vpop.f32.mrf.mxu0
      %v2059 = vadd.f32 0.0, %v2058
      %v2060 = vpop.f32.mrf.mxu0
      %v2061 = vadd.f32 0.0, %v2060
      %2062 = vmatprep.mubr.bf16.mxu0 0
      %2063 = vmatmul.mubr.bf16.gmra.mxu0 %v951
      %v2064 = vpop.f32.mrf.mxu0
      %v2065 = vadd.f32 0.0, %v2064
      %v2066 = vpop.f32.mrf.mxu0
      %v2067 = vadd.f32 0.0, %v2066
      %v2068 = vpop.f32.mrf.mxu0
      %v2069 = vadd.f32 0.0, %v2068
      %v2070 = vpop.f32.mrf.mxu0
      %v2071 = vadd.f32 0.0, %v2070
      %2072 = vmatprep.mubr.bf16.mxu0 0
      %2073 = vmatmul.mubr.bf16.gmra.mxu0 %v954
      %v2074 = vpop.f32.mrf.mxu0
      %v2075 = vadd.f32 0.0, %v2074
      %v2076 = vpop.f32.mrf.mxu0
      %v2077 = vadd.f32 0.0, %v2076
      %v2078 = vpop.f32.mrf.mxu0
      %v2079 = vadd.f32 0.0, %v2078
      %v2080 = vpop.f32.mrf.mxu0
      %v2081 = vadd.f32 0.0, %v2080
      %2082 = vmatprep.mubr.bf16.mxu0 0
      %2083 = vmatmul.mubr.bf16.gmra.mxu0 %v957
      %v2084 = vpop.f32.mrf.mxu0
      %v2085 = vadd.f32 0.0, %v2084
      %v2086 = vpop.f32.mrf.mxu0
      %v2087 = vadd.f32 0.0, %v2086
      %v2088 = vpop.f32.mrf.mxu0
      %v2089 = vadd.f32 0.0, %v2088
      %v2090 = vpop.f32.mrf.mxu0
      %v2091 = vadd.f32 0.0, %v2090
      %2092 = vmatprep.mubr.bf16.mxu0 0
      %2093 = vmatmul.mubr.bf16.gmra.mxu0 %v960
      %v2094 = vpop.f32.mrf.mxu0
      %v2095 = vadd.f32 0.0, %v2094
      %v2096 = vpop.f32.mrf.mxu0
      %v2097 = vadd.f32 0.0, %v2096
      %v2098 = vpop.f32.mrf.mxu0
      %v2099 = vadd.f32 0.0, %v2098
      %v2100 = vpop.f32.mrf.mxu0
      %v2101 = vadd.f32 0.0, %v2100
      %2102 = vmatprep.mubr.bf16.mxu0 0
      %2103 = vmatmul.mubr.bf16.gmra.mxu0 %v963
      %v2104 = vpop.f32.mrf.mxu0
      %v2105 = vadd.f32 0.0, %v2104
      %v2106 = vpop.f32.mrf.mxu0
      %v2107 = vadd.f32 0.0, %v2106
      %v2108 = vpop.f32.mrf.mxu0
      %v2109 = vadd.f32 0.0, %v2108
      %v2110 = vpop.f32.mrf.mxu0
      %v2111 = vadd.f32 0.0, %v2110
      %2112 = vmatprep.mubr.bf16.mxu0 0
      %2113 = vmatmul.mubr.bf16.gmra.mxu0 %v966
      %v2114 = vpop.f32.mrf.mxu0
      %v2115 = vadd.f32 0.0, %v2114
      %v2116 = vpop.f32.mrf.mxu0
      %v2117 = vadd.f32 0.0, %v2116
      %v2118 = vpop.f32.mrf.mxu0
      %v2119 = vadd.f32 0.0, %v2118
      %v2120 = vpop.f32.mrf.mxu0
      %v2121 = vadd.f32 0.0, %v2120
      %2122 = vmatprep.mubr.bf16.mxu0 0
      %2123 = vmatmul.mubr.bf16.gmra.mxu0 %v969
      %v2124 = vpop.f32.mrf.mxu0
      %v2125 = vadd.f32 0.0, %v2124
      %v2126 = vpop.f32.mrf.mxu0
      %v2127 = vadd.f32 0.0, %v2126
      %v2128 = vpop.f32.mrf.mxu0
      %v2129 = vadd.f32 0.0, %v2128
      %v2130 = vpop.f32.mrf.mxu0
      %v2131 = vadd.f32 0.0, %v2130
      %2132 = vmatprep.mubr.bf16.mxu0 0
      %2133 = vmatmul.mubr.bf16.gmra.mxu0 %v972
      %v2134 = vpop.f32.mrf.mxu0
      %v2135 = vadd.f32 0.0, %v2134
      %v2136 = vpop.f32.mrf.mxu0
      %v2137 = vadd.f32 0.0, %v2136
      %v2138 = vpop.f32.mrf.mxu0
      %v2139 = vadd.f32 0.0, %v2138
      %v2140 = vpop.f32.mrf.mxu0
      %v2141 = vadd.f32 0.0, %v2140
      %2142 = vmatprep.mubr.bf16.mxu0 0
      %2143 = vmatmul.mubr.bf16.gmra.mxu0 %v975
      %v2144 = vpop.f32.mrf.mxu0
      %v2145 = vadd.f32 0.0, %v2144
      %v2146 = vpop.f32.mrf.mxu0
      %v2147 = vadd.f32 0.0, %v2146
      %v2148 = vpop.f32.mrf.mxu0
      %v2149 = vadd.f32 0.0, %v2148
      %v2150 = vpop.f32.mrf.mxu0
      %v2151 = vadd.f32 0.0, %v2150
      %2152 = vmatprep.mubr.bf16.mxu0 0
      %2153 = vmatmul.mubr.bf16.gmra.mxu0 %v978
      %v2154 = vpop.f32.mrf.mxu0
      %v2155 = vadd.f32 0.0, %v2154
      %v2156 = vpop.f32.mrf.mxu0
      %v2157 = vadd.f32 0.0, %v2156
      %v2158 = vpop.f32.mrf.mxu0
      %v2159 = vadd.f32 0.0, %v2158
      %v2160 = vpop.f32.mrf.mxu0
      %v2161 = vadd.f32 0.0, %v2160
      %2162 = vmatprep.mubr.bf16.mxu0 0
      %2163 = vmatmul.mubr.bf16.gmra.mxu0 %v981
      %v2164 = vpop.f32.mrf.mxu0
      %v2165 = vadd.f32 0.0, %v2164
      %v2166 = vpop.f32.mrf.mxu0
      %v2167 = vadd.f32 0.0, %v2166
      %v2168 = vpop.f32.mrf.mxu0
      %v2169 = vadd.f32 0.0, %v2168
      %v2170 = vpop.f32.mrf.mxu0
      %v2171 = vadd.f32 0.0, %v2170
      %2172 = vmatprep.mubr.bf16.mxu0 0
      %2173 = vmatmul.mubr.bf16.gmra.mxu0 %v984
      %v2174 = vpop.f32.mrf.mxu0
      %v2175 = vadd.f32 0.0, %v2174
      %v2176 = vpop.f32.mrf.mxu0
      %v2177 = vadd.f32 0.0, %v2176
      %v2178 = vpop.f32.mrf.mxu0
      %v2179 = vadd.f32 0.0, %v2178
      %v2180 = vpop.f32.mrf.mxu0
      %v2181 = vadd.f32 0.0, %v2180
      %2182 = vmatprep.mubr.bf16.mxu0 0
      %2183 = vmatmul.mubr.bf16.gmra.mxu0 %v987
      %v2184 = vpop.f32.mrf.mxu0
      %v2185 = vadd.f32 0.0, %v2184
      %v2186 = vpop.f32.mrf.mxu0
      %v2187 = vadd.f32 0.0, %v2186
      %v2188 = vpop.f32.mrf.mxu0
      %v2189 = vadd.f32 0.0, %v2188
      %v2190 = vpop.f32.mrf.mxu0
      %v2191 = vadd.f32 0.0, %v2190
      %2192 = vmatprep.mubr.bf16.mxu0 0
      %2193 = vmatmul.mubr.bf16.gmra.mxu0 %v990
      %v2194 = vpop.f32.mrf.mxu0
      %v2195 = vadd.f32 0.0, %v2194
      %v2196 = vpop.f32.mrf.mxu0
      %v2197 = vadd.f32 0.0, %v2196
      %v2198 = vpop.f32.mrf.mxu0
      %v2199 = vadd.f32 0.0, %v2198
      %v2200 = vpop.f32.mrf.mxu0
      %v2201 = vadd.f32 0.0, %v2200
      %2202 = vmatprep.mubr.bf16.mxu0 0
      %2203 = vmatmul.mubr.bf16.gmra.mxu0 %v993
      %v2204 = vpop.f32.mrf.mxu0
      %v2205 = vadd.f32 0.0, %v2204
      %v2206 = vpop.f32.mrf.mxu0
      %v2207 = vadd.f32 0.0, %v2206
      %v2208 = vpop.f32.mrf.mxu0
      %v2209 = vadd.f32 0.0, %v2208
      %v2210 = vpop.f32.mrf.mxu0
      %v2211 = vadd.f32 0.0, %v2210
      %2212 = vmatprep.mubr.bf16.mxu0 0
      %2213 = vmatmul.mubr.bf16.gmra.mxu0 %v996
      %v2214 = vpop.f32.mrf.mxu0
      %v2215 = vadd.f32 0.0, %v2214
      %v2216 = vpop.f32.mrf.mxu0
      %v2217 = vadd.f32 0.0, %v2216
      %v2218 = vpop.f32.mrf.mxu0
      %v2219 = vadd.f32 0.0, %v2218
      %v2220 = vpop.f32.mrf.mxu0
      %v2221 = vadd.f32 0.0, %v2220
      %2222 = vmatprep.mubr.bf16.mxu0 0
      %2223 = vmatmul.mubr.bf16.gmra.mxu0 %v999
      %v2224 = vpop.f32.mrf.mxu0
      %v2225 = vadd.f32 0.0, %v2224
      %v2226 = vpop.f32.mrf.mxu0
      %v2227 = vadd.f32 0.0, %v2226
      %v2228 = vpop.f32.mrf.mxu0
      %v2229 = vadd.f32 0.0, %v2228
      %v2230 = vpop.f32.mrf.mxu0
      %v2231 = vadd.f32 0.0, %v2230
      %2232 = vmatprep.mubr.bf16.mxu0 0
      %2233 = vmatmul.mubr.bf16.gmra.mxu0 %v1002
      %v2234 = vpop.f32.mrf.mxu0
      %v2235 = vadd.f32 0.0, %v2234
      %v2236 = vpop.f32.mrf.mxu0
      %v2237 = vadd.f32 0.0, %v2236
      %v2238 = vpop.f32.mrf.mxu0
      %v2239 = vadd.f32 0.0, %v2238
      %v2240 = vpop.f32.mrf.mxu0
      %v2241 = vadd.f32 0.0, %v2240
      %2242 = vmatprep.mubr.bf16.mxu0 0
      %2243 = vmatmul.mubr.bf16.gmra.mxu0 %v1005
      %v2244 = vpop.f32.mrf.mxu0
      %v2245 = vadd.f32 0.0, %v2244
      %v2246 = vpop.f32.mrf.mxu0
      %v2247 = vadd.f32 0.0, %v2246
      %v2248 = vpop.f32.mrf.mxu0
      %v2249 = vadd.f32 0.0, %v2248
      %v2250 = vpop.f32.mrf.mxu0
      %v2251 = vadd.f32 0.0, %v2250
      %2252 = vmatprep.mubr.bf16.mxu0 0
      %2253 = vmatmul.mubr.bf16.gmra.mxu0 %v1008
      %v2254 = vpop.f32.mrf.mxu0
      %v2255 = vadd.f32 0.0, %v2254
      %v2256 = vpop.f32.mrf.mxu0
      %v2257 = vadd.f32 0.0, %v2256
      %v2258 = vpop.f32.mrf.mxu0
      %v2259 = vadd.f32 0.0, %v2258
      %v2260 = vpop.f32.mrf.mxu0
      %v2261 = vadd.f32 0.0, %v2260
      %2262 = vmatprep.mubr.bf16.mxu0 0
      %2263 = vmatmul.mubr.bf16.gmra.mxu0 %v1011
      %v2264 = vpop.f32.mrf.mxu0
      %v2265 = vadd.f32 0.0, %v2264
      %v2266 = vpop.f32.mrf.mxu0
      %v2267 = vadd.f32 0.0, %v2266
      %v2268 = vpop.f32.mrf.mxu0
      %v2269 = vadd.f32 0.0, %v2268
      %v2270 = vpop.f32.mrf.mxu0
      %v2271 = vadd.f32 0.0, %v2270
      %2272 = vmatprep.mubr.bf16.mxu0 0
      %2273 = vmatmul.mubr.bf16.gmra.mxu0 %v1014
      %v2274 = vpop.f32.mrf.mxu0
      %v2275 = vadd.f32 0.0, %v2274
      %v2276 = vpop.f32.mrf.mxu0
      %v2277 = vadd.f32 0.0, %v2276
      %v2278 = vpop.f32.mrf.mxu0
      %v2279 = vadd.f32 0.0, %v2278
      %v2280 = vpop.f32.mrf.mxu0
      %v2281 = vadd.f32 0.0, %v2280
      %2282 = vmatprep.mubr.bf16.mxu0 0
      %2283 = vmatmul.mubr.bf16.gmra.mxu0 %v1017
      %v2284 = vpop.f32.mrf.mxu0
      %v2285 = vadd.f32 0.0, %v2284
      %v2286 = vpop.f32.mrf.mxu0
      %v2287 = vadd.f32 0.0, %v2286
      %v2288 = vpop.f32.mrf.mxu0
      %v2289 = vadd.f32 0.0, %v2288
      %v2290 = vpop.f32.mrf.mxu0
      %v2291 = vadd.f32 0.0, %v2290
      %2292 = vmatprep.mubr.bf16.mxu0 0
      %2293 = vmatmul.mubr.bf16.gmra.mxu0 %v1020
      %v2294 = vpop.f32.mrf.mxu0
      %v2295 = vadd.f32 0.0, %v2294
      %v2296 = vpop.f32.mrf.mxu0
      %v2297 = vadd.f32 0.0, %v2296
      %v2298 = vpop.f32.mrf.mxu0
      %v2299 = vadd.f32 0.0, %v2298
      %v2300 = vpop.f32.mrf.mxu0
      %v2301 = vadd.f32 0.0, %v2300
      %2302 = vmatprep.mubr.bf16.mxu0 0
      %2303 = vmatmul.mubr.bf16.gmra.mxu0 %v1023
      %v2304 = vpop.f32.mrf.mxu0
      %v2305 = vadd.f32 0.0, %v2304
      %v2306 = vpop.f32.mrf.mxu0
      %v2307 = vadd.f32 0.0, %v2306
      %v2308 = vpop.f32.mrf.mxu0
      %v2309 = vadd.f32 0.0, %v2308
      %v2310 = vpop.f32.mrf.mxu0
      %v2311 = vadd.f32 0.0, %v2310
      %2312 = vmatprep.mubr.bf16.mxu0 0
      %2313 = vmatmul.mubr.bf16.gmra.mxu0 %v1026
      %v2314 = vpop.f32.mrf.mxu0
      %v2315 = vadd.f32 0.0, %v2314
      %v2316 = vpop.f32.mrf.mxu0
      %v2317 = vadd.f32 0.0, %v2316
      %v2318 = vpop.f32.mrf.mxu0
      %v2319 = vadd.f32 0.0, %v2318
      %v2320 = vpop.f32.mrf.mxu0
      %v2321 = vadd.f32 0.0, %v2320
      %2322 = vmatprep.mubr.bf16.mxu0 0
      %2323 = vmatmul.mubr.bf16.gmra.mxu0 %v1029
      %v2324 = vpop.f32.mrf.mxu0
      %v2325 = vadd.f32 0.0, %v2324
      %v2326 = vpop.f32.mrf.mxu0
      %v2327 = vadd.f32 0.0, %v2326
      %v2328 = vpop.f32.mrf.mxu0
      %v2329 = vadd.f32 0.0, %v2328
      %v2330 = vpop.f32.mrf.mxu0
      %v2331 = vadd.f32 0.0, %v2330
      %2332 = vmatprep.mubr.bf16.mxu0 0
      %2333 = vmatmul.mubr.bf16.gmra.mxu0 %v1032
      %v2334 = vpop.f32.mrf.mxu0
      %v2335 = vadd.f32 0.0, %v2334
      %v2336 = vpop.f32.mrf.mxu0
      %v2337 = vadd.f32 0.0, %v2336
      %v2338 = vpop.f32.mrf.mxu0
      %v2339 = vadd.f32 0.0, %v2338
      %v2340 = vpop.f32.mrf.mxu0
      %v2341 = vadd.f32 0.0, %v2340
      %2342 = vmatprep.mubr.bf16.mxu0 0
      %2343 = vmatmul.mubr.bf16.gmra.mxu0 %v1035
      %v2344 = vpop.f32.mrf.mxu0
      %v2345 = vadd.f32 0.0, %v2344
      %v2346 = vpop.f32.mrf.mxu0
      %v2347 = vadd.f32 0.0, %v2346
      %v2348 = vpop.f32.mrf.mxu0
      %v2349 = vadd.f32 0.0, %v2348
      %v2350 = vpop.f32.mrf.mxu0
      %v2351 = vadd.f32 0.0, %v2350
      %2352 = vmatprep.mubr.bf16.mxu0 0
      %2353 = vmatmul.mubr.bf16.gmra.mxu0 %v1038
      %v2354 = vpop.f32.mrf.mxu0
      %v2355 = vadd.f32 0.0, %v2354
      %v2356 = vpop.f32.mrf.mxu0
      %v2357 = vadd.f32 0.0, %v2356
      %v2358 = vpop.f32.mrf.mxu0
      %v2359 = vadd.f32 0.0, %v2358
      %v2360 = vpop.f32.mrf.mxu0
      %v2361 = vadd.f32 0.0, %v2360
      %2362 = vmatprep.mubr.bf16.mxu0 0
      %2363 = vmatmul.mubr.bf16.gmra.mxu0 %v1041
      %v2364 = vpop.f32.mrf.mxu0
      %v2365 = vadd.f32 0.0, %v2364
      %v2366 = vpop.f32.mrf.mxu0
      %v2367 = vadd.f32 0.0, %v2366
      %v2368 = vpop.f32.mrf.mxu0
      %v2369 = vadd.f32 0.0, %v2368
      %v2370 = vpop.f32.mrf.mxu0
      %v2371 = vadd.f32 0.0, %v2370
      %2372 = vmatprep.mubr.bf16.mxu0 0
      %2373 = vmatmul.mubr.bf16.gmra.mxu0 %v1044
      %v2374 = vpop.f32.mrf.mxu0
      %v2375 = vadd.f32 0.0, %v2374
      %v2376 = vpop.f32.mrf.mxu0
      %v2377 = vadd.f32 0.0, %v2376
      %v2378 = vpop.f32.mrf.mxu0
      %v2379 = vadd.f32 0.0, %v2378
      %v2380 = vpop.f32.mrf.mxu0
      %v2381 = vadd.f32 0.0, %v2380
      %2382 = vmatprep.mubr.bf16.mxu0 0
      %2383 = vmatmul.mubr.bf16.gmra.mxu0 %v1047
      %v2384 = vpop.f32.mrf.mxu0
      %v2385 = vadd.f32 0.0, %v2384
      %v2386 = vpop.f32.mrf.mxu0
      %v2387 = vadd.f32 0.0, %v2386
      %v2388 = vpop.f32.mrf.mxu0
      %v2389 = vadd.f32 0.0, %v2388
      %v2390 = vpop.f32.mrf.mxu0
      %v2391 = vadd.f32 0.0, %v2390
      %2392 = vmatprep.mubr.bf16.mxu0 0
      %2393 = vmatmul.mubr.bf16.gmra.mxu0 %v1050
      %v2394 = vpop.f32.mrf.mxu0
      %v2395 = vadd.f32 0.0, %v2394
      %v2396 = vpop.f32.mrf.mxu0
      %v2397 = vadd.f32 0.0, %v2396
      %v2398 = vpop.f32.mrf.mxu0
      %v2399 = vadd.f32 0.0, %v2398
      %v2400 = vpop.f32.mrf.mxu0
      %v2401 = vadd.f32 0.0, %v2400
      %2402 = vmatprep.mubr.bf16.mxu0 0
      %2403 = vmatmul.mubr.bf16.gmra.mxu0 %v1053
      %v2404 = vpop.f32.mrf.mxu0
      %v2405 = vadd.f32 0.0, %v2404
      %v2406 = vpop.f32.mrf.mxu0
      %v2407 = vadd.f32 0.0, %v2406
      %v2408 = vpop.f32.mrf.mxu0
      %v2409 = vadd.f32 0.0, %v2408
      %v2410 = vpop.f32.mrf.mxu0
      %v2411 = vadd.f32 0.0, %v2410
      %2412 = vmatprep.mubr.bf16.mxu0 0
      %2413 = vmatmul.mubr.bf16.gmra.mxu0 %v1056
      %v2414 = vpop.f32.mrf.mxu0
      %v2415 = vadd.f32 0.0, %v2414
      %v2416 = vpop.f32.mrf.mxu0
      %v2417 = vadd.f32 0.0, %v2416
      %v2418 = vpop.f32.mrf.mxu0
      %v2419 = vadd.f32 0.0, %v2418
      %v2420 = vpop.f32.mrf.mxu0
      %v2421 = vadd.f32 0.0, %v2420
      %2422 = vdwg.mxu0
      %2423 = vmatprep.subr.bf16.mxu0 0
      %2424 = vmatpush1.bf16.msra.mxu0 0
      %2425 = vmatprep.subr.bf16.mxu0 0
      %2426 = vmatpush1.bf16.msra.mxu0 0
      %2427 = vmatprep.subr.bf16.mxu0 0
      %2428 = vmatpush1.bf16.msra.mxu0 0
      %2429 = vmatprep.subr.bf16.mxu0 0
      %2430 = vmatpush1.bf16.msra.mxu0 0
      %2431 = vmatprep.subr.bf16.mxu0 0
      %2432 = vmatpush1.bf16.msra.mxu0 0
      %2433 = vmatprep.subr.bf16.mxu0 0
      %2434 = vmatpush1.bf16.msra.mxu0 0
      %2435 = vmatprep.subr.bf16.mxu0 %v1075
      %2436 = vmatpush1.bf16.msra.mxu0 %v1072
      %2437 = vmatprep.subr.bf16.mxu0 %v853
      %2438 = vmatpush1.bf16.msra.mxu0 %v852
      %2439 = vmatprep.subr.bf16.mxu0 0
      %2440 = vmatpush2.bf16.msra.mxu0 0
      %2441 = vmatprep.subr.bf16.mxu0 0
      %2442 = vmatpush2.bf16.msra.mxu0 0
      %2443 = vmatprep.subr.bf16.mxu0 0
      %2444 = vmatpush2.bf16.msra.mxu0 0
      %2445 = vmatprep.subr.bf16.mxu0 0
      %2446 = vmatpush2.bf16.msra.mxu0 0
      %2447 = vmatprep.subr.bf16.mxu0 0
      %2448 = vmatpush2.bf16.msra.mxu0 0
      %2449 = vmatprep.subr.bf16.mxu0 0
      %2450 = vmatpush2.bf16.msra.mxu0 0
      %2451 = vmatprep.subr.bf16.mxu0 0
      %2452 = vmatpush2.bf16.msra.mxu0 0
      %2453 = vmatprep.subr.bf16.mxu0 0
      %2454 = vmatpush2.bf16.msra.mxu0 0
      %2455 = vmatprep.mubr.bf16.mxu0 0
      %2456 = vmatmul.mubr.bf16.gmra.mxu0 %v867
      %v2457 = vpop.f32.mrf.mxu0
      %v2458 = vadd.f32 0.0, %v2457
      %v2459 = vpop.f32.mrf.mxu0
      %v2460 = vadd.f32 0.0, %v2459
      %v2461 = vpop.f32.mrf.mxu0
      %v2462 = vadd.f32 0.0, %v2461
      %v2463 = vpop.f32.mrf.mxu0
      %v2464 = vadd.f32 0.0, %v2463
      %2465 = vmatprep.mubr.bf16.mxu0 0
      %2466 = vmatmul.mubr.bf16.gmra.mxu0 %v870
      %v2467 = vpop.f32.mrf.mxu0
      %v2468 = vadd.f32 0.0, %v2467
      %v2469 = vpop.f32.mrf.mxu0
      %v2470 = vadd.f32 0.0, %v2469
      %v2471 = vpop.f32.mrf.mxu0
      %v2472 = vadd.f32 0.0, %v2471
      %v2473 = vpop.f32.mrf.mxu0
      %v2474 = vadd.f32 0.0, %v2473
      %2475 = vmatprep.mubr.bf16.mxu0 0
      %2476 = vmatmul.mubr.bf16.gmra.mxu0 %v873
      %v2477 = vpop.f32.mrf.mxu0
      %v2478 = vadd.f32 0.0, %v2477
      %v2479 = vpop.f32.mrf.mxu0
      %v2480 = vadd.f32 0.0, %v2479
      %v2481 = vpop.f32.mrf.mxu0
      %v2482 = vadd.f32 0.0, %v2481
      %v2483 = vpop.f32.mrf.mxu0
      %v2484 = vadd.f32 0.0, %v2483
      %2485 = vmatprep.mubr.bf16.mxu0 0
      %2486 = vmatmul.mubr.bf16.gmra.mxu0 %v876
      %v2487 = vpop.f32.mrf.mxu0
      %v2488 = vadd.f32 0.0, %v2487
      %v2489 = vpop.f32.mrf.mxu0
      %v2490 = vadd.f32 0.0, %v2489
      %v2491 = vpop.f32.mrf.mxu0
      %v2492 = vadd.f32 0.0, %v2491
      %v2493 = vpop.f32.mrf.mxu0
      %v2494 = vadd.f32 0.0, %v2493
      %2495 = vmatprep.mubr.bf16.mxu0 0
      %2496 = vmatmul.mubr.bf16.gmra.mxu0 %v879
      %v2497 = vpop.f32.mrf.mxu0
      %v2498 = vadd.f32 0.0, %v2497
      %v2499 = vpop.f32.mrf.mxu0
      %v2500 = vadd.f32 0.0, %v2499
      %v2501 = vpop.f32.mrf.mxu0
      %v2502 = vadd.f32 0.0, %v2501
      %v2503 = vpop.f32.mrf.mxu0
      %v2504 = vadd.f32 0.0, %v2503
      %2505 = vmatprep.mubr.bf16.mxu0 0
      %2506 = vmatmul.mubr.bf16.gmra.mxu0 %v882
      %v2507 = vpop.f32.mrf.mxu0
      %v2508 = vadd.f32 0.0, %v2507
      %v2509 = vpop.f32.mrf.mxu0
      %v2510 = vadd.f32 0.0, %v2509
      %v2511 = vpop.f32.mrf.mxu0
      %v2512 = vadd.f32 0.0, %v2511
      %v2513 = vpop.f32.mrf.mxu0
      %v2514 = vadd.f32 0.0, %v2513
      %2515 = vmatprep.mubr.bf16.mxu0 0
      %2516 = vmatmul.mubr.bf16.gmra.mxu0 %v885
      %v2517 = vpop.f32.mrf.mxu0
      %v2518 = vadd.f32 0.0, %v2517
      %v2519 = vpop.f32.mrf.mxu0
      %v2520 = vadd.f32 0.0, %v2519
      %v2521 = vpop.f32.mrf.mxu0
      %v2522 = vadd.f32 0.0, %v2521
      %v2523 = vpop.f32.mrf.mxu0
      %v2524 = vadd.f32 0.0, %v2523
      %2525 = vmatprep.mubr.bf16.mxu0 0
      %2526 = vmatmul.mubr.bf16.gmra.mxu0 %v888
      %v2527 = vpop.f32.mrf.mxu0
      %v2528 = vadd.f32 0.0, %v2527
      %v2529 = vpop.f32.mrf.mxu0
      %v2530 = vadd.f32 0.0, %v2529
      %v2531 = vpop.f32.mrf.mxu0
      %v2532 = vadd.f32 0.0, %v2531
      %v2533 = vpop.f32.mrf.mxu0
      %v2534 = vadd.f32 0.0, %v2533
      %2535 = vmatprep.mubr.bf16.mxu0 0
      %2536 = vmatmul.mubr.bf16.gmra.mxu0 %v891
      %v2537 = vpop.f32.mrf.mxu0
      %v2538 = vadd.f32 0.0, %v2537
      %v2539 = vpop.f32.mrf.mxu0
      %v2540 = vadd.f32 0.0, %v2539
      %v2541 = vpop.f32.mrf.mxu0
      %v2542 = vadd.f32 0.0, %v2541
      %v2543 = vpop.f32.mrf.mxu0
      %v2544 = vadd.f32 0.0, %v2543
      %2545 = vmatprep.mubr.bf16.mxu0 0
      %2546 = vmatmul.mubr.bf16.gmra.mxu0 %v894
      %v2547 = vpop.f32.mrf.mxu0
      %v2548 = vadd.f32 0.0, %v2547
      %v2549 = vpop.f32.mrf.mxu0
      %v2550 = vadd.f32 0.0, %v2549
      %v2551 = vpop.f32.mrf.mxu0
      %v2552 = vadd.f32 0.0, %v2551
      %v2553 = vpop.f32.mrf.mxu0
      %v2554 = vadd.f32 0.0, %v2553
      %2555 = vmatprep.mubr.bf16.mxu0 0
      %2556 = vmatmul.mubr.bf16.gmra.mxu0 %v897
      %v2557 = vpop.f32.mrf.mxu0
      %v2558 = vadd.f32 0.0, %v2557
      %v2559 = vpop.f32.mrf.mxu0
      %v2560 = vadd.f32 0.0, %v2559
      %v2561 = vpop.f32.mrf.mxu0
      %v2562 = vadd.f32 0.0, %v2561
      %v2563 = vpop.f32.mrf.mxu0
      %v2564 = vadd.f32 0.0, %v2563
      %2565 = vmatprep.mubr.bf16.mxu0 0
      %2566 = vmatmul.mubr.bf16.gmra.mxu0 %v900
      %v2567 = vpop.f32.mrf.mxu0
      %v2568 = vadd.f32 0.0, %v2567
      %v2569 = vpop.f32.mrf.mxu0
      %v2570 = vadd.f32 0.0, %v2569
      %v2571 = vpop.f32.mrf.mxu0
      %v2572 = vadd.f32 0.0, %v2571
      %v2573 = vpop.f32.mrf.mxu0
      %v2574 = vadd.f32 0.0, %v2573
      %2575 = vmatprep.mubr.bf16.mxu0 0
      %2576 = vmatmul.mubr.bf16.gmra.mxu0 %v903
      %v2577 = vpop.f32.mrf.mxu0
      %v2578 = vadd.f32 0.0, %v2577
      %v2579 = vpop.f32.mrf.mxu0
      %v2580 = vadd.f32 0.0, %v2579
      %v2581 = vpop.f32.mrf.mxu0
      %v2582 = vadd.f32 0.0, %v2581
      %v2583 = vpop.f32.mrf.mxu0
      %v2584 = vadd.f32 0.0, %v2583
      %2585 = vmatprep.mubr.bf16.mxu0 0
      %2586 = vmatmul.mubr.bf16.gmra.mxu0 %v906
      %v2587 = vpop.f32.mrf.mxu0
      %v2588 = vadd.f32 0.0, %v2587
      %v2589 = vpop.f32.mrf.mxu0
      %v2590 = vadd.f32 0.0, %v2589
      %v2591 = vpop.f32.mrf.mxu0
      %v2592 = vadd.f32 0.0, %v2591
      %v2593 = vpop.f32.mrf.mxu0
      %v2594 = vadd.f32 0.0, %v2593
      %2595 = vmatprep.mubr.bf16.mxu0 0
      %2596 = vmatmul.mubr.bf16.gmra.mxu0 %v909
      %v2597 = vpop.f32.mrf.mxu0
      %v2598 = vadd.f32 0.0, %v2597
      %v2599 = vpop.f32.mrf.mxu0
      %v2600 = vadd.f32 0.0, %v2599
      %v2601 = vpop.f32.mrf.mxu0
      %v2602 = vadd.f32 0.0, %v2601
      %v2603 = vpop.f32.mrf.mxu0
      %v2604 = vadd.f32 0.0, %v2603
      %2605 = vmatprep.mubr.bf16.mxu0 0
      %2606 = vmatmul.mubr.bf16.gmra.mxu0 %v912
      %v2607 = vpop.f32.mrf.mxu0
      %v2608 = vadd.f32 0.0, %v2607
      %v2609 = vpop.f32.mrf.mxu0
      %v2610 = vadd.f32 0.0, %v2609
      %v2611 = vpop.f32.mrf.mxu0
      %v2612 = vadd.f32 0.0, %v2611
      %v2613 = vpop.f32.mrf.mxu0
      %v2614 = vadd.f32 0.0, %v2613
      %2615 = vmatprep.mubr.bf16.mxu0 0
      %2616 = vmatmul.mubr.bf16.gmra.mxu0 %v915
      %v2617 = vpop.f32.mrf.mxu0
      %v2618 = vadd.f32 0.0, %v2617
      %v2619 = vpop.f32.mrf.mxu0
      %v2620 = vadd.f32 0.0, %v2619
      %v2621 = vpop.f32.mrf.mxu0
      %v2622 = vadd.f32 0.0, %v2621
      %v2623 = vpop.f32.mrf.mxu0
      %v2624 = vadd.f32 0.0, %v2623
      %2625 = vmatprep.mubr.bf16.mxu0 0
      %2626 = vmatmul.mubr.bf16.gmra.mxu0 %v918
      %v2627 = vpop.f32.mrf.mxu0
      %v2628 = vadd.f32 0.0, %v2627
      %v2629 = vpop.f32.mrf.mxu0
      %v2630 = vadd.f32 0.0, %v2629
      %v2631 = vpop.f32.mrf.mxu0
      %v2632 = vadd.f32 0.0, %v2631
      %v2633 = vpop.f32.mrf.mxu0
      %v2634 = vadd.f32 0.0, %v2633
      %2635 = vmatprep.mubr.bf16.mxu0 0
      %2636 = vmatmul.mubr.bf16.gmra.mxu0 %v921
      %v2637 = vpop.f32.mrf.mxu0
      %v2638 = vadd.f32 0.0, %v2637
      %v2639 = vpop.f32.mrf.mxu0
      %v2640 = vadd.f32 0.0, %v2639
      %v2641 = vpop.f32.mrf.mxu0
      %v2642 = vadd.f32 0.0, %v2641
      %v2643 = vpop.f32.mrf.mxu0
      %v2644 = vadd.f32 0.0, %v2643
      %2645 = vmatprep.mubr.bf16.mxu0 0
      %2646 = vmatmul.mubr.bf16.gmra.mxu0 %v924
      %v2647 = vpop.f32.mrf.mxu0
      %v2648 = vadd.f32 0.0, %v2647
      %v2649 = vpop.f32.mrf.mxu0
      %v2650 = vadd.f32 0.0, %v2649
      %v2651 = vpop.f32.mrf.mxu0
      %v2652 = vadd.f32 0.0, %v2651
      %v2653 = vpop.f32.mrf.mxu0
      %v2654 = vadd.f32 0.0, %v2653
      %2655 = vmatprep.mubr.bf16.mxu0 0
      %2656 = vmatmul.mubr.bf16.gmra.mxu0 %v927
      %v2657 = vpop.f32.mrf.mxu0
      %v2658 = vadd.f32 0.0, %v2657
      %v2659 = vpop.f32.mrf.mxu0
      %v2660 = vadd.f32 0.0, %v2659
      %v2661 = vpop.f32.mrf.mxu0
      %v2662 = vadd.f32 0.0, %v2661
      %v2663 = vpop.f32.mrf.mxu0
      %v2664 = vadd.f32 0.0, %v2663
      %2665 = vmatprep.mubr.bf16.mxu0 0
      %2666 = vmatmul.mubr.bf16.gmra.mxu0 %v930
      %v2667 = vpop.f32.mrf.mxu0
      %v2668 = vadd.f32 0.0, %v2667
      %v2669 = vpop.f32.mrf.mxu0
      %v2670 = vadd.f32 0.0, %v2669
      %v2671 = vpop.f32.mrf.mxu0
      %v2672 = vadd.f32 0.0, %v2671
      %v2673 = vpop.f32.mrf.mxu0
      %v2674 = vadd.f32 0.0, %v2673
      %2675 = vmatprep.mubr.bf16.mxu0 0
      %2676 = vmatmul.mubr.bf16.gmra.mxu0 %v933
      %v2677 = vpop.f32.mrf.mxu0
      %v2678 = vadd.f32 0.0, %v2677
      %v2679 = vpop.f32.mrf.mxu0
      %v2680 = vadd.f32 0.0, %v2679
      %v2681 = vpop.f32.mrf.mxu0
      %v2682 = vadd.f32 0.0, %v2681
      %v2683 = vpop.f32.mrf.mxu0
      %v2684 = vadd.f32 0.0, %v2683
      %2685 = vmatprep.mubr.bf16.mxu0 0
      %2686 = vmatmul.mubr.bf16.gmra.mxu0 %v936
      %v2687 = vpop.f32.mrf.mxu0
      %v2688 = vadd.f32 0.0, %v2687
      %v2689 = vpop.f32.mrf.mxu0
      %v2690 = vadd.f32 0.0, %v2689
      %v2691 = vpop.f32.mrf.mxu0
      %v2692 = vadd.f32 0.0, %v2691
      %v2693 = vpop.f32.mrf.mxu0
      %v2694 = vadd.f32 0.0, %v2693
      %2695 = vmatprep.mubr.bf16.mxu0 0
      %2696 = vmatmul.mubr.bf16.gmra.mxu0 %v939
      %v2697 = vpop.f32.mrf.mxu0
      %v2698 = vadd.f32 0.0, %v2697
      %v2699 = vpop.f32.mrf.mxu0
      %v2700 = vadd.f32 0.0, %v2699
      %v2701 = vpop.f32.mrf.mxu0
      %v2702 = vadd.f32 0.0, %v2701
      %v2703 = vpop.f32.mrf.mxu0
      %v2704 = vadd.f32 0.0, %v2703
      %2705 = vmatprep.mubr.bf16.mxu0 0
      %2706 = vmatmul.mubr.bf16.gmra.mxu0 %v942
      %v2707 = vpop.f32.mrf.mxu0
      %v2708 = vadd.f32 0.0, %v2707
      %v2709 = vpop.f32.mrf.mxu0
      %v2710 = vadd.f32 0.0, %v2709
      %v2711 = vpop.f32.mrf.mxu0
      %v2712 = vadd.f32 0.0, %v2711
      %v2713 = vpop.f32.mrf.mxu0
      %v2714 = vadd.f32 0.0, %v2713
      %2715 = vmatprep.mubr.bf16.mxu0 0
      %2716 = vmatmul.mubr.bf16.gmra.mxu0 %v945
      %v2717 = vpop.f32.mrf.mxu0
      %v2718 = vadd.f32 0.0, %v2717
      %v2719 = vpop.f32.mrf.mxu0
      %v2720 = vadd.f32 0.0, %v2719
      %v2721 = vpop.f32.mrf.mxu0
      %v2722 = vadd.f32 0.0, %v2721
      %v2723 = vpop.f32.mrf.mxu0
      %v2724 = vadd.f32 0.0, %v2723
      %2725 = vmatprep.mubr.bf16.mxu0 0
      %2726 = vmatmul.mubr.bf16.gmra.mxu0 %v948
      %v2727 = vpop.f32.mrf.mxu0
      %v2728 = vadd.f32 0.0, %v2727
      %v2729 = vpop.f32.mrf.mxu0
      %v2730 = vadd.f32 0.0, %v2729
      %v2731 = vpop.f32.mrf.mxu0
      %v2732 = vadd.f32 0.0, %v2731
      %v2733 = vpop.f32.mrf.mxu0
      %v2734 = vadd.f32 0.0, %v2733
      %2735 = vmatprep.mubr.bf16.mxu0 0
      %2736 = vmatmul.mubr.bf16.gmra.mxu0 %v951
      %v2737 = vpop.f32.mrf.mxu0
      %v2738 = vadd.f32 0.0, %v2737
      %v2739 = vpop.f32.mrf.mxu0
      %v2740 = vadd.f32 0.0, %v2739
      %v2741 = vpop.f32.mrf.mxu0
      %v2742 = vadd.f32 0.0, %v2741
      %v2743 = vpop.f32.mrf.mxu0
      %v2744 = vadd.f32 0.0, %v2743
      %2745 = vmatprep.mubr.bf16.mxu0 0
      %2746 = vmatmul.mubr.bf16.gmra.mxu0 %v954
      %v2747 = vpop.f32.mrf.mxu0
      %v2748 = vadd.f32 0.0, %v2747
      %v2749 = vpop.f32.mrf.mxu0
      %v2750 = vadd.f32 0.0, %v2749
      %v2751 = vpop.f32.mrf.mxu0
      %v2752 = vadd.f32 0.0, %v2751
      %v2753 = vpop.f32.mrf.mxu0
      %v2754 = vadd.f32 0.0, %v2753
      %2755 = vmatprep.mubr.bf16.mxu0 0
      %2756 = vmatmul.mubr.bf16.gmra.mxu0 %v957
      %v2757 = vpop.f32.mrf.mxu0
      %v2758 = vadd.f32 0.0, %v2757
      %v2759 = vpop.f32.mrf.mxu0
      %v2760 = vadd.f32 0.0, %v2759
      %v2761 = vpop.f32.mrf.mxu0
      %v2762 = vadd.f32 0.0, %v2761
      %v2763 = vpop.f32.mrf.mxu0
      %v2764 = vadd.f32 0.0, %v2763
      %2765 = vmatprep.mubr.bf16.mxu0 0
      %2766 = vmatmul.mubr.bf16.gmra.mxu0 %v960
      %v2767 = vpop.f32.mrf.mxu0
      %v2768 = vadd.f32 0.0, %v2767
      %v2769 = vpop.f32.mrf.mxu0
      %v2770 = vadd.f32 0.0, %v2769
      %v2771 = vpop.f32.mrf.mxu0
      %v2772 = vadd.f32 0.0, %v2771
      %v2773 = vpop.f32.mrf.mxu0
      %v2774 = vadd.f32 0.0, %v2773
      %2775 = vmatprep.mubr.bf16.mxu0 0
      %2776 = vmatmul.mubr.bf16.gmra.mxu0 %v963
      %v2777 = vpop.f32.mrf.mxu0
      %v2778 = vadd.f32 0.0, %v2777
      %v2779 = vpop.f32.mrf.mxu0
      %v2780 = vadd.f32 0.0, %v2779
      %v2781 = vpop.f32.mrf.mxu0
      %v2782 = vadd.f32 0.0, %v2781
      %v2783 = vpop.f32.mrf.mxu0
      %v2784 = vadd.f32 0.0, %v2783
      %2785 = vmatprep.mubr.bf16.mxu0 0
      %2786 = vmatmul.mubr.bf16.gmra.mxu0 %v966
      %v2787 = vpop.f32.mrf.mxu0
      %v2788 = vadd.f32 0.0, %v2787
      %v2789 = vpop.f32.mrf.mxu0
      %v2790 = vadd.f32 0.0, %v2789
      %v2791 = vpop.f32.mrf.mxu0
      %v2792 = vadd.f32 0.0, %v2791
      %v2793 = vpop.f32.mrf.mxu0
      %v2794 = vadd.f32 0.0, %v2793
      %2795 = vmatprep.mubr.bf16.mxu0 0
      %2796 = vmatmul.mubr.bf16.gmra.mxu0 %v969
      %v2797 = vpop.f32.mrf.mxu0
      %v2798 = vadd.f32 0.0, %v2797
      %v2799 = vpop.f32.mrf.mxu0
      %v2800 = vadd.f32 0.0, %v2799
      %v2801 = vpop.f32.mrf.mxu0
      %v2802 = vadd.f32 0.0, %v2801
      %v2803 = vpop.f32.mrf.mxu0
      %v2804 = vadd.f32 0.0, %v2803
      %2805 = vmatprep.mubr.bf16.mxu0 0
      %2806 = vmatmul.mubr.bf16.gmra.mxu0 %v972
      %v2807 = vpop.f32.mrf.mxu0
      %v2808 = vadd.f32 0.0, %v2807
      %v2809 = vpop.f32.mrf.mxu0
      %v2810 = vadd.f32 0.0, %v2809
      %v2811 = vpop.f32.mrf.mxu0
      %v2812 = vadd.f32 0.0, %v2811
      %v2813 = vpop.f32.mrf.mxu0
      %v2814 = vadd.f32 0.0, %v2813
      %2815 = vmatprep.mubr.bf16.mxu0 0
      %2816 = vmatmul.mubr.bf16.gmra.mxu0 %v975
      %v2817 = vpop.f32.mrf.mxu0
      %v2818 = vadd.f32 0.0, %v2817
      %v2819 = vpop.f32.mrf.mxu0
      %v2820 = vadd.f32 0.0, %v2819
      %v2821 = vpop.f32.mrf.mxu0
      %v2822 = vadd.f32 0.0, %v2821
      %v2823 = vpop.f32.mrf.mxu0
      %v2824 = vadd.f32 0.0, %v2823
      %2825 = vmatprep.mubr.bf16.mxu0 0
      %2826 = vmatmul.mubr.bf16.gmra.mxu0 %v978
      %v2827 = vpop.f32.mrf.mxu0
      %v2828 = vadd.f32 0.0, %v2827
      %v2829 = vpop.f32.mrf.mxu0
      %v2830 = vadd.f32 0.0, %v2829
      %v2831 = vpop.f32.mrf.mxu0
      %v2832 = vadd.f32 0.0, %v2831
      %v2833 = vpop.f32.mrf.mxu0
      %v2834 = vadd.f32 0.0, %v2833
      %2835 = vmatprep.mubr.bf16.mxu0 0
      %2836 = vmatmul.mubr.bf16.gmra.mxu0 %v981
      %v2837 = vpop.f32.mrf.mxu0
      %v2838 = vadd.f32 0.0, %v2837
      %v2839 = vpop.f32.mrf.mxu0
      %v2840 = vadd.f32 0.0, %v2839
      %v2841 = vpop.f32.mrf.mxu0
      %v2842 = vadd.f32 0.0, %v2841
      %v2843 = vpop.f32.mrf.mxu0
      %v2844 = vadd.f32 0.0, %v2843
      %2845 = vmatprep.mubr.bf16.mxu0 0
      %2846 = vmatmul.mubr.bf16.gmra.mxu0 %v984
      %v2847 = vpop.f32.mrf.mxu0
      %v2848 = vadd.f32 0.0, %v2847
      %v2849 = vpop.f32.mrf.mxu0
      %v2850 = vadd.f32 0.0, %v2849
      %v2851 = vpop.f32.mrf.mxu0
      %v2852 = vadd.f32 0.0, %v2851
      %v2853 = vpop.f32.mrf.mxu0
      %v2854 = vadd.f32 0.0, %v2853
      %2855 = vmatprep.mubr.bf16.mxu0 0
      %2856 = vmatmul.mubr.bf16.gmra.mxu0 %v987
      %v2857 = vpop.f32.mrf.mxu0
      %v2858 = vadd.f32 0.0, %v2857
      %v2859 = vpop.f32.mrf.mxu0
      %v2860 = vadd.f32 0.0, %v2859
      %v2861 = vpop.f32.mrf.mxu0
      %v2862 = vadd.f32 0.0, %v2861
      %v2863 = vpop.f32.mrf.mxu0
      %v2864 = vadd.f32 0.0, %v2863
      %2865 = vmatprep.mubr.bf16.mxu0 0
      %2866 = vmatmul.mubr.bf16.gmra.mxu0 %v990
      %v2867 = vpop.f32.mrf.mxu0
      %v2868 = vadd.f32 0.0, %v2867
      %v2869 = vpop.f32.mrf.mxu0
      %v2870 = vadd.f32 0.0, %v2869
      %v2871 = vpop.f32.mrf.mxu0
      %v2872 = vadd.f32 0.0, %v2871
      %v2873 = vpop.f32.mrf.mxu0
      %v2874 = vadd.f32 0.0, %v2873
      %2875 = vmatprep.mubr.bf16.mxu0 0
      %2876 = vmatmul.mubr.bf16.gmra.mxu0 %v993
      %v2877 = vpop.f32.mrf.mxu0
      %v2878 = vadd.f32 0.0, %v2877
      %v2879 = vpop.f32.mrf.mxu0
      %v2880 = vadd.f32 0.0, %v2879
      %v2881 = vpop.f32.mrf.mxu0
      %v2882 = vadd.f32 0.0, %v2881
      %v2883 = vpop.f32.mrf.mxu0
      %v2884 = vadd.f32 0.0, %v2883
      %2885 = vmatprep.mubr.bf16.mxu0 0
      %2886 = vmatmul.mubr.bf16.gmra.mxu0 %v996
      %v2887 = vpop.f32.mrf.mxu0
      %v2888 = vadd.f32 0.0, %v2887
      %v2889 = vpop.f32.mrf.mxu0
      %v2890 = vadd.f32 0.0, %v2889
      %v2891 = vpop.f32.mrf.mxu0
      %v2892 = vadd.f32 0.0, %v2891
      %v2893 = vpop.f32.mrf.mxu0
      %v2894 = vadd.f32 0.0, %v2893
      %2895 = vmatprep.mubr.bf16.mxu0 0
      %2896 = vmatmul.mubr.bf16.gmra.mxu0 %v999
      %v2897 = vpop.f32.mrf.mxu0
      %v2898 = vadd.f32 0.0, %v2897
      %v2899 = vpop.f32.mrf.mxu0
      %v2900 = vadd.f32 0.0, %v2899
      %v2901 = vpop.f32.mrf.mxu0
      %v2902 = vadd.f32 0.0, %v2901
      %v2903 = vpop.f32.mrf.mxu0
      %v2904 = vadd.f32 0.0, %v2903
      %2905 = vmatprep.mubr.bf16.mxu0 0
      %2906 = vmatmul.mubr.bf16.gmra.mxu0 %v1002
      %v2907 = vpop.f32.mrf.mxu0
      %v2908 = vadd.f32 0.0, %v2907
      %v2909 = vpop.f32.mrf.mxu0
      %v2910 = vadd.f32 0.0, %v2909
      %v2911 = vpop.f32.mrf.mxu0
      %v2912 = vadd.f32 0.0, %v2911
      %v2913 = vpop.f32.mrf.mxu0
      %v2914 = vadd.f32 0.0, %v2913
      %2915 = vmatprep.mubr.bf16.mxu0 0
      %2916 = vmatmul.mubr.bf16.gmra.mxu0 %v1005
      %v2917 = vpop.f32.mrf.mxu0
      %v2918 = vadd.f32 0.0, %v2917
      %v2919 = vpop.f32.mrf.mxu0
      %v2920 = vadd.f32 0.0, %v2919
      %v2921 = vpop.f32.mrf.mxu0
      %v2922 = vadd.f32 0.0, %v2921
      %v2923 = vpop.f32.mrf.mxu0
      %v2924 = vadd.f32 0.0, %v2923
      %2925 = vmatprep.mubr.bf16.mxu0 0
      %2926 = vmatmul.mubr.bf16.gmra.mxu0 %v1008
      %v2927 = vpop.f32.mrf.mxu0
      %v2928 = vadd.f32 0.0, %v2927
      %v2929 = vpop.f32.mrf.mxu0
      %v2930 = vadd.f32 0.0, %v2929
      %v2931 = vpop.f32.mrf.mxu0
      %v2932 = vadd.f32 0.0, %v2931
      %v2933 = vpop.f32.mrf.mxu0
      %v2934 = vadd.f32 0.0, %v2933
      %2935 = vmatprep.mubr.bf16.mxu0 0
      %2936 = vmatmul.mubr.bf16.gmra.mxu0 %v1011
      %v2937 = vpop.f32.mrf.mxu0
      %v2938 = vadd.f32 0.0, %v2937
      %v2939 = vpop.f32.mrf.mxu0
      %v2940 = vadd.f32 0.0, %v2939
      %v2941 = vpop.f32.mrf.mxu0
      %v2942 = vadd.f32 0.0, %v2941
      %v2943 = vpop.f32.mrf.mxu0
      %v2944 = vadd.f32 0.0, %v2943
      %2945 = vmatprep.mubr.bf16.mxu0 0
      %2946 = vmatmul.mubr.bf16.gmra.mxu0 %v1014
      %v2947 = vpop.f32.mrf.mxu0
      %v2948 = vadd.f32 0.0, %v2947
      %v2949 = vpop.f32.mrf.mxu0
      %v2950 = vadd.f32 0.0, %v2949
      %v2951 = vpop.f32.mrf.mxu0
      %v2952 = vadd.f32 0.0, %v2951
      %v2953 = vpop.f32.mrf.mxu0
      %v2954 = vadd.f32 0.0, %v2953
      %2955 = vmatprep.mubr.bf16.mxu0 0
      %2956 = vmatmul.mubr.bf16.gmra.mxu0 %v1017
      %v2957 = vpop.f32.mrf.mxu0
      %v2958 = vadd.f32 0.0, %v2957
      %v2959 = vpop.f32.mrf.mxu0
      %v2960 = vadd.f32 0.0, %v2959
      %v2961 = vpop.f32.mrf.mxu0
      %v2962 = vadd.f32 0.0, %v2961
      %v2963 = vpop.f32.mrf.mxu0
      %v2964 = vadd.f32 0.0, %v2963
      %2965 = vmatprep.mubr.bf16.mxu0 0
      %2966 = vmatmul.mubr.bf16.gmra.mxu0 %v1020
      %v2967 = vpop.f32.mrf.mxu0
      %v2968 = vadd.f32 0.0, %v2967
      %v2969 = vpop.f32.mrf.mxu0
      %v2970 = vadd.f32 0.0, %v2969
      %v2971 = vpop.f32.mrf.mxu0
      %v2972 = vadd.f32 0.0, %v2971
      %v2973 = vpop.f32.mrf.mxu0
      %v2974 = vadd.f32 0.0, %v2973
      %2975 = vmatprep.mubr.bf16.mxu0 0
      %2976 = vmatmul.mubr.bf16.gmra.mxu0 %v1023
      %v2977 = vpop.f32.mrf.mxu0
      %v2978 = vadd.f32 0.0, %v2977
      %v2979 = vpop.f32.mrf.mxu0
      %v2980 = vadd.f32 0.0, %v2979
      %v2981 = vpop.f32.mrf.mxu0
      %v2982 = vadd.f32 0.0, %v2981
      %v2983 = vpop.f32.mrf.mxu0
      %v2984 = vadd.f32 0.0, %v2983
      %2985 = vmatprep.mubr.bf16.mxu0 0
      %2986 = vmatmul.mubr.bf16.gmra.mxu0 %v1026
      %v2987 = vpop.f32.mrf.mxu0
      %v2988 = vadd.f32 0.0, %v2987
      %v2989 = vpop.f32.mrf.mxu0
      %v2990 = vadd.f32 0.0, %v2989
      %v2991 = vpop.f32.mrf.mxu0
      %v2992 = vadd.f32 0.0, %v2991
      %v2993 = vpop.f32.mrf.mxu0
      %v2994 = vadd.f32 0.0, %v2993
      %2995 = vmatprep.mubr.bf16.mxu0 0
      %2996 = vmatmul.mubr.bf16.gmra.mxu0 %v1029
      %v2997 = vpop.f32.mrf.mxu0
      %v2998 = vadd.f32 0.0, %v2997
      %v2999 = vpop.f32.mrf.mxu0
      %v3000 = vadd.f32 0.0, %v2999
      %v3001 = vpop.f32.mrf.mxu0
      %v3002 = vadd.f32 0.0, %v3001
      %v3003 = vpop.f32.mrf.mxu0
      %v3004 = vadd.f32 0.0, %v3003
      %3005 = vmatprep.mubr.bf16.mxu0 0
      %3006 = vmatmul.mubr.bf16.gmra.mxu0 %v1032
      %v3007 = vpop.f32.mrf.mxu0
      %v3008 = vadd.f32 0.0, %v3007
      %v3009 = vpop.f32.mrf.mxu0
      %v3010 = vadd.f32 0.0, %v3009
      %v3011 = vpop.f32.mrf.mxu0
      %v3012 = vadd.f32 0.0, %v3011
      %v3013 = vpop.f32.mrf.mxu0
      %v3014 = vadd.f32 0.0, %v3013
      %3015 = vmatprep.mubr.bf16.mxu0 0
      %3016 = vmatmul.mubr.bf16.gmra.mxu0 %v1035
      %v3017 = vpop.f32.mrf.mxu0
      %v3018 = vadd.f32 0.0, %v3017
      %v3019 = vpop.f32.mrf.mxu0
      %v3020 = vadd.f32 0.0, %v3019
      %v3021 = vpop.f32.mrf.mxu0
      %v3022 = vadd.f32 0.0, %v3021
      %v3023 = vpop.f32.mrf.mxu0
      %v3024 = vadd.f32 0.0, %v3023
      %3025 = vmatprep.mubr.bf16.mxu0 0
      %3026 = vmatmul.mubr.bf16.gmra.mxu0 %v1038
      %v3027 = vpop.f32.mrf.mxu0
      %v3028 = vadd.f32 0.0, %v3027
      %v3029 = vpop.f32.mrf.mxu0
      %v3030 = vadd.f32 0.0, %v3029
      %v3031 = vpop.f32.mrf.mxu0
      %v3032 = vadd.f32 0.0, %v3031
      %v3033 = vpop.f32.mrf.mxu0
      %v3034 = vadd.f32 0.0, %v3033
      %3035 = vmatprep.mubr.bf16.mxu0 0
      %3036 = vmatmul.mubr.bf16.gmra.mxu0 %v1041
      %v3037 = vpop.f32.mrf.mxu0
      %v3038 = vadd.f32 0.0, %v3037
      %v3039 = vpop.f32.mrf.mxu0
      %v3040 = vadd.f32 0.0, %v3039
      %v3041 = vpop.f32.mrf.mxu0
      %v3042 = vadd.f32 0.0, %v3041
      %v3043 = vpop.f32.mrf.mxu0
      %v3044 = vadd.f32 0.0, %v3043
      %3045 = vmatprep.mubr.bf16.mxu0 0
      %3046 = vmatmul.mubr.bf16.gmra.mxu0 %v1044
      %v3047 = vpop.f32.mrf.mxu0
      %v3048 = vadd.f32 0.0, %v3047
      %v3049 = vpop.f32.mrf.mxu0
      %v3050 = vadd.f32 0.0, %v3049
      %v3051 = vpop.f32.mrf.mxu0
      %v3052 = vadd.f32 0.0, %v3051
      %v3053 = vpop.f32.mrf.mxu0
      %v3054 = vadd.f32 0.0, %v3053
      %3055 = vmatprep.mubr.bf16.mxu0 0
      %3056 = vmatmul.mubr.bf16.gmra.mxu0 %v1047
      %v3057 = vpop.f32.mrf.mxu0
      %v3058 = vadd.f32 0.0, %v3057
      %v3059 = vpop.f32.mrf.mxu0
      %v3060 = vadd.f32 0.0, %v3059
      %v3061 = vpop.f32.mrf.mxu0
      %v3062 = vadd.f32 0.0, %v3061
      %v3063 = vpop.f32.mrf.mxu0
      %v3064 = vadd.f32 0.0, %v3063
      %3065 = vmatprep.mubr.bf16.mxu0 0
      %3066 = vmatmul.mubr.bf16.gmra.mxu0 %v1050
      %v3067 = vpop.f32.mrf.mxu0
      %v3068 = vadd.f32 0.0, %v3067
      %v3069 = vpop.f32.mrf.mxu0
      %v3070 = vadd.f32 0.0, %v3069
      %v3071 = vpop.f32.mrf.mxu0
      %v3072 = vadd.f32 0.0, %v3071
      %v3073 = vpop.f32.mrf.mxu0
      %v3074 = vadd.f32 0.0, %v3073
      %3075 = vmatprep.mubr.bf16.mxu0 0
      %3076 = vmatmul.mubr.bf16.gmra.mxu0 %v1053
      %v3077 = vpop.f32.mrf.mxu0
      %v3078 = vadd.f32 0.0, %v3077
      %v3079 = vpop.f32.mrf.mxu0
      %v3080 = vadd.f32 0.0, %v3079
      %v3081 = vpop.f32.mrf.mxu0
      %v3082 = vadd.f32 0.0, %v3081
      %v3083 = vpop.f32.mrf.mxu0
      %v3084 = vadd.f32 0.0, %v3083
      %3085 = vmatprep.mubr.bf16.mxu0 0
      %3086 = vmatmul.mubr.bf16.gmra.mxu0 %v1056
      %v3087 = vpop.f32.mrf.mxu0
      %v3088 = vadd.f32 0.0, %v3087
      %v3089 = vpop.f32.mrf.mxu0
      %v3090 = vadd.f32 0.0, %v3089
      %v3091 = vpop.f32.mrf.mxu0
      %v3092 = vadd.f32 0.0, %v3091
      %v3093 = vpop.f32.mrf.mxu0
      %v3094 = vadd.f32 0.0, %v3093
      %3095 = vdwg.mxu0
      %vm3224 = vcmask 1046528
      %v3225 = vrot.slane %v1785, 1
      %v3226 = vrot.slane %v1789, 1
      %v3227 = vsel %vm3224, %v3225, %v3226
      %v3228 = vrot.slane %v1795, 1
      %v3229 = vsel %vm3224, %v3226, %v3228
      %v3230 = vrot.slane %v1799, 1
      %v3231 = vsel %vm3224, %v3228, %v3230
      %v3232 = vrot.slane %v1805, 1
      %v3233 = vrot.slane %v1809, 1
      %v3234 = vsel %vm3224, %v3232, %v3233
      %v3235 = vrot.slane %v1815, 1
      %v3236 = vsel %vm3224, %v3233, %v3235
      %v3237 = vrot.slane %v1819, 1
      %v3238 = vsel %vm3224, %v3235, %v3237
      %v3239 = vrot.slane %v1825, 1
      %v3240 = vrot.slane %v1829, 1
      %v3241 = vsel %vm3224, %v3239, %v3240
      %v3242 = vrot.slane %v1835, 1
      %v3243 = vsel %vm3224, %v3240, %v3242
      %v3244 = vrot.slane %v1839, 1
      %v3245 = vsel %vm3224, %v3242, %v3244
      %v3246 = vrot.slane %v1845, 1
      %v3247 = vrot.slane %v1849, 1
      %v3248 = vsel %vm3224, %v3246, %v3247
      %v3249 = vrot.slane %v1855, 1
      %v3250 = vsel %vm3224, %v3247, %v3249
      %v3251 = vrot.slane %v1859, 1
      %v3252 = vsel %vm3224, %v3249, %v3251
      %v3253 = vrot.slane %v1865, 1
      %v3254 = vrot.slane %v1869, 1
      %v3255 = vsel %vm3224, %v3253, %v3254
      %v3256 = vrot.slane %v1875, 1
      %v3257 = vsel %vm3224, %v3254, %v3256
      %v3258 = vrot.slane %v1879, 1
      %v3259 = vsel %vm3224, %v3256, %v3258
      %v3260 = vrot.slane %v1885, 1
      %v3261 = vrot.slane %v1889, 1
      %v3262 = vsel %vm3224, %v3260, %v3261
      %v3263 = vrot.slane %v1895, 1
      %v3264 = vsel %vm3224, %v3261, %v3263
      %v3265 = vrot.slane %v1899, 1
      %v3266 = vsel %vm3224, %v3263, %v3265
      %v3267 = vrot.slane %v1905, 1
      %v3268 = vrot.slane %v1909, 1
      %v3269 = vsel %vm3224, %v3267, %v3268
      %v3270 = vrot.slane %v1915, 1
      %v3271 = vsel %vm3224, %v3268, %v3270
      %v3272 = vrot.slane %v1919, 1
      %v3273 = vsel %vm3224, %v3270, %v3272
      %v3274 = vrot.slane %v1925, 1
      %v3275 = vrot.slane %v1929, 1
      %v3276 = vsel %vm3224, %v3274, %v3275
      %v3277 = vrot.slane %v1935, 1
      %v3278 = vsel %vm3224, %v3275, %v3277
      %v3279 = vrot.slane %v1939, 1
      %v3280 = vsel %vm3224, %v3277, %v3279
      %v3281 = vrot.slane %v1945, 1
      %v3282 = vrot.slane %v1949, 1
      %v3283 = vsel %vm3224, %v3281, %v3282
      %v3284 = vrot.slane %v1955, 1
      %v3285 = vsel %vm3224, %v3282, %v3284
      %v3286 = vrot.slane %v1959, 1
      %v3287 = vsel %vm3224, %v3284, %v3286
      %v3288 = vrot.slane %v1965, 1
      %v3289 = vrot.slane %v1969, 1
      %v3290 = vsel %vm3224, %v3288, %v3289
      %v3291 = vrot.slane %v1975, 1
      %v3292 = vsel %vm3224, %v3289, %v3291
      %v3293 = vrot.slane %v1979, 1
      %v3294 = vsel %vm3224, %v3291, %v3293
      %v3295 = vrot.slane %v1985, 1
      %v3296 = vrot.slane %v1989, 1
      %v3297 = vsel %vm3224, %v3295, %v3296
      %v3298 = vrot.slane %v1995, 1
      %v3299 = vsel %vm3224, %v3296, %v3298
      %v3300 = vrot.slane %v1999, 1
      %v3301 = vsel %vm3224, %v3298, %v3300
      %v3302 = vrot.slane %v2005, 1
      %v3303 = vrot.slane %v2009, 1
      %v3304 = vsel %vm3224, %v3302, %v3303
      %v3305 = vrot.slane %v2015, 1
      %v3306 = vsel %vm3224, %v3303, %v3305
      %v3307 = vrot.slane %v2019, 1
      %v3308 = vsel %vm3224, %v3305, %v3307
      %v3309 = vrot.slane %v2025, 1
      %v3310 = vrot.slane %v2029, 1
      %v3311 = vsel %vm3224, %v3309, %v3310
      %v3312 = vrot.slane %v2035, 1
      %v3313 = vsel %vm3224, %v3310, %v3312
      %v3314 = vrot.slane %v2039, 1
      %v3315 = vsel %vm3224, %v3312, %v3314
      %v3316 = vrot.slane %v2045, 1
      %v3317 = vrot.slane %v2049, 1
      %v3318 = vsel %vm3224, %v3316, %v3317
      %v3319 = vrot.slane %v2055, 1
      %v3320 = vsel %vm3224, %v3317, %v3319
      %v3321 = vrot.slane %v2059, 1
      %v3322 = vsel %vm3224, %v3319, %v3321
      %v3323 = vrot.slane %v2065, 1
      %v3324 = vrot.slane %v2069, 1
      %v3325 = vsel %vm3224, %v3323, %v3324
      %v3326 = vrot.slane %v2075, 1
      %v3327 = vsel %vm3224, %v3324, %v3326
      %v3328 = vrot.slane %v2079, 1
      %v3329 = vsel %vm3224, %v3326, %v3328
      %v3330 = vrot.slane %v2085, 1
      %v3331 = vrot.slane %v2089, 1
      %v3332 = vsel %vm3224, %v3330, %v3331
      %v3333 = vrot.slane %v2095, 1
      %v3334 = vsel %vm3224, %v3331, %v3333
      %v3335 = vrot.slane %v2099, 1
      %v3336 = vsel %vm3224, %v3333, %v3335
      %v3337 = vrot.slane %v2105, 1
      %v3338 = vrot.slane %v2109, 1
      %v3339 = vsel %vm3224, %v3337, %v3338
      %v3340 = vrot.slane %v2115, 1
      %v3341 = vsel %vm3224, %v3338, %v3340
      %v3342 = vrot.slane %v2119, 1
      %v3343 = vsel %vm3224, %v3340, %v3342
      %v3344 = vrot.slane %v2125, 1
      %v3345 = vrot.slane %v2129, 1
      %v3346 = vsel %vm3224, %v3344, %v3345
      %v3347 = vrot.slane %v2135, 1
      %v3348 = vsel %vm3224, %v3345, %v3347
      %v3349 = vrot.slane %v2139, 1
      %v3350 = vsel %vm3224, %v3347, %v3349
      %v3351 = vrot.slane %v2145, 1
      %v3352 = vrot.slane %v2149, 1
      %v3353 = vsel %vm3224, %v3351, %v3352
      %v3354 = vrot.slane %v2155, 1
      %v3355 = vsel %vm3224, %v3352, %v3354
      %v3356 = vrot.slane %v2159, 1
      %v3357 = vsel %vm3224, %v3354, %v3356
      %v3358 = vrot.slane %v2165, 1
      %v3359 = vrot.slane %v2169, 1
      %v3360 = vsel %vm3224, %v3358, %v3359
      %v3361 = vrot.slane %v2175, 1
      %v3362 = vsel %vm3224, %v3359, %v3361
      %v3363 = vrot.slane %v2179, 1
      %v3364 = vsel %vm3224, %v3361, %v3363
      %v3365 = vrot.slane %v2185, 1
      %v3366 = vrot.slane %v2189, 1
      %v3367 = vsel %vm3224, %v3365, %v3366
      %v3368 = vrot.slane %v2195, 1
      %v3369 = vsel %vm3224, %v3366, %v3368
      %v3370 = vrot.slane %v2199, 1
      %v3371 = vsel %vm3224, %v3368, %v3370
      %v3372 = vrot.slane %v2205, 1
      %v3373 = vrot.slane %v2209, 1
      %v3374 = vsel %vm3224, %v3372, %v3373
      %v3375 = vrot.slane %v2215, 1
      %v3376 = vsel %vm3224, %v3373, %v3375
      %v3377 = vrot.slane %v2219, 1
      %v3378 = vsel %vm3224, %v3375, %v3377
      %v3379 = vrot.slane %v2225, 1
      %v3380 = vrot.slane %v2229, 1
      %v3381 = vsel %vm3224, %v3379, %v3380
      %v3382 = vrot.slane %v2235, 1
      %v3383 = vsel %vm3224, %v3380, %v3382
      %v3384 = vrot.slane %v2239, 1
      %v3385 = vsel %vm3224, %v3382, %v3384
      %v3386 = vrot.slane %v2245, 1
      %v3387 = vrot.slane %v2249, 1
      %v3388 = vsel %vm3224, %v3386, %v3387
      %v3389 = vrot.slane %v2255, 1
      %v3390 = vsel %vm3224, %v3387, %v3389
      %v3391 = vrot.slane %v2259, 1
      %v3392 = vsel %vm3224, %v3389, %v3391
      %v3393 = vrot.slane %v2265, 1
      %v3394 = vrot.slane %v2269, 1
      %v3395 = vsel %vm3224, %v3393, %v3394
      %v3396 = vrot.slane %v2275, 1
      %v3397 = vsel %vm3224, %v3394, %v3396
      %v3398 = vrot.slane %v2279, 1
      %v3399 = vsel %vm3224, %v3396, %v3398
      %v3400 = vrot.slane %v2285, 1
      %v3401 = vrot.slane %v2289, 1
      %v3402 = vsel %vm3224, %v3400, %v3401
      %v3403 = vrot.slane %v2295, 1
      %v3404 = vsel %vm3224, %v3401, %v3403
      %v3405 = vrot.slane %v2299, 1
      %v3406 = vsel %vm3224, %v3403, %v3405
      %v3407 = vrot.slane %v2305, 1
      %v3408 = vrot.slane %v2309, 1
      %v3409 = vsel %vm3224, %v3407, %v3408
      %v3410 = vrot.slane %v2315, 1
      %v3411 = vsel %vm3224, %v3408, %v3410
      %v3412 = vrot.slane %v2319, 1
      %v3413 = vsel %vm3224, %v3410, %v3412
      %v3414 = vrot.slane %v2325, 1
      %v3415 = vrot.slane %v2329, 1
      %v3416 = vsel %vm3224, %v3414, %v3415
      %v3417 = vrot.slane %v2335, 1
      %v3418 = vsel %vm3224, %v3415, %v3417
      %v3419 = vrot.slane %v2339, 1
      %v3420 = vsel %vm3224, %v3417, %v3419
      %v3421 = vrot.slane %v2345, 1
      %v3422 = vrot.slane %v2349, 1
      %v3423 = vsel %vm3224, %v3421, %v3422
      %v3424 = vrot.slane %v2355, 1
      %v3425 = vsel %vm3224, %v3422, %v3424
      %v3426 = vrot.slane %v2359, 1
      %v3427 = vsel %vm3224, %v3424, %v3426
      %v3428 = vrot.slane %v2365, 1
      %v3429 = vrot.slane %v2369, 1
      %v3430 = vsel %vm3224, %v3428, %v3429
      %v3431 = vrot.slane %v2375, 1
      %v3432 = vsel %vm3224, %v3429, %v3431
      %v3433 = vrot.slane %v2379, 1
      %v3434 = vsel %vm3224, %v3431, %v3433
      %v3435 = vrot.slane %v2385, 1
      %v3436 = vrot.slane %v2389, 1
      %v3437 = vsel %vm3224, %v3435, %v3436
      %v3438 = vrot.slane %v2395, 1
      %v3439 = vsel %vm3224, %v3436, %v3438
      %v3440 = vrot.slane %v2399, 1
      %v3441 = vsel %vm3224, %v3438, %v3440
      %v3442 = vrot.slane %v2405, 1
      %v3443 = vrot.slane %v2409, 1
      %v3444 = vsel %vm3224, %v3442, %v3443
      %v3445 = vrot.slane %v2415, 1
      %v3446 = vsel %vm3224, %v3443, %v3445
      %v3447 = vrot.slane %v2419, 1
      %v3448 = vsel %vm3224, %v3445, %v3447
      %v3577 = vadd.f32 %v1112, %v3227
      %v3578 = vadd.f32 %v1116, %v3229
      %v3579 = vadd.f32 %v1122, %v3231
      %v3580 = vadd.f32 %v1126, %v3230
      %v3581 = vadd.f32 %v1132, %v3234
      %v3582 = vadd.f32 %v1136, %v3236
      %v3583 = vadd.f32 %v1142, %v3238
      %v3584 = vadd.f32 %v1146, %v3237
      %v3585 = vadd.f32 %v1152, %v3241
      %v3586 = vadd.f32 %v1156, %v3243
      %v3587 = vadd.f32 %v1162, %v3245
      %v3588 = vadd.f32 %v1166, %v3244
      %v3589 = vadd.f32 %v1172, %v3248
      %v3590 = vadd.f32 %v1176, %v3250
      %v3591 = vadd.f32 %v1182, %v3252
      %v3592 = vadd.f32 %v1186, %v3251
      %v3593 = vadd.f32 %v1192, %v3255
      %v3594 = vadd.f32 %v1196, %v3257
      %v3595 = vadd.f32 %v1202, %v3259
      %v3596 = vadd.f32 %v1206, %v3258
      %v3597 = vadd.f32 %v1212, %v3262
      %v3598 = vadd.f32 %v1216, %v3264
      %v3599 = vadd.f32 %v1222, %v3266
      %v3600 = vadd.f32 %v1226, %v3265
      %v3601 = vadd.f32 %v1232, %v3269
      %v3602 = vadd.f32 %v1236, %v3271
      %v3603 = vadd.f32 %v1242, %v3273
      %v3604 = vadd.f32 %v1246, %v3272
      %v3605 = vadd.f32 %v1252, %v3276
      %v3606 = vadd.f32 %v1256, %v3278
      %v3607 = vadd.f32 %v1262, %v3280
      %v3608 = vadd.f32 %v1266, %v3279
      %v3609 = vadd.f32 %v1272, %v3283
      %v3610 = vadd.f32 %v1276, %v3285
      %v3611 = vadd.f32 %v1282, %v3287
      %v3612 = vadd.f32 %v1286, %v3286
      %v3613 = vadd.f32 %v1292, %v3290
      %v3614 = vadd.f32 %v1296, %v3292
      %v3615 = vadd.f32 %v1302, %v3294
      %v3616 = vadd.f32 %v1306, %v3293
      %v3617 = vadd.f32 %v1312, %v3297
      %v3618 = vadd.f32 %v1316, %v3299
      %v3619 = vadd.f32 %v1322, %v3301
      %v3620 = vadd.f32 %v1326, %v3300
      %v3621 = vadd.f32 %v1332, %v3304
      %v3622 = vadd.f32 %v1336, %v3306
      %v3623 = vadd.f32 %v1342, %v3308
      %v3624 = vadd.f32 %v1346, %v3307
      %v3625 = vadd.f32 %v1352, %v3311
      %v3626 = vadd.f32 %v1356, %v3313
      %v3627 = vadd.f32 %v1362, %v3315
      %v3628 = vadd.f32 %v1366, %v3314
      %v3629 = vadd.f32 %v1372, %v3318
      %v3630 = vadd.f32 %v1376, %v3320
      %v3631 = vadd.f32 %v1382, %v3322
      %v3632 = vadd.f32 %v1386, %v3321
      %v3633 = vadd.f32 %v1392, %v3325
      %v3634 = vadd.f32 %v1396, %v3327
      %v3635 = vadd.f32 %v1402, %v3329
      %v3636 = vadd.f32 %v1406, %v3328
      %v3637 = vadd.f32 %v1412, %v3332
      %v3638 = vadd.f32 %v1416, %v3334
      %v3639 = vadd.f32 %v1422, %v3336
      %v3640 = vadd.f32 %v1426, %v3335
      %v3641 = vadd.f32 %v1432, %v3339
      %v3642 = vadd.f32 %v1436, %v3341
      %v3643 = vadd.f32 %v1442, %v3343
      %v3644 = vadd.f32 %v1446, %v3342
      %v3645 = vadd.f32 %v1452, %v3346
      %v3646 = vadd.f32 %v1456, %v3348
      %v3647 = vadd.f32 %v1462, %v3350
      %v3648 = vadd.f32 %v1466, %v3349
      %v3649 = vadd.f32 %v1472, %v3353
      %v3650 = vadd.f32 %v1476, %v3355
      %v3651 = vadd.f32 %v1482, %v3357
      %v3652 = vadd.f32 %v1486, %v3356
      %v3653 = vadd.f32 %v1492, %v3360
      %v3654 = vadd.f32 %v1496, %v3362
      %v3655 = vadd.f32 %v1502, %v3364
      %v3656 = vadd.f32 %v1506, %v3363
      %v3657 = vadd.f32 %v1512, %v3367
      %v3658 = vadd.f32 %v1516, %v3369
      %v3659 = vadd.f32 %v1522, %v3371
      %v3660 = vadd.f32 %v1526, %v3370
      %v3661 = vadd.f32 %v1532, %v3374
      %v3662 = vadd.f32 %v1536, %v3376
      %v3663 = vadd.f32 %v1542, %v3378
      %v3664 = vadd.f32 %v1546, %v3377
      %v3665 = vadd.f32 %v1552, %v3381
      %v3666 = vadd.f32 %v1556, %v3383
      %v3667 = vadd.f32 %v1562, %v3385
      %v3668 = vadd.f32 %v1566, %v3384
      %v3669 = vadd.f32 %v1572, %v3388
      %v3670 = vadd.f32 %v1576, %v3390
      %v3671 = vadd.f32 %v1582, %v3392
      %v3672 = vadd.f32 %v1586, %v3391
      %v3673 = vadd.f32 %v1592, %v3395
      %v3674 = vadd.f32 %v1596, %v3397
      %v3675 = vadd.f32 %v1602, %v3399
      %v3676 = vadd.f32 %v1606, %v3398
      %v3677 = vadd.f32 %v1612, %v3402
      %v3678 = vadd.f32 %v1616, %v3404
      %v3679 = vadd.f32 %v1622, %v3406
      %v3680 = vadd.f32 %v1626, %v3405
      %v3681 = vadd.f32 %v1632, %v3409
      %v3682 = vadd.f32 %v1636, %v3411
      %v3683 = vadd.f32 %v1642, %v3413
      %v3684 = vadd.f32 %v1646, %v3412
      %v3685 = vadd.f32 %v1652, %v3416
      %v3686 = vadd.f32 %v1656, %v3418
      %v3687 = vadd.f32 %v1662, %v3420
      %v3688 = vadd.f32 %v1666, %v3419
      %v3689 = vadd.f32 %v1672, %v3423
      %v3690 = vadd.f32 %v1676, %v3425
      %v3691 = vadd.f32 %v1682, %v3427
      %v3692 = vadd.f32 %v1686, %v3426
      %v3693 = vadd.f32 %v1692, %v3430
      %v3694 = vadd.f32 %v1696, %v3432
      %v3695 = vadd.f32 %v1702, %v3434
      %v3696 = vadd.f32 %v1706, %v3433
      %v3697 = vadd.f32 %v1712, %v3437
      %v3698 = vadd.f32 %v1716, %v3439
      %v3699 = vadd.f32 %v1722, %v3441
      %v3700 = vadd.f32 %v1726, %v3440
      %v3701 = vadd.f32 %v1732, %v3444
      %v3702 = vadd.f32 %v1736, %v3446
      %v3703 = vadd.f32 %v1742, %v3448
      %v3704 = vadd.f32 %v1746, %v3447
      %v3833 = vrot.slane %v2458, 2
      %v3834 = vrot.slane %v2462, 2
      %v3835 = vsel %vm1058, %v3833, %v3834
      %v3836 = vrot.slane %v2468, 2
      %v3837 = vsel %vm1058, %v3834, %v3836
      %v3838 = vrot.slane %v2472, 2
      %v3839 = vsel %vm1058, %v3836, %v3838
      %v3840 = vrot.slane %v2478, 2
      %v3841 = vrot.slane %v2482, 2
      %v3842 = vsel %vm1058, %v3840, %v3841
      %v3843 = vrot.slane %v2488, 2
      %v3844 = vsel %vm1058, %v3841, %v3843
      %v3845 = vrot.slane %v2492, 2
      %v3846 = vsel %vm1058, %v3843, %v3845
      %v3847 = vrot.slane %v2498, 2
      %v3848 = vrot.slane %v2502, 2
      %v3849 = vsel %vm1058, %v3847, %v3848
      %v3850 = vrot.slane %v2508, 2
      %v3851 = vsel %vm1058, %v3848, %v3850
      %v3852 = vrot.slane %v2512, 2
      %v3853 = vsel %vm1058, %v3850, %v3852
      %v3854 = vrot.slane %v2518, 2
      %v3855 = vrot.slane %v2522, 2
      %v3856 = vsel %vm1058, %v3854, %v3855
      %v3857 = vrot.slane %v2528, 2
      %v3858 = vsel %vm1058, %v3855, %v3857
      %v3859 = vrot.slane %v2532, 2
      %v3860 = vsel %vm1058, %v3857, %v3859
      %v3861 = vrot.slane %v2538, 2
      %v3862 = vrot.slane %v2542, 2
      %v3863 = vsel %vm1058, %v3861, %v3862
      %v3864 = vrot.slane %v2548, 2
      %v3865 = vsel %vm1058, %v3862, %v3864
      %v3866 = vrot.slane %v2552, 2
      %v3867 = vsel %vm1058, %v3864, %v3866
      %v3868 = vrot.slane %v2558, 2
      %v3869 = vrot.slane %v2562, 2
      %v3870 = vsel %vm1058, %v3868, %v3869
      %v3871 = vrot.slane %v2568, 2
      %v3872 = vsel %vm1058, %v3869, %v3871
      %v3873 = vrot.slane %v2572, 2
      %v3874 = vsel %vm1058, %v3871, %v3873
      %v3875 = vrot.slane %v2578, 2
      %v3876 = vrot.slane %v2582, 2
      %v3877 = vsel %vm1058, %v3875, %v3876
      %v3878 = vrot.slane %v2588, 2
      %v3879 = vsel %vm1058, %v3876, %v3878
      %v3880 = vrot.slane %v2592, 2
      %v3881 = vsel %vm1058, %v3878, %v3880
      %v3882 = vrot.slane %v2598, 2
      %v3883 = vrot.slane %v2602, 2
      %v3884 = vsel %vm1058, %v3882, %v3883
      %v3885 = vrot.slane %v2608, 2
      %v3886 = vsel %vm1058, %v3883, %v3885
      %v3887 = vrot.slane %v2612, 2
      %v3888 = vsel %vm1058, %v3885, %v3887
      %v3889 = vrot.slane %v2618, 2
      %v3890 = vrot.slane %v2622, 2
      %v3891 = vsel %vm1058, %v3889, %v3890
      %v3892 = vrot.slane %v2628, 2
      %v3893 = vsel %vm1058, %v3890, %v3892
      %v3894 = vrot.slane %v2632, 2
      %v3895 = vsel %vm1058, %v3892, %v3894
      %v3896 = vrot.slane %v2638, 2
      %v3897 = vrot.slane %v2642, 2
      %v3898 = vsel %vm1058, %v3896, %v3897
      %v3899 = vrot.slane %v2648, 2
      %v3900 = vsel %vm1058, %v3897, %v3899
      %v3901 = vrot.slane %v2652, 2
      %v3902 = vsel %vm1058, %v3899, %v3901
      %v3903 = vrot.slane %v2658, 2
      %v3904 = vrot.slane %v2662, 2
      %v3905 = vsel %vm1058, %v3903, %v3904
      %v3906 = vrot.slane %v2668, 2
      %v3907 = vsel %vm1058, %v3904, %v3906
      %v3908 = vrot.slane %v2672, 2
      %v3909 = vsel %vm1058, %v3906, %v3908
      %v3910 = vrot.slane %v2678, 2
      %v3911 = vrot.slane %v2682, 2
      %v3912 = vsel %vm1058, %v3910, %v3911
      %v3913 = vrot.slane %v2688, 2
      %v3914 = vsel %vm1058, %v3911, %v3913
      %v3915 = vrot.slane %v2692, 2
      %v3916 = vsel %vm1058, %v3913, %v3915
      %v3917 = vrot.slane %v2698, 2
      %v3918 = vrot.slane %v2702, 2
      %v3919 = vsel %vm1058, %v3917, %v3918
      %v3920 = vrot.slane %v2708, 2
      %v3921 = vsel %vm1058, %v3918, %v3920
      %v3922 = vrot.slane %v2712, 2
      %v3923 = vsel %vm1058, %v3920, %v3922
      %v3924 = vrot.slane %v2718, 2
      %v3925 = vrot.slane %v2722, 2
      %v3926 = vsel %vm1058, %v3924, %v3925
      %v3927 = vrot.slane %v2728, 2
      %v3928 = vsel %vm1058, %v3925, %v3927
      %v3929 = vrot.slane %v2732, 2
      %v3930 = vsel %vm1058, %v3927, %v3929
      %v3931 = vrot.slane %v2738, 2
      %v3932 = vrot.slane %v2742, 2
      %v3933 = vsel %vm1058, %v3931, %v3932
      %v3934 = vrot.slane %v2748, 2
      %v3935 = vsel %vm1058, %v3932, %v3934
      %v3936 = vrot.slane %v2752, 2
      %v3937 = vsel %vm1058, %v3934, %v3936
      %v3938 = vrot.slane %v2758, 2
      %v3939 = vrot.slane %v2762, 2
      %v3940 = vsel %vm1058, %v3938, %v3939
      %v3941 = vrot.slane %v2768, 2
      %v3942 = vsel %vm1058, %v3939, %v3941
      %v3943 = vrot.slane %v2772, 2
      %v3944 = vsel %vm1058, %v3941, %v3943
      %v3945 = vrot.slane %v2778, 2
      %v3946 = vrot.slane %v2782, 2
      %v3947 = vsel %vm1058, %v3945, %v3946
      %v3948 = vrot.slane %v2788, 2
      %v3949 = vsel %vm1058, %v3946, %v3948
      %v3950 = vrot.slane %v2792, 2
      %v3951 = vsel %vm1058, %v3948, %v3950
      %v3952 = vrot.slane %v2798, 2
      %v3953 = vrot.slane %v2802, 2
      %v3954 = vsel %vm1058, %v3952, %v3953
      %v3955 = vrot.slane %v2808, 2
      %v3956 = vsel %vm1058, %v3953, %v3955
      %v3957 = vrot.slane %v2812, 2
      %v3958 = vsel %vm1058, %v3955, %v3957
      %v3959 = vrot.slane %v2818, 2
      %v3960 = vrot.slane %v2822, 2
      %v3961 = vsel %vm1058, %v3959, %v3960
      %v3962 = vrot.slane %v2828, 2
      %v3963 = vsel %vm1058, %v3960, %v3962
      %v3964 = vrot.slane %v2832, 2
      %v3965 = vsel %vm1058, %v3962, %v3964
      %v3966 = vrot.slane %v2838, 2
      %v3967 = vrot.slane %v2842, 2
      %v3968 = vsel %vm1058, %v3966, %v3967
      %v3969 = vrot.slane %v2848, 2
      %v3970 = vsel %vm1058, %v3967, %v3969
      %v3971 = vrot.slane %v2852, 2
      %v3972 = vsel %vm1058, %v3969, %v3971
      %v3973 = vrot.slane %v2858, 2
      %v3974 = vrot.slane %v2862, 2
      %v3975 = vsel %vm1058, %v3973, %v3974
      %v3976 = vrot.slane %v2868, 2
      %v3977 = vsel %vm1058, %v3974, %v3976
      %v3978 = vrot.slane %v2872, 2
      %v3979 = vsel %vm1058, %v3976, %v3978
      %v3980 = vrot.slane %v2878, 2
      %v3981 = vrot.slane %v2882, 2
      %v3982 = vsel %vm1058, %v3980, %v3981
      %v3983 = vrot.slane %v2888, 2
      %v3984 = vsel %vm1058, %v3981, %v3983
      %v3985 = vrot.slane %v2892, 2
      %v3986 = vsel %vm1058, %v3983, %v3985
      %v3987 = vrot.slane %v2898, 2
      %v3988 = vrot.slane %v2902, 2
      %v3989 = vsel %vm1058, %v3987, %v3988
      %v3990 = vrot.slane %v2908, 2
      %v3991 = vsel %vm1058, %v3988, %v3990
      %v3992 = vrot.slane %v2912, 2
      %v3993 = vsel %vm1058, %v3990, %v3992
      %v3994 = vrot.slane %v2918, 2
      %v3995 = vrot.slane %v2922, 2
      %v3996 = vsel %vm1058, %v3994, %v3995
      %v3997 = vrot.slane %v2928, 2
      %v3998 = vsel %vm1058, %v3995, %v3997
      %v3999 = vrot.slane %v2932, 2
      %v4000 = vsel %vm1058, %v3997, %v3999
      %v4001 = vrot.slane %v2938, 2
      %v4002 = vrot.slane %v2942, 2
      %v4003 = vsel %vm1058, %v4001, %v4002
      %v4004 = vrot.slane %v2948, 2
      %v4005 = vsel %vm1058, %v4002, %v4004
      %v4006 = vrot.slane %v2952, 2
      %v4007 = vsel %vm1058, %v4004, %v4006
      %v4008 = vrot.slane %v2958, 2
      %v4009 = vrot.slane %v2962, 2
      %v4010 = vsel %vm1058, %v4008, %v4009
      %v4011 = vrot.slane %v2968, 2
      %v4012 = vsel %vm1058, %v4009, %v4011
      %v4013 = vrot.slane %v2972, 2
      %v4014 = vsel %vm1058, %v4011, %v4013
      %v4015 = vrot.slane %v2978, 2
      %v4016 = vrot.slane %v2982, 2
      %v4017 = vsel %vm1058, %v4015, %v4016
      %v4018 = vrot.slane %v2988, 2
      %v4019 = vsel %vm1058, %v4016, %v4018
      %v4020 = vrot.slane %v2992, 2
      %v4021 = vsel %vm1058, %v4018, %v4020
      %v4022 = vrot.slane %v2998, 2
      %v4023 = vrot.slane %v3002, 2
      %v4024 = vsel %vm1058, %v4022, %v4023
      %v4025 = vrot.slane %v3008, 2
      %v4026 = vsel %vm1058, %v4023, %v4025
      %v4027 = vrot.slane %v3012, 2
      %v4028 = vsel %vm1058, %v4025, %v4027
      %v4029 = vrot.slane %v3018, 2
      %v4030 = vrot.slane %v3022, 2
      %v4031 = vsel %vm1058, %v4029, %v4030
      %v4032 = vrot.slane %v3028, 2
      %v4033 = vsel %vm1058, %v4030, %v4032
      %v4034 = vrot.slane %v3032, 2
      %v4035 = vsel %vm1058, %v4032, %v4034
      %v4036 = vrot.slane %v3038, 2
      %v4037 = vrot.slane %v3042, 2
      %v4038 = vsel %vm1058, %v4036, %v4037
      %v4039 = vrot.slane %v3048, 2
      %v4040 = vsel %vm1058, %v4037, %v4039
      %v4041 = vrot.slane %v3052, 2
      %v4042 = vsel %vm1058, %v4039, %v4041
      %v4043 = vrot.slane %v3058, 2
      %v4044 = vrot.slane %v3062, 2
      %v4045 = vsel %vm1058, %v4043, %v4044
      %v4046 = vrot.slane %v3068, 2
      %v4047 = vsel %vm1058, %v4044, %v4046
      %v4048 = vrot.slane %v3072, 2
      %v4049 = vsel %vm1058, %v4046, %v4048
      %v4050 = vrot.slane %v3078, 2
      %v4051 = vrot.slane %v3082, 2
      %v4052 = vsel %vm1058, %v4050, %v4051
      %v4053 = vrot.slane %v3088, 2
      %v4054 = vsel %vm1058, %v4051, %v4053
      %v4055 = vrot.slane %v3092, 2
      %v4056 = vsel %vm1058, %v4053, %v4055
      %v4185 = vadd.f32 %v3577, %v3835
      %v4186 = vadd.f32 %v3578, %v3837
      %v4187 = vadd.f32 %v3579, %v3839
      %v4188 = vadd.f32 %v3580, %v3838
      %v4189 = vadd.f32 %v3581, %v3842
      %v4190 = vadd.f32 %v3582, %v3844
      %v4191 = vadd.f32 %v3583, %v3846
      %v4192 = vadd.f32 %v3584, %v3845
      %v4193 = vadd.f32 %v3585, %v3849
      %v4194 = vadd.f32 %v3586, %v3851
      %v4195 = vadd.f32 %v3587, %v3853
      %v4196 = vadd.f32 %v3588, %v3852
      %v4197 = vadd.f32 %v3589, %v3856
      %v4198 = vadd.f32 %v3590, %v3858
      %v4199 = vadd.f32 %v3591, %v3860
      %v4200 = vadd.f32 %v3592, %v3859
      %v4201 = vadd.f32 %v3593, %v3863
      %v4202 = vadd.f32 %v3594, %v3865
      %v4203 = vadd.f32 %v3595, %v3867
      %v4204 = vadd.f32 %v3596, %v3866
      %v4205 = vadd.f32 %v3597, %v3870
      %v4206 = vadd.f32 %v3598, %v3872
      %v4207 = vadd.f32 %v3599, %v3874
      %v4208 = vadd.f32 %v3600, %v3873
      %v4209 = vadd.f32 %v3601, %v3877
      %v4210 = vadd.f32 %v3602, %v3879
      %v4211 = vadd.f32 %v3603, %v3881
      %v4212 = vadd.f32 %v3604, %v3880
      %v4213 = vadd.f32 %v3605, %v3884
      %v4214 = vadd.f32 %v3606, %v3886
      %v4215 = vadd.f32 %v3607, %v3888
      %v4216 = vadd.f32 %v3608, %v3887
      %v4217 = vadd.f32 %v3609, %v3891
      %v4218 = vadd.f32 %v3610, %v3893
      %v4219 = vadd.f32 %v3611, %v3895
      %v4220 = vadd.f32 %v3612, %v3894
      %v4221 = vadd.f32 %v3613, %v3898
      %v4222 = vadd.f32 %v3614, %v3900
      %v4223 = vadd.f32 %v3615, %v3902
      %v4224 = vadd.f32 %v3616, %v3901
      %v4225 = vadd.f32 %v3617, %v3905
      %v4226 = vadd.f32 %v3618, %v3907
      %v4227 = vadd.f32 %v3619, %v3909
      %v4228 = vadd.f32 %v3620, %v3908
      %v4229 = vadd.f32 %v3621, %v3912
      %v4230 = vadd.f32 %v3622, %v3914
      %v4231 = vadd.f32 %v3623, %v3916
      %v4232 = vadd.f32 %v3624, %v3915
      %v4233 = vadd.f32 %v3625, %v3919
      %v4234 = vadd.f32 %v3626, %v3921
      %v4235 = vadd.f32 %v3627, %v3923
      %v4236 = vadd.f32 %v3628, %v3922
      %v4237 = vadd.f32 %v3629, %v3926
      %v4238 = vadd.f32 %v3630, %v3928
      %v4239 = vadd.f32 %v3631, %v3930
      %v4240 = vadd.f32 %v3632, %v3929
      %v4241 = vadd.f32 %v3633, %v3933
      %v4242 = vadd.f32 %v3634, %v3935
      %v4243 = vadd.f32 %v3635, %v3937
      %v4244 = vadd.f32 %v3636, %v3936
      %v4245 = vadd.f32 %v3637, %v3940
      %v4246 = vadd.f32 %v3638, %v3942
      %v4247 = vadd.f32 %v3639, %v3944
      %v4248 = vadd.f32 %v3640, %v3943
      %v4249 = vadd.f32 %v3641, %v3947
      %v4250 = vadd.f32 %v3642, %v3949
      %v4251 = vadd.f32 %v3643, %v3951
      %v4252 = vadd.f32 %v3644, %v3950
      %v4253 = vadd.f32 %v3645, %v3954
      %v4254 = vadd.f32 %v3646, %v3956
      %v4255 = vadd.f32 %v3647, %v3958
      %v4256 = vadd.f32 %v3648, %v3957
      %v4257 = vadd.f32 %v3649, %v3961
      %v4258 = vadd.f32 %v3650, %v3963
      %v4259 = vadd.f32 %v3651, %v3965
      %v4260 = vadd.f32 %v3652, %v3964
      %v4261 = vadd.f32 %v3653, %v3968
      %v4262 = vadd.f32 %v3654, %v3970
      %v4263 = vadd.f32 %v3655, %v3972
      %v4264 = vadd.f32 %v3656, %v3971
      %v4265 = vadd.f32 %v3657, %v3975
      %v4266 = vadd.f32 %v3658, %v3977
      %v4267 = vadd.f32 %v3659, %v3979
      %v4268 = vadd.f32 %v3660, %v3978
      %v4269 = vadd.f32 %v3661, %v3982
      %v4270 = vadd.f32 %v3662, %v3984
      %v4271 = vadd.f32 %v3663, %v3986
      %v4272 = vadd.f32 %v3664, %v3985
      %v4273 = vadd.f32 %v3665, %v3989
      %v4274 = vadd.f32 %v3666, %v3991
      %v4275 = vadd.f32 %v3667, %v3993
      %v4276 = vadd.f32 %v3668, %v3992
      %v4277 = vadd.f32 %v3669, %v3996
      %v4278 = vadd.f32 %v3670, %v3998
      %v4279 = vadd.f32 %v3671, %v4000
      %v4280 = vadd.f32 %v3672, %v3999
      %v4281 = vadd.f32 %v3673, %v4003
      %v4282 = vadd.f32 %v3674, %v4005
      %v4283 = vadd.f32 %v3675, %v4007
      %v4284 = vadd.f32 %v3676, %v4006
      %v4285 = vadd.f32 %v3677, %v4010
      %v4286 = vadd.f32 %v3678, %v4012
      %v4287 = vadd.f32 %v3679, %v4014
      %v4288 = vadd.f32 %v3680, %v4013
      %v4289 = vadd.f32 %v3681, %v4017
      %v4290 = vadd.f32 %v3682, %v4019
      %v4291 = vadd.f32 %v3683, %v4021
      %v4292 = vadd.f32 %v3684, %v4020
      %v4293 = vadd.f32 %v3685, %v4024
      %v4294 = vadd.f32 %v3686, %v4026
      %v4295 = vadd.f32 %v3687, %v4028
      %v4296 = vadd.f32 %v3688, %v4027
      %v4297 = vadd.f32 %v3689, %v4031
      %v4298 = vadd.f32 %v3690, %v4033
      %v4299 = vadd.f32 %v3691, %v4035
      %v4300 = vadd.f32 %v3692, %v4034
      %v4301 = vadd.f32 %v3693, %v4038
      %v4302 = vadd.f32 %v3694, %v4040
      %v4303 = vadd.f32 %v3695, %v4042
      %v4304 = vadd.f32 %v3696, %v4041
      %v4305 = vadd.f32 %v3697, %v4045
      %v4306 = vadd.f32 %v3698, %v4047
      %v4307 = vadd.f32 %v3699, %v4049
      %v4308 = vadd.f32 %v3700, %v4048
      %v4309 = vadd.f32 %v3701, %v4052
      %v4310 = vadd.f32 %v3702, %v4054
      %v4311 = vadd.f32 %v3703, %v4056
      %v4312 = vadd.f32 %v3704, %v4055
      %v4441 = vrot.slane %v1787, 1
      %v4442 = vrot.slane %v1791, 1
      %v4443 = vsel %vm3224, %v4441, %v4442
      %v4444 = vrot.slane %v1797, 1
      %v4445 = vsel %vm3224, %v4442, %v4444
      %v4446 = vrot.slane %v1801, 1
      %v4447 = vsel %vm3224, %v4444, %v4446
      %v4448 = vrot.slane %v1807, 1
      %v4449 = vrot.slane %v1811, 1
      %v4450 = vsel %vm3224, %v4448, %v4449
      %v4451 = vrot.slane %v1817, 1
      %v4452 = vsel %vm3224, %v4449, %v4451
      %v4453 = vrot.slane %v1821, 1
      %v4454 = vsel %vm3224, %v4451, %v4453
      %v4455 = vrot.slane %v1827, 1
      %v4456 = vrot.slane %v1831, 1
      %v4457 = vsel %vm3224, %v4455, %v4456
      %v4458 = vrot.slane %v1837, 1
      %v4459 = vsel %vm3224, %v4456, %v4458
      %v4460 = vrot.slane %v1841, 1
      %v4461 = vsel %vm3224, %v4458, %v4460
      %v4462 = vrot.slane %v1847, 1
      %v4463 = vrot.slane %v1851, 1
      %v4464 = vsel %vm3224, %v4462, %v4463
      %v4465 = vrot.slane %v1857, 1
      %v4466 = vsel %vm3224, %v4463, %v4465
      %v4467 = vrot.slane %v1861, 1
      %v4468 = vsel %vm3224, %v4465, %v4467
      %v4469 = vrot.slane %v1867, 1
      %v4470 = vrot.slane %v1871, 1
      %v4471 = vsel %vm3224, %v4469, %v4470
      %v4472 = vrot.slane %v1877, 1
      %v4473 = vsel %vm3224, %v4470, %v4472
      %v4474 = vrot.slane %v1881, 1
      %v4475 = vsel %vm3224, %v4472, %v4474
      %v4476 = vrot.slane %v1887, 1
      %v4477 = vrot.slane %v1891, 1
      %v4478 = vsel %vm3224, %v4476, %v4477
      %v4479 = vrot.slane %v1897, 1
      %v4480 = vsel %vm3224, %v4477, %v4479
      %v4481 = vrot.slane %v1901, 1
      %v4482 = vsel %vm3224, %v4479, %v4481
      %v4483 = vrot.slane %v1907, 1
      %v4484 = vrot.slane %v1911, 1
      %v4485 = vsel %vm3224, %v4483, %v4484
      %v4486 = vrot.slane %v1917, 1
      %v4487 = vsel %vm3224, %v4484, %v4486
      %v4488 = vrot.slane %v1921, 1
      %v4489 = vsel %vm3224, %v4486, %v4488
      %v4490 = vrot.slane %v1927, 1
      %v4491 = vrot.slane %v1931, 1
      %v4492 = vsel %vm3224, %v4490, %v4491
      %v4493 = vrot.slane %v1937, 1
      %v4494 = vsel %vm3224, %v4491, %v4493
      %v4495 = vrot.slane %v1941, 1
      %v4496 = vsel %vm3224, %v4493, %v4495
      %v4497 = vrot.slane %v1947, 1
      %v4498 = vrot.slane %v1951, 1
      %v4499 = vsel %vm3224, %v4497, %v4498
      %v4500 = vrot.slane %v1957, 1
      %v4501 = vsel %vm3224, %v4498, %v4500
      %v4502 = vrot.slane %v1961, 1
      %v4503 = vsel %vm3224, %v4500, %v4502
      %v4504 = vrot.slane %v1967, 1
      %v4505 = vrot.slane %v1971, 1
      %v4506 = vsel %vm3224, %v4504, %v4505
      %v4507 = vrot.slane %v1977, 1
      %v4508 = vsel %vm3224, %v4505, %v4507
      %v4509 = vrot.slane %v1981, 1
      %v4510 = vsel %vm3224, %v4507, %v4509
      %v4511 = vrot.slane %v1987, 1
      %v4512 = vrot.slane %v1991, 1
      %v4513 = vsel %vm3224, %v4511, %v4512
      %v4514 = vrot.slane %v1997, 1
      %v4515 = vsel %vm3224, %v4512, %v4514
      %v4516 = vrot.slane %v2001, 1
      %v4517 = vsel %vm3224, %v4514, %v4516
      %v4518 = vrot.slane %v2007, 1
      %v4519 = vrot.slane %v2011, 1
      %v4520 = vsel %vm3224, %v4518, %v4519
      %v4521 = vrot.slane %v2017, 1
      %v4522 = vsel %vm3224, %v4519, %v4521
      %v4523 = vrot.slane %v2021, 1
      %v4524 = vsel %vm3224, %v4521, %v4523
      %v4525 = vrot.slane %v2027, 1
      %v4526 = vrot.slane %v2031, 1
      %v4527 = vsel %vm3224, %v4525, %v4526
      %v4528 = vrot.slane %v2037, 1
      %v4529 = vsel %vm3224, %v4526, %v4528
      %v4530 = vrot.slane %v2041, 1
      %v4531 = vsel %vm3224, %v4528, %v4530
      %v4532 = vrot.slane %v2047, 1
      %v4533 = vrot.slane %v2051, 1
      %v4534 = vsel %vm3224, %v4532, %v4533
      %v4535 = vrot.slane %v2057, 1
      %v4536 = vsel %vm3224, %v4533, %v4535
      %v4537 = vrot.slane %v2061, 1
      %v4538 = vsel %vm3224, %v4535, %v4537
      %v4539 = vrot.slane %v2067, 1
      %v4540 = vrot.slane %v2071, 1
      %v4541 = vsel %vm3224, %v4539, %v4540
      %v4542 = vrot.slane %v2077, 1
      %v4543 = vsel %vm3224, %v4540, %v4542
      %v4544 = vrot.slane %v2081, 1
      %v4545 = vsel %vm3224, %v4542, %v4544
      %v4546 = vrot.slane %v2087, 1
      %v4547 = vrot.slane %v2091, 1
      %v4548 = vsel %vm3224, %v4546, %v4547
      %v4549 = vrot.slane %v2097, 1
      %v4550 = vsel %vm3224, %v4547, %v4549
      %v4551 = vrot.slane %v2101, 1
      %v4552 = vsel %vm3224, %v4549, %v4551
      %v4553 = vrot.slane %v2107, 1
      %v4554 = vrot.slane %v2111, 1
      %v4555 = vsel %vm3224, %v4553, %v4554
      %v4556 = vrot.slane %v2117, 1
      %v4557 = vsel %vm3224, %v4554, %v4556
      %v4558 = vrot.slane %v2121, 1
      %v4559 = vsel %vm3224, %v4556, %v4558
      %v4560 = vrot.slane %v2127, 1
      %v4561 = vrot.slane %v2131, 1
      %v4562 = vsel %vm3224, %v4560, %v4561
      %v4563 = vrot.slane %v2137, 1
      %v4564 = vsel %vm3224, %v4561, %v4563
      %v4565 = vrot.slane %v2141, 1
      %v4566 = vsel %vm3224, %v4563, %v4565
      %v4567 = vrot.slane %v2147, 1
      %v4568 = vrot.slane %v2151, 1
      %v4569 = vsel %vm3224, %v4567, %v4568
      %v4570 = vrot.slane %v2157, 1
      %v4571 = vsel %vm3224, %v4568, %v4570
      %v4572 = vrot.slane %v2161, 1
      %v4573 = vsel %vm3224, %v4570, %v4572
      %v4574 = vrot.slane %v2167, 1
      %v4575 = vrot.slane %v2171, 1
      %v4576 = vsel %vm3224, %v4574, %v4575
      %v4577 = vrot.slane %v2177, 1
      %v4578 = vsel %vm3224, %v4575, %v4577
      %v4579 = vrot.slane %v2181, 1
      %v4580 = vsel %vm3224, %v4577, %v4579
      %v4581 = vrot.slane %v2187, 1
      %v4582 = vrot.slane %v2191, 1
      %v4583 = vsel %vm3224, %v4581, %v4582
      %v4584 = vrot.slane %v2197, 1
      %v4585 = vsel %vm3224, %v4582, %v4584
      %v4586 = vrot.slane %v2201, 1
      %v4587 = vsel %vm3224, %v4584, %v4586
      %v4588 = vrot.slane %v2207, 1
      %v4589 = vrot.slane %v2211, 1
      %v4590 = vsel %vm3224, %v4588, %v4589
      %v4591 = vrot.slane %v2217, 1
      %v4592 = vsel %vm3224, %v4589, %v4591
      %v4593 = vrot.slane %v2221, 1
      %v4594 = vsel %vm3224, %v4591, %v4593
      %v4595 = vrot.slane %v2227, 1
      %v4596 = vrot.slane %v2231, 1
      %v4597 = vsel %vm3224, %v4595, %v4596
      %v4598 = vrot.slane %v2237, 1
      %v4599 = vsel %vm3224, %v4596, %v4598
      %v4600 = vrot.slane %v2241, 1
      %v4601 = vsel %vm3224, %v4598, %v4600
      %v4602 = vrot.slane %v2247, 1
      %v4603 = vrot.slane %v2251, 1
      %v4604 = vsel %vm3224, %v4602, %v4603
      %v4605 = vrot.slane %v2257, 1
      %v4606 = vsel %vm3224, %v4603, %v4605
      %v4607 = vrot.slane %v2261, 1
      %v4608 = vsel %vm3224, %v4605, %v4607
      %v4609 = vrot.slane %v2267, 1
      %v4610 = vrot.slane %v2271, 1
      %v4611 = vsel %vm3224, %v4609, %v4610
      %v4612 = vrot.slane %v2277, 1
      %v4613 = vsel %vm3224, %v4610, %v4612
      %v4614 = vrot.slane %v2281, 1
      %v4615 = vsel %vm3224, %v4612, %v4614
      %v4616 = vrot.slane %v2287, 1
      %v4617 = vrot.slane %v2291, 1
      %v4618 = vsel %vm3224, %v4616, %v4617
      %v4619 = vrot.slane %v2297, 1
      %v4620 = vsel %vm3224, %v4617, %v4619
      %v4621 = vrot.slane %v2301, 1
      %v4622 = vsel %vm3224, %v4619, %v4621
      %v4623 = vrot.slane %v2307, 1
      %v4624 = vrot.slane %v2311, 1
      %v4625 = vsel %vm3224, %v4623, %v4624
      %v4626 = vrot.slane %v2317, 1
      %v4627 = vsel %vm3224, %v4624, %v4626
      %v4628 = vrot.slane %v2321, 1
      %v4629 = vsel %vm3224, %v4626, %v4628
      %v4630 = vrot.slane %v2327, 1
      %v4631 = vrot.slane %v2331, 1
      %v4632 = vsel %vm3224, %v4630, %v4631
      %v4633 = vrot.slane %v2337, 1
      %v4634 = vsel %vm3224, %v4631, %v4633
      %v4635 = vrot.slane %v2341, 1
      %v4636 = vsel %vm3224, %v4633, %v4635
      %v4637 = vrot.slane %v2347, 1
      %v4638 = vrot.slane %v2351, 1
      %v4639 = vsel %vm3224, %v4637, %v4638
      %v4640 = vrot.slane %v2357, 1
      %v4641 = vsel %vm3224, %v4638, %v4640
      %v4642 = vrot.slane %v2361, 1
      %v4643 = vsel %vm3224, %v4640, %v4642
      %v4644 = vrot.slane %v2367, 1
      %v4645 = vrot.slane %v2371, 1
      %v4646 = vsel %vm3224, %v4644, %v4645
      %v4647 = vrot.slane %v2377, 1
      %v4648 = vsel %vm3224, %v4645, %v4647
      %v4649 = vrot.slane %v2381, 1
      %v4650 = vsel %vm3224, %v4647, %v4649
      %v4651 = vrot.slane %v2387, 1
      %v4652 = vrot.slane %v2391, 1
      %v4653 = vsel %vm3224, %v4651, %v4652
      %v4654 = vrot.slane %v2397, 1
      %v4655 = vsel %vm3224, %v4652, %v4654
      %v4656 = vrot.slane %v2401, 1
      %v4657 = vsel %vm3224, %v4654, %v4656
      %v4658 = vrot.slane %v2407, 1
      %v4659 = vrot.slane %v2411, 1
      %v4660 = vsel %vm3224, %v4658, %v4659
      %v4661 = vrot.slane %v2417, 1
      %v4662 = vsel %vm3224, %v4659, %v4661
      %v4663 = vrot.slane %v2421, 1
      %v4664 = vsel %vm3224, %v4661, %v4663
      %v4793 = vadd.f32 %v1114, %v4443
      %v4794 = vadd.f32 %v1118, %v4445
      %v4795 = vadd.f32 %v1124, %v4447
      %v4796 = vadd.f32 %v1128, %v4446
      %v4797 = vadd.f32 %v1134, %v4450
      %v4798 = vadd.f32 %v1138, %v4452
      %v4799 = vadd.f32 %v1144, %v4454
      %v4800 = vadd.f32 %v1148, %v4453
      %v4801 = vadd.f32 %v1154, %v4457
      %v4802 = vadd.f32 %v1158, %v4459
      %v4803 = vadd.f32 %v1164, %v4461
      %v4804 = vadd.f32 %v1168, %v4460
      %v4805 = vadd.f32 %v1174, %v4464
      %v4806 = vadd.f32 %v1178, %v4466
      %v4807 = vadd.f32 %v1184, %v4468
      %v4808 = vadd.f32 %v1188, %v4467
      %v4809 = vadd.f32 %v1194, %v4471
      %v4810 = vadd.f32 %v1198, %v4473
      %v4811 = vadd.f32 %v1204, %v4475
      %v4812 = vadd.f32 %v1208, %v4474
      %v4813 = vadd.f32 %v1214, %v4478
      %v4814 = vadd.f32 %v1218, %v4480
      %v4815 = vadd.f32 %v1224, %v4482
      %v4816 = vadd.f32 %v1228, %v4481
      %v4817 = vadd.f32 %v1234, %v4485
      %v4818 = vadd.f32 %v1238, %v4487
      %v4819 = vadd.f32 %v1244, %v4489
      %v4820 = vadd.f32 %v1248, %v4488
      %v4821 = vadd.f32 %v1254, %v4492
      %v4822 = vadd.f32 %v1258, %v4494
      %v4823 = vadd.f32 %v1264, %v4496
      %v4824 = vadd.f32 %v1268, %v4495
      %v4825 = vadd.f32 %v1274, %v4499
      %v4826 = vadd.f32 %v1278, %v4501
      %v4827 = vadd.f32 %v1284, %v4503
      %v4828 = vadd.f32 %v1288, %v4502
      %v4829 = vadd.f32 %v1294, %v4506
      %v4830 = vadd.f32 %v1298, %v4508
      %v4831 = vadd.f32 %v1304, %v4510
      %v4832 = vadd.f32 %v1308, %v4509
      %v4833 = vadd.f32 %v1314, %v4513
      %v4834 = vadd.f32 %v1318, %v4515
      %v4835 = vadd.f32 %v1324, %v4517
      %v4836 = vadd.f32 %v1328, %v4516
      %v4837 = vadd.f32 %v1334, %v4520
      %v4838 = vadd.f32 %v1338, %v4522
      %v4839 = vadd.f32 %v1344, %v4524
      %v4840 = vadd.f32 %v1348, %v4523
      %v4841 = vadd.f32 %v1354, %v4527
      %v4842 = vadd.f32 %v1358, %v4529
      %v4843 = vadd.f32 %v1364, %v4531
      %v4844 = vadd.f32 %v1368, %v4530
      %v4845 = vadd.f32 %v1374, %v4534
      %v4846 = vadd.f32 %v1378, %v4536
      %v4847 = vadd.f32 %v1384, %v4538
      %v4848 = vadd.f32 %v1388, %v4537
      %v4849 = vadd.f32 %v1394, %v4541
      %v4850 = vadd.f32 %v1398, %v4543
      %v4851 = vadd.f32 %v1404, %v4545
      %v4852 = vadd.f32 %v1408, %v4544
      %v4853 = vadd.f32 %v1414, %v4548
      %v4854 = vadd.f32 %v1418, %v4550
      %v4855 = vadd.f32 %v1424, %v4552
      %v4856 = vadd.f32 %v1428, %v4551
      %v4857 = vadd.f32 %v1434, %v4555
      %v4858 = vadd.f32 %v1438, %v4557
      %v4859 = vadd.f32 %v1444, %v4559
      %v4860 = vadd.f32 %v1448, %v4558
      %v4861 = vadd.f32 %v1454, %v4562
      %v4862 = vadd.f32 %v1458, %v4564
      %v4863 = vadd.f32 %v1464, %v4566
      %v4864 = vadd.f32 %v1468, %v4565
      %v4865 = vadd.f32 %v1474, %v4569
      %v4866 = vadd.f32 %v1478, %v4571
      %v4867 = vadd.f32 %v1484, %v4573
      %v4868 = vadd.f32 %v1488, %v4572
      %v4869 = vadd.f32 %v1494, %v4576
      %v4870 = vadd.f32 %v1498, %v4578
      %v4871 = vadd.f32 %v1504, %v4580
      %v4872 = vadd.f32 %v1508, %v4579
      %v4873 = vadd.f32 %v1514, %v4583
      %v4874 = vadd.f32 %v1518, %v4585
      %v4875 = vadd.f32 %v1524, %v4587
      %v4876 = vadd.f32 %v1528, %v4586
      %v4877 = vadd.f32 %v1534, %v4590
      %v4878 = vadd.f32 %v1538, %v4592
      %v4879 = vadd.f32 %v1544, %v4594
      %v4880 = vadd.f32 %v1548, %v4593
      %v4881 = vadd.f32 %v1554, %v4597
      %v4882 = vadd.f32 %v1558, %v4599
      %v4883 = vadd.f32 %v1564, %v4601
      %v4884 = vadd.f32 %v1568, %v4600
      %v4885 = vadd.f32 %v1574, %v4604
      %v4886 = vadd.f32 %v1578, %v4606
      %v4887 = vadd.f32 %v1584, %v4608
      %v4888 = vadd.f32 %v1588, %v4607
      %v4889 = vadd.f32 %v1594, %v4611
      %v4890 = vadd.f32 %v1598, %v4613
      %v4891 = vadd.f32 %v1604, %v4615
      %v4892 = vadd.f32 %v1608, %v4614
      %v4893 = vadd.f32 %v1614, %v4618
      %v4894 = vadd.f32 %v1618, %v4620
      %v4895 = vadd.f32 %v1624, %v4622
      %v4896 = vadd.f32 %v1628, %v4621
      %v4897 = vadd.f32 %v1634, %v4625
      %v4898 = vadd.f32 %v1638, %v4627
      %v4899 = vadd.f32 %v1644, %v4629
      %v4900 = vadd.f32 %v1648, %v4628
      %v4901 = vadd.f32 %v1654, %v4632
      %v4902 = vadd.f32 %v1658, %v4634
      %v4903 = vadd.f32 %v1664, %v4636
      %v4904 = vadd.f32 %v1668, %v4635
      %v4905 = vadd.f32 %v1674, %v4639
      %v4906 = vadd.f32 %v1678, %v4641
      %v4907 = vadd.f32 %v1684, %v4643
      %v4908 = vadd.f32 %v1688, %v4642
      %v4909 = vadd.f32 %v1694, %v4646
      %v4910 = vadd.f32 %v1698, %v4648
      %v4911 = vadd.f32 %v1704, %v4650
      %v4912 = vadd.f32 %v1708, %v4649
      %v4913 = vadd.f32 %v1714, %v4653
      %v4914 = vadd.f32 %v1718, %v4655
      %v4915 = vadd.f32 %v1724, %v4657
      %v4916 = vadd.f32 %v1728, %v4656
      %v4917 = vadd.f32 %v1734, %v4660
      %v4918 = vadd.f32 %v1738, %v4662
      %v4919 = vadd.f32 %v1744, %v4664
      %v4920 = vadd.f32 %v1748, %v4663
      %v5049 = vrot.slane %v2460, 2
      %v5050 = vrot.slane %v2464, 2
      %v5051 = vsel %vm1058, %v5049, %v5050
      %v5052 = vrot.slane %v2470, 2
      %v5053 = vsel %vm1058, %v5050, %v5052
      %v5054 = vrot.slane %v2474, 2
      %v5055 = vsel %vm1058, %v5052, %v5054
      %v5056 = vrot.slane %v2480, 2
      %v5057 = vrot.slane %v2484, 2
      %v5058 = vsel %vm1058, %v5056, %v5057
      %v5059 = vrot.slane %v2490, 2
      %v5060 = vsel %vm1058, %v5057, %v5059
      %v5061 = vrot.slane %v2494, 2
      %v5062 = vsel %vm1058, %v5059, %v5061
      %v5063 = vrot.slane %v2500, 2
      %v5064 = vrot.slane %v2504, 2
      %v5065 = vsel %vm1058, %v5063, %v5064
      %v5066 = vrot.slane %v2510, 2
      %v5067 = vsel %vm1058, %v5064, %v5066
      %v5068 = vrot.slane %v2514, 2
      %v5069 = vsel %vm1058, %v5066, %v5068
      %v5070 = vrot.slane %v2520, 2
      %v5071 = vrot.slane %v2524, 2
      %v5072 = vsel %vm1058, %v5070, %v5071
      %v5073 = vrot.slane %v2530, 2
      %v5074 = vsel %vm1058, %v5071, %v5073
      %v5075 = vrot.slane %v2534, 2
      %v5076 = vsel %vm1058, %v5073, %v5075
      %v5077 = vrot.slane %v2540, 2
      %v5078 = vrot.slane %v2544, 2
      %v5079 = vsel %vm1058, %v5077, %v5078
      %v5080 = vrot.slane %v2550, 2
      %v5081 = vsel %vm1058, %v5078, %v5080
      %v5082 = vrot.slane %v2554, 2
      %v5083 = vsel %vm1058, %v5080, %v5082
      %v5084 = vrot.slane %v2560, 2
      %v5085 = vrot.slane %v2564, 2
      %v5086 = vsel %vm1058, %v5084, %v5085
      %v5087 = vrot.slane %v2570, 2
      %v5088 = vsel %vm1058, %v5085, %v5087
      %v5089 = vrot.slane %v2574, 2
      %v5090 = vsel %vm1058, %v5087, %v5089
      %v5091 = vrot.slane %v2580, 2
      %v5092 = vrot.slane %v2584, 2
      %v5093 = vsel %vm1058, %v5091, %v5092
      %v5094 = vrot.slane %v2590, 2
      %v5095 = vsel %vm1058, %v5092, %v5094
      %v5096 = vrot.slane %v2594, 2
      %v5097 = vsel %vm1058, %v5094, %v5096
      %v5098 = vrot.slane %v2600, 2
      %v5099 = vrot.slane %v2604, 2
      %v5100 = vsel %vm1058, %v5098, %v5099
      %v5101 = vrot.slane %v2610, 2
      %v5102 = vsel %vm1058, %v5099, %v5101
      %v5103 = vrot.slane %v2614, 2
      %v5104 = vsel %vm1058, %v5101, %v5103
      %v5105 = vrot.slane %v2620, 2
      %v5106 = vrot.slane %v2624, 2
      %v5107 = vsel %vm1058, %v5105, %v5106
      %v5108 = vrot.slane %v2630, 2
      %v5109 = vsel %vm1058, %v5106, %v5108
      %v5110 = vrot.slane %v2634, 2
      %v5111 = vsel %vm1058, %v5108, %v5110
      %v5112 = vrot.slane %v2640, 2
      %v5113 = vrot.slane %v2644, 2
      %v5114 = vsel %vm1058, %v5112, %v5113
      %v5115 = vrot.slane %v2650, 2
      %v5116 = vsel %vm1058, %v5113, %v5115
      %v5117 = vrot.slane %v2654, 2
      %v5118 = vsel %vm1058, %v5115, %v5117
      %v5119 = vrot.slane %v2660, 2
      %v5120 = vrot.slane %v2664, 2
      %v5121 = vsel %vm1058, %v5119, %v5120
      %v5122 = vrot.slane %v2670, 2
      %v5123 = vsel %vm1058, %v5120, %v5122
      %v5124 = vrot.slane %v2674, 2
      %v5125 = vsel %vm1058, %v5122, %v5124
      %v5126 = vrot.slane %v2680, 2
      %v5127 = vrot.slane %v2684, 2
      %v5128 = vsel %vm1058, %v5126, %v5127
      %v5129 = vrot.slane %v2690, 2
      %v5130 = vsel %vm1058, %v5127, %v5129
      %v5131 = vrot.slane %v2694, 2
      %v5132 = vsel %vm1058, %v5129, %v5131
      %v5133 = vrot.slane %v2700, 2
      %v5134 = vrot.slane %v2704, 2
      %v5135 = vsel %vm1058, %v5133, %v5134
      %v5136 = vrot.slane %v2710, 2
      %v5137 = vsel %vm1058, %v5134, %v5136
      %v5138 = vrot.slane %v2714, 2
      %v5139 = vsel %vm1058, %v5136, %v5138
      %v5140 = vrot.slane %v2720, 2
      %v5141 = vrot.slane %v2724, 2
      %v5142 = vsel %vm1058, %v5140, %v5141
      %v5143 = vrot.slane %v2730, 2
      %v5144 = vsel %vm1058, %v5141, %v5143
      %v5145 = vrot.slane %v2734, 2
      %v5146 = vsel %vm1058, %v5143, %v5145
      %v5147 = vrot.slane %v2740, 2
      %v5148 = vrot.slane %v2744, 2
      %v5149 = vsel %vm1058, %v5147, %v5148
      %v5150 = vrot.slane %v2750, 2
      %v5151 = vsel %vm1058, %v5148, %v5150
      %v5152 = vrot.slane %v2754, 2
      %v5153 = vsel %vm1058, %v5150, %v5152
      %v5154 = vrot.slane %v2760, 2
      %v5155 = vrot.slane %v2764, 2
      %v5156 = vsel %vm1058, %v5154, %v5155
      %v5157 = vrot.slane %v2770, 2
      %v5158 = vsel %vm1058, %v5155, %v5157
      %v5159 = vrot.slane %v2774, 2
      %v5160 = vsel %vm1058, %v5157, %v5159
      %v5161 = vrot.slane %v2780, 2
      %v5162 = vrot.slane %v2784, 2
      %v5163 = vsel %vm1058, %v5161, %v5162
      %v5164 = vrot.slane %v2790, 2
      %v5165 = vsel %vm1058, %v5162, %v5164
      %v5166 = vrot.slane %v2794, 2
      %v5167 = vsel %vm1058, %v5164, %v5166
      %v5168 = vrot.slane %v2800, 2
      %v5169 = vrot.slane %v2804, 2
      %v5170 = vsel %vm1058, %v5168, %v5169
      %v5171 = vrot.slane %v2810, 2
      %v5172 = vsel %vm1058, %v5169, %v5171
      %v5173 = vrot.slane %v2814, 2
      %v5174 = vsel %vm1058, %v5171, %v5173
      %v5175 = vrot.slane %v2820, 2
      %v5176 = vrot.slane %v2824, 2
      %v5177 = vsel %vm1058, %v5175, %v5176
      %v5178 = vrot.slane %v2830, 2
      %v5179 = vsel %vm1058, %v5176, %v5178
      %v5180 = vrot.slane %v2834, 2
      %v5181 = vsel %vm1058, %v5178, %v5180
      %v5182 = vrot.slane %v2840, 2
      %v5183 = vrot.slane %v2844, 2
      %v5184 = vsel %vm1058, %v5182, %v5183
      %v5185 = vrot.slane %v2850, 2
      %v5186 = vsel %vm1058, %v5183, %v5185
      %v5187 = vrot.slane %v2854, 2
      %v5188 = vsel %vm1058, %v5185, %v5187
      %v5189 = vrot.slane %v2860, 2
      %v5190 = vrot.slane %v2864, 2
      %v5191 = vsel %vm1058, %v5189, %v5190
      %v5192 = vrot.slane %v2870, 2
      %v5193 = vsel %vm1058, %v5190, %v5192
      %v5194 = vrot.slane %v2874, 2
      %v5195 = vsel %vm1058, %v5192, %v5194
      %v5196 = vrot.slane %v2880, 2
      %v5197 = vrot.slane %v2884, 2
      %v5198 = vsel %vm1058, %v5196, %v5197
      %v5199 = vrot.slane %v2890, 2
      %v5200 = vsel %vm1058, %v5197, %v5199
      %v5201 = vrot.slane %v2894, 2
      %v5202 = vsel %vm1058, %v5199, %v5201
      %v5203 = vrot.slane %v2900, 2
      %v5204 = vrot.slane %v2904, 2
      %v5205 = vsel %vm1058, %v5203, %v5204
      %v5206 = vrot.slane %v2910, 2
      %v5207 = vsel %vm1058, %v5204, %v5206
      %v5208 = vrot.slane %v2914, 2
      %v5209 = vsel %vm1058, %v5206, %v5208
      %v5210 = vrot.slane %v2920, 2
      %v5211 = vrot.slane %v2924, 2
      %v5212 = vsel %vm1058, %v5210, %v5211
      %v5213 = vrot.slane %v2930, 2
      %v5214 = vsel %vm1058, %v5211, %v5213
      %v5215 = vrot.slane %v2934, 2
      %v5216 = vsel %vm1058, %v5213, %v5215
      %v5217 = vrot.slane %v2940, 2
      %v5218 = vrot.slane %v2944, 2
      %v5219 = vsel %vm1058, %v5217, %v5218
      %v5220 = vrot.slane %v2950, 2
      %v5221 = vsel %vm1058, %v5218, %v5220
      %v5222 = vrot.slane %v2954, 2
      %v5223 = vsel %vm1058, %v5220, %v5222
      %v5224 = vrot.slane %v2960, 2
      %v5225 = vrot.slane %v2964, 2
      %v5226 = vsel %vm1058, %v5224, %v5225
      %v5227 = vrot.slane %v2970, 2
      %v5228 = vsel %vm1058, %v5225, %v5227
      %v5229 = vrot.slane %v2974, 2
      %v5230 = vsel %vm1058, %v5227, %v5229
      %v5231 = vrot.slane %v2980, 2
      %v5232 = vrot.slane %v2984, 2
      %v5233 = vsel %vm1058, %v5231, %v5232
      %v5234 = vrot.slane %v2990, 2
      %v5235 = vsel %vm1058, %v5232, %v5234
      %v5236 = vrot.slane %v2994, 2
      %v5237 = vsel %vm1058, %v5234, %v5236
      %v5238 = vrot.slane %v3000, 2
      %v5239 = vrot.slane %v3004, 2
      %v5240 = vsel %vm1058, %v5238, %v5239
      %v5241 = vrot.slane %v3010, 2
      %v5242 = vsel %vm1058, %v5239, %v5241
      %v5243 = vrot.slane %v3014, 2
      %v5244 = vsel %vm1058, %v5241, %v5243
      %v5245 = vrot.slane %v3020, 2
      %v5246 = vrot.slane %v3024, 2
      %v5247 = vsel %vm1058, %v5245, %v5246
      %v5248 = vrot.slane %v3030, 2
      %v5249 = vsel %vm1058, %v5246, %v5248
      %v5250 = vrot.slane %v3034, 2
      %v5251 = vsel %vm1058, %v5248, %v5250
      %v5252 = vrot.slane %v3040, 2
      %v5253 = vrot.slane %v3044, 2
      %v5254 = vsel %vm1058, %v5252, %v5253
      %v5255 = vrot.slane %v3050, 2
      %v5256 = vsel %vm1058, %v5253, %v5255
      %v5257 = vrot.slane %v3054, 2
      %v5258 = vsel %vm1058, %v5255, %v5257
      %v5259 = vrot.slane %v3060, 2
      %v5260 = vrot.slane %v3064, 2
      %v5261 = vsel %vm1058, %v5259, %v5260
      %v5262 = vrot.slane %v3070, 2
      %v5263 = vsel %vm1058, %v5260, %v5262
      %v5264 = vrot.slane %v3074, 2
      %v5265 = vsel %vm1058, %v5262, %v5264
      %v5266 = vrot.slane %v3080, 2
      %v5267 = vrot.slane %v3084, 2
      %v5268 = vsel %vm1058, %v5266, %v5267
      %v5269 = vrot.slane %v3090, 2
      %v5270 = vsel %vm1058, %v5267, %v5269
      %v5271 = vrot.slane %v3094, 2
      %v5272 = vsel %vm1058, %v5269, %v5271
      %v5401 = vadd.f32 %v4793, %v5051
      %v5402 = vadd.f32 %v4794, %v5053
      %v5403 = vadd.f32 %v4795, %v5055
      %v5404 = vadd.f32 %v4796, %v5054
      %v5405 = vadd.f32 %v4797, %v5058
      %v5406 = vadd.f32 %v4798, %v5060
      %v5407 = vadd.f32 %v4799, %v5062
      %v5408 = vadd.f32 %v4800, %v5061
      %v5409 = vadd.f32 %v4801, %v5065
      %v5410 = vadd.f32 %v4802, %v5067
      %v5411 = vadd.f32 %v4803, %v5069
      %v5412 = vadd.f32 %v4804, %v5068
      %v5413 = vadd.f32 %v4805, %v5072
      %v5414 = vadd.f32 %v4806, %v5074
      %v5415 = vadd.f32 %v4807, %v5076
      %v5416 = vadd.f32 %v4808, %v5075
      %v5417 = vadd.f32 %v4809, %v5079
      %v5418 = vadd.f32 %v4810, %v5081
      %v5419 = vadd.f32 %v4811, %v5083
      %v5420 = vadd.f32 %v4812, %v5082
      %v5421 = vadd.f32 %v4813, %v5086
      %v5422 = vadd.f32 %v4814, %v5088
      %v5423 = vadd.f32 %v4815, %v5090
      %v5424 = vadd.f32 %v4816, %v5089
      %v5425 = vadd.f32 %v4817, %v5093
      %v5426 = vadd.f32 %v4818, %v5095
      %v5427 = vadd.f32 %v4819, %v5097
      %v5428 = vadd.f32 %v4820, %v5096
      %v5429 = vadd.f32 %v4821, %v5100
      %v5430 = vadd.f32 %v4822, %v5102
      %v5431 = vadd.f32 %v4823, %v5104
      %v5432 = vadd.f32 %v4824, %v5103
      %v5433 = vadd.f32 %v4825, %v5107
      %v5434 = vadd.f32 %v4826, %v5109
      %v5435 = vadd.f32 %v4827, %v5111
      %v5436 = vadd.f32 %v4828, %v5110
      %v5437 = vadd.f32 %v4829, %v5114
      %v5438 = vadd.f32 %v4830, %v5116
      %v5439 = vadd.f32 %v4831, %v5118
      %v5440 = vadd.f32 %v4832, %v5117
      %v5441 = vadd.f32 %v4833, %v5121
      %v5442 = vadd.f32 %v4834, %v5123
      %v5443 = vadd.f32 %v4835, %v5125
      %v5444 = vadd.f32 %v4836, %v5124
      %v5445 = vadd.f32 %v4837, %v5128
      %v5446 = vadd.f32 %v4838, %v5130
      %v5447 = vadd.f32 %v4839, %v5132
      %v5448 = vadd.f32 %v4840, %v5131
      %v5449 = vadd.f32 %v4841, %v5135
      %v5450 = vadd.f32 %v4842, %v5137
      %v5451 = vadd.f32 %v4843, %v5139
      %v5452 = vadd.f32 %v4844, %v5138
      %v5453 = vadd.f32 %v4845, %v5142
      %v5454 = vadd.f32 %v4846, %v5144
      %v5455 = vadd.f32 %v4847, %v5146
      %v5456 = vadd.f32 %v4848, %v5145
      %v5457 = vadd.f32 %v4849, %v5149
      %v5458 = vadd.f32 %v4850, %v5151
      %v5459 = vadd.f32 %v4851, %v5153
      %v5460 = vadd.f32 %v4852, %v5152
      %v5461 = vadd.f32 %v4853, %v5156
      %v5462 = vadd.f32 %v4854, %v5158
      %v5463 = vadd.f32 %v4855, %v5160
      %v5464 = vadd.f32 %v4856, %v5159
      %v5465 = vadd.f32 %v4857, %v5163
      %v5466 = vadd.f32 %v4858, %v5165
      %v5467 = vadd.f32 %v4859, %v5167
      %v5468 = vadd.f32 %v4860, %v5166
      %v5469 = vadd.f32 %v4861, %v5170
      %v5470 = vadd.f32 %v4862, %v5172
      %v5471 = vadd.f32 %v4863, %v5174
      %v5472 = vadd.f32 %v4864, %v5173
      %v5473 = vadd.f32 %v4865, %v5177
      %v5474 = vadd.f32 %v4866, %v5179
      %v5475 = vadd.f32 %v4867, %v5181
      %v5476 = vadd.f32 %v4868, %v5180
      %v5477 = vadd.f32 %v4869, %v5184
      %v5478 = vadd.f32 %v4870, %v5186
      %v5479 = vadd.f32 %v4871, %v5188
      %v5480 = vadd.f32 %v4872, %v5187
      %v5481 = vadd.f32 %v4873, %v5191
      %v5482 = vadd.f32 %v4874, %v5193
      %v5483 = vadd.f32 %v4875, %v5195
      %v5484 = vadd.f32 %v4876, %v5194
      %v5485 = vadd.f32 %v4877, %v5198
      %v5486 = vadd.f32 %v4878, %v5200
      %v5487 = vadd.f32 %v4879, %v5202
      %v5488 = vadd.f32 %v4880, %v5201
      %v5489 = vadd.f32 %v4881, %v5205
      %v5490 = vadd.f32 %v4882, %v5207
      %v5491 = vadd.f32 %v4883, %v5209
      %v5492 = vadd.f32 %v4884, %v5208
      %v5493 = vadd.f32 %v4885, %v5212
      %v5494 = vadd.f32 %v4886, %v5214
      %v5495 = vadd.f32 %v4887, %v5216
      %v5496 = vadd.f32 %v4888, %v5215
      %v5497 = vadd.f32 %v4889, %v5219
      %v5498 = vadd.f32 %v4890, %v5221
      %v5499 = vadd.f32 %v4891, %v5223
      %v5500 = vadd.f32 %v4892, %v5222
      %v5501 = vadd.f32 %v4893, %v5226
      %v5502 = vadd.f32 %v4894, %v5228
      %v5503 = vadd.f32 %v4895, %v5230
      %v5504 = vadd.f32 %v4896, %v5229
      %v5505 = vadd.f32 %v4897, %v5233
      %v5506 = vadd.f32 %v4898, %v5235
      %v5507 = vadd.f32 %v4899, %v5237
      %v5508 = vadd.f32 %v4900, %v5236
      %v5509 = vadd.f32 %v4901, %v5240
      %v5510 = vadd.f32 %v4902, %v5242
      %v5511 = vadd.f32 %v4903, %v5244
      %v5512 = vadd.f32 %v4904, %v5243
      %v5513 = vadd.f32 %v4905, %v5247
      %v5514 = vadd.f32 %v4906, %v5249
      %v5515 = vadd.f32 %v4907, %v5251
      %v5516 = vadd.f32 %v4908, %v5250
      %v5517 = vadd.f32 %v4909, %v5254
      %v5518 = vadd.f32 %v4910, %v5256
      %v5519 = vadd.f32 %v4911, %v5258
      %v5520 = vadd.f32 %v4912, %v5257
      %v5521 = vadd.f32 %v4913, %v5261
      %v5522 = vadd.f32 %v4914, %v5263
      %v5523 = vadd.f32 %v4915, %v5265
      %v5524 = vadd.f32 %v4916, %v5264
      %v5525 = vadd.f32 %v4917, %v5268
      %v5526 = vadd.f32 %v4918, %v5270
      %v5527 = vadd.f32 %v4919, %v5272
      %v5528 = vadd.f32 %v4920, %v5271
      %v5529 = vmax.f32 %v4185, %v5401
      %v5530 = vmax.f32 %v4186, %v5402
      %v5531 = vmax.f32 %v4187, %v5403
      %v5532 = vmax.f32 %v4188, %v5404
      %v5533 = vmax.f32 %v4189, %v5405
      %v5534 = vmax.f32 %v4190, %v5406
      %v5535 = vmax.f32 %v4191, %v5407
      %v5536 = vmax.f32 %v4192, %v5408
      %v5537 = vmax.f32 %v4193, %v5409
      %v5538 = vmax.f32 %v4194, %v5410
      %v5539 = vmax.f32 %v4195, %v5411
      %v5540 = vmax.f32 %v4196, %v5412
      %v5541 = vmax.f32 %v4197, %v5413
      %v5542 = vmax.f32 %v4198, %v5414
      %v5543 = vmax.f32 %v4199, %v5415
      %v5544 = vmax.f32 %v4200, %v5416
      %v5545 = vmax.f32 %v4201, %v5417
      %v5546 = vmax.f32 %v4202, %v5418
      %v5547 = vmax.f32 %v4203, %v5419
      %v5548 = vmax.f32 %v4204, %v5420
      %v5549 = vmax.f32 %v4205, %v5421
      %v5550 = vmax.f32 %v4206, %v5422
      %v5551 = vmax.f32 %v4207, %v5423
      %v5552 = vmax.f32 %v4208, %v5424
      %v5553 = vmax.f32 %v4209, %v5425
      %v5554 = vmax.f32 %v4210, %v5426
      %v5555 = vmax.f32 %v4211, %v5427
      %v5556 = vmax.f32 %v4212, %v5428
      %v5557 = vmax.f32 %v4213, %v5429
      %v5558 = vmax.f32 %v4214, %v5430
      %v5559 = vmax.f32 %v4215, %v5431
      %v5560 = vmax.f32 %v4216, %v5432
      %v5561 = vmax.f32 %v4217, %v5433
      %v5562 = vmax.f32 %v4218, %v5434
      %v5563 = vmax.f32 %v4219, %v5435
      %v5564 = vmax.f32 %v4220, %v5436
      %v5565 = vmax.f32 %v4221, %v5437
      %v5566 = vmax.f32 %v4222, %v5438
      %v5567 = vmax.f32 %v4223, %v5439
      %v5568 = vmax.f32 %v4224, %v5440
      %v5569 = vmax.f32 %v4225, %v5441
      %v5570 = vmax.f32 %v4226, %v5442
      %v5571 = vmax.f32 %v4227, %v5443
      %v5572 = vmax.f32 %v4228, %v5444
      %v5573 = vmax.f32 %v4229, %v5445
      %v5574 = vmax.f32 %v4230, %v5446
      %v5575 = vmax.f32 %v4231, %v5447
      %v5576 = vmax.f32 %v4232, %v5448
      %v5577 = vmax.f32 %v4233, %v5449
      %v5578 = vmax.f32 %v4234, %v5450
      %v5579 = vmax.f32 %v4235, %v5451
      %v5580 = vmax.f32 %v4236, %v5452
      %v5581 = vmax.f32 %v4237, %v5453
      %v5582 = vmax.f32 %v4238, %v5454
      %v5583 = vmax.f32 %v4239, %v5455
      %v5584 = vmax.f32 %v4240, %v5456
      %v5585 = vmax.f32 %v4241, %v5457
      %v5586 = vmax.f32 %v4242, %v5458
      %v5587 = vmax.f32 %v4243, %v5459
      %v5588 = vmax.f32 %v4244, %v5460
      %v5589 = vmax.f32 %v4245, %v5461
      %v5590 = vmax.f32 %v4246, %v5462
      %v5591 = vmax.f32 %v4247, %v5463
      %v5592 = vmax.f32 %v4248, %v5464
      %v5593 = vmax.f32 %v4249, %v5465
      %v5594 = vmax.f32 %v4250, %v5466
      %v5595 = vmax.f32 %v4251, %v5467
      %v5596 = vmax.f32 %v4252, %v5468
      %v5597 = vmax.f32 %v4253, %v5469
      %v5598 = vmax.f32 %v4254, %v5470
      %v5599 = vmax.f32 %v4255, %v5471
      %v5600 = vmax.f32 %v4256, %v5472
      %v5601 = vmax.f32 %v4257, %v5473
      %v5602 = vmax.f32 %v4258, %v5474
      %v5603 = vmax.f32 %v4259, %v5475
      %v5604 = vmax.f32 %v4260, %v5476
      %v5605 = vmax.f32 %v4261, %v5477
      %v5606 = vmax.f32 %v4262, %v5478
      %v5607 = vmax.f32 %v4263, %v5479
      %v5608 = vmax.f32 %v4264, %v5480
      %v5609 = vmax.f32 %v4265, %v5481
      %v5610 = vmax.f32 %v4266, %v5482
      %v5611 = vmax.f32 %v4267, %v5483
      %v5612 = vmax.f32 %v4268, %v5484
      %v5613 = vmax.f32 %v4269, %v5485
      %v5614 = vmax.f32 %v4270, %v5486
      %v5615 = vmax.f32 %v4271, %v5487
      %v5616 = vmax.f32 %v4272, %v5488
      %v5617 = vmax.f32 %v4273, %v5489
      %v5618 = vmax.f32 %v4274, %v5490
      %v5619 = vmax.f32 %v4275, %v5491
      %v5620 = vmax.f32 %v4276, %v5492
      %v5621 = vmax.f32 %v4277, %v5493
      %v5622 = vmax.f32 %v4278, %v5494
      %v5623 = vmax.f32 %v4279, %v5495
      %v5624 = vmax.f32 %v4280, %v5496
      %v5625 = vmax.f32 %v4281, %v5497
      %v5626 = vmax.f32 %v4282, %v5498
      %v5627 = vmax.f32 %v4283, %v5499
      %v5628 = vmax.f32 %v4284, %v5500
      %v5629 = vmax.f32 %v4285, %v5501
      %v5630 = vmax.f32 %v4286, %v5502
      %v5631 = vmax.f32 %v4287, %v5503
      %v5632 = vmax.f32 %v4288, %v5504
      %v5633 = vmax.f32 %v4289, %v5505
      %v5634 = vmax.f32 %v4290, %v5506
      %v5635 = vmax.f32 %v4291, %v5507
      %v5636 = vmax.f32 %v4292, %v5508
      %v5637 = vmax.f32 %v4293, %v5509
      %v5638 = vmax.f32 %v4294, %v5510
      %v5639 = vmax.f32 %v4295, %v5511
      %v5640 = vmax.f32 %v4296, %v5512
      %v5641 = vmax.f32 %v4297, %v5513
      %v5642 = vmax.f32 %v4298, %v5514
      %v5643 = vmax.f32 %v4299, %v5515
      %v5644 = vmax.f32 %v4300, %v5516
      %v5645 = vmax.f32 %v4301, %v5517
      %v5646 = vmax.f32 %v4302, %v5518
      %v5647 = vmax.f32 %v4303, %v5519
      %v5648 = vmax.f32 %v4304, %v5520
      %v5649 = vmax.f32 %v4305, %v5521
      %v5650 = vmax.f32 %v4306, %v5522
      %v5651 = vmax.f32 %v4307, %v5523
      %v5652 = vmax.f32 %v4308, %v5524
      %v5653 = vmax.f32 %v4309, %v5525
      %v5654 = vmax.f32 %v4310, %v5526
      %v5655 = vmax.f32 %v4311, %v5527
      %v5656 = vmax.f32 %v4312, %v5528
      %vm5657 = vcmask 916480
      %5658 = vst.msk [vmem:[#allocation3] sm:$0xff] %vm5657, %v5529
      %5659 = vst.msk [vmem:[#allocation3 + $0x8] sm:$0xff] %vm5657, %v5530
      %5660 = vst.msk [vmem:[#allocation3 + $0x10] sm:$0xff] %vm5657, %v5531
      %vm5661 = vcmask 912384
      %5662 = vst.msk [vmem:[#allocation3 + $0x18] sm:$0xf] %vm5661, %v5532
      %5663 = vst.msk [vmem:[#allocation3 + $0x20] sm:$0xff] %vm5657, %v5533
      %5664 = vst.msk [vmem:[#allocation3 + $0x28] sm:$0xff] %vm5657, %v5534
      %5665 = vst.msk [vmem:[#allocation3 + $0x30] sm:$0xff] %vm5657, %v5535
      %5666 = vst.msk [vmem:[#allocation3 + $0x38] sm:$0xf] %vm5661, %v5536
      %5667 = vst.msk [vmem:[#allocation3 + $0x40] sm:$0xff] %vm5657, %v5537
      %5668 = vst.msk [vmem:[#allocation3 + $0x48] sm:$0xff] %vm5657, %v5538
      %5669 = vst.msk [vmem:[#allocation3 + $0x50] sm:$0xff] %vm5657, %v5539
      %5670 = vst.msk [vmem:[#allocation3 + $0x58] sm:$0xf] %vm5661, %v5540
      %5671 = vst.msk [vmem:[#allocation3 + $0x60] sm:$0xff] %vm5657, %v5541
      %5672 = vst.msk [vmem:[#allocation3 + $0x68] sm:$0xff] %vm5657, %v5542
      %5673 = vst.msk [vmem:[#allocation3 + $0x70] sm:$0xff] %vm5657, %v5543
      %5674 = vst.msk [vmem:[#allocation3 + $0x78] sm:$0xf] %vm5661, %v5544
      %5675 = vst.msk [vmem:[#allocation3 + $0x80] sm:$0xff] %vm5657, %v5545
      %5676 = vst.msk [vmem:[#allocation3 + $0x88] sm:$0xff] %vm5657, %v5546
      %5677 = vst.msk [vmem:[#allocation3 + $0x90] sm:$0xff] %vm5657, %v5547
      %5678 = vst.msk [vmem:[#allocation3 + $0x98] sm:$0xf] %vm5661, %v5548
      %5679 = vst.msk [vmem:[#allocation3 + $0xa0] sm:$0xff] %vm5657, %v5549
      %5680 = vst.msk [vmem:[#allocation3 + $0xa8] sm:$0xff] %vm5657, %v5550
      %5681 = vst.msk [vmem:[#allocation3 + $0xb0] sm:$0xff] %vm5657, %v5551
      %5682 = vst.msk [vmem:[#allocation3 + $0xb8] sm:$0xf] %vm5661, %v5552
      %5683 = vst.msk [vmem:[#allocation3 + $0xc0] sm:$0xff] %vm5657, %v5553
      %5684 = vst.msk [vmem:[#allocation3 + $0xc8] sm:$0xff] %vm5657, %v5554
      %5685 = vst.msk [vmem:[#allocation3 + $0xd0] sm:$0xff] %vm5657, %v5555
      %5686 = vst.msk [vmem:[#allocation3 + $0xd8] sm:$0xf] %vm5661, %v5556
      %5687 = vst.msk [vmem:[#allocation3 + $0xe0] sm:$0xff] %vm5657, %v5557
      %5688 = vst.msk [vmem:[#allocation3 + $0xe8] sm:$0xff] %vm5657, %v5558
      %5689 = vst.msk [vmem:[#allocation3 + $0xf0] sm:$0xff] %vm5657, %v5559
      %5690 = vst.msk [vmem:[#allocation3 + $0xf8] sm:$0xf] %vm5661, %v5560
      %5691 = vst.msk [vmem:[#allocation3 + $0x100] sm:$0xff] %vm5657, %v5561
      %5692 = vst.msk [vmem:[#allocation3 + $0x108] sm:$0xff] %vm5657, %v5562
      %5693 = vst.msk [vmem:[#allocation3 + $0x110] sm:$0xff] %vm5657, %v5563
      %5694 = vst.msk [vmem:[#allocation3 + $0x118] sm:$0xf] %vm5661, %v5564
      %5695 = vst.msk [vmem:[#allocation3 + $0x120] sm:$0xff] %vm5657, %v5565
      %5696 = vst.msk [vmem:[#allocation3 + $0x128] sm:$0xff] %vm5657, %v5566
      %5697 = vst.msk [vmem:[#allocation3 + $0x130] sm:$0xff] %vm5657, %v5567
      %5698 = vst.msk [vmem:[#allocation3 + $0x138] sm:$0xf] %vm5661, %v5568
      %5699 = vst.msk [vmem:[#allocation3 + $0x140] sm:$0xff] %vm5657, %v5569
      %5700 = vst.msk [vmem:[#allocation3 + $0x148] sm:$0xff] %vm5657, %v5570
      %5701 = vst.msk [vmem:[#allocation3 + $0x150] sm:$0xff] %vm5657, %v5571
      %5702 = vst.msk [vmem:[#allocation3 + $0x158] sm:$0xf] %vm5661, %v5572
      %5703 = vst.msk [vmem:[#allocation3 + $0x160] sm:$0xff] %vm5657, %v5573
      %5704 = vst.msk [vmem:[#allocation3 + $0x168] sm:$0xff] %vm5657, %v5574
      %5705 = vst.msk [vmem:[#allocation3 + $0x170] sm:$0xff] %vm5657, %v5575
      %5706 = vst.msk [vmem:[#allocation3 + $0x178] sm:$0xf] %vm5661, %v5576
      %5707 = vst.msk [vmem:[#allocation3 + $0x180] sm:$0xff] %vm5657, %v5577
      %5708 = vst.msk [vmem:[#allocation3 + $0x188] sm:$0xff] %vm5657, %v5578
      %5709 = vst.msk [vmem:[#allocation3 + $0x190] sm:$0xff] %vm5657, %v5579
      %5710 = vst.msk [vmem:[#allocation3 + $0x198] sm:$0xf] %vm5661, %v5580
      %5711 = vst.msk [vmem:[#allocation3 + $0x1a0] sm:$0xff] %vm5657, %v5581
      %5712 = vst.msk [vmem:[#allocation3 + $0x1a8] sm:$0xff] %vm5657, %v5582
      %5713 = vst.msk [vmem:[#allocation3 + $0x1b0] sm:$0xff] %vm5657, %v5583
      %5714 = vst.msk [vmem:[#allocation3 + $0x1b8] sm:$0xf] %vm5661, %v5584
      %5715 = vst.msk [vmem:[#allocation3 + $0x1c0] sm:$0xff] %vm5657, %v5585
      %5716 = vst.msk [vmem:[#allocation3 + $0x1c8] sm:$0xff] %vm5657, %v5586
      %5717 = vst.msk [vmem:[#allocation3 + $0x1d0] sm:$0xff] %vm5657, %v5587
      %5718 = vst.msk [vmem:[#allocation3 + $0x1d8] sm:$0xf] %vm5661, %v5588
      %5719 = vst.msk [vmem:[#allocation3 + $0x1e0] sm:$0xff] %vm5657, %v5589
      %5720 = vst.msk [vmem:[#allocation3 + $0x1e8] sm:$0xff] %vm5657, %v5590
      %5721 = vst.msk [vmem:[#allocation3 + $0x1f0] sm:$0xff] %vm5657, %v5591
      %5722 = vst.msk [vmem:[#allocation3 + $0x1f8] sm:$0xf] %vm5661, %v5592
      %5723 = vst.msk [vmem:[#allocation3 + $0x200] sm:$0xff] %vm5657, %v5593
      %5724 = vst.msk [vmem:[#allocation3 + $0x208] sm:$0xff] %vm5657, %v5594
      %5725 = vst.msk [vmem:[#allocation3 + $0x210] sm:$0xff] %vm5657, %v5595
      %5726 = vst.msk [vmem:[#allocation3 + $0x218] sm:$0xf] %vm5661, %v5596
      %5727 = vst.msk [vmem:[#allocation3 + $0x220] sm:$0xff] %vm5657, %v5597
      %5728 = vst.msk [vmem:[#allocation3 + $0x228] sm:$0xff] %vm5657, %v5598
      %5729 = vst.msk [vmem:[#allocation3 + $0x230] sm:$0xff] %vm5657, %v5599
      %5730 = vst.msk [vmem:[#allocation3 + $0x238] sm:$0xf] %vm5661, %v5600
      %5731 = vst.msk [vmem:[#allocation3 + $0x240] sm:$0xff] %vm5657, %v5601
      %5732 = vst.msk [vmem:[#allocation3 + $0x248] sm:$0xff] %vm5657, %v5602
      %5733 = vst.msk [vmem:[#allocation3 + $0x250] sm:$0xff] %vm5657, %v5603
      %5734 = vst.msk [vmem:[#allocation3 + $0x258] sm:$0xf] %vm5661, %v5604
      %5735 = vst.msk [vmem:[#allocation3 + $0x260] sm:$0xff] %vm5657, %v5605
      %5736 = vst.msk [vmem:[#allocation3 + $0x268] sm:$0xff] %vm5657, %v5606
      %5737 = vst.msk [vmem:[#allocation3 + $0x270] sm:$0xff] %vm5657, %v5607
      %5738 = vst.msk [vmem:[#allocation3 + $0x278] sm:$0xf] %vm5661, %v5608
      %5739 = vst.msk [vmem:[#allocation3 + $0x280] sm:$0xff] %vm5657, %v5609
      %5740 = vst.msk [vmem:[#allocation3 + $0x288] sm:$0xff] %vm5657, %v5610
      %5741 = vst.msk [vmem:[#allocation3 + $0x290] sm:$0xff] %vm5657, %v5611
      %5742 = vst.msk [vmem:[#allocation3 + $0x298] sm:$0xf] %vm5661, %v5612
      %5743 = vst.msk [vmem:[#allocation3 + $0x2a0] sm:$0xff] %vm5657, %v5613
      %5744 = vst.msk [vmem:[#allocation3 + $0x2a8] sm:$0xff] %vm5657, %v5614
      %5745 = vst.msk [vmem:[#allocation3 + $0x2b0] sm:$0xff] %vm5657, %v5615
      %5746 = vst.msk [vmem:[#allocation3 + $0x2b8] sm:$0xf] %vm5661, %v5616
      %5747 = vst.msk [vmem:[#allocation3 + $0x2c0] sm:$0xff] %vm5657, %v5617
      %5748 = vst.msk [vmem:[#allocation3 + $0x2c8] sm:$0xff] %vm5657, %v5618
      %5749 = vst.msk [vmem:[#allocation3 + $0x2d0] sm:$0xff] %vm5657, %v5619
      %5750 = vst.msk [vmem:[#allocation3 + $0x2d8] sm:$0xf] %vm5661, %v5620
      %5751 = vst.msk [vmem:[#allocation3 + $0x2e0] sm:$0xff] %vm5657, %v5621
      %5752 = vst.msk [vmem:[#allocation3 + $0x2e8] sm:$0xff] %vm5657, %v5622
      %5753 = vst.msk [vmem:[#allocation3 + $0x2f0] sm:$0xff] %vm5657, %v5623
      %5754 = vst.msk [vmem:[#allocation3 + $0x2f8] sm:$0xf] %vm5661, %v5624
      %5755 = vst.msk [vmem:[#allocation3 + $0x300] sm:$0xff] %vm5657, %v5625
      %5756 = vst.msk [vmem:[#allocation3 + $0x308] sm:$0xff] %vm5657, %v5626
      %5757 = vst.msk [vmem:[#allocation3 + $0x310] sm:$0xff] %vm5657, %v5627
      %5758 = vst.msk [vmem:[#allocation3 + $0x318] sm:$0xf] %vm5661, %v5628
      %5759 = vst.msk [vmem:[#allocation3 + $0x320] sm:$0xff] %vm5657, %v5629
      %5760 = vst.msk [vmem:[#allocation3 + $0x328] sm:$0xff] %vm5657, %v5630
      %5761 = vst.msk [vmem:[#allocation3 + $0x330] sm:$0xff] %vm5657, %v5631
      %5762 = vst.msk [vmem:[#allocation3 + $0x338] sm:$0xf] %vm5661, %v5632
      %5763 = vst.msk [vmem:[#allocation3 + $0x340] sm:$0xff] %vm5657, %v5633
      %5764 = vst.msk [vmem:[#allocation3 + $0x348] sm:$0xff] %vm5657, %v5634
      %5765 = vst.msk [vmem:[#allocation3 + $0x350] sm:$0xff] %vm5657, %v5635
      %5766 = vst.msk [vmem:[#allocation3 + $0x358] sm:$0xf] %vm5661, %v5636
      %5767 = vst.msk [vmem:[#allocation3 + $0x360] sm:$0xff] %vm5657, %v5637
      %5768 = vst.msk [vmem:[#allocation3 + $0x368] sm:$0xff] %vm5657, %v5638
      %5769 = vst.msk [vmem:[#allocation3 + $0x370] sm:$0xff] %vm5657, %v5639
      %5770 = vst.msk [vmem:[#allocation3 + $0x378] sm:$0xf] %vm5661, %v5640
      %5771 = vst.msk [vmem:[#allocation3 + $0x380] sm:$0xff] %vm5657, %v5641
      %5772 = vst.msk [vmem:[#allocation3 + $0x388] sm:$0xff] %vm5657, %v5642
      %5773 = vst.msk [vmem:[#allocation3 + $0x390] sm:$0xff] %vm5657, %v5643
      %5774 = vst.msk [vmem:[#allocation3 + $0x398] sm:$0xf] %vm5661, %v5644
      %5775 = vst.msk [vmem:[#allocation3 + $0x3a0] sm:$0xff] %vm5657, %v5645
      %5776 = vst.msk [vmem:[#allocation3 + $0x3a8] sm:$0xff] %vm5657, %v5646
      %5777 = vst.msk [vmem:[#allocation3 + $0x3b0] sm:$0xff] %vm5657, %v5647
      %5778 = vst.msk [vmem:[#allocation3 + $0x3b8] sm:$0xf] %vm5661, %v5648
      %5779 = vst.msk [vmem:[#allocation3 + $0x3c0] sm:$0xff] %vm5657, %v5649
      %5780 = vst.msk [vmem:[#allocation3 + $0x3c8] sm:$0xff] %vm5657, %v5650
      %5781 = vst.msk [vmem:[#allocation3 + $0x3d0] sm:$0xff] %vm5657, %v5651
      %5782 = vst.msk [vmem:[#allocation3 + $0x3d8] sm:$0xf] %vm5661, %v5652
      %5783 = vst.msk [vmem:[#allocation3 + $0x3e0] sm:$0xff] %vm5657, %v5653
      %5784 = vst.msk [vmem:[#allocation3 + $0x3e8] sm:$0xff] %vm5657, %v5654
      %5785 = vst.msk [vmem:[#allocation3 + $0x3f0] sm:$0xff] %vm5657, %v5655
      %5786 = vst.msk [vmem:[#allocation3 + $0x3f8] sm:$0xf] %vm5661, %v5656
      %v5787 = vld [vmem:[#allocation3] ss:$2 sm:$0xff]
      %s5788 = scalar_lea.vmem [#allocation3], 16
      %v5789 = vld [vmem:[%s5788] ss:$2 sm:$0x3f]
      %s5790 = scalar_lea.vmem [#allocation3], 32
      %v5791 = vld [vmem:[%s5790] ss:$2 sm:$0xff]
      %s5792 = scalar_lea.vmem [#allocation3], 48
      %v5793 = vld [vmem:[%s5792] ss:$2 sm:$0x3f]
      %s5794 = scalar_lea.vmem [#allocation3], 64
      %v5795 = vld [vmem:[%s5794] ss:$2 sm:$0xff]
      %s5796 = scalar_lea.vmem [#allocation3], 80
      %v5797 = vld [vmem:[%s5796] ss:$2 sm:$0x3f]
      %s5798 = scalar_lea.vmem [#allocation3], 96
      %v5799 = vld [vmem:[%s5798] ss:$2 sm:$0xff]
      %s5800 = scalar_lea.vmem [#allocation3], 112
      %v5801 = vld [vmem:[%s5800] ss:$2 sm:$0x3f]
      %s5802 = scalar_lea.vmem [#allocation3], 128
      %v5803 = vld [vmem:[%s5802] ss:$2 sm:$0xff]
      %s5804 = scalar_lea.vmem [#allocation3], 144
      %v5805 = vld [vmem:[%s5804] ss:$2 sm:$0x3f]
      %s5806 = scalar_lea.vmem [#allocation3], 160
      %v5807 = vld [vmem:[%s5806] ss:$2 sm:$0xff]
      %s5808 = scalar_lea.vmem [#allocation3], 176
      %v5809 = vld [vmem:[%s5808] ss:$2 sm:$0x3f]
      %s5810 = scalar_lea.vmem [#allocation3], 192
      %v5811 = vld [vmem:[%s5810] ss:$2 sm:$0xff]
      %s5812 = scalar_lea.vmem [#allocation3], 208
      %v5813 = vld [vmem:[%s5812] ss:$2 sm:$0x3f]
      %s5814 = scalar_lea.vmem [#allocation3], 224
      %v5815 = vld [vmem:[%s5814] ss:$2 sm:$0xff]
      %s5816 = scalar_lea.vmem [#allocation3], 240
      %v5817 = vld [vmem:[%s5816] ss:$2 sm:$0x3f]
      %s5818 = scalar_lea.vmem [#allocation3], 256
      %v5819 = vld [vmem:[%s5818] ss:$2 sm:$0xff]
      %s5820 = scalar_lea.vmem [#allocation3], 272
      %v5821 = vld [vmem:[%s5820] ss:$2 sm:$0x3f]
      %s5822 = scalar_lea.vmem [#allocation3], 288
      %v5823 = vld [vmem:[%s5822] ss:$2 sm:$0xff]
      %s5824 = scalar_lea.vmem [#allocation3], 304
      %v5825 = vld [vmem:[%s5824] ss:$2 sm:$0x3f]
      %s5826 = scalar_lea.vmem [#allocation3], 320
      %v5827 = vld [vmem:[%s5826] ss:$2 sm:$0xff]
      %s5828 = scalar_lea.vmem [#allocation3], 336
      %v5829 = vld [vmem:[%s5828] ss:$2 sm:$0x3f]
      %s5830 = scalar_lea.vmem [#allocation3], 352
      %v5831 = vld [vmem:[%s5830] ss:$2 sm:$0xff]
      %s5832 = scalar_lea.vmem [#allocation3], 368
      %v5833 = vld [vmem:[%s5832] ss:$2 sm:$0x3f]
      %s5834 = scalar_lea.vmem [#allocation3], 384
      %v5835 = vld [vmem:[%s5834] ss:$2 sm:$0xff]
      %s5836 = scalar_lea.vmem [#allocation3], 400
      %v5837 = vld [vmem:[%s5836] ss:$2 sm:$0x3f]
      %s5838 = scalar_lea.vmem [#allocation3], 416
      %v5839 = vld [vmem:[%s5838] ss:$2 sm:$0xff]
      %s5840 = scalar_lea.vmem [#allocation3], 432
      %v5841 = vld [vmem:[%s5840] ss:$2 sm:$0x3f]
      %s5842 = scalar_lea.vmem [#allocation3], 448
      %v5843 = vld [vmem:[%s5842] ss:$2 sm:$0xff]
      %s5844 = scalar_lea.vmem [#allocation3], 464
      %v5845 = vld [vmem:[%s5844] ss:$2 sm:$0x3f]
      %s5846 = scalar_lea.vmem [#allocation3], 480
      %v5847 = vld [vmem:[%s5846] ss:$2 sm:$0xff]
      %s5848 = scalar_lea.vmem [#allocation3], 496
      %v5849 = vld [vmem:[%s5848] ss:$2 sm:$0x3f]
      %s5850 = scalar_lea.vmem [#allocation3], 512
      %v5851 = vld [vmem:[%s5850] ss:$2 sm:$0xff]
      %s5852 = scalar_lea.vmem [#allocation3], 528
      %v5853 = vld [vmem:[%s5852] ss:$2 sm:$0x3f]
      %s5854 = scalar_lea.vmem [#allocation3], 544
      %v5855 = vld [vmem:[%s5854] ss:$2 sm:$0xff]
      %s5856 = scalar_lea.vmem [#allocation3], 560
      %v5857 = vld [vmem:[%s5856] ss:$2 sm:$0x3f]
      %s5858 = scalar_lea.vmem [#allocation3], 576
      %v5859 = vld [vmem:[%s5858] ss:$2 sm:$0xff]
      %s5860 = scalar_lea.vmem [#allocation3], 592
      %v5861 = vld [vmem:[%s5860] ss:$2 sm:$0x3f]
      %s5862 = scalar_lea.vmem [#allocation3], 608
      %v5863 = vld [vmem:[%s5862] ss:$2 sm:$0xff]
      %s5864 = scalar_lea.vmem [#allocation3], 624
      %v5865 = vld [vmem:[%s5864] ss:$2 sm:$0x3f]
      %s5866 = scalar_lea.vmem [#allocation3], 640
      %v5867 = vld [vmem:[%s5866] ss:$2 sm:$0xff]
      %s5868 = scalar_lea.vmem [#allocation3], 656
      %v5869 = vld [vmem:[%s5868] ss:$2 sm:$0x3f]
      %s5870 = scalar_lea.vmem [#allocation3], 672
      %v5871 = vld [vmem:[%s5870] ss:$2 sm:$0xff]
      %s5872 = scalar_lea.vmem [#allocation3], 688
      %v5873 = vld [vmem:[%s5872] ss:$2 sm:$0x3f]
      %s5874 = scalar_lea.vmem [#allocation3], 704
      %v5875 = vld [vmem:[%s5874] ss:$2 sm:$0xff]
      %s5876 = scalar_lea.vmem [#allocation3], 720
      %v5877 = vld [vmem:[%s5876] ss:$2 sm:$0x3f]
      %s5878 = scalar_lea.vmem [#allocation3], 736
      %v5879 = vld [vmem:[%s5878] ss:$2 sm:$0xff]
      %s5880 = scalar_lea.vmem [#allocation3], 752
      %v5881 = vld [vmem:[%s5880] ss:$2 sm:$0x3f]
      %s5882 = scalar_lea.vmem [#allocation3], 768
      %v5883 = vld [vmem:[%s5882] ss:$2 sm:$0xff]
      %s5884 = scalar_lea.vmem [#allocation3], 784
      %v5885 = vld [vmem:[%s5884] ss:$2 sm:$0x3f]
      %s5886 = scalar_lea.vmem [#allocation3], 800
      %v5887 = vld [vmem:[%s5886] ss:$2 sm:$0xff]
      %s5888 = scalar_lea.vmem [#allocation3], 816
      %v5889 = vld [vmem:[%s5888] ss:$2 sm:$0x3f]
      %s5890 = scalar_lea.vmem [#allocation3], 832
      %v5891 = vld [vmem:[%s5890] ss:$2 sm:$0xff]
      %s5892 = scalar_lea.vmem [#allocation3], 848
      %v5893 = vld [vmem:[%s5892] ss:$2 sm:$0x3f]
      %s5894 = scalar_lea.vmem [#allocation3], 864
      %v5895 = vld [vmem:[%s5894] ss:$2 sm:$0xff]
      %s5896 = scalar_lea.vmem [#allocation3], 880
      %v5897 = vld [vmem:[%s5896] ss:$2 sm:$0x3f]
      %s5898 = scalar_lea.vmem [#allocation3], 896
      %v5899 = vld [vmem:[%s5898] ss:$2 sm:$0xff]
      %s5900 = scalar_lea.vmem [#allocation3], 912
      %v5901 = vld [vmem:[%s5900] ss:$2 sm:$0x3f]
      %s5902 = scalar_lea.vmem [#allocation3], 928
      %v5903 = vld [vmem:[%s5902] ss:$2 sm:$0xff]
      %s5904 = scalar_lea.vmem [#allocation3], 944
      %v5905 = vld [vmem:[%s5904] ss:$2 sm:$0x3f]
      %s5906 = scalar_lea.vmem [#allocation3], 960
      %v5907 = vld [vmem:[%s5906] ss:$2 sm:$0xff]
      %s5908 = scalar_lea.vmem [#allocation3], 976
      %v5909 = vld [vmem:[%s5908] ss:$2 sm:$0x3f]
      %s5910 = scalar_lea.vmem [#allocation3], 992
      %v5911 = vld [vmem:[%s5910] ss:$2 sm:$0xff]
      %s5912 = scalar_lea.vmem [#allocation3], 1008
      %v5913 = vld [vmem:[%s5912] ss:$2 sm:$0x3f]
      %s5914 = scalar_lea.vmem [#allocation3], 1
      %v5915 = vld [vmem:[%s5914] ss:$2 sm:$0xff]
      %s5916 = scalar_lea.vmem [#allocation3], 17
      %v5917 = vld [vmem:[%s5916] ss:$2 sm:$0x3f]
      %s5918 = scalar_lea.vmem [#allocation3], 33
      %v5919 = vld [vmem:[%s5918] ss:$2 sm:$0xff]
      %s5920 = scalar_lea.vmem [#allocation3], 49
      %v5921 = vld [vmem:[%s5920] ss:$2 sm:$0x3f]
      %s5922 = scalar_lea.vmem [#allocation3], 65
      %v5923 = vld [vmem:[%s5922] ss:$2 sm:$0xff]
      %s5924 = scalar_lea.vmem [#allocation3], 81
      %v5925 = vld [vmem:[%s5924] ss:$2 sm:$0x3f]
      %s5926 = scalar_lea.vmem [#allocation3], 97
      %v5927 = vld [vmem:[%s5926] ss:$2 sm:$0xff]
      %s5928 = scalar_lea.vmem [#allocation3], 113
      %v5929 = vld [vmem:[%s5928] ss:$2 sm:$0x3f]
      %s5930 = scalar_lea.vmem [#allocation3], 129
      %v5931 = vld [vmem:[%s5930] ss:$2 sm:$0xff]
      %s5932 = scalar_lea.vmem [#allocation3], 145
      %v5933 = vld [vmem:[%s5932] ss:$2 sm:$0x3f]
      %s5934 = scalar_lea.vmem [#allocation3], 161
      %v5935 = vld [vmem:[%s5934] ss:$2 sm:$0xff]
      %s5936 = scalar_lea.vmem [#allocation3], 177
      %v5937 = vld [vmem:[%s5936] ss:$2 sm:$0x3f]
      %s5938 = scalar_lea.vmem [#allocation3], 193
      %v5939 = vld [vmem:[%s5938] ss:$2 sm:$0xff]
      %s5940 = scalar_lea.vmem [#allocation3], 209
      %v5941 = vld [vmem:[%s5940] ss:$2 sm:$0x3f]
      %s5942 = scalar_lea.vmem [#allocation3], 225
      %v5943 = vld [vmem:[%s5942] ss:$2 sm:$0xff]
      %s5944 = scalar_lea.vmem [#allocation3], 241
      %v5945 = vld [vmem:[%s5944] ss:$2 sm:$0x3f]
      %s5946 = scalar_lea.vmem [#allocation3], 257
      %v5947 = vld [vmem:[%s5946] ss:$2 sm:$0xff]
      %s5948 = scalar_lea.vmem [#allocation3], 273
      %v5949 = vld [vmem:[%s5948] ss:$2 sm:$0x3f]
      %s5950 = scalar_lea.vmem [#allocation3], 289
      %v5951 = vld [vmem:[%s5950] ss:$2 sm:$0xff]
      %s5952 = scalar_lea.vmem [#allocation3], 305
      %v5953 = vld [vmem:[%s5952] ss:$2 sm:$0x3f]
      %s5954 = scalar_lea.vmem [#allocation3], 321
      %v5955 = vld [vmem:[%s5954] ss:$2 sm:$0xff]
      %s5956 = scalar_lea.vmem [#allocation3], 337
      %v5957 = vld [vmem:[%s5956] ss:$2 sm:$0x3f]
      %s5958 = scalar_lea.vmem [#allocation3], 353
      %v5959 = vld [vmem:[%s5958] ss:$2 sm:$0xff]
      %s5960 = scalar_lea.vmem [#allocation3], 369
      %v5961 = vld [vmem:[%s5960] ss:$2 sm:$0x3f]
      %s5962 = scalar_lea.vmem [#allocation3], 385
      %v5963 = vld [vmem:[%s5962] ss:$2 sm:$0xff]
      %s5964 = scalar_lea.vmem [#allocation3], 401
      %v5965 = vld [vmem:[%s5964] ss:$2 sm:$0x3f]
      %s5966 = scalar_lea.vmem [#allocation3], 417
      %v5967 = vld [vmem:[%s5966] ss:$2 sm:$0xff]
      %s5968 = scalar_lea.vmem [#allocation3], 433
      %v5969 = vld [vmem:[%s5968] ss:$2 sm:$0x3f]
      %s5970 = scalar_lea.vmem [#allocation3], 449
      %v5971 = vld [vmem:[%s5970] ss:$2 sm:$0xff]
      %s5972 = scalar_lea.vmem [#allocation3], 465
      %v5973 = vld [vmem:[%s5972] ss:$2 sm:$0x3f]
      %s5974 = scalar_lea.vmem [#allocation3], 481
      %v5975 = vld [vmem:[%s5974] ss:$2 sm:$0xff]
      %s5976 = scalar_lea.vmem [#allocation3], 497
      %v5977 = vld [vmem:[%s5976] ss:$2 sm:$0x3f]
      %s5978 = scalar_lea.vmem [#allocation3], 513
      %v5979 = vld [vmem:[%s5978] ss:$2 sm:$0xff]
      %s5980 = scalar_lea.vmem [#allocation3], 529
      %v5981 = vld [vmem:[%s5980] ss:$2 sm:$0x3f]
      %s5982 = scalar_lea.vmem [#allocation3], 545
      %v5983 = vld [vmem:[%s5982] ss:$2 sm:$0xff]
      %s5984 = scalar_lea.vmem [#allocation3], 561
      %v5985 = vld [vmem:[%s5984] ss:$2 sm:$0x3f]
      %s5986 = scalar_lea.vmem [#allocation3], 577
      %v5987 = vld [vmem:[%s5986] ss:$2 sm:$0xff]
      %s5988 = scalar_lea.vmem [#allocation3], 593
      %v5989 = vld [vmem:[%s5988] ss:$2 sm:$0x3f]
      %s5990 = scalar_lea.vmem [#allocation3], 609
      %v5991 = vld [vmem:[%s5990] ss:$2 sm:$0xff]
      %s5992 = scalar_lea.vmem [#allocation3], 625
      %v5993 = vld [vmem:[%s5992] ss:$2 sm:$0x3f]
      %s5994 = scalar_lea.vmem [#allocation3], 641
      %v5995 = vld [vmem:[%s5994] ss:$2 sm:$0xff]
      %s5996 = scalar_lea.vmem [#allocation3], 657
      %v5997 = vld [vmem:[%s5996] ss:$2 sm:$0x3f]
      %s5998 = scalar_lea.vmem [#allocation3], 673
      %v5999 = vld [vmem:[%s5998] ss:$2 sm:$0xff]
      %s6000 = scalar_lea.vmem [#allocation3], 689
      %v6001 = vld [vmem:[%s6000] ss:$2 sm:$0x3f]
      %s6002 = scalar_lea.vmem [#allocation3], 705
      %v6003 = vld [vmem:[%s6002] ss:$2 sm:$0xff]
      %s6004 = scalar_lea.vmem [#allocation3], 721
      %v6005 = vld [vmem:[%s6004] ss:$2 sm:$0x3f]
      %s6006 = scalar_lea.vmem [#allocation3], 737
      %v6007 = vld [vmem:[%s6006] ss:$2 sm:$0xff]
      %s6008 = scalar_lea.vmem [#allocation3], 753
      %v6009 = vld [vmem:[%s6008] ss:$2 sm:$0x3f]
      %s6010 = scalar_lea.vmem [#allocation3], 769
      %v6011 = vld [vmem:[%s6010] ss:$2 sm:$0xff]
      %s6012 = scalar_lea.vmem [#allocation3], 785
      %v6013 = vld [vmem:[%s6012] ss:$2 sm:$0x3f]
      %s6014 = scalar_lea.vmem [#allocation3], 801
      %v6015 = vld [vmem:[%s6014] ss:$2 sm:$0xff]
      %s6016 = scalar_lea.vmem [#allocation3], 817
      %v6017 = vld [vmem:[%s6016] ss:$2 sm:$0x3f]
      %s6018 = scalar_lea.vmem [#allocation3], 833
      %v6019 = vld [vmem:[%s6018] ss:$2 sm:$0xff]
      %s6020 = scalar_lea.vmem [#allocation3], 849
      %v6021 = vld [vmem:[%s6020] ss:$2 sm:$0x3f]
      %s6022 = scalar_lea.vmem [#allocation3], 865
      %v6023 = vld [vmem:[%s6022] ss:$2 sm:$0xff]
      %s6024 = scalar_lea.vmem [#allocation3], 881
      %v6025 = vld [vmem:[%s6024] ss:$2 sm:$0x3f]
      %s6026 = scalar_lea.vmem [#allocation3], 897
      %v6027 = vld [vmem:[%s6026] ss:$2 sm:$0xff]
      %s6028 = scalar_lea.vmem [#allocation3], 913
      %v6029 = vld [vmem:[%s6028] ss:$2 sm:$0x3f]
      %s6030 = scalar_lea.vmem [#allocation3], 929
      %v6031 = vld [vmem:[%s6030] ss:$2 sm:$0xff]
      %s6032 = scalar_lea.vmem [#allocation3], 945
      %v6033 = vld [vmem:[%s6032] ss:$2 sm:$0x3f]
      %s6034 = scalar_lea.vmem [#allocation3], 961
      %v6035 = vld [vmem:[%s6034] ss:$2 sm:$0xff]
      %s6036 = scalar_lea.vmem [#allocation3], 977
      %v6037 = vld [vmem:[%s6036] ss:$2 sm:$0x3f]
      %s6038 = scalar_lea.vmem [#allocation3], 993
      %v6039 = vld [vmem:[%s6038] ss:$2 sm:$0xff]
      %s6040 = scalar_lea.vmem [#allocation3], 1009
      %v6041 = vld [vmem:[%s6040] ss:$2 sm:$0x3f]
      %v6042 = vmax.f32 %v5787, %v5915
      %v6043 = vmax.f32 %v5789, %v5917
      %v6044 = vmax.f32 %v5791, %v5919
      %v6045 = vmax.f32 %v5793, %v5921
      %v6046 = vmax.f32 %v5795, %v5923
      %v6047 = vmax.f32 %v5797, %v5925
      %v6048 = vmax.f32 %v5799, %v5927
      %v6049 = vmax.f32 %v5801, %v5929
      %v6050 = vmax.f32 %v5803, %v5931
      %v6051 = vmax.f32 %v5805, %v5933
      %v6052 = vmax.f32 %v5807, %v5935
      %v6053 = vmax.f32 %v5809, %v5937
      %v6054 = vmax.f32 %v5811, %v5939
      %v6055 = vmax.f32 %v5813, %v5941
      %v6056 = vmax.f32 %v5815, %v5943
      %v6057 = vmax.f32 %v5817, %v5945
      %v6058 = vmax.f32 %v5819, %v5947
      %v6059 = vmax.f32 %v5821, %v5949
      %v6060 = vmax.f32 %v5823, %v5951
      %v6061 = vmax.f32 %v5825, %v5953
      %v6062 = vmax.f32 %v5827, %v5955
      %v6063 = vmax.f32 %v5829, %v5957
      %v6064 = vmax.f32 %v5831, %v5959
      %v6065 = vmax.f32 %v5833, %v5961
      %v6066 = vmax.f32 %v5835, %v5963
      %v6067 = vmax.f32 %v5837, %v5965
      %v6068 = vmax.f32 %v5839, %v5967
      %v6069 = vmax.f32 %v5841, %v5969
      %v6070 = vmax.f32 %v5843, %v5971
      %v6071 = vmax.f32 %v5845, %v5973
      %v6072 = vmax.f32 %v5847, %v5975
      %v6073 = vmax.f32 %v5849, %v5977
      %v6074 = vmax.f32 %v5851, %v5979
      %v6075 = vmax.f32 %v5853, %v5981
      %v6076 = vmax.f32 %v5855, %v5983
      %v6077 = vmax.f32 %v5857, %v5985
      %v6078 = vmax.f32 %v5859, %v5987
      %v6079 = vmax.f32 %v5861, %v5989
      %v6080 = vmax.f32 %v5863, %v5991
      %v6081 = vmax.f32 %v5865, %v5993
      %v6082 = vmax.f32 %v5867, %v5995
      %v6083 = vmax.f32 %v5869, %v5997
      %v6084 = vmax.f32 %v5871, %v5999
      %v6085 = vmax.f32 %v5873, %v6001
      %v6086 = vmax.f32 %v5875, %v6003
      %v6087 = vmax.f32 %v5877, %v6005
      %v6088 = vmax.f32 %v5879, %v6007
      %v6089 = vmax.f32 %v5881, %v6009
      %v6090 = vmax.f32 %v5883, %v6011
      %v6091 = vmax.f32 %v5885, %v6013
      %v6092 = vmax.f32 %v5887, %v6015
      %v6093 = vmax.f32 %v5889, %v6017
      %v6094 = vmax.f32 %v5891, %v6019
      %v6095 = vmax.f32 %v5893, %v6021
      %v6096 = vmax.f32 %v5895, %v6023
      %v6097 = vmax.f32 %v5897, %v6025
      %v6098 = vmax.f32 %v5899, %v6027
      %v6099 = vmax.f32 %v5901, %v6029
      %v6100 = vmax.f32 %v5903, %v6031
      %v6101 = vmax.f32 %v5905, %v6033
      %v6102 = vmax.f32 %v5907, %v6035
      %v6103 = vmax.f32 %v5909, %v6037
      %v6104 = vmax.f32 %v5911, %v6039
      %v6105 = vmax.f32 %v5913, %v6041
      %v6106 = vld [vmem:[%s2] sm:$0x1]
      %v6108 = vlaneseq
      %v6109 = vshrl.u32 %v6108, 7
      %v6110 = vsub.s32 0, %v6109
      %v6111 = vrot.slane %v6106, %v6110
      %v6113 = vadd.f32 %v6042, %v6111
      %v6114 = vadd.f32 %v6043, %v6111
      %v6115 = vadd.f32 %v6044, %v6111
      %v6116 = vadd.f32 %v6045, %v6111
      %v6117 = vadd.f32 %v6046, %v6111
      %v6118 = vadd.f32 %v6047, %v6111
      %v6119 = vadd.f32 %v6048, %v6111
      %v6120 = vadd.f32 %v6049, %v6111
      %v6121 = vadd.f32 %v6050, %v6111
      %v6122 = vadd.f32 %v6051, %v6111
      %v6123 = vadd.f32 %v6052, %v6111
      %v6124 = vadd.f32 %v6053, %v6111
      %v6125 = vadd.f32 %v6054, %v6111
      %v6126 = vadd.f32 %v6055, %v6111
      %v6127 = vadd.f32 %v6056, %v6111
      %v6128 = vadd.f32 %v6057, %v6111
      %v6129 = vadd.f32 %v6058, %v6111
      %v6130 = vadd.f32 %v6059, %v6111
      %v6131 = vadd.f32 %v6060, %v6111
      %v6132 = vadd.f32 %v6061, %v6111
      %v6133 = vadd.f32 %v6062, %v6111
      %v6134 = vadd.f32 %v6063, %v6111
      %v6135 = vadd.f32 %v6064, %v6111
      %v6136 = vadd.f32 %v6065, %v6111
      %v6137 = vadd.f32 %v6066, %v6111
      %v6138 = vadd.f32 %v6067, %v6111
      %v6139 = vadd.f32 %v6068, %v6111
      %v6140 = vadd.f32 %v6069, %v6111
      %v6141 = vadd.f32 %v6070, %v6111
      %v6142 = vadd.f32 %v6071, %v6111
      %v6143 = vadd.f32 %v6072, %v6111
      %v6144 = vadd.f32 %v6073, %v6111
      %v6145 = vadd.f32 %v6074, %v6111
      %v6146 = vadd.f32 %v6075, %v6111
      %v6147 = vadd.f32 %v6076, %v6111
      %v6148 = vadd.f32 %v6077, %v6111
      %v6149 = vadd.f32 %v6078, %v6111
      %v6150 = vadd.f32 %v6079, %v6111
      %v6151 = vadd.f32 %v6080, %v6111
      %v6152 = vadd.f32 %v6081, %v6111
      %v6153 = vadd.f32 %v6082, %v6111
      %v6154 = vadd.f32 %v6083, %v6111
      %v6155 = vadd.f32 %v6084, %v6111
      %v6156 = vadd.f32 %v6085, %v6111
      %v6157 = vadd.f32 %v6086, %v6111
      %v6158 = vadd.f32 %v6087, %v6111
      %v6159 = vadd.f32 %v6088, %v6111
      %v6160 = vadd.f32 %v6089, %v6111
      %v6161 = vadd.f32 %v6090, %v6111
      %v6162 = vadd.f32 %v6091, %v6111
      %v6163 = vadd.f32 %v6092, %v6111
      %v6164 = vadd.f32 %v6093, %v6111
      %v6165 = vadd.f32 %v6094, %v6111
      %v6166 = vadd.f32 %v6095, %v6111
      %v6167 = vadd.f32 %v6096, %v6111
      %v6168 = vadd.f32 %v6097, %v6111
      %v6169 = vadd.f32 %v6098, %v6111
      %v6170 = vadd.f32 %v6099, %v6111
      %v6171 = vadd.f32 %v6100, %v6111
      %v6172 = vadd.f32 %v6101, %v6111
      %v6173 = vadd.f32 %v6102, %v6111
      %v6174 = vadd.f32 %v6103, %v6111
      %v6175 = vadd.f32 %v6104, %v6111
      %v6176 = vadd.f32 %v6105, %v6111
      %v6177 = vmax.f32 %v6113, 0.0
      %v6178 = vmax.f32 %v6114, 0.0
      %v6179 = vmax.f32 %v6115, 0.0
      %v6180 = vmax.f32 %v6116, 0.0
      %v6181 = vmax.f32 %v6117, 0.0
      %v6182 = vmax.f32 %v6118, 0.0
      %v6183 = vmax.f32 %v6119, 0.0
      %v6184 = vmax.f32 %v6120, 0.0
      %v6185 = vmax.f32 %v6121, 0.0
      %v6186 = vmax.f32 %v6122, 0.0
      %v6187 = vmax.f32 %v6123, 0.0
      %v6188 = vmax.f32 %v6124, 0.0
      %v6189 = vmax.f32 %v6125, 0.0
      %v6190 = vmax.f32 %v6126, 0.0
      %v6191 = vmax.f32 %v6127, 0.0
      %v6192 = vmax.f32 %v6128, 0.0
      %v6193 = vmax.f32 %v6129, 0.0
      %v6194 = vmax.f32 %v6130, 0.0
      %v6195 = vmax.f32 %v6131, 0.0
      %v6196 = vmax.f32 %v6132, 0.0
      %v6197 = vmax.f32 %v6133, 0.0
      %v6198 = vmax.f32 %v6134, 0.0
      %v6199 = vmax.f32 %v6135, 0.0
      %v6200 = vmax.f32 %v6136, 0.0
      %v6201 = vmax.f32 %v6137, 0.0
      %v6202 = vmax.f32 %v6138, 0.0
      %v6203 = vmax.f32 %v6139, 0.0
      %v6204 = vmax.f32 %v6140, 0.0
      %v6205 = vmax.f32 %v6141, 0.0
      %v6206 = vmax.f32 %v6142, 0.0
      %v6207 = vmax.f32 %v6143, 0.0
      %v6208 = vmax.f32 %v6144, 0.0
      %v6209 = vmax.f32 %v6145, 0.0
      %v6210 = vmax.f32 %v6146, 0.0
      %v6211 = vmax.f32 %v6147, 0.0
      %v6212 = vmax.f32 %v6148, 0.0
      %v6213 = vmax.f32 %v6149, 0.0
      %v6214 = vmax.f32 %v6150, 0.0
      %v6215 = vmax.f32 %v6151, 0.0
      %v6216 = vmax.f32 %v6152, 0.0
      %v6217 = vmax.f32 %v6153, 0.0
      %v6218 = vmax.f32 %v6154, 0.0
      %v6219 = vmax.f32 %v6155, 0.0
      %v6220 = vmax.f32 %v6156, 0.0
      %v6221 = vmax.f32 %v6157, 0.0
      %v6222 = vmax.f32 %v6158, 0.0
      %v6223 = vmax.f32 %v6159, 0.0
      %v6224 = vmax.f32 %v6160, 0.0
      %v6225 = vmax.f32 %v6161, 0.0
      %v6226 = vmax.f32 %v6162, 0.0
      %v6227 = vmax.f32 %v6163, 0.0
      %v6228 = vmax.f32 %v6164, 0.0
      %v6229 = vmax.f32 %v6165, 0.0
      %v6230 = vmax.f32 %v6166, 0.0
      %v6231 = vmax.f32 %v6167, 0.0
      %v6232 = vmax.f32 %v6168, 0.0
      %v6233 = vmax.f32 %v6169, 0.0
      %v6234 = vmax.f32 %v6170, 0.0
      %v6235 = vmax.f32 %v6171, 0.0
      %v6236 = vmax.f32 %v6172, 0.0
      %v6237 = vmax.f32 %v6173, 0.0
      %v6238 = vmax.f32 %v6174, 0.0
      %v6239 = vmax.f32 %v6175, 0.0
      %v6240 = vmax.f32 %v6176, 0.0
      %vm6241 = vcmask 909312
      %6242 = vst.msk [vmem:[#allocation4] sm:$0x1] %vm6241, 0.0
      %6243 = vst.msk [vmem:[#allocation4 + $0x10] sm:$0x1] %vm6241, 0.0
      %6244 = vst.msk [vmem:[#allocation4 + $0x20] sm:$0x1] %vm6241, 0.0
      %6245 = vst.msk [vmem:[#allocation4 + $0x30] sm:$0x1] %vm6241, 0.0
      %6246 = vst.msk [vmem:[#allocation4 + $0x40] sm:$0x1] %vm6241, 0.0
      %6247 = vst.msk [vmem:[#allocation4 + $0x50] sm:$0x1] %vm6241, 0.0
      %6248 = vst.msk [vmem:[#allocation4 + $0x60] sm:$0x1] %vm6241, 0.0
      %6249 = vst.msk [vmem:[#allocation4 + $0x70] sm:$0x1] %vm6241, 0.0
      %6250 = vst.msk [vmem:[#allocation4 + $0x80] sm:$0x1] %vm6241, 0.0
      %6251 = vst.msk [vmem:[#allocation4 + $0x90] sm:$0x1] %vm6241, 0.0
      %6252 = vst.msk [vmem:[#allocation4 + $0xa0] sm:$0x1] %vm6241, 0.0
      %6253 = vst.msk [vmem:[#allocation4 + $0xb0] sm:$0x1] %vm6241, 0.0
      %6254 = vst.msk [vmem:[#allocation4 + $0xc0] sm:$0x1] %vm6241, 0.0
      %6255 = vst.msk [vmem:[#allocation4 + $0xd0] sm:$0x1] %vm6241, 0.0
      %6256 = vst.msk [vmem:[#allocation4 + $0xe0] sm:$0x1] %vm6241, 0.0
      %6257 = vst.msk [vmem:[#allocation4 + $0xf0] sm:$0x1] %vm6241, 0.0
      %6258 = vst.msk [vmem:[#allocation4 + $0x100] sm:$0x1] %vm6241, 0.0
      %6259 = vst.msk [vmem:[#allocation4 + $0x110] sm:$0x1] %vm6241, 0.0
      %6260 = vst.msk [vmem:[#allocation4 + $0x120] sm:$0x1] %vm6241, 0.0
      %6261 = vst.msk [vmem:[#allocation4 + $0x130] sm:$0x1] %vm6241, 0.0
      %6262 = vst.msk [vmem:[#allocation4 + $0x140] sm:$0x1] %vm6241, 0.0
      %6263 = vst.msk [vmem:[#allocation4 + $0x150] sm:$0x1] %vm6241, 0.0
      %6264 = vst.msk [vmem:[#allocation4 + $0x160] sm:$0x1] %vm6241, 0.0
      %6265 = vst.msk [vmem:[#allocation4 + $0x170] sm:$0x1] %vm6241, 0.0
      %6266 = vst.msk [vmem:[#allocation4 + $0x180] sm:$0x1] %vm6241, 0.0
      %6267 = vst.msk [vmem:[#allocation4 + $0x190] sm:$0x1] %vm6241, 0.0
      %6268 = vst.msk [vmem:[#allocation4 + $0x1a0] sm:$0x1] %vm6241, 0.0
      %6269 = vst.msk [vmem:[#allocation4 + $0x1b0] sm:$0x1] %vm6241, 0.0
      %6270 = vst.msk [vmem:[#allocation4 + $0x1c0] sm:$0x1] %vm6241, 0.0
      %6271 = vst.msk [vmem:[#allocation4 + $0x1d0] sm:$0x1] %vm6241, 0.0
      %6272 = vst.msk [vmem:[#allocation4 + $0x1e0] sm:$0x1] %vm6241, 0.0
      %6273 = vst.msk [vmem:[#allocation4 + $0x1f0] sm:$0x1] %vm6241, 0.0
      %6274 = vst.msk [vmem:[#allocation4 + $0xf] sm:$0x1] %vm6241, 0.0
      %6275 = vst.msk [vmem:[#allocation4 + $0x1f] sm:$0x1] %vm6241, 0.0
      %6276 = vst.msk [vmem:[#allocation4 + $0x2f] sm:$0x1] %vm6241, 0.0
      %6277 = vst.msk [vmem:[#allocation4 + $0x3f] sm:$0x1] %vm6241, 0.0
      %6278 = vst.msk [vmem:[#allocation4 + $0x4f] sm:$0x1] %vm6241, 0.0
      %6279 = vst.msk [vmem:[#allocation4 + $0x5f] sm:$0x1] %vm6241, 0.0
      %6280 = vst.msk [vmem:[#allocation4 + $0x6f] sm:$0x1] %vm6241, 0.0
      %6281 = vst.msk [vmem:[#allocation4 + $0x7f] sm:$0x1] %vm6241, 0.0
      %6282 = vst.msk [vmem:[#allocation4 + $0x8f] sm:$0x1] %vm6241, 0.0
      %6283 = vst.msk [vmem:[#allocation4 + $0x9f] sm:$0x1] %vm6241, 0.0
      %6284 = vst.msk [vmem:[#allocation4 + $0xaf] sm:$0x1] %vm6241, 0.0
      %6285 = vst.msk [vmem:[#allocation4 + $0xbf] sm:$0x1] %vm6241, 0.0
      %6286 = vst.msk [vmem:[#allocation4 + $0xcf] sm:$0x1] %vm6241, 0.0
      %6287 = vst.msk [vmem:[#allocation4 + $0xdf] sm:$0x1] %vm6241, 0.0
      %6288 = vst.msk [vmem:[#allocation4 + $0xef] sm:$0x1] %vm6241, 0.0
      %6289 = vst.msk [vmem:[#allocation4 + $0xff] sm:$0x1] %vm6241, 0.0
      %6290 = vst.msk [vmem:[#allocation4 + $0x10f] sm:$0x1] %vm6241, 0.0
      %6291 = vst.msk [vmem:[#allocation4 + $0x11f] sm:$0x1] %vm6241, 0.0
      %6292 = vst.msk [vmem:[#allocation4 + $0x12f] sm:$0x1] %vm6241, 0.0
      %6293 = vst.msk [vmem:[#allocation4 + $0x13f] sm:$0x1] %vm6241, 0.0
      %6294 = vst.msk [vmem:[#allocation4 + $0x14f] sm:$0x1] %vm6241, 0.0
      %6295 = vst.msk [vmem:[#allocation4 + $0x15f] sm:$0x1] %vm6241, 0.0
      %6296 = vst.msk [vmem:[#allocation4 + $0x16f] sm:$0x1] %vm6241, 0.0
      %6297 = vst.msk [vmem:[#allocation4 + $0x17f] sm:$0x1] %vm6241, 0.0
      %6298 = vst.msk [vmem:[#allocation4 + $0x18f] sm:$0x1] %vm6241, 0.0
      %6299 = vst.msk [vmem:[#allocation4 + $0x19f] sm:$0x1] %vm6241, 0.0
      %6300 = vst.msk [vmem:[#allocation4 + $0x1af] sm:$0x1] %vm6241, 0.0
      %6301 = vst.msk [vmem:[#allocation4 + $0x1bf] sm:$0x1] %vm6241, 0.0
      %6302 = vst.msk [vmem:[#allocation4 + $0x1cf] sm:$0x1] %vm6241, 0.0
      %6303 = vst.msk [vmem:[#allocation4 + $0x1df] sm:$0x1] %vm6241, 0.0
      %6304 = vst.msk [vmem:[#allocation4 + $0x1ef] sm:$0x1] %vm6241, 0.0
      %6305 = vst.msk [vmem:[#allocation4 + $0x1ff] sm:$0x1] %vm6241, 0.0
      %6306 = vst.msk [vmem:[#allocation4 + $0x1] sm:$0xff] %vm5657, %v6177
      %vm6307 = vcmask 914432
      %6308 = vst.msk [vmem:[#allocation4 + $0x9] sm:$0x3f] %vm6307, %v6178
      %6309 = vst.msk [vmem:[#allocation4 + $0x11] sm:$0xff] %vm5657, %v6179
      %6310 = vst.msk [vmem:[#allocation4 + $0x19] sm:$0x3f] %vm6307, %v6180
      %6311 = vst.msk [vmem:[#allocation4 + $0x21] sm:$0xff] %vm5657, %v6181
      %6312 = vst.msk [vmem:[#allocation4 + $0x29] sm:$0x3f] %vm6307, %v6182
      %6313 = vst.msk [vmem:[#allocation4 + $0x31] sm:$0xff] %vm5657, %v6183
      %6314 = vst.msk [vmem:[#allocation4 + $0x39] sm:$0x3f] %vm6307, %v6184
      %6315 = vst.msk [vmem:[#allocation4 + $0x41] sm:$0xff] %vm5657, %v6185
      %6316 = vst.msk [vmem:[#allocation4 + $0x49] sm:$0x3f] %vm6307, %v6186
      %6317 = vst.msk [vmem:[#allocation4 + $0x51] sm:$0xff] %vm5657, %v6187
      %6318 = vst.msk [vmem:[#allocation4 + $0x59] sm:$0x3f] %vm6307, %v6188
      %6319 = vst.msk [vmem:[#allocation4 + $0x61] sm:$0xff] %vm5657, %v6189
      %6320 = vst.msk [vmem:[#allocation4 + $0x69] sm:$0x3f] %vm6307, %v6190
      %6321 = vst.msk [vmem:[#allocation4 + $0x71] sm:$0xff] %vm5657, %v6191
      %6322 = vst.msk [vmem:[#allocation4 + $0x79] sm:$0x3f] %vm6307, %v6192
      %6323 = vst.msk [vmem:[#allocation4 + $0x81] sm:$0xff] %vm5657, %v6193
      %6324 = vst.msk [vmem:[#allocation4 + $0x89] sm:$0x3f] %vm6307, %v6194
      %6325 = vst.msk [vmem:[#allocation4 + $0x91] sm:$0xff] %vm5657, %v6195
      %6326 = vst.msk [vmem:[#allocation4 + $0x99] sm:$0x3f] %vm6307, %v6196
      %6327 = vst.msk [vmem:[#allocation4 + $0xa1] sm:$0xff] %vm5657, %v6197
      %6328 = vst.msk [vmem:[#allocation4 + $0xa9] sm:$0x3f] %vm6307, %v6198
      %6329 = vst.msk [vmem:[#allocation4 + $0xb1] sm:$0xff] %vm5657, %v6199
      %6330 = vst.msk [vmem:[#allocation4 + $0xb9] sm:$0x3f] %vm6307, %v6200
      %6331 = vst.msk [vmem:[#allocation4 + $0xc1] sm:$0xff] %vm5657, %v6201
      %6332 = vst.msk [vmem:[#allocation4 + $0xc9] sm:$0x3f] %vm6307, %v6202
      %6333 = vst.msk [vmem:[#allocation4 + $0xd1] sm:$0xff] %vm5657, %v6203
      %6334 = vst.msk [vmem:[#allocation4 + $0xd9] sm:$0x3f] %vm6307, %v6204
      %6335 = vst.msk [vmem:[#allocation4 + $0xe1] sm:$0xff] %vm5657, %v6205
      %6336 = vst.msk [vmem:[#allocation4 + $0xe9] sm:$0x3f] %vm6307, %v6206
      %6337 = vst.msk [vmem:[#allocation4 + $0xf1] sm:$0xff] %vm5657, %v6207
      %6338 = vst.msk [vmem:[#allocation4 + $0xf9] sm:$0x3f] %vm6307, %v6208
      %6339 = vst.msk [vmem:[#allocation4 + $0x101] sm:$0xff] %vm5657, %v6209
      %6340 = vst.msk [vmem:[#allocation4 + $0x109] sm:$0x3f] %vm6307, %v6210
      %6341 = vst.msk [vmem:[#allocation4 + $0x111] sm:$0xff] %vm5657, %v6211
      %6342 = vst.msk [vmem:[#allocation4 + $0x119] sm:$0x3f] %vm6307, %v6212
      %6343 = vst.msk [vmem:[#allocation4 + $0x121] sm:$0xff] %vm5657, %v6213
      %6344 = vst.msk [vmem:[#allocation4 + $0x129] sm:$0x3f] %vm6307, %v6214
      %6345 = vst.msk [vmem:[#allocation4 + $0x131] sm:$0xff] %vm5657, %v6215
      %6346 = vst.msk [vmem:[#allocation4 + $0x139] sm:$0x3f] %vm6307, %v6216
      %6347 = vst.msk [vmem:[#allocation4 + $0x141] sm:$0xff] %vm5657, %v6217
      %6348 = vst.msk [vmem:[#allocation4 + $0x149] sm:$0x3f] %vm6307, %v6218
      %6349 = vst.msk [vmem:[#allocation4 + $0x151] sm:$0xff] %vm5657, %v6219
      %6350 = vst.msk [vmem:[#allocation4 + $0x159] sm:$0x3f] %vm6307, %v6220
      %6351 = vst.msk [vmem:[#allocation4 + $0x161] sm:$0xff] %vm5657, %v6221
      %6352 = vst.msk [vmem:[#allocation4 + $0x169] sm:$0x3f] %vm6307, %v6222
      %6353 = vst.msk [vmem:[#allocation4 + $0x171] sm:$0xff] %vm5657, %v6223
      %6354 = vst.msk [vmem:[#allocation4 + $0x179] sm:$0x3f] %vm6307, %v6224
      %6355 = vst.msk [vmem:[#allocation4 + $0x181] sm:$0xff] %vm5657, %v6225
      %6356 = vst.msk [vmem:[#allocation4 + $0x189] sm:$0x3f] %vm6307, %v6226
      %6357 = vst.msk [vmem:[#allocation4 + $0x191] sm:$0xff] %vm5657, %v6227
      %6358 = vst.msk [vmem:[#allocation4 + $0x199] sm:$0x3f] %vm6307, %v6228
      %6359 = vst.msk [vmem:[#allocation4 + $0x1a1] sm:$0xff] %vm5657, %v6229
      %6360 = vst.msk [vmem:[#allocation4 + $0x1a9] sm:$0x3f] %vm6307, %v6230
      %6361 = vst.msk [vmem:[#allocation4 + $0x1b1] sm:$0xff] %vm5657, %v6231
      %6362 = vst.msk [vmem:[#allocation4 + $0x1b9] sm:$0x3f] %vm6307, %v6232
      %6363 = vst.msk [vmem:[#allocation4 + $0x1c1] sm:$0xff] %vm5657, %v6233
      %6364 = vst.msk [vmem:[#allocation4 + $0x1c9] sm:$0x3f] %vm6307, %v6234
      %6365 = vst.msk [vmem:[#allocation4 + $0x1d1] sm:$0xff] %vm5657, %v6235
      %6366 = vst.msk [vmem:[#allocation4 + $0x1d9] sm:$0x3f] %vm6307, %v6236
      %6367 = vst.msk [vmem:[#allocation4 + $0x1e1] sm:$0xff] %vm5657, %v6237
      %6368 = vst.msk [vmem:[#allocation4 + $0x1e9] sm:$0x3f] %vm6307, %v6238
      %6369 = vst.msk [vmem:[#allocation4 + $0x1f1] sm:$0xff] %vm5657, %v6239
      %6370 = vst.msk [vmem:[#allocation4 + $0x1f9] sm:$0x3f] %vm6307, %v6240
      %v6371 = vld [vmem:[#allocation4] sm:$0xff]
      %v6372 = vld [vmem:[#allocation4 + $0x8] sm:$0xff]
      %v6373 = vld [vmem:[#allocation4 + $0x10] sm:$0xff]
      %v6374 = vld [vmem:[#allocation4 + $0x18] sm:$0xff]
      %v6375 = vld [vmem:[#allocation4 + $0x20] sm:$0xff]
      %v6376 = vld [vmem:[#allocation4 + $0x28] sm:$0xff]
      %v6377 = vld [vmem:[#allocation4 + $0x30] sm:$0xff]
      %v6378 = vld [vmem:[#allocation4 + $0x38] sm:$0xff]
      %v6379 = vld [vmem:[#allocation4 + $0x40] sm:$0xff]
      %v6380 = vld [vmem:[#allocation4 + $0x48] sm:$0xff]
      %v6381 = vld [vmem:[#allocation4 + $0x50] sm:$0xff]
      %v6382 = vld [vmem:[#allocation4 + $0x58] sm:$0xff]
      %v6383 = vld [vmem:[#allocation4 + $0x60] sm:$0xff]
      %v6384 = vld [vmem:[#allocation4 + $0x68] sm:$0xff]
      %v6385 = vld [vmem:[#allocation4 + $0x70] sm:$0xff]
      %v6386 = vld [vmem:[#allocation4 + $0x78] sm:$0xff]
      %v6387 = vld [vmem:[#allocation4 + $0x80] sm:$0xff]
      %v6388 = vld [vmem:[#allocation4 + $0x88] sm:$0xff]
      %v6389 = vld [vmem:[#allocation4 + $0x90] sm:$0xff]
      %v6390 = vld [vmem:[#allocation4 + $0x98] sm:$0xff]
      %v6391 = vld [vmem:[#allocation4 + $0xa0] sm:$0xff]
      %v6392 = vld [vmem:[#allocation4 + $0xa8] sm:$0xff]
      %v6393 = vld [vmem:[#allocation4 + $0xb0] sm:$0xff]
      %v6394 = vld [vmem:[#allocation4 + $0xb8] sm:$0xff]
      %v6395 = vld [vmem:[#allocation4 + $0xc0] sm:$0xff]
      %v6396 = vld [vmem:[#allocation4 + $0xc8] sm:$0xff]
      %v6397 = vld [vmem:[#allocation4 + $0xd0] sm:$0xff]
      %v6398 = vld [vmem:[#allocation4 + $0xd8] sm:$0xff]
      %v6399 = vld [vmem:[#allocation4 + $0xe0] sm:$0xff]
      %v6400 = vld [vmem:[#allocation4 + $0xe8] sm:$0xff]
      %v6401 = vld [vmem:[#allocation4 + $0xf0] sm:$0xff]
      %v6402 = vld [vmem:[#allocation4 + $0xf8] sm:$0xff]
      %v6403 = vld [vmem:[#allocation4 + $0x100] sm:$0xff]
      %v6404 = vld [vmem:[#allocation4 + $0x108] sm:$0xff]
      %v6405 = vld [vmem:[#allocation4 + $0x110] sm:$0xff]
      %v6406 = vld [vmem:[#allocation4 + $0x118] sm:$0xff]
      %v6407 = vld [vmem:[#allocation4 + $0x120] sm:$0xff]
      %v6408 = vld [vmem:[#allocation4 + $0x128] sm:$0xff]
      %v6409 = vld [vmem:[#allocation4 + $0x130] sm:$0xff]
      %v6410 = vld [vmem:[#allocation4 + $0x138] sm:$0xff]
      %v6411 = vld [vmem:[#allocation4 + $0x140] sm:$0xff]
      %v6412 = vld [vmem:[#allocation4 + $0x148] sm:$0xff]
      %v6413 = vld [vmem:[#allocation4 + $0x150] sm:$0xff]
      %v6414 = vld [vmem:[#allocation4 + $0x158] sm:$0xff]
      %v6415 = vld [vmem:[#allocation4 + $0x160] sm:$0xff]
      %v6416 = vld [vmem:[#allocation4 + $0x168] sm:$0xff]
      %v6417 = vld [vmem:[#allocation4 + $0x170] sm:$0xff]
      %v6418 = vld [vmem:[#allocation4 + $0x178] sm:$0xff]
      %v6419 = vld [vmem:[#allocation4 + $0x180] sm:$0xff]
      %v6420 = vld [vmem:[#allocation4 + $0x188] sm:$0xff]
      %v6421 = vld [vmem:[#allocation4 + $0x190] sm:$0xff]
      %v6422 = vld [vmem:[#allocation4 + $0x198] sm:$0xff]
      %v6423 = vld [vmem:[#allocation4 + $0x1a0] sm:$0xff]
      %v6424 = vld [vmem:[#allocation4 + $0x1a8] sm:$0xff]
      %v6425 = vld [vmem:[#allocation4 + $0x1b0] sm:$0xff]
      %v6426 = vld [vmem:[#allocation4 + $0x1b8] sm:$0xff]
      %v6427 = vld [vmem:[#allocation4 + $0x1c0] sm:$0xff]
      %v6428 = vld [vmem:[#allocation4 + $0x1c8] sm:$0xff]
      %v6429 = vld [vmem:[#allocation4 + $0x1d0] sm:$0xff]
      %v6430 = vld [vmem:[#allocation4 + $0x1d8] sm:$0xff]
      %v6431 = vld [vmem:[#allocation4 + $0x1e0] sm:$0xff]
      %v6432 = vld [vmem:[#allocation4 + $0x1e8] sm:$0xff]
      %v6433 = vld [vmem:[#allocation4 + $0x1f0] sm:$0xff]
      %v6434 = vld [vmem:[#allocation4 + $0x1f8] sm:$0xff]
      %v6435 = vpack.c.bf16 %v6372, %v6371
      %v6436 = vpack.c.bf16 %v6374, %v6373
      %v6437 = vpack.c.bf16 %v6376, %v6375
      %v6438 = vpack.c.bf16 %v6378, %v6377
      %v6439 = vpack.c.bf16 %v6380, %v6379
      %v6440 = vpack.c.bf16 %v6382, %v6381
      %v6441 = vpack.c.bf16 %v6384, %v6383
      %v6442 = vpack.c.bf16 %v6386, %v6385
      %v6443 = vpack.c.bf16 %v6388, %v6387
      %v6444 = vpack.c.bf16 %v6390, %v6389
      %v6445 = vpack.c.bf16 %v6392, %v6391
      %v6446 = vpack.c.bf16 %v6394, %v6393
      %v6447 = vpack.c.bf16 %v6396, %v6395
      %v6448 = vpack.c.bf16 %v6398, %v6397
      %v6449 = vpack.c.bf16 %v6400, %v6399
      %v6450 = vpack.c.bf16 %v6402, %v6401
      %v6451 = vpack.c.bf16 %v6404, %v6403
      %v6452 = vpack.c.bf16 %v6406, %v6405
      %v6453 = vpack.c.bf16 %v6408, %v6407
      %v6454 = vpack.c.bf16 %v6410, %v6409
      %v6455 = vpack.c.bf16 %v6412, %v6411
      %v6456 = vpack.c.bf16 %v6414, %v6413
      %v6457 = vpack.c.bf16 %v6416, %v6415
      %v6458 = vpack.c.bf16 %v6418, %v6417
      %v6459 = vpack.c.bf16 %v6420, %v6419
      %v6460 = vpack.c.bf16 %v6422, %v6421
      %v6461 = vpack.c.bf16 %v6424, %v6423
      %v6462 = vpack.c.bf16 %v6426, %v6425
      %v6463 = vpack.c.bf16 %v6428, %v6427
      %v6464 = vpack.c.bf16 %v6430, %v6429
      %v6465 = vpack.c.bf16 %v6432, %v6431
      %v6466 = vpack.c.bf16 %v6434, %v6433
      %v6467 = vld [vmem:[%s3] sm:$0xff]
      %v6468 = vld [vmem:[%s3 + $0x8] sm:$0xff]
      %v6469 = vld [vmem:[%s3 + $0x10] sm:$0xff]
      %v6470 = vld [vmem:[%s3 + $0x18] sm:$0xff]
      %v6471 = vld [vmem:[%s3 + $0x20] sm:$0xff]
      %v6472 = vld [vmem:[%s3 + $0x28] sm:$0xff]
      %v6473 = vld [vmem:[%s3 + $0x30] sm:$0xff]
      %v6474 = vld [vmem:[%s3 + $0x38] sm:$0xff]
      %v6475 = vld [vmem:[%s3 + $0x40] sm:$0xff]
      %v6476 = vld [vmem:[%s3 + $0x48] sm:$0xff]
      %v6477 = vld [vmem:[%s3 + $0x50] sm:$0xff]
      %v6478 = vld [vmem:[%s3 + $0x58] sm:$0xff]
      %v6479 = vld [vmem:[%s3 + $0x60] sm:$0xff]
      %v6480 = vld [vmem:[%s3 + $0x68] sm:$0xff]
      %v6481 = vld [vmem:[%s3 + $0x70] sm:$0xff]
      %v6482 = vld [vmem:[%s3 + $0x78] sm:$0xff]
      %v6483 = vld [vmem:[%s3 + $0x80] sm:$0xff]
      %v6484 = vld [vmem:[%s3 + $0x88] sm:$0xff]
      %v6485 = vld [vmem:[%s3 + $0x90] sm:$0xff]
      %v6486 = vld [vmem:[%s3 + $0x98] sm:$0xff]
      %v6487 = vld [vmem:[%s3 + $0xa0] sm:$0xff]
      %v6488 = vld [vmem:[%s3 + $0xa8] sm:$0xff]
      %v6489 = vld [vmem:[%s3 + $0xb0] sm:$0xff]
      %v6490 = vld [vmem:[%s3 + $0xb8] sm:$0xff]
      %v6491 = vld [vmem:[%s3 + $0xc0] sm:$0xff]
      %v6492 = vld [vmem:[%s3 + $0xc8] sm:$0xff]
      %v6493 = vld [vmem:[%s3 + $0xd0] sm:$0xff]
      %v6494 = vld [vmem:[%s3 + $0xd8] sm:$0xff]
      %v6495 = vld [vmem:[%s3 + $0xe0] sm:$0xff]
      %v6496 = vld [vmem:[%s3 + $0xe8] sm:$0xff]
      %v6497 = vld [vmem:[%s3 + $0xf0] sm:$0xff]
      %v6498 = vld [vmem:[%s3 + $0xf8] sm:$0xff]
      %v6499 = vld [vmem:[%s3 + $0x100] sm:$0xff]
      %v6500 = vld [vmem:[%s3 + $0x108] sm:$0xff]
      %v6501 = vld [vmem:[%s3 + $0x110] sm:$0xff]
      %v6502 = vld [vmem:[%s3 + $0x118] sm:$0xff]
      %v6503 = vld [vmem:[%s3 + $0x120] sm:$0xff]
      %v6504 = vld [vmem:[%s3 + $0x128] sm:$0xff]
      %v6505 = vld [vmem:[%s3 + $0x130] sm:$0xff]
      %v6506 = vld [vmem:[%s3 + $0x138] sm:$0xff]
      %v6507 = vld [vmem:[%s3 + $0x140] sm:$0xff]
      %v6508 = vld [vmem:[%s3 + $0x148] sm:$0xff]
      %v6551 = vunpack.c.l.b16 %v6467
      %v6552 = vunpack.c.h.b16 %v6467
      %v6553 = vunpack.c.l.b16 %v6468
      %v6554 = vunpack.c.h.b16 %v6468
      %v6555 = vunpack.c.l.b16 %v6469
      %v6556 = vunpack.c.h.b16 %v6469
      %v6557 = vunpack.c.l.b16 %v6470
      %v6558 = vunpack.c.h.b16 %v6470
      %v6559 = vunpack.c.l.b16 %v6471
      %v6560 = vunpack.c.h.b16 %v6471
      %v6561 = vunpack.c.l.b16 %v6472
      %v6562 = vunpack.c.h.b16 %v6472
      %v6563 = vunpack.c.l.b16 %v6473
      %v6564 = vunpack.c.h.b16 %v6473
      %v6565 = vunpack.c.l.b16 %v6474
      %v6566 = vunpack.c.h.b16 %v6474
      %v6567 = vunpack.c.l.b16 %v6475
      %v6568 = vunpack.c.h.b16 %v6475
      %v6569 = vunpack.c.l.b16 %v6476
      %v6570 = vunpack.c.h.b16 %v6476
      %v6571 = vunpack.c.l.b16 %v6477
      %v6572 = vunpack.c.h.b16 %v6477
      %v6573 = vunpack.c.l.b16 %v6478
      %v6574 = vunpack.c.h.b16 %v6478
      %v6575 = vunpack.c.l.b16 %v6479
      %v6576 = vunpack.c.h.b16 %v6479
      %v6577 = vunpack.c.l.b16 %v6480
      %v6578 = vunpack.c.h.b16 %v6480
      %v6579 = vunpack.c.l.b16 %v6481
      %v6580 = vunpack.c.h.b16 %v6481
      %v6581 = vunpack.c.l.b16 %v6482
      %v6582 = vunpack.c.h.b16 %v6482
      %v6583 = vunpack.c.l.b16 %v6483
      %v6584 = vunpack.c.h.b16 %v6483
      %v6585 = vunpack.c.l.b16 %v6484
      %v6586 = vunpack.c.h.b16 %v6484
      %v6587 = vunpack.c.l.b16 %v6485
      %v6588 = vunpack.c.h.b16 %v6485
      %v6589 = vunpack.c.l.b16 %v6486
      %v6590 = vunpack.c.h.b16 %v6486
      %v6591 = vunpack.c.l.b16 %v6487
      %v6592 = vunpack.c.h.b16 %v6487
      %v6593 = vunpack.c.l.b16 %v6488
      %v6594 = vunpack.c.h.b16 %v6488
      %v6595 = vunpack.c.l.b16 %v6489
      %v6596 = vunpack.c.h.b16 %v6489
      %v6597 = vunpack.c.l.b16 %v6490
      %v6598 = vunpack.c.h.b16 %v6490
      %v6599 = vunpack.c.l.b16 %v6491
      %v6600 = vunpack.c.h.b16 %v6491
      %v6601 = vunpack.c.l.b16 %v6492
      %v6602 = vunpack.c.h.b16 %v6492
      %v6603 = vunpack.c.l.b16 %v6493
      %v6604 = vunpack.c.h.b16 %v6493
      %v6605 = vunpack.c.l.b16 %v6494
      %v6606 = vunpack.c.h.b16 %v6494
      %v6607 = vunpack.c.l.b16 %v6495
      %v6608 = vunpack.c.h.b16 %v6495
      %v6609 = vunpack.c.l.b16 %v6496
      %v6610 = vunpack.c.h.b16 %v6496
      %v6611 = vunpack.c.l.b16 %v6497
      %v6612 = vunpack.c.h.b16 %v6497
      %v6613 = vunpack.c.l.b16 %v6498
      %v6614 = vunpack.c.h.b16 %v6498
      %v6615 = vunpack.c.l.b16 %v6499
      %v6616 = vunpack.c.h.b16 %v6499
      %v6617 = vunpack.c.l.b16 %v6500
      %v6618 = vunpack.c.h.b16 %v6500
      %v6619 = vunpack.c.l.b16 %v6501
      %v6620 = vunpack.c.h.b16 %v6501
      %v6621 = vunpack.c.l.b16 %v6502
      %v6622 = vunpack.c.h.b16 %v6502
      %v6623 = vunpack.c.l.b16 %v6503
      %v6624 = vunpack.c.h.b16 %v6503
      %v6625 = vunpack.c.l.b16 %v6504
      %v6626 = vunpack.c.h.b16 %v6504
      %v6627 = vunpack.c.l.b16 %v6505
      %v6628 = vunpack.c.h.b16 %v6505
      %v6629 = vunpack.c.l.b16 %v6506
      %v6630 = vunpack.c.h.b16 %v6506
      %v6631 = vunpack.c.l.b16 %v6507
      %v6632 = vunpack.c.h.b16 %v6507
      %v6633 = vunpack.c.l.b16 %v6508
      %v6634 = vunpack.c.h.b16 %v6508
      %v6635 = vpack.c.b16 %v6557, %v6551
      %v6636 = vpack.c.b16 %v6558, %v6552
      %v6637 = vpack.c.b16 %v6559, %v6553
      %v6638 = vpack.c.b16 %v6560, %v6554
      %v6639 = vpack.c.b16 %v6561, %v6555
      %v6640 = vpack.c.b16 %v6562, %v6556
      %v6641 = vpack.c.b16 %v6569, %v6563
      %v6642 = vpack.c.b16 %v6570, %v6564
      %v6643 = vpack.c.b16 %v6571, %v6565
      %v6644 = vpack.c.b16 %v6572, %v6566
      %v6645 = vpack.c.b16 %v6573, %v6567
      %v6646 = vpack.c.b16 %v6574, %v6568
      %v6647 = vpack.c.b16 %v6581, %v6575
      %v6648 = vpack.c.b16 %v6582, %v6576
      %v6649 = vpack.c.b16 %v6583, %v6577
      %v6650 = vpack.c.b16 %v6584, %v6578
      %v6651 = vpack.c.b16 %v6585, %v6579
      %v6652 = vpack.c.b16 %v6586, %v6580
      %v6653 = vpack.c.b16 %v6593, %v6587
      %v6654 = vpack.c.b16 %v6594, %v6588
      %v6655 = vpack.c.b16 %v6595, %v6589
      %v6656 = vpack.c.b16 %v6596, %v6590
      %v6657 = vpack.c.b16 %v6597, %v6591
      %v6658 = vpack.c.b16 %v6598, %v6592
      %v6659 = vpack.c.b16 %v6605, %v6599
      %v6660 = vpack.c.b16 %v6606, %v6600
      %v6661 = vpack.c.b16 %v6607, %v6601
      %v6662 = vpack.c.b16 %v6608, %v6602
      %v6663 = vpack.c.b16 %v6609, %v6603
      %v6664 = vpack.c.b16 %v6610, %v6604
      %v6665 = vpack.c.b16 %v6617, %v6611
      %v6666 = vpack.c.b16 %v6618, %v6612
      %v6667 = vpack.c.b16 %v6619, %v6613
      %v6668 = vpack.c.b16 %v6620, %v6614
      %v6669 = vpack.c.b16 %v6621, %v6615
      %v6670 = vpack.c.b16 %v6622, %v6616
      %v6671 = vpack.c.b16 %v6629, %v6623
      %v6672 = vpack.c.b16 %v6630, %v6624
      %v6673 = vpack.c.b16 %v6631, %v6625
      %v6674 = vpack.c.b16 %v6632, %v6626
      %v6675 = vpack.c.b16 %v6633, %v6627
      %v6676 = vpack.c.b16 %v6634, %v6628
      %v6720 = vsel %vm5657, %v6435, 0
      %v6723 = vsel %vm5657, %v6436, 0
      %v6726 = vsel %vm5657, %v6437, 0
      %v6729 = vsel %vm5657, %v6438, 0
      %v6732 = vsel %vm5657, %v6439, 0
      %v6735 = vsel %vm5657, %v6440, 0
      %v6738 = vsel %vm5657, %v6441, 0
      %v6741 = vsel %vm5657, %v6442, 0
      %v6744 = vsel %vm5657, %v6443, 0
      %v6747 = vsel %vm5657, %v6444, 0
      %v6750 = vsel %vm5657, %v6445, 0
      %v6753 = vsel %vm5657, %v6446, 0
      %v6756 = vsel %vm5657, %v6447, 0
      %v6759 = vsel %vm5657, %v6448, 0
      %v6762 = vsel %vm5657, %v6449, 0
      %v6765 = vsel %vm5657, %v6450, 0
      %v6768 = vsel %vm5657, %v6451, 0
      %v6771 = vsel %vm5657, %v6452, 0
      %v6774 = vsel %vm5657, %v6453, 0
      %v6777 = vsel %vm5657, %v6454, 0
      %v6780 = vsel %vm5657, %v6455, 0
      %v6783 = vsel %vm5657, %v6456, 0
      %v6786 = vsel %vm5657, %v6457, 0
      %v6789 = vsel %vm5657, %v6458, 0
      %v6792 = vsel %vm5657, %v6459, 0
      %v6795 = vsel %vm5657, %v6460, 0
      %v6798 = vsel %vm5657, %v6461, 0
      %v6801 = vsel %vm5657, %v6462, 0
      %v6804 = vsel %vm5657, %v6463, 0
      %v6807 = vsel %vm5657, %v6464, 0
      %v6810 = vsel %vm5657, %v6465, 0
      %v6813 = vsel %vm5657, %v6466, 0
      %6815 = vmatprep.subr.bf16.mxu0 0
      %6816 = vmatpush1.bf16.msra.mxu0 0
      %6817 = vmatprep.subr.bf16.mxu0 %v6672
      %6818 = vmatpush1.bf16.msra.mxu0 %v6671
      %6819 = vmatprep.subr.bf16.mxu0 %v6666
      %6820 = vmatpush1.bf16.msra.mxu0 %v6665
      %6821 = vmatprep.subr.bf16.mxu0 %v6660
      %6822 = vmatpush1.bf16.msra.mxu0 %v6659
      %6823 = vmatprep.subr.bf16.mxu0 %v6654
      %6824 = vmatpush1.bf16.msra.mxu0 %v6653
      %6825 = vmatprep.subr.bf16.mxu0 %v6648
      %6826 = vmatpush1.bf16.msra.mxu0 %v6647
      %6827 = vmatprep.subr.bf16.mxu0 %v6642
      %6828 = vmatpush1.bf16.msra.mxu0 %v6641
      %6829 = vmatprep.subr.bf16.mxu0 %v6636
      %6830 = vmatpush1.bf16.msra.mxu0 %v6635
      %6831 = vmatprep.subr.bf16.mxu0 0
      %6832 = vmatpush2.bf16.msra.mxu0 0
      %6833 = vmatprep.subr.bf16.mxu0 0
      %6834 = vmatpush2.bf16.msra.mxu0 0
      %6835 = vmatprep.subr.bf16.mxu0 0
      %6836 = vmatpush2.bf16.msra.mxu0 0
      %6837 = vmatprep.subr.bf16.mxu0 0
      %6838 = vmatpush2.bf16.msra.mxu0 0
      %6839 = vmatprep.subr.bf16.mxu0 0
      %6840 = vmatpush2.bf16.msra.mxu0 0
      %6841 = vmatprep.subr.bf16.mxu0 0
      %6842 = vmatpush2.bf16.msra.mxu0 0
      %6843 = vmatprep.subr.bf16.mxu0 0
      %6844 = vmatpush2.bf16.msra.mxu0 0
      %6845 = vmatprep.subr.bf16.mxu0 0
      %6846 = vmatpush2.bf16.msra.mxu0 0
      %6847 = vmatprep.mubr.bf16.mxu0 0
      %6848 = vmatmul.mubr.bf16.gmra.mxu0 %v6720
      %v6849 = vpop.f32.mrf.mxu0
      %v6850 = vadd.f32 0.0, %v6849
      %v6851 = vpop.f32.mrf.mxu0
      %v6852 = vadd.f32 0.0, %v6851
      %v6853 = vpop.f32.mrf.mxu0
      %v6854 = vadd.f32 0.0, %v6853
      %v6855 = vpop.f32.mrf.mxu0
      %v6856 = vadd.f32 0.0, %v6855
      %6857 = vmatprep.mubr.bf16.mxu0 0
      %6858 = vmatmul.mubr.bf16.gmra.mxu0 %v6723
      %v6859 = vpop.f32.mrf.mxu0
      %v6860 = vadd.f32 0.0, %v6859
      %v6861 = vpop.f32.mrf.mxu0
      %v6862 = vadd.f32 0.0, %v6861
      %v6863 = vpop.f32.mrf.mxu0
      %v6864 = vadd.f32 0.0, %v6863
      %v6865 = vpop.f32.mrf.mxu0
      %v6866 = vadd.f32 0.0, %v6865
      %6867 = vmatprep.mubr.bf16.mxu0 0
      %6868 = vmatmul.mubr.bf16.gmra.mxu0 %v6726
      %v6869 = vpop.f32.mrf.mxu0
      %v6870 = vadd.f32 0.0, %v6869
      %v6871 = vpop.f32.mrf.mxu0
      %v6872 = vadd.f32 0.0, %v6871
      %v6873 = vpop.f32.mrf.mxu0
      %v6874 = vadd.f32 0.0, %v6873
      %v6875 = vpop.f32.mrf.mxu0
      %v6876 = vadd.f32 0.0, %v6875
      %6877 = vmatprep.mubr.bf16.mxu0 0
      %6878 = vmatmul.mubr.bf16.gmra.mxu0 %v6729
      %v6879 = vpop.f32.mrf.mxu0
      %v6880 = vadd.f32 0.0, %v6879
      %v6881 = vpop.f32.mrf.mxu0
      %v6882 = vadd.f32 0.0, %v6881
      %v6883 = vpop.f32.mrf.mxu0
      %v6884 = vadd.f32 0.0, %v6883
      %v6885 = vpop.f32.mrf.mxu0
      %v6886 = vadd.f32 0.0, %v6885
      %6887 = vmatprep.mubr.bf16.mxu0 0
      %6888 = vmatmul.mubr.bf16.gmra.mxu0 %v6732
      %v6889 = vpop.f32.mrf.mxu0
      %v6890 = vadd.f32 0.0, %v6889
      %v6891 = vpop.f32.mrf.mxu0
      %v6892 = vadd.f32 0.0, %v6891
      %v6893 = vpop.f32.mrf.mxu0
      %v6894 = vadd.f32 0.0, %v6893
      %v6895 = vpop.f32.mrf.mxu0
      %v6896 = vadd.f32 0.0, %v6895
      %6897 = vmatprep.mubr.bf16.mxu0 0
      %6898 = vmatmul.mubr.bf16.gmra.mxu0 %v6735
      %v6899 = vpop.f32.mrf.mxu0
      %v6900 = vadd.f32 0.0, %v6899
      %v6901 = vpop.f32.mrf.mxu0
      %v6902 = vadd.f32 0.0, %v6901
      %v6903 = vpop.f32.mrf.mxu0
      %v6904 = vadd.f32 0.0, %v6903
      %v6905 = vpop.f32.mrf.mxu0
      %v6906 = vadd.f32 0.0, %v6905
      %6907 = vmatprep.mubr.bf16.mxu0 0
      %6908 = vmatmul.mubr.bf16.gmra.mxu0 %v6738
      %v6909 = vpop.f32.mrf.mxu0
      %v6910 = vadd.f32 0.0, %v6909
      %v6911 = vpop.f32.mrf.mxu0
      %v6912 = vadd.f32 0.0, %v6911
      %v6913 = vpop.f32.mrf.mxu0
      %v6914 = vadd.f32 0.0, %v6913
      %v6915 = vpop.f32.mrf.mxu0
      %v6916 = vadd.f32 0.0, %v6915
      %6917 = vmatprep.mubr.bf16.mxu0 0
      %6918 = vmatmul.mubr.bf16.gmra.mxu0 %v6741
      %v6919 = vpop.f32.mrf.mxu0
      %v6920 = vadd.f32 0.0, %v6919
      %v6921 = vpop.f32.mrf.mxu0
      %v6922 = vadd.f32 0.0, %v6921
      %v6923 = vpop.f32.mrf.mxu0
      %v6924 = vadd.f32 0.0, %v6923
      %v6925 = vpop.f32.mrf.mxu0
      %v6926 = vadd.f32 0.0, %v6925
      %6927 = vmatprep.mubr.bf16.mxu0 0
      %6928 = vmatmul.mubr.bf16.gmra.mxu0 %v6744
      %v6929 = vpop.f32.mrf.mxu0
      %v6930 = vadd.f32 0.0, %v6929
      %v6931 = vpop.f32.mrf.mxu0
      %v6932 = vadd.f32 0.0, %v6931
      %v6933 = vpop.f32.mrf.mxu0
      %v6934 = vadd.f32 0.0, %v6933
      %v6935 = vpop.f32.mrf.mxu0
      %v6936 = vadd.f32 0.0, %v6935
      %6937 = vmatprep.mubr.bf16.mxu0 0
      %6938 = vmatmul.mubr.bf16.gmra.mxu0 %v6747
      %v6939 = vpop.f32.mrf.mxu0
      %v6940 = vadd.f32 0.0, %v6939
      %v6941 = vpop.f32.mrf.mxu0
      %v6942 = vadd.f32 0.0, %v6941
      %v6943 = vpop.f32.mrf.mxu0
      %v6944 = vadd.f32 0.0, %v6943
      %v6945 = vpop.f32.mrf.mxu0
      %v6946 = vadd.f32 0.0, %v6945
      %6947 = vmatprep.mubr.bf16.mxu0 0
      %6948 = vmatmul.mubr.bf16.gmra.mxu0 %v6750
      %v6949 = vpop.f32.mrf.mxu0
      %v6950 = vadd.f32 0.0, %v6949
      %v6951 = vpop.f32.mrf.mxu0
      %v6952 = vadd.f32 0.0, %v6951
      %v6953 = vpop.f32.mrf.mxu0
      %v6954 = vadd.f32 0.0, %v6953
      %v6955 = vpop.f32.mrf.mxu0
      %v6956 = vadd.f32 0.0, %v6955
      %6957 = vmatprep.mubr.bf16.mxu0 0
      %6958 = vmatmul.mubr.bf16.gmra.mxu0 %v6753
      %v6959 = vpop.f32.mrf.mxu0
      %v6960 = vadd.f32 0.0, %v6959
      %v6961 = vpop.f32.mrf.mxu0
      %v6962 = vadd.f32 0.0, %v6961
      %v6963 = vpop.f32.mrf.mxu0
      %v6964 = vadd.f32 0.0, %v6963
      %v6965 = vpop.f32.mrf.mxu0
      %v6966 = vadd.f32 0.0, %v6965
      %6967 = vmatprep.mubr.bf16.mxu0 0
      %6968 = vmatmul.mubr.bf16.gmra.mxu0 %v6756
      %v6969 = vpop.f32.mrf.mxu0
      %v6970 = vadd.f32 0.0, %v6969
      %v6971 = vpop.f32.mrf.mxu0
      %v6972 = vadd.f32 0.0, %v6971
      %v6973 = vpop.f32.mrf.mxu0
      %v6974 = vadd.f32 0.0, %v6973
      %v6975 = vpop.f32.mrf.mxu0
      %v6976 = vadd.f32 0.0, %v6975
      %6977 = vmatprep.mubr.bf16.mxu0 0
      %6978 = vmatmul.mubr.bf16.gmra.mxu0 %v6759
      %v6979 = vpop.f32.mrf.mxu0
      %v6980 = vadd.f32 0.0, %v6979
      %v6981 = vpop.f32.mrf.mxu0
      %v6982 = vadd.f32 0.0, %v6981
      %v6983 = vpop.f32.mrf.mxu0
      %v6984 = vadd.f32 0.0, %v6983
      %v6985 = vpop.f32.mrf.mxu0
      %v6986 = vadd.f32 0.0, %v6985
      %6987 = vmatprep.mubr.bf16.mxu0 0
      %6988 = vmatmul.mubr.bf16.gmra.mxu0 %v6762
      %v6989 = vpop.f32.mrf.mxu0
      %v6990 = vadd.f32 0.0, %v6989
      %v6991 = vpop.f32.mrf.mxu0
      %v6992 = vadd.f32 0.0, %v6991
      %v6993 = vpop.f32.mrf.mxu0
      %v6994 = vadd.f32 0.0, %v6993
      %v6995 = vpop.f32.mrf.mxu0
      %v6996 = vadd.f32 0.0, %v6995
      %6997 = vmatprep.mubr.bf16.mxu0 0
      %6998 = vmatmul.mubr.bf16.gmra.mxu0 %v6765
      %v6999 = vpop.f32.mrf.mxu0
      %v7000 = vadd.f32 0.0, %v6999
      %v7001 = vpop.f32.mrf.mxu0
      %v7002 = vadd.f32 0.0, %v7001
      %v7003 = vpop.f32.mrf.mxu0
      %v7004 = vadd.f32 0.0, %v7003
      %v7005 = vpop.f32.mrf.mxu0
      %v7006 = vadd.f32 0.0, %v7005
      %7007 = vmatprep.mubr.bf16.mxu0 0
      %7008 = vmatmul.mubr.bf16.gmra.mxu0 %v6768
      %v7009 = vpop.f32.mrf.mxu0
      %v7010 = vadd.f32 0.0, %v7009
      %v7011 = vpop.f32.mrf.mxu0
      %v7012 = vadd.f32 0.0, %v7011
      %v7013 = vpop.f32.mrf.mxu0
      %v7014 = vadd.f32 0.0, %v7013
      %v7015 = vpop.f32.mrf.mxu0
      %v7016 = vadd.f32 0.0, %v7015
      %7017 = vmatprep.mubr.bf16.mxu0 0
      %7018 = vmatmul.mubr.bf16.gmra.mxu0 %v6771
      %v7019 = vpop.f32.mrf.mxu0
      %v7020 = vadd.f32 0.0, %v7019
      %v7021 = vpop.f32.mrf.mxu0
      %v7022 = vadd.f32 0.0, %v7021
      %v7023 = vpop.f32.mrf.mxu0
      %v7024 = vadd.f32 0.0, %v7023
      %v7025 = vpop.f32.mrf.mxu0
      %v7026 = vadd.f32 0.0, %v7025
      %7027 = vmatprep.mubr.bf16.mxu0 0
      %7028 = vmatmul.mubr.bf16.gmra.mxu0 %v6774
      %v7029 = vpop.f32.mrf.mxu0
      %v7030 = vadd.f32 0.0, %v7029
      %v7031 = vpop.f32.mrf.mxu0
      %v7032 = vadd.f32 0.0, %v7031
      %v7033 = vpop.f32.mrf.mxu0
      %v7034 = vadd.f32 0.0, %v7033
      %v7035 = vpop.f32.mrf.mxu0
      %v7036 = vadd.f32 0.0, %v7035
      %7037 = vmatprep.mubr.bf16.mxu0 0
      %7038 = vmatmul.mubr.bf16.gmra.mxu0 %v6777
      %v7039 = vpop.f32.mrf.mxu0
      %v7040 = vadd.f32 0.0, %v7039
      %v7041 = vpop.f32.mrf.mxu0
      %v7042 = vadd.f32 0.0, %v7041
      %v7043 = vpop.f32.mrf.mxu0
      %v7044 = vadd.f32 0.0, %v7043
      %v7045 = vpop.f32.mrf.mxu0
      %v7046 = vadd.f32 0.0, %v7045
      %7047 = vmatprep.mubr.bf16.mxu0 0
      %7048 = vmatmul.mubr.bf16.gmra.mxu0 %v6780
      %v7049 = vpop.f32.mrf.mxu0
      %v7050 = vadd.f32 0.0, %v7049
      %v7051 = vpop.f32.mrf.mxu0
      %v7052 = vadd.f32 0.0, %v7051
      %v7053 = vpop.f32.mrf.mxu0
      %v7054 = vadd.f32 0.0, %v7053
      %v7055 = vpop.f32.mrf.mxu0
      %v7056 = vadd.f32 0.0, %v7055
      %7057 = vmatprep.mubr.bf16.mxu0 0
      %7058 = vmatmul.mubr.bf16.gmra.mxu0 %v6783
      %v7059 = vpop.f32.mrf.mxu0
      %v7060 = vadd.f32 0.0, %v7059
      %v7061 = vpop.f32.mrf.mxu0
      %v7062 = vadd.f32 0.0, %v7061
      %v7063 = vpop.f32.mrf.mxu0
      %v7064 = vadd.f32 0.0, %v7063
      %v7065 = vpop.f32.mrf.mxu0
      %v7066 = vadd.f32 0.0, %v7065
      %7067 = vmatprep.mubr.bf16.mxu0 0
      %7068 = vmatmul.mubr.bf16.gmra.mxu0 %v6786
      %v7069 = vpop.f32.mrf.mxu0
      %v7070 = vadd.f32 0.0, %v7069
      %v7071 = vpop.f32.mrf.mxu0
      %v7072 = vadd.f32 0.0, %v7071
      %v7073 = vpop.f32.mrf.mxu0
      %v7074 = vadd.f32 0.0, %v7073
      %v7075 = vpop.f32.mrf.mxu0
      %v7076 = vadd.f32 0.0, %v7075
      %7077 = vmatprep.mubr.bf16.mxu0 0
      %7078 = vmatmul.mubr.bf16.gmra.mxu0 %v6789
      %v7079 = vpop.f32.mrf.mxu0
      %v7080 = vadd.f32 0.0, %v7079
      %v7081 = vpop.f32.mrf.mxu0
      %v7082 = vadd.f32 0.0, %v7081
      %v7083 = vpop.f32.mrf.mxu0
      %v7084 = vadd.f32 0.0, %v7083
      %v7085 = vpop.f32.mrf.mxu0
      %v7086 = vadd.f32 0.0, %v7085
      %7087 = vmatprep.mubr.bf16.mxu0 0
      %7088 = vmatmul.mubr.bf16.gmra.mxu0 %v6792
      %v7089 = vpop.f32.mrf.mxu0
      %v7090 = vadd.f32 0.0, %v7089
      %v7091 = vpop.f32.mrf.mxu0
      %v7092 = vadd.f32 0.0, %v7091
      %v7093 = vpop.f32.mrf.mxu0
      %v7094 = vadd.f32 0.0, %v7093
      %v7095 = vpop.f32.mrf.mxu0
      %v7096 = vadd.f32 0.0, %v7095
      %7097 = vmatprep.mubr.bf16.mxu0 0
      %7098 = vmatmul.mubr.bf16.gmra.mxu0 %v6795
      %v7099 = vpop.f32.mrf.mxu0
      %v7100 = vadd.f32 0.0, %v7099
      %v7101 = vpop.f32.mrf.mxu0
      %v7102 = vadd.f32 0.0, %v7101
      %v7103 = vpop.f32.mrf.mxu0
      %v7104 = vadd.f32 0.0, %v7103
      %v7105 = vpop.f32.mrf.mxu0
      %v7106 = vadd.f32 0.0, %v7105
      %7107 = vmatprep.mubr.bf16.mxu0 0
      %7108 = vmatmul.mubr.bf16.gmra.mxu0 %v6798
      %v7109 = vpop.f32.mrf.mxu0
      %v7110 = vadd.f32 0.0, %v7109
      %v7111 = vpop.f32.mrf.mxu0
      %v7112 = vadd.f32 0.0, %v7111
      %v7113 = vpop.f32.mrf.mxu0
      %v7114 = vadd.f32 0.0, %v7113
      %v7115 = vpop.f32.mrf.mxu0
      %v7116 = vadd.f32 0.0, %v7115
      %7117 = vmatprep.mubr.bf16.mxu0 0
      %7118 = vmatmul.mubr.bf16.gmra.mxu0 %v6801
      %v7119 = vpop.f32.mrf.mxu0
      %v7120 = vadd.f32 0.0, %v7119
      %v7121 = vpop.f32.mrf.mxu0
      %v7122 = vadd.f32 0.0, %v7121
      %v7123 = vpop.f32.mrf.mxu0
      %v7124 = vadd.f32 0.0, %v7123
      %v7125 = vpop.f32.mrf.mxu0
      %v7126 = vadd.f32 0.0, %v7125
      %7127 = vmatprep.mubr.bf16.mxu0 0
      %7128 = vmatmul.mubr.bf16.gmra.mxu0 %v6804
      %v7129 = vpop.f32.mrf.mxu0
      %v7130 = vadd.f32 0.0, %v7129
      %v7131 = vpop.f32.mrf.mxu0
      %v7132 = vadd.f32 0.0, %v7131
      %v7133 = vpop.f32.mrf.mxu0
      %v7134 = vadd.f32 0.0, %v7133
      %v7135 = vpop.f32.mrf.mxu0
      %v7136 = vadd.f32 0.0, %v7135
      %7137 = vmatprep.mubr.bf16.mxu0 0
      %7138 = vmatmul.mubr.bf16.gmra.mxu0 %v6807
      %v7139 = vpop.f32.mrf.mxu0
      %v7140 = vadd.f32 0.0, %v7139
      %v7141 = vpop.f32.mrf.mxu0
      %v7142 = vadd.f32 0.0, %v7141
      %v7143 = vpop.f32.mrf.mxu0
      %v7144 = vadd.f32 0.0, %v7143
      %v7145 = vpop.f32.mrf.mxu0
      %v7146 = vadd.f32 0.0, %v7145
      %7147 = vmatprep.mubr.bf16.mxu0 0
      %7148 = vmatmul.mubr.bf16.gmra.mxu0 %v6810
      %v7149 = vpop.f32.mrf.mxu0
      %v7150 = vadd.f32 0.0, %v7149
      %v7151 = vpop.f32.mrf.mxu0
      %v7152 = vadd.f32 0.0, %v7151
      %v7153 = vpop.f32.mrf.mxu0
      %v7154 = vadd.f32 0.0, %v7153
      %v7155 = vpop.f32.mrf.mxu0
      %v7156 = vadd.f32 0.0, %v7155
      %7157 = vmatprep.mubr.bf16.mxu0 0
      %7158 = vmatmul.mubr.bf16.gmra.mxu0 %v6813
      %v7159 = vpop.f32.mrf.mxu0
      %v7160 = vadd.f32 0.0, %v7159
      %v7161 = vpop.f32.mrf.mxu0
      %v7162 = vadd.f32 0.0, %v7161
      %v7163 = vpop.f32.mrf.mxu0
      %v7164 = vadd.f32 0.0, %v7163
      %v7165 = vpop.f32.mrf.mxu0
      %v7166 = vadd.f32 0.0, %v7165
      %7167 = vdwg.mxu0
      %7168 = vmatprep.subr.bf16.mxu0 0
      %7169 = vmatpush1.bf16.msra.mxu0 0
      %7170 = vmatprep.subr.bf16.mxu0 %v6674
      %7171 = vmatpush1.bf16.msra.mxu0 %v6673
      %7172 = vmatprep.subr.bf16.mxu0 %v6668
      %7173 = vmatpush1.bf16.msra.mxu0 %v6667
      %7174 = vmatprep.subr.bf16.mxu0 %v6662
      %7175 = vmatpush1.bf16.msra.mxu0 %v6661
      %7176 = vmatprep.subr.bf16.mxu0 %v6656
      %7177 = vmatpush1.bf16.msra.mxu0 %v6655
      %7178 = vmatprep.subr.bf16.mxu0 %v6650
      %7179 = vmatpush1.bf16.msra.mxu0 %v6649
      %7180 = vmatprep.subr.bf16.mxu0 %v6644
      %7181 = vmatpush1.bf16.msra.mxu0 %v6643
      %7182 = vmatprep.subr.bf16.mxu0 %v6638
      %7183 = vmatpush1.bf16.msra.mxu0 %v6637
      %7184 = vmatprep.subr.bf16.mxu0 0
      %7185 = vmatpush2.bf16.msra.mxu0 0
      %7186 = vmatprep.subr.bf16.mxu0 0
      %7187 = vmatpush2.bf16.msra.mxu0 0
      %7188 = vmatprep.subr.bf16.mxu0 0
      %7189 = vmatpush2.bf16.msra.mxu0 0
      %7190 = vmatprep.subr.bf16.mxu0 0
      %7191 = vmatpush2.bf16.msra.mxu0 0
      %7192 = vmatprep.subr.bf16.mxu0 0
      %7193 = vmatpush2.bf16.msra.mxu0 0
      %7194 = vmatprep.subr.bf16.mxu0 0
      %7195 = vmatpush2.bf16.msra.mxu0 0
      %7196 = vmatprep.subr.bf16.mxu0 0
      %7197 = vmatpush2.bf16.msra.mxu0 0
      %7198 = vmatprep.subr.bf16.mxu0 0
      %7199 = vmatpush2.bf16.msra.mxu0 0
      %7200 = vmatprep.mubr.bf16.mxu0 0
      %7201 = vmatmul.mubr.bf16.gmra.mxu0 %v6720
      %v7202 = vpop.f32.mrf.mxu0
      %v7203 = vadd.f32 0.0, %v7202
      %v7204 = vpop.f32.mrf.mxu0
      %v7205 = vadd.f32 0.0, %v7204
      %v7206 = vpop.f32.mrf.mxu0
      %v7207 = vadd.f32 0.0, %v7206
      %v7208 = vpop.f32.mrf.mxu0
      %v7209 = vadd.f32 0.0, %v7208
      %7210 = vmatprep.mubr.bf16.mxu0 0
      %7211 = vmatmul.mubr.bf16.gmra.mxu0 %v6723
      %v7212 = vpop.f32.mrf.mxu0
      %v7213 = vadd.f32 0.0, %v7212
      %v7214 = vpop.f32.mrf.mxu0
      %v7215 = vadd.f32 0.0, %v7214
      %v7216 = vpop.f32.mrf.mxu0
      %v7217 = vadd.f32 0.0, %v7216
      %v7218 = vpop.f32.mrf.mxu0
      %v7219 = vadd.f32 0.0, %v7218
      %7220 = vmatprep.mubr.bf16.mxu0 0
      %7221 = vmatmul.mubr.bf16.gmra.mxu0 %v6726
      %v7222 = vpop.f32.mrf.mxu0
      %v7223 = vadd.f32 0.0, %v7222
      %v7224 = vpop.f32.mrf.mxu0
      %v7225 = vadd.f32 0.0, %v7224
      %v7226 = vpop.f32.mrf.mxu0
      %v7227 = vadd.f32 0.0, %v7226
      %v7228 = vpop.f32.mrf.mxu0
      %v7229 = vadd.f32 0.0, %v7228
      %7230 = vmatprep.mubr.bf16.mxu0 0
      %7231 = vmatmul.mubr.bf16.gmra.mxu0 %v6729
      %v7232 = vpop.f32.mrf.mxu0
      %v7233 = vadd.f32 0.0, %v7232
      %v7234 = vpop.f32.mrf.mxu0
      %v7235 = vadd.f32 0.0, %v7234
      %v7236 = vpop.f32.mrf.mxu0
      %v7237 = vadd.f32 0.0, %v7236
      %v7238 = vpop.f32.mrf.mxu0
      %v7239 = vadd.f32 0.0, %v7238
      %7240 = vmatprep.mubr.bf16.mxu0 0
      %7241 = vmatmul.mubr.bf16.gmra.mxu0 %v6732
      %v7242 = vpop.f32.mrf.mxu0
      %v7243 = vadd.f32 0.0, %v7242
      %v7244 = vpop.f32.mrf.mxu0
      %v7245 = vadd.f32 0.0, %v7244
      %v7246 = vpop.f32.mrf.mxu0
      %v7247 = vadd.f32 0.0, %v7246
      %v7248 = vpop.f32.mrf.mxu0
      %v7249 = vadd.f32 0.0, %v7248
      %7250 = vmatprep.mubr.bf16.mxu0 0
      %7251 = vmatmul.mubr.bf16.gmra.mxu0 %v6735
      %v7252 = vpop.f32.mrf.mxu0
      %v7253 = vadd.f32 0.0, %v7252
      %v7254 = vpop.f32.mrf.mxu0
      %v7255 = vadd.f32 0.0, %v7254
      %v7256 = vpop.f32.mrf.mxu0
      %v7257 = vadd.f32 0.0, %v7256
      %v7258 = vpop.f32.mrf.mxu0
      %v7259 = vadd.f32 0.0, %v7258
      %7260 = vmatprep.mubr.bf16.mxu0 0
      %7261 = vmatmul.mubr.bf16.gmra.mxu0 %v6738
      %v7262 = vpop.f32.mrf.mxu0
      %v7263 = vadd.f32 0.0, %v7262
      %v7264 = vpop.f32.mrf.mxu0
      %v7265 = vadd.f32 0.0, %v7264
      %v7266 = vpop.f32.mrf.mxu0
      %v7267 = vadd.f32 0.0, %v7266
      %v7268 = vpop.f32.mrf.mxu0
      %v7269 = vadd.f32 0.0, %v7268
      %7270 = vmatprep.mubr.bf16.mxu0 0
      %7271 = vmatmul.mubr.bf16.gmra.mxu0 %v6741
      %v7272 = vpop.f32.mrf.mxu0
      %v7273 = vadd.f32 0.0, %v7272
      %v7274 = vpop.f32.mrf.mxu0
      %v7275 = vadd.f32 0.0, %v7274
      %v7276 = vpop.f32.mrf.mxu0
      %v7277 = vadd.f32 0.0, %v7276
      %v7278 = vpop.f32.mrf.mxu0
      %v7279 = vadd.f32 0.0, %v7278
      %7280 = vmatprep.mubr.bf16.mxu0 0
      %7281 = vmatmul.mubr.bf16.gmra.mxu0 %v6744
      %v7282 = vpop.f32.mrf.mxu0
      %v7283 = vadd.f32 0.0, %v7282
      %v7284 = vpop.f32.mrf.mxu0
      %v7285 = vadd.f32 0.0, %v7284
      %v7286 = vpop.f32.mrf.mxu0
      %v7287 = vadd.f32 0.0, %v7286
      %v7288 = vpop.f32.mrf.mxu0
      %v7289 = vadd.f32 0.0, %v7288
      %7290 = vmatprep.mubr.bf16.mxu0 0
      %7291 = vmatmul.mubr.bf16.gmra.mxu0 %v6747
      %v7292 = vpop.f32.mrf.mxu0
      %v7293 = vadd.f32 0.0, %v7292
      %v7294 = vpop.f32.mrf.mxu0
      %v7295 = vadd.f32 0.0, %v7294
      %v7296 = vpop.f32.mrf.mxu0
      %v7297 = vadd.f32 0.0, %v7296
      %v7298 = vpop.f32.mrf.mxu0
      %v7299 = vadd.f32 0.0, %v7298
      %7300 = vmatprep.mubr.bf16.mxu0 0
      %7301 = vmatmul.mubr.bf16.gmra.mxu0 %v6750
      %v7302 = vpop.f32.mrf.mxu0
      %v7303 = vadd.f32 0.0, %v7302
      %v7304 = vpop.f32.mrf.mxu0
      %v7305 = vadd.f32 0.0, %v7304
      %v7306 = vpop.f32.mrf.mxu0
      %v7307 = vadd.f32 0.0, %v7306
      %v7308 = vpop.f32.mrf.mxu0
      %v7309 = vadd.f32 0.0, %v7308
      %7310 = vmatprep.mubr.bf16.mxu0 0
      %7311 = vmatmul.mubr.bf16.gmra.mxu0 %v6753
      %v7312 = vpop.f32.mrf.mxu0
      %v7313 = vadd.f32 0.0, %v7312
      %v7314 = vpop.f32.mrf.mxu0
      %v7315 = vadd.f32 0.0, %v7314
      %v7316 = vpop.f32.mrf.mxu0
      %v7317 = vadd.f32 0.0, %v7316
      %v7318 = vpop.f32.mrf.mxu0
      %v7319 = vadd.f32 0.0, %v7318
      %7320 = vmatprep.mubr.bf16.mxu0 0
      %7321 = vmatmul.mubr.bf16.gmra.mxu0 %v6756
      %v7322 = vpop.f32.mrf.mxu0
      %v7323 = vadd.f32 0.0, %v7322
      %v7324 = vpop.f32.mrf.mxu0
      %v7325 = vadd.f32 0.0, %v7324
      %v7326 = vpop.f32.mrf.mxu0
      %v7327 = vadd.f32 0.0, %v7326
      %v7328 = vpop.f32.mrf.mxu0
      %v7329 = vadd.f32 0.0, %v7328
      %7330 = vmatprep.mubr.bf16.mxu0 0
      %7331 = vmatmul.mubr.bf16.gmra.mxu0 %v6759
      %v7332 = vpop.f32.mrf.mxu0
      %v7333 = vadd.f32 0.0, %v7332
      %v7334 = vpop.f32.mrf.mxu0
      %v7335 = vadd.f32 0.0, %v7334
      %v7336 = vpop.f32.mrf.mxu0
      %v7337 = vadd.f32 0.0, %v7336
      %v7338 = vpop.f32.mrf.mxu0
      %v7339 = vadd.f32 0.0, %v7338
      %7340 = vmatprep.mubr.bf16.mxu0 0
      %7341 = vmatmul.mubr.bf16.gmra.mxu0 %v6762
      %v7342 = vpop.f32.mrf.mxu0
      %v7343 = vadd.f32 0.0, %v7342
      %v7344 = vpop.f32.mrf.mxu0
      %v7345 = vadd.f32 0.0, %v7344
      %v7346 = vpop.f32.mrf.mxu0
      %v7347 = vadd.f32 0.0, %v7346
      %v7348 = vpop.f32.mrf.mxu0
      %v7349 = vadd.f32 0.0, %v7348
      %7350 = vmatprep.mubr.bf16.mxu0 0
      %7351 = vmatmul.mubr.bf16.gmra.mxu0 %v6765
      %v7352 = vpop.f32.mrf.mxu0
      %v7353 = vadd.f32 0.0, %v7352
      %v7354 = vpop.f32.mrf.mxu0
      %v7355 = vadd.f32 0.0, %v7354
      %v7356 = vpop.f32.mrf.mxu0
      %v7357 = vadd.f32 0.0, %v7356
      %v7358 = vpop.f32.mrf.mxu0
      %v7359 = vadd.f32 0.0, %v7358
      %7360 = vmatprep.mubr.bf16.mxu0 0
      %7361 = vmatmul.mubr.bf16.gmra.mxu0 %v6768
      %v7362 = vpop.f32.mrf.mxu0
      %v7363 = vadd.f32 0.0, %v7362
      %v7364 = vpop.f32.mrf.mxu0
      %v7365 = vadd.f32 0.0, %v7364
      %v7366 = vpop.f32.mrf.mxu0
      %v7367 = vadd.f32 0.0, %v7366
      %v7368 = vpop.f32.mrf.mxu0
      %v7369 = vadd.f32 0.0, %v7368
      %7370 = vmatprep.mubr.bf16.mxu0 0
      %7371 = vmatmul.mubr.bf16.gmra.mxu0 %v6771
      %v7372 = vpop.f32.mrf.mxu0
      %v7373 = vadd.f32 0.0, %v7372
      %v7374 = vpop.f32.mrf.mxu0
      %v7375 = vadd.f32 0.0, %v7374
      %v7376 = vpop.f32.mrf.mxu0
      %v7377 = vadd.f32 0.0, %v7376
      %v7378 = vpop.f32.mrf.mxu0
      %v7379 = vadd.f32 0.0, %v7378
      %7380 = vmatprep.mubr.bf16.mxu0 0
      %7381 = vmatmul.mubr.bf16.gmra.mxu0 %v6774
      %v7382 = vpop.f32.mrf.mxu0
      %v7383 = vadd.f32 0.0, %v7382
      %v7384 = vpop.f32.mrf.mxu0
      %v7385 = vadd.f32 0.0, %v7384
      %v7386 = vpop.f32.mrf.mxu0
      %v7387 = vadd.f32 0.0, %v7386
      %v7388 = vpop.f32.mrf.mxu0
      %v7389 = vadd.f32 0.0, %v7388
      %7390 = vmatprep.mubr.bf16.mxu0 0
      %7391 = vmatmul.mubr.bf16.gmra.mxu0 %v6777
      %v7392 = vpop.f32.mrf.mxu0
      %v7393 = vadd.f32 0.0, %v7392
      %v7394 = vpop.f32.mrf.mxu0
      %v7395 = vadd.f32 0.0, %v7394
      %v7396 = vpop.f32.mrf.mxu0
      %v7397 = vadd.f32 0.0, %v7396
      %v7398 = vpop.f32.mrf.mxu0
      %v7399 = vadd.f32 0.0, %v7398
      %7400 = vmatprep.mubr.bf16.mxu0 0
      %7401 = vmatmul.mubr.bf16.gmra.mxu0 %v6780
      %v7402 = vpop.f32.mrf.mxu0
      %v7403 = vadd.f32 0.0, %v7402
      %v7404 = vpop.f32.mrf.mxu0
      %v7405 = vadd.f32 0.0, %v7404
      %v7406 = vpop.f32.mrf.mxu0
      %v7407 = vadd.f32 0.0, %v7406
      %v7408 = vpop.f32.mrf.mxu0
      %v7409 = vadd.f32 0.0, %v7408
      %7410 = vmatprep.mubr.bf16.mxu0 0
      %7411 = vmatmul.mubr.bf16.gmra.mxu0 %v6783
      %v7412 = vpop.f32.mrf.mxu0
      %v7413 = vadd.f32 0.0, %v7412
      %v7414 = vpop.f32.mrf.mxu0
      %v7415 = vadd.f32 0.0, %v7414
      %v7416 = vpop.f32.mrf.mxu0
      %v7417 = vadd.f32 0.0, %v7416
      %v7418 = vpop.f32.mrf.mxu0
      %v7419 = vadd.f32 0.0, %v7418
      %7420 = vmatprep.mubr.bf16.mxu0 0
      %7421 = vmatmul.mubr.bf16.gmra.mxu0 %v6786
      %v7422 = vpop.f32.mrf.mxu0
      %v7423 = vadd.f32 0.0, %v7422
      %v7424 = vpop.f32.mrf.mxu0
      %v7425 = vadd.f32 0.0, %v7424
      %v7426 = vpop.f32.mrf.mxu0
      %v7427 = vadd.f32 0.0, %v7426
      %v7428 = vpop.f32.mrf.mxu0
      %v7429 = vadd.f32 0.0, %v7428
      %7430 = vmatprep.mubr.bf16.mxu0 0
      %7431 = vmatmul.mubr.bf16.gmra.mxu0 %v6789
      %v7432 = vpop.f32.mrf.mxu0
      %v7433 = vadd.f32 0.0, %v7432
      %v7434 = vpop.f32.mrf.mxu0
      %v7435 = vadd.f32 0.0, %v7434
      %v7436 = vpop.f32.mrf.mxu0
      %v7437 = vadd.f32 0.0, %v7436
      %v7438 = vpop.f32.mrf.mxu0
      %v7439 = vadd.f32 0.0, %v7438
      %7440 = vmatprep.mubr.bf16.mxu0 0
      %7441 = vmatmul.mubr.bf16.gmra.mxu0 %v6792
      %v7442 = vpop.f32.mrf.mxu0
      %v7443 = vadd.f32 0.0, %v7442
      %v7444 = vpop.f32.mrf.mxu0
      %v7445 = vadd.f32 0.0, %v7444
      %v7446 = vpop.f32.mrf.mxu0
      %v7447 = vadd.f32 0.0, %v7446
      %v7448 = vpop.f32.mrf.mxu0
      %v7449 = vadd.f32 0.0, %v7448
      %7450 = vmatprep.mubr.bf16.mxu0 0
      %7451 = vmatmul.mubr.bf16.gmra.mxu0 %v6795
      %v7452 = vpop.f32.mrf.mxu0
      %v7453 = vadd.f32 0.0, %v7452
      %v7454 = vpop.f32.mrf.mxu0
      %v7455 = vadd.f32 0.0, %v7454
      %v7456 = vpop.f32.mrf.mxu0
      %v7457 = vadd.f32 0.0, %v7456
      %v7458 = vpop.f32.mrf.mxu0
      %v7459 = vadd.f32 0.0, %v7458
      %7460 = vmatprep.mubr.bf16.mxu0 0
      %7461 = vmatmul.mubr.bf16.gmra.mxu0 %v6798
      %v7462 = vpop.f32.mrf.mxu0
      %v7463 = vadd.f32 0.0, %v7462
      %v7464 = vpop.f32.mrf.mxu0
      %v7465 = vadd.f32 0.0, %v7464
      %v7466 = vpop.f32.mrf.mxu0
      %v7467 = vadd.f32 0.0, %v7466
      %v7468 = vpop.f32.mrf.mxu0
      %v7469 = vadd.f32 0.0, %v7468
      %7470 = vmatprep.mubr.bf16.mxu0 0
      %7471 = vmatmul.mubr.bf16.gmra.mxu0 %v6801
      %v7472 = vpop.f32.mrf.mxu0
      %v7473 = vadd.f32 0.0, %v7472
      %v7474 = vpop.f32.mrf.mxu0
      %v7475 = vadd.f32 0.0, %v7474
      %v7476 = vpop.f32.mrf.mxu0
      %v7477 = vadd.f32 0.0, %v7476
      %v7478 = vpop.f32.mrf.mxu0
      %v7479 = vadd.f32 0.0, %v7478
      %7480 = vmatprep.mubr.bf16.mxu0 0
      %7481 = vmatmul.mubr.bf16.gmra.mxu0 %v6804
      %v7482 = vpop.f32.mrf.mxu0
      %v7483 = vadd.f32 0.0, %v7482
      %v7484 = vpop.f32.mrf.mxu0
      %v7485 = vadd.f32 0.0, %v7484
      %v7486 = vpop.f32.mrf.mxu0
      %v7487 = vadd.f32 0.0, %v7486
      %v7488 = vpop.f32.mrf.mxu0
      %v7489 = vadd.f32 0.0, %v7488
      %7490 = vmatprep.mubr.bf16.mxu0 0
      %7491 = vmatmul.mubr.bf16.gmra.mxu0 %v6807
      %v7492 = vpop.f32.mrf.mxu0
      %v7493 = vadd.f32 0.0, %v7492
      %v7494 = vpop.f32.mrf.mxu0
      %v7495 = vadd.f32 0.0, %v7494
      %v7496 = vpop.f32.mrf.mxu0
      %v7497 = vadd.f32 0.0, %v7496
      %v7498 = vpop.f32.mrf.mxu0
      %v7499 = vadd.f32 0.0, %v7498
      %7500 = vmatprep.mubr.bf16.mxu0 0
      %7501 = vmatmul.mubr.bf16.gmra.mxu0 %v6810
      %v7502 = vpop.f32.mrf.mxu0
      %v7503 = vadd.f32 0.0, %v7502
      %v7504 = vpop.f32.mrf.mxu0
      %v7505 = vadd.f32 0.0, %v7504
      %v7506 = vpop.f32.mrf.mxu0
      %v7507 = vadd.f32 0.0, %v7506
      %v7508 = vpop.f32.mrf.mxu0
      %v7509 = vadd.f32 0.0, %v7508
      %7510 = vmatprep.mubr.bf16.mxu0 0
      %7511 = vmatmul.mubr.bf16.gmra.mxu0 %v6813
      %v7512 = vpop.f32.mrf.mxu0
      %v7513 = vadd.f32 0.0, %v7512
      %v7514 = vpop.f32.mrf.mxu0
      %v7515 = vadd.f32 0.0, %v7514
      %v7516 = vpop.f32.mrf.mxu0
      %v7517 = vadd.f32 0.0, %v7516
      %v7518 = vpop.f32.mrf.mxu0
      %v7519 = vadd.f32 0.0, %v7518
      %7520 = vdwg.mxu0
      %7521 = vmatprep.subr.bf16.mxu0 0
      %7522 = vmatpush1.bf16.msra.mxu0 0
      %7523 = vmatprep.subr.bf16.mxu0 %v6676
      %7524 = vmatpush1.bf16.msra.mxu0 %v6675
      %7525 = vmatprep.subr.bf16.mxu0 %v6670
      %7526 = vmatpush1.bf16.msra.mxu0 %v6669
      %7527 = vmatprep.subr.bf16.mxu0 %v6664
      %7528 = vmatpush1.bf16.msra.mxu0 %v6663
      %7529 = vmatprep.subr.bf16.mxu0 %v6658
      %7530 = vmatpush1.bf16.msra.mxu0 %v6657
      %7531 = vmatprep.subr.bf16.mxu0 %v6652
      %7532 = vmatpush1.bf16.msra.mxu0 %v6651
      %7533 = vmatprep.subr.bf16.mxu0 %v6646
      %7534 = vmatpush1.bf16.msra.mxu0 %v6645
      %7535 = vmatprep.subr.bf16.mxu0 %v6640
      %7536 = vmatpush1.bf16.msra.mxu0 %v6639
      %7537 = vmatprep.subr.bf16.mxu0 0
      %7538 = vmatpush2.bf16.msra.mxu0 0
      %7539 = vmatprep.subr.bf16.mxu0 0
      %7540 = vmatpush2.bf16.msra.mxu0 0
      %7541 = vmatprep.subr.bf16.mxu0 0
      %7542 = vmatpush2.bf16.msra.mxu0 0
      %7543 = vmatprep.subr.bf16.mxu0 0
      %7544 = vmatpush2.bf16.msra.mxu0 0
      %7545 = vmatprep.subr.bf16.mxu0 0
      %7546 = vmatpush2.bf16.msra.mxu0 0
      %7547 = vmatprep.subr.bf16.mxu0 0
      %7548 = vmatpush2.bf16.msra.mxu0 0
      %7549 = vmatprep.subr.bf16.mxu0 0
      %7550 = vmatpush2.bf16.msra.mxu0 0
      %7551 = vmatprep.subr.bf16.mxu0 0
      %7552 = vmatpush2.bf16.msra.mxu0 0
      %7553 = vmatprep.mubr.bf16.mxu0 0
      %7554 = vmatmul.mubr.bf16.gmra.mxu0 %v6720
      %v7555 = vpop.f32.mrf.mxu0
      %v7556 = vadd.f32 0.0, %v7555
      %v7557 = vpop.f32.mrf.mxu0
      %v7558 = vadd.f32 0.0, %v7557
      %v7559 = vpop.f32.mrf.mxu0
      %v7560 = vadd.f32 0.0, %v7559
      %v7561 = vpop.f32.mrf.mxu0
      %v7562 = vadd.f32 0.0, %v7561
      %7563 = vmatprep.mubr.bf16.mxu0 0
      %7564 = vmatmul.mubr.bf16.gmra.mxu0 %v6723
      %v7565 = vpop.f32.mrf.mxu0
      %v7566 = vadd.f32 0.0, %v7565
      %v7567 = vpop.f32.mrf.mxu0
      %v7568 = vadd.f32 0.0, %v7567
      %v7569 = vpop.f32.mrf.mxu0
      %v7570 = vadd.f32 0.0, %v7569
      %v7571 = vpop.f32.mrf.mxu0
      %v7572 = vadd.f32 0.0, %v7571
      %7573 = vmatprep.mubr.bf16.mxu0 0
      %7574 = vmatmul.mubr.bf16.gmra.mxu0 %v6726
      %v7575 = vpop.f32.mrf.mxu0
      %v7576 = vadd.f32 0.0, %v7575
      %v7577 = vpop.f32.mrf.mxu0
      %v7578 = vadd.f32 0.0, %v7577
      %v7579 = vpop.f32.mrf.mxu0
      %v7580 = vadd.f32 0.0, %v7579
      %v7581 = vpop.f32.mrf.mxu0
      %v7582 = vadd.f32 0.0, %v7581
      %7583 = vmatprep.mubr.bf16.mxu0 0
      %7584 = vmatmul.mubr.bf16.gmra.mxu0 %v6729
      %v7585 = vpop.f32.mrf.mxu0
      %v7586 = vadd.f32 0.0, %v7585
      %v7587 = vpop.f32.mrf.mxu0
      %v7588 = vadd.f32 0.0, %v7587
      %v7589 = vpop.f32.mrf.mxu0
      %v7590 = vadd.f32 0.0, %v7589
      %v7591 = vpop.f32.mrf.mxu0
      %v7592 = vadd.f32 0.0, %v7591
      %7593 = vmatprep.mubr.bf16.mxu0 0
      %7594 = vmatmul.mubr.bf16.gmra.mxu0 %v6732
      %v7595 = vpop.f32.mrf.mxu0
      %v7596 = vadd.f32 0.0, %v7595
      %v7597 = vpop.f32.mrf.mxu0
      %v7598 = vadd.f32 0.0, %v7597
      %v7599 = vpop.f32.mrf.mxu0
      %v7600 = vadd.f32 0.0, %v7599
      %v7601 = vpop.f32.mrf.mxu0
      %v7602 = vadd.f32 0.0, %v7601
      %7603 = vmatprep.mubr.bf16.mxu0 0
      %7604 = vmatmul.mubr.bf16.gmra.mxu0 %v6735
      %v7605 = vpop.f32.mrf.mxu0
      %v7606 = vadd.f32 0.0, %v7605
      %v7607 = vpop.f32.mrf.mxu0
      %v7608 = vadd.f32 0.0, %v7607
      %v7609 = vpop.f32.mrf.mxu0
      %v7610 = vadd.f32 0.0, %v7609
      %v7611 = vpop.f32.mrf.mxu0
      %v7612 = vadd.f32 0.0, %v7611
      %7613 = vmatprep.mubr.bf16.mxu0 0
      %7614 = vmatmul.mubr.bf16.gmra.mxu0 %v6738
      %v7615 = vpop.f32.mrf.mxu0
      %v7616 = vadd.f32 0.0, %v7615
      %v7617 = vpop.f32.mrf.mxu0
      %v7618 = vadd.f32 0.0, %v7617
      %v7619 = vpop.f32.mrf.mxu0
      %v7620 = vadd.f32 0.0, %v7619
      %v7621 = vpop.f32.mrf.mxu0
      %v7622 = vadd.f32 0.0, %v7621
      %7623 = vmatprep.mubr.bf16.mxu0 0
      %7624 = vmatmul.mubr.bf16.gmra.mxu0 %v6741
      %v7625 = vpop.f32.mrf.mxu0
      %v7626 = vadd.f32 0.0, %v7625
      %v7627 = vpop.f32.mrf.mxu0
      %v7628 = vadd.f32 0.0, %v7627
      %v7629 = vpop.f32.mrf.mxu0
      %v7630 = vadd.f32 0.0, %v7629
      %v7631 = vpop.f32.mrf.mxu0
      %v7632 = vadd.f32 0.0, %v7631
      %7633 = vmatprep.mubr.bf16.mxu0 0
      %7634 = vmatmul.mubr.bf16.gmra.mxu0 %v6744
      %v7635 = vpop.f32.mrf.mxu0
      %v7636 = vadd.f32 0.0, %v7635
      %v7637 = vpop.f32.mrf.mxu0
      %v7638 = vadd.f32 0.0, %v7637
      %v7639 = vpop.f32.mrf.mxu0
      %v7640 = vadd.f32 0.0, %v7639
      %v7641 = vpop.f32.mrf.mxu0
      %v7642 = vadd.f32 0.0, %v7641
      %7643 = vmatprep.mubr.bf16.mxu0 0
      %7644 = vmatmul.mubr.bf16.gmra.mxu0 %v6747
      %v7645 = vpop.f32.mrf.mxu0
      %v7646 = vadd.f32 0.0, %v7645
      %v7647 = vpop.f32.mrf.mxu0
      %v7648 = vadd.f32 0.0, %v7647
      %v7649 = vpop.f32.mrf.mxu0
      %v7650 = vadd.f32 0.0, %v7649
      %v7651 = vpop.f32.mrf.mxu0
      %v7652 = vadd.f32 0.0, %v7651
      %7653 = vmatprep.mubr.bf16.mxu0 0
      %7654 = vmatmul.mubr.bf16.gmra.mxu0 %v6750
      %v7655 = vpop.f32.mrf.mxu0
      %v7656 = vadd.f32 0.0, %v7655
      %v7657 = vpop.f32.mrf.mxu0
      %v7658 = vadd.f32 0.0, %v7657
      %v7659 = vpop.f32.mrf.mxu0
      %v7660 = vadd.f32 0.0, %v7659
      %v7661 = vpop.f32.mrf.mxu0
      %v7662 = vadd.f32 0.0, %v7661
      %7663 = vmatprep.mubr.bf16.mxu0 0
      %7664 = vmatmul.mubr.bf16.gmra.mxu0 %v6753
      %v7665 = vpop.f32.mrf.mxu0
      %v7666 = vadd.f32 0.0, %v7665
      %v7667 = vpop.f32.mrf.mxu0
      %v7668 = vadd.f32 0.0, %v7667
      %v7669 = vpop.f32.mrf.mxu0
      %v7670 = vadd.f32 0.0, %v7669
      %v7671 = vpop.f32.mrf.mxu0
      %v7672 = vadd.f32 0.0, %v7671
      %7673 = vmatprep.mubr.bf16.mxu0 0
      %7674 = vmatmul.mubr.bf16.gmra.mxu0 %v6756
      %v7675 = vpop.f32.mrf.mxu0
      %v7676 = vadd.f32 0.0, %v7675
      %v7677 = vpop.f32.mrf.mxu0
      %v7678 = vadd.f32 0.0, %v7677
      %v7679 = vpop.f32.mrf.mxu0
      %v7680 = vadd.f32 0.0, %v7679
      %v7681 = vpop.f32.mrf.mxu0
      %v7682 = vadd.f32 0.0, %v7681
      %7683 = vmatprep.mubr.bf16.mxu0 0
      %7684 = vmatmul.mubr.bf16.gmra.mxu0 %v6759
      %v7685 = vpop.f32.mrf.mxu0
      %v7686 = vadd.f32 0.0, %v7685
      %v7687 = vpop.f32.mrf.mxu0
      %v7688 = vadd.f32 0.0, %v7687
      %v7689 = vpop.f32.mrf.mxu0
      %v7690 = vadd.f32 0.0, %v7689
      %v7691 = vpop.f32.mrf.mxu0
      %v7692 = vadd.f32 0.0, %v7691
      %7693 = vmatprep.mubr.bf16.mxu0 0
      %7694 = vmatmul.mubr.bf16.gmra.mxu0 %v6762
      %v7695 = vpop.f32.mrf.mxu0
      %v7696 = vadd.f32 0.0, %v7695
      %v7697 = vpop.f32.mrf.mxu0
      %v7698 = vadd.f32 0.0, %v7697
      %v7699 = vpop.f32.mrf.mxu0
      %v7700 = vadd.f32 0.0, %v7699
      %v7701 = vpop.f32.mrf.mxu0
      %v7702 = vadd.f32 0.0, %v7701
      %7703 = vmatprep.mubr.bf16.mxu0 0
      %7704 = vmatmul.mubr.bf16.gmra.mxu0 %v6765
      %v7705 = vpop.f32.mrf.mxu0
      %v7706 = vadd.f32 0.0, %v7705
      %v7707 = vpop.f32.mrf.mxu0
      %v7708 = vadd.f32 0.0, %v7707
      %v7709 = vpop.f32.mrf.mxu0
      %v7710 = vadd.f32 0.0, %v7709
      %v7711 = vpop.f32.mrf.mxu0
      %v7712 = vadd.f32 0.0, %v7711
      %7713 = vmatprep.mubr.bf16.mxu0 0
      %7714 = vmatmul.mubr.bf16.gmra.mxu0 %v6768
      %v7715 = vpop.f32.mrf.mxu0
      %v7716 = vadd.f32 0.0, %v7715
      %v7717 = vpop.f32.mrf.mxu0
      %v7718 = vadd.f32 0.0, %v7717
      %v7719 = vpop.f32.mrf.mxu0
      %v7720 = vadd.f32 0.0, %v7719
      %v7721 = vpop.f32.mrf.mxu0
      %v7722 = vadd.f32 0.0, %v7721
      %7723 = vmatprep.mubr.bf16.mxu0 0
      %7724 = vmatmul.mubr.bf16.gmra.mxu0 %v6771
      %v7725 = vpop.f32.mrf.mxu0
      %v7726 = vadd.f32 0.0, %v7725
      %v7727 = vpop.f32.mrf.mxu0
      %v7728 = vadd.f32 0.0, %v7727
      %v7729 = vpop.f32.mrf.mxu0
      %v7730 = vadd.f32 0.0, %v7729
      %v7731 = vpop.f32.mrf.mxu0
      %v7732 = vadd.f32 0.0, %v7731
      %7733 = vmatprep.mubr.bf16.mxu0 0
      %7734 = vmatmul.mubr.bf16.gmra.mxu0 %v6774
      %v7735 = vpop.f32.mrf.mxu0
      %v7736 = vadd.f32 0.0, %v7735
      %v7737 = vpop.f32.mrf.mxu0
      %v7738 = vadd.f32 0.0, %v7737
      %v7739 = vpop.f32.mrf.mxu0
      %v7740 = vadd.f32 0.0, %v7739
      %v7741 = vpop.f32.mrf.mxu0
      %v7742 = vadd.f32 0.0, %v7741
      %7743 = vmatprep.mubr.bf16.mxu0 0
      %7744 = vmatmul.mubr.bf16.gmra.mxu0 %v6777
      %v7745 = vpop.f32.mrf.mxu0
      %v7746 = vadd.f32 0.0, %v7745
      %v7747 = vpop.f32.mrf.mxu0
      %v7748 = vadd.f32 0.0, %v7747
      %v7749 = vpop.f32.mrf.mxu0
      %v7750 = vadd.f32 0.0, %v7749
      %v7751 = vpop.f32.mrf.mxu0
      %v7752 = vadd.f32 0.0, %v7751
      %7753 = vmatprep.mubr.bf16.mxu0 0
      %7754 = vmatmul.mubr.bf16.gmra.mxu0 %v6780
      %v7755 = vpop.f32.mrf.mxu0
      %v7756 = vadd.f32 0.0, %v7755
      %v7757 = vpop.f32.mrf.mxu0
      %v7758 = vadd.f32 0.0, %v7757
      %v7759 = vpop.f32.mrf.mxu0
      %v7760 = vadd.f32 0.0, %v7759
      %v7761 = vpop.f32.mrf.mxu0
      %v7762 = vadd.f32 0.0, %v7761
      %7763 = vmatprep.mubr.bf16.mxu0 0
      %7764 = vmatmul.mubr.bf16.gmra.mxu0 %v6783
      %v7765 = vpop.f32.mrf.mxu0
      %v7766 = vadd.f32 0.0, %v7765
      %v7767 = vpop.f32.mrf.mxu0
      %v7768 = vadd.f32 0.0, %v7767
      %v7769 = vpop.f32.mrf.mxu0
      %v7770 = vadd.f32 0.0, %v7769
      %v7771 = vpop.f32.mrf.mxu0
      %v7772 = vadd.f32 0.0, %v7771
      %7773 = vmatprep.mubr.bf16.mxu0 0
      %7774 = vmatmul.mubr.bf16.gmra.mxu0 %v6786
      %v7775 = vpop.f32.mrf.mxu0
      %v7776 = vadd.f32 0.0, %v7775
      %v7777 = vpop.f32.mrf.mxu0
      %v7778 = vadd.f32 0.0, %v7777
      %v7779 = vpop.f32.mrf.mxu0
      %v7780 = vadd.f32 0.0, %v7779
      %v7781 = vpop.f32.mrf.mxu0
      %v7782 = vadd.f32 0.0, %v7781
      %7783 = vmatprep.mubr.bf16.mxu0 0
      %7784 = vmatmul.mubr.bf16.gmra.mxu0 %v6789
      %v7785 = vpop.f32.mrf.mxu0
      %v7786 = vadd.f32 0.0, %v7785
      %v7787 = vpop.f32.mrf.mxu0
      %v7788 = vadd.f32 0.0, %v7787
      %v7789 = vpop.f32.mrf.mxu0
      %v7790 = vadd.f32 0.0, %v7789
      %v7791 = vpop.f32.mrf.mxu0
      %v7792 = vadd.f32 0.0, %v7791
      %7793 = vmatprep.mubr.bf16.mxu0 0
      %7794 = vmatmul.mubr.bf16.gmra.mxu0 %v6792
      %v7795 = vpop.f32.mrf.mxu0
      %v7796 = vadd.f32 0.0, %v7795
      %v7797 = vpop.f32.mrf.mxu0
      %v7798 = vadd.f32 0.0, %v7797
      %v7799 = vpop.f32.mrf.mxu0
      %v7800 = vadd.f32 0.0, %v7799
      %v7801 = vpop.f32.mrf.mxu0
      %v7802 = vadd.f32 0.0, %v7801
      %7803 = vmatprep.mubr.bf16.mxu0 0
      %7804 = vmatmul.mubr.bf16.gmra.mxu0 %v6795
      %v7805 = vpop.f32.mrf.mxu0
      %v7806 = vadd.f32 0.0, %v7805
      %v7807 = vpop.f32.mrf.mxu0
      %v7808 = vadd.f32 0.0, %v7807
      %v7809 = vpop.f32.mrf.mxu0
      %v7810 = vadd.f32 0.0, %v7809
      %v7811 = vpop.f32.mrf.mxu0
      %v7812 = vadd.f32 0.0, %v7811
      %7813 = vmatprep.mubr.bf16.mxu0 0
      %7814 = vmatmul.mubr.bf16.gmra.mxu0 %v6798
      %v7815 = vpop.f32.mrf.mxu0
      %v7816 = vadd.f32 0.0, %v7815
      %v7817 = vpop.f32.mrf.mxu0
      %v7818 = vadd.f32 0.0, %v7817
      %v7819 = vpop.f32.mrf.mxu0
      %v7820 = vadd.f32 0.0, %v7819
      %v7821 = vpop.f32.mrf.mxu0
      %v7822 = vadd.f32 0.0, %v7821
      %7823 = vmatprep.mubr.bf16.mxu0 0
      %7824 = vmatmul.mubr.bf16.gmra.mxu0 %v6801
      %v7825 = vpop.f32.mrf.mxu0
      %v7826 = vadd.f32 0.0, %v7825
      %v7827 = vpop.f32.mrf.mxu0
      %v7828 = vadd.f32 0.0, %v7827
      %v7829 = vpop.f32.mrf.mxu0
      %v7830 = vadd.f32 0.0, %v7829
      %v7831 = vpop.f32.mrf.mxu0
      %v7832 = vadd.f32 0.0, %v7831
      %7833 = vmatprep.mubr.bf16.mxu0 0
      %7834 = vmatmul.mubr.bf16.gmra.mxu0 %v6804
      %v7835 = vpop.f32.mrf.mxu0
      %v7836 = vadd.f32 0.0, %v7835
      %v7837 = vpop.f32.mrf.mxu0
      %v7838 = vadd.f32 0.0, %v7837
      %v7839 = vpop.f32.mrf.mxu0
      %v7840 = vadd.f32 0.0, %v7839
      %v7841 = vpop.f32.mrf.mxu0
      %v7842 = vadd.f32 0.0, %v7841
      %7843 = vmatprep.mubr.bf16.mxu0 0
      %7844 = vmatmul.mubr.bf16.gmra.mxu0 %v6807
      %v7845 = vpop.f32.mrf.mxu0
      %v7846 = vadd.f32 0.0, %v7845
      %v7847 = vpop.f32.mrf.mxu0
      %v7848 = vadd.f32 0.0, %v7847
      %v7849 = vpop.f32.mrf.mxu0
      %v7850 = vadd.f32 0.0, %v7849
      %v7851 = vpop.f32.mrf.mxu0
      %v7852 = vadd.f32 0.0, %v7851
      %7853 = vmatprep.mubr.bf16.mxu0 0
      %7854 = vmatmul.mubr.bf16.gmra.mxu0 %v6810
      %v7855 = vpop.f32.mrf.mxu0
      %v7856 = vadd.f32 0.0, %v7855
      %v7857 = vpop.f32.mrf.mxu0
      %v7858 = vadd.f32 0.0, %v7857
      %v7859 = vpop.f32.mrf.mxu0
      %v7860 = vadd.f32 0.0, %v7859
      %v7861 = vpop.f32.mrf.mxu0
      %v7862 = vadd.f32 0.0, %v7861
      %7863 = vmatprep.mubr.bf16.mxu0 0
      %7864 = vmatmul.mubr.bf16.gmra.mxu0 %v6813
      %v7865 = vpop.f32.mrf.mxu0
      %v7866 = vadd.f32 0.0, %v7865
      %v7867 = vpop.f32.mrf.mxu0
      %v7868 = vadd.f32 0.0, %v7867
      %v7869 = vpop.f32.mrf.mxu0
      %v7870 = vadd.f32 0.0, %v7869
      %v7871 = vpop.f32.mrf.mxu0
      %v7872 = vadd.f32 0.0, %v7871
      %7873 = vdwg.mxu0
      %v7938 = vrot.slane %v7203, 1
      %v7939 = vrot.slane %v7207, 1
      %v7940 = vsel %vm3224, %v7938, %v7939
      %v7941 = vrot.slane %v7213, 1
      %v7942 = vrot.slane %v7217, 1
      %v7943 = vsel %vm3224, %v7941, %v7942
      %v7944 = vrot.slane %v7223, 1
      %v7945 = vrot.slane %v7227, 1
      %v7946 = vsel %vm3224, %v7944, %v7945
      %v7947 = vrot.slane %v7233, 1
      %v7948 = vrot.slane %v7237, 1
      %v7949 = vsel %vm3224, %v7947, %v7948
      %v7950 = vrot.slane %v7243, 1
      %v7951 = vrot.slane %v7247, 1
      %v7952 = vsel %vm3224, %v7950, %v7951
      %v7953 = vrot.slane %v7253, 1
      %v7954 = vrot.slane %v7257, 1
      %v7955 = vsel %vm3224, %v7953, %v7954
      %v7956 = vrot.slane %v7263, 1
      %v7957 = vrot.slane %v7267, 1
      %v7958 = vsel %vm3224, %v7956, %v7957
      %v7959 = vrot.slane %v7273, 1
      %v7960 = vrot.slane %v7277, 1
      %v7961 = vsel %vm3224, %v7959, %v7960
      %v7962 = vrot.slane %v7283, 1
      %v7963 = vrot.slane %v7287, 1
      %v7964 = vsel %vm3224, %v7962, %v7963
      %v7965 = vrot.slane %v7293, 1
      %v7966 = vrot.slane %v7297, 1
      %v7967 = vsel %vm3224, %v7965, %v7966
      %v7968 = vrot.slane %v7303, 1
      %v7969 = vrot.slane %v7307, 1
      %v7970 = vsel %vm3224, %v7968, %v7969
      %v7971 = vrot.slane %v7313, 1
      %v7972 = vrot.slane %v7317, 1
      %v7973 = vsel %vm3224, %v7971, %v7972
      %v7974 = vrot.slane %v7323, 1
      %v7975 = vrot.slane %v7327, 1
      %v7976 = vsel %vm3224, %v7974, %v7975
      %v7977 = vrot.slane %v7333, 1
      %v7978 = vrot.slane %v7337, 1
      %v7979 = vsel %vm3224, %v7977, %v7978
      %v7980 = vrot.slane %v7343, 1
      %v7981 = vrot.slane %v7347, 1
      %v7982 = vsel %vm3224, %v7980, %v7981
      %v7983 = vrot.slane %v7353, 1
      %v7984 = vrot.slane %v7357, 1
      %v7985 = vsel %vm3224, %v7983, %v7984
      %v7986 = vrot.slane %v7363, 1
      %v7987 = vrot.slane %v7367, 1
      %v7988 = vsel %vm3224, %v7986, %v7987
      %v7989 = vrot.slane %v7373, 1
      %v7990 = vrot.slane %v7377, 1
      %v7991 = vsel %vm3224, %v7989, %v7990
      %v7992 = vrot.slane %v7383, 1
      %v7993 = vrot.slane %v7387, 1
      %v7994 = vsel %vm3224, %v7992, %v7993
      %v7995 = vrot.slane %v7393, 1
      %v7996 = vrot.slane %v7397, 1
      %v7997 = vsel %vm3224, %v7995, %v7996
      %v7998 = vrot.slane %v7403, 1
      %v7999 = vrot.slane %v7407, 1
      %v8000 = vsel %vm3224, %v7998, %v7999
      %v8001 = vrot.slane %v7413, 1
      %v8002 = vrot.slane %v7417, 1
      %v8003 = vsel %vm3224, %v8001, %v8002
      %v8004 = vrot.slane %v7423, 1
      %v8005 = vrot.slane %v7427, 1
      %v8006 = vsel %vm3224, %v8004, %v8005
      %v8007 = vrot.slane %v7433, 1
      %v8008 = vrot.slane %v7437, 1
      %v8009 = vsel %vm3224, %v8007, %v8008
      %v8010 = vrot.slane %v7443, 1
      %v8011 = vrot.slane %v7447, 1
      %v8012 = vsel %vm3224, %v8010, %v8011
      %v8013 = vrot.slane %v7453, 1
      %v8014 = vrot.slane %v7457, 1
      %v8015 = vsel %vm3224, %v8013, %v8014
      %v8016 = vrot.slane %v7463, 1
      %v8017 = vrot.slane %v7467, 1
      %v8018 = vsel %vm3224, %v8016, %v8017
      %v8019 = vrot.slane %v7473, 1
      %v8020 = vrot.slane %v7477, 1
      %v8021 = vsel %vm3224, %v8019, %v8020
      %v8022 = vrot.slane %v7483, 1
      %v8023 = vrot.slane %v7487, 1
      %v8024 = vsel %vm3224, %v8022, %v8023
      %v8025 = vrot.slane %v7493, 1
      %v8026 = vrot.slane %v7497, 1
      %v8027 = vsel %vm3224, %v8025, %v8026
      %v8028 = vrot.slane %v7503, 1
      %v8029 = vrot.slane %v7507, 1
      %v8030 = vsel %vm3224, %v8028, %v8029
      %v8031 = vrot.slane %v7513, 1
      %v8032 = vrot.slane %v7517, 1
      %v8033 = vsel %vm3224, %v8031, %v8032
      %v8098 = vadd.f32 %v6850, %v7940
      %v8099 = vadd.f32 %v6854, %v7939
      %v8100 = vadd.f32 %v6860, %v7943
      %v8101 = vadd.f32 %v6864, %v7942
      %v8102 = vadd.f32 %v6870, %v7946
      %v8103 = vadd.f32 %v6874, %v7945
      %v8104 = vadd.f32 %v6880, %v7949
      %v8105 = vadd.f32 %v6884, %v7948
      %v8106 = vadd.f32 %v6890, %v7952
      %v8107 = vadd.f32 %v6894, %v7951
      %v8108 = vadd.f32 %v6900, %v7955
      %v8109 = vadd.f32 %v6904, %v7954
      %v8110 = vadd.f32 %v6910, %v7958
      %v8111 = vadd.f32 %v6914, %v7957
      %v8112 = vadd.f32 %v6920, %v7961
      %v8113 = vadd.f32 %v6924, %v7960
      %v8114 = vadd.f32 %v6930, %v7964
      %v8115 = vadd.f32 %v6934, %v7963
      %v8116 = vadd.f32 %v6940, %v7967
      %v8117 = vadd.f32 %v6944, %v7966
      %v8118 = vadd.f32 %v6950, %v7970
      %v8119 = vadd.f32 %v6954, %v7969
      %v8120 = vadd.f32 %v6960, %v7973
      %v8121 = vadd.f32 %v6964, %v7972
      %v8122 = vadd.f32 %v6970, %v7976
      %v8123 = vadd.f32 %v6974, %v7975
      %v8124 = vadd.f32 %v6980, %v7979
      %v8125 = vadd.f32 %v6984, %v7978
      %v8126 = vadd.f32 %v6990, %v7982
      %v8127 = vadd.f32 %v6994, %v7981
      %v8128 = vadd.f32 %v7000, %v7985
      %v8129 = vadd.f32 %v7004, %v7984
      %v8130 = vadd.f32 %v7010, %v7988
      %v8131 = vadd.f32 %v7014, %v7987
      %v8132 = vadd.f32 %v7020, %v7991
      %v8133 = vadd.f32 %v7024, %v7990
      %v8134 = vadd.f32 %v7030, %v7994
      %v8135 = vadd.f32 %v7034, %v7993
      %v8136 = vadd.f32 %v7040, %v7997
      %v8137 = vadd.f32 %v7044, %v7996
      %v8138 = vadd.f32 %v7050, %v8000
      %v8139 = vadd.f32 %v7054, %v7999
      %v8140 = vadd.f32 %v7060, %v8003
      %v8141 = vadd.f32 %v7064, %v8002
      %v8142 = vadd.f32 %v7070, %v8006
      %v8143 = vadd.f32 %v7074, %v8005
      %v8144 = vadd.f32 %v7080, %v8009
      %v8145 = vadd.f32 %v7084, %v8008
      %v8146 = vadd.f32 %v7090, %v8012
      %v8147 = vadd.f32 %v7094, %v8011
      %v8148 = vadd.f32 %v7100, %v8015
      %v8149 = vadd.f32 %v7104, %v8014
      %v8150 = vadd.f32 %v7110, %v8018
      %v8151 = vadd.f32 %v7114, %v8017
      %v8152 = vadd.f32 %v7120, %v8021
      %v8153 = vadd.f32 %v7124, %v8020
      %v8154 = vadd.f32 %v7130, %v8024
      %v8155 = vadd.f32 %v7134, %v8023
      %v8156 = vadd.f32 %v7140, %v8027
      %v8157 = vadd.f32 %v7144, %v8026
      %v8158 = vadd.f32 %v7150, %v8030
      %v8159 = vadd.f32 %v7154, %v8029
      %v8160 = vadd.f32 %v7160, %v8033
      %v8161 = vadd.f32 %v7164, %v8032
      %v8226 = vrot.slane %v7556, 2
      %v8227 = vrot.slane %v7560, 2
      %v8228 = vsel %vm1058, %v8226, %v8227
      %v8229 = vrot.slane %v7566, 2
      %v8230 = vrot.slane %v7570, 2
      %v8231 = vsel %vm1058, %v8229, %v8230
      %v8232 = vrot.slane %v7576, 2
      %v8233 = vrot.slane %v7580, 2
      %v8234 = vsel %vm1058, %v8232, %v8233
      %v8235 = vrot.slane %v7586, 2
      %v8236 = vrot.slane %v7590, 2
      %v8237 = vsel %vm1058, %v8235, %v8236
      %v8238 = vrot.slane %v7596, 2
      %v8239 = vrot.slane %v7600, 2
      %v8240 = vsel %vm1058, %v8238, %v8239
      %v8241 = vrot.slane %v7606, 2
      %v8242 = vrot.slane %v7610, 2
      %v8243 = vsel %vm1058, %v8241, %v8242
      %v8244 = vrot.slane %v7616, 2
      %v8245 = vrot.slane %v7620, 2
      %v8246 = vsel %vm1058, %v8244, %v8245
      %v8247 = vrot.slane %v7626, 2
      %v8248 = vrot.slane %v7630, 2
      %v8249 = vsel %vm1058, %v8247, %v8248
      %v8250 = vrot.slane %v7636, 2
      %v8251 = vrot.slane %v7640, 2
      %v8252 = vsel %vm1058, %v8250, %v8251
      %v8253 = vrot.slane %v7646, 2
      %v8254 = vrot.slane %v7650, 2
      %v8255 = vsel %vm1058, %v8253, %v8254
      %v8256 = vrot.slane %v7656, 2
      %v8257 = vrot.slane %v7660, 2
      %v8258 = vsel %vm1058, %v8256, %v8257
      %v8259 = vrot.slane %v7666, 2
      %v8260 = vrot.slane %v7670, 2
      %v8261 = vsel %vm1058, %v8259, %v8260
      %v8262 = vrot.slane %v7676, 2
      %v8263 = vrot.slane %v7680, 2
      %v8264 = vsel %vm1058, %v8262, %v8263
      %v8265 = vrot.slane %v7686, 2
      %v8266 = vrot.slane %v7690, 2
      %v8267 = vsel %vm1058, %v8265, %v8266
      %v8268 = vrot.slane %v7696, 2
      %v8269 = vrot.slane %v7700, 2
      %v8270 = vsel %vm1058, %v8268, %v8269
      %v8271 = vrot.slane %v7706, 2
      %v8272 = vrot.slane %v7710, 2
      %v8273 = vsel %vm1058, %v8271, %v8272
      %v8274 = vrot.slane %v7716, 2
      %v8275 = vrot.slane %v7720, 2
      %v8276 = vsel %vm1058, %v8274, %v8275
      %v8277 = vrot.slane %v7726, 2
      %v8278 = vrot.slane %v7730, 2
      %v8279 = vsel %vm1058, %v8277, %v8278
      %v8280 = vrot.slane %v7736, 2
      %v8281 = vrot.slane %v7740, 2
      %v8282 = vsel %vm1058, %v8280, %v8281
      %v8283 = vrot.slane %v7746, 2
      %v8284 = vrot.slane %v7750, 2
      %v8285 = vsel %vm1058, %v8283, %v8284
      %v8286 = vrot.slane %v7756, 2
      %v8287 = vrot.slane %v7760, 2
      %v8288 = vsel %vm1058, %v8286, %v8287
      %v8289 = vrot.slane %v7766, 2
      %v8290 = vrot.slane %v7770, 2
      %v8291 = vsel %vm1058, %v8289, %v8290
      %v8292 = vrot.slane %v7776, 2
      %v8293 = vrot.slane %v7780, 2
      %v8294 = vsel %vm1058, %v8292, %v8293
      %v8295 = vrot.slane %v7786, 2
      %v8296 = vrot.slane %v7790, 2
      %v8297 = vsel %vm1058, %v8295, %v8296
      %v8298 = vrot.slane %v7796, 2
      %v8299 = vrot.slane %v7800, 2
      %v8300 = vsel %vm1058, %v8298, %v8299
      %v8301 = vrot.slane %v7806, 2
      %v8302 = vrot.slane %v7810, 2
      %v8303 = vsel %vm1058, %v8301, %v8302
      %v8304 = vrot.slane %v7816, 2
      %v8305 = vrot.slane %v7820, 2
      %v8306 = vsel %vm1058, %v8304, %v8305
      %v8307 = vrot.slane %v7826, 2
      %v8308 = vrot.slane %v7830, 2
      %v8309 = vsel %vm1058, %v8307, %v8308
      %v8310 = vrot.slane %v7836, 2
      %v8311 = vrot.slane %v7840, 2
      %v8312 = vsel %vm1058, %v8310, %v8311
      %v8313 = vrot.slane %v7846, 2
      %v8314 = vrot.slane %v7850, 2
      %v8315 = vsel %vm1058, %v8313, %v8314
      %v8316 = vrot.slane %v7856, 2
      %v8317 = vrot.slane %v7860, 2
      %v8318 = vsel %vm1058, %v8316, %v8317
      %v8319 = vrot.slane %v7866, 2
      %v8320 = vrot.slane %v7870, 2
      %v8321 = vsel %vm1058, %v8319, %v8320
      %v8386 = vadd.f32 %v8098, %v8228
      %v8387 = vadd.f32 %v8099, %v8227
      %v8388 = vadd.f32 %v8100, %v8231
      %v8389 = vadd.f32 %v8101, %v8230
      %v8390 = vadd.f32 %v8102, %v8234
      %v8391 = vadd.f32 %v8103, %v8233
      %v8392 = vadd.f32 %v8104, %v8237
      %v8393 = vadd.f32 %v8105, %v8236
      %v8394 = vadd.f32 %v8106, %v8240
      %v8395 = vadd.f32 %v8107, %v8239
      %v8396 = vadd.f32 %v8108, %v8243
      %v8397 = vadd.f32 %v8109, %v8242
      %v8398 = vadd.f32 %v8110, %v8246
      %v8399 = vadd.f32 %v8111, %v8245
      %v8400 = vadd.f32 %v8112, %v8249
      %v8401 = vadd.f32 %v8113, %v8248
      %v8402 = vadd.f32 %v8114, %v8252
      %v8403 = vadd.f32 %v8115, %v8251
      %v8404 = vadd.f32 %v8116, %v8255
      %v8405 = vadd.f32 %v8117, %v8254
      %v8406 = vadd.f32 %v8118, %v8258
      %v8407 = vadd.f32 %v8119, %v8257
      %v8408 = vadd.f32 %v8120, %v8261
      %v8409 = vadd.f32 %v8121, %v8260
      %v8410 = vadd.f32 %v8122, %v8264
      %v8411 = vadd.f32 %v8123, %v8263
      %v8412 = vadd.f32 %v8124, %v8267
      %v8413 = vadd.f32 %v8125, %v8266
      %v8414 = vadd.f32 %v8126, %v8270
      %v8415 = vadd.f32 %v8127, %v8269
      %v8416 = vadd.f32 %v8128, %v8273
      %v8417 = vadd.f32 %v8129, %v8272
      %v8418 = vadd.f32 %v8130, %v8276
      %v8419 = vadd.f32 %v8131, %v8275
      %v8420 = vadd.f32 %v8132, %v8279
      %v8421 = vadd.f32 %v8133, %v8278
      %v8422 = vadd.f32 %v8134, %v8282
      %v8423 = vadd.f32 %v8135, %v8281
      %v8424 = vadd.f32 %v8136, %v8285
      %v8425 = vadd.f32 %v8137, %v8284
      %v8426 = vadd.f32 %v8138, %v8288
      %v8427 = vadd.f32 %v8139, %v8287
      %v8428 = vadd.f32 %v8140, %v8291
      %v8429 = vadd.f32 %v8141, %v8290
      %v8430 = vadd.f32 %v8142, %v8294
      %v8431 = vadd.f32 %v8143, %v8293
      %v8432 = vadd.f32 %v8144, %v8297
      %v8433 = vadd.f32 %v8145, %v8296
      %v8434 = vadd.f32 %v8146, %v8300
      %v8435 = vadd.f32 %v8147, %v8299
      %v8436 = vadd.f32 %v8148, %v8303
      %v8437 = vadd.f32 %v8149, %v8302
      %v8438 = vadd.f32 %v8150, %v8306
      %v8439 = vadd.f32 %v8151, %v8305
      %v8440 = vadd.f32 %v8152, %v8309
      %v8441 = vadd.f32 %v8153, %v8308
      %v8442 = vadd.f32 %v8154, %v8312
      %v8443 = vadd.f32 %v8155, %v8311
      %v8444 = vadd.f32 %v8156, %v8315
      %v8445 = vadd.f32 %v8157, %v8314
      %v8446 = vadd.f32 %v8158, %v8318
      %v8447 = vadd.f32 %v8159, %v8317
      %v8448 = vadd.f32 %v8160, %v8321
      %v8449 = vadd.f32 %v8161, %v8320
      %v8514 = vrot.slane %v7205, 1
      %v8515 = vrot.slane %v7209, 1
      %v8516 = vsel %vm3224, %v8514, %v8515
      %v8517 = vrot.slane %v7215, 1
      %v8518 = vrot.slane %v7219, 1
      %v8519 = vsel %vm3224, %v8517, %v8518
      %v8520 = vrot.slane %v7225, 1
      %v8521 = vrot.slane %v7229, 1
      %v8522 = vsel %vm3224, %v8520, %v8521
      %v8523 = vrot.slane %v7235, 1
      %v8524 = vrot.slane %v7239, 1
      %v8525 = vsel %vm3224, %v8523, %v8524
      %v8526 = vrot.slane %v7245, 1
      %v8527 = vrot.slane %v7249, 1
      %v8528 = vsel %vm3224, %v8526, %v8527
      %v8529 = vrot.slane %v7255, 1
      %v8530 = vrot.slane %v7259, 1
      %v8531 = vsel %vm3224, %v8529, %v8530
      %v8532 = vrot.slane %v7265, 1
      %v8533 = vrot.slane %v7269, 1
      %v8534 = vsel %vm3224, %v8532, %v8533
      %v8535 = vrot.slane %v7275, 1
      %v8536 = vrot.slane %v7279, 1
      %v8537 = vsel %vm3224, %v8535, %v8536
      %v8538 = vrot.slane %v7285, 1
      %v8539 = vrot.slane %v7289, 1
      %v8540 = vsel %vm3224, %v8538, %v8539
      %v8541 = vrot.slane %v7295, 1
      %v8542 = vrot.slane %v7299, 1
      %v8543 = vsel %vm3224, %v8541, %v8542
      %v8544 = vrot.slane %v7305, 1
      %v8545 = vrot.slane %v7309, 1
      %v8546 = vsel %vm3224, %v8544, %v8545
      %v8547 = vrot.slane %v7315, 1
      %v8548 = vrot.slane %v7319, 1
      %v8549 = vsel %vm3224, %v8547, %v8548
      %v8550 = vrot.slane %v7325, 1
      %v8551 = vrot.slane %v7329, 1
      %v8552 = vsel %vm3224, %v8550, %v8551
      %v8553 = vrot.slane %v7335, 1
      %v8554 = vrot.slane %v7339, 1
      %v8555 = vsel %vm3224, %v8553, %v8554
      %v8556 = vrot.slane %v7345, 1
      %v8557 = vrot.slane %v7349, 1
      %v8558 = vsel %vm3224, %v8556, %v8557
      %v8559 = vrot.slane %v7355, 1
      %v8560 = vrot.slane %v7359, 1
      %v8561 = vsel %vm3224, %v8559, %v8560
      %v8562 = vrot.slane %v7365, 1
      %v8563 = vrot.slane %v7369, 1
      %v8564 = vsel %vm3224, %v8562, %v8563
      %v8565 = vrot.slane %v7375, 1
      %v8566 = vrot.slane %v7379, 1
      %v8567 = vsel %vm3224, %v8565, %v8566
      %v8568 = vrot.slane %v7385, 1
      %v8569 = vrot.slane %v7389, 1
      %v8570 = vsel %vm3224, %v8568, %v8569
      %v8571 = vrot.slane %v7395, 1
      %v8572 = vrot.slane %v7399, 1
      %v8573 = vsel %vm3224, %v8571, %v8572
      %v8574 = vrot.slane %v7405, 1
      %v8575 = vrot.slane %v7409, 1
      %v8576 = vsel %vm3224, %v8574, %v8575
      %v8577 = vrot.slane %v7415, 1
      %v8578 = vrot.slane %v7419, 1
      %v8579 = vsel %vm3224, %v8577, %v8578
      %v8580 = vrot.slane %v7425, 1
      %v8581 = vrot.slane %v7429, 1
      %v8582 = vsel %vm3224, %v8580, %v8581
      %v8583 = vrot.slane %v7435, 1
      %v8584 = vrot.slane %v7439, 1
      %v8585 = vsel %vm3224, %v8583, %v8584
      %v8586 = vrot.slane %v7445, 1
      %v8587 = vrot.slane %v7449, 1
      %v8588 = vsel %vm3224, %v8586, %v8587
      %v8589 = vrot.slane %v7455, 1
      %v8590 = vrot.slane %v7459, 1
      %v8591 = vsel %vm3224, %v8589, %v8590
      %v8592 = vrot.slane %v7465, 1
      %v8593 = vrot.slane %v7469, 1
      %v8594 = vsel %vm3224, %v8592, %v8593
      %v8595 = vrot.slane %v7475, 1
      %v8596 = vrot.slane %v7479, 1
      %v8597 = vsel %vm3224, %v8595, %v8596
      %v8598 = vrot.slane %v7485, 1
      %v8599 = vrot.slane %v7489, 1
      %v8600 = vsel %vm3224, %v8598, %v8599
      %v8601 = vrot.slane %v7495, 1
      %v8602 = vrot.slane %v7499, 1
      %v8603 = vsel %vm3224, %v8601, %v8602
      %v8604 = vrot.slane %v7505, 1
      %v8605 = vrot.slane %v7509, 1
      %v8606 = vsel %vm3224, %v8604, %v8605
      %v8607 = vrot.slane %v7515, 1
      %v8608 = vrot.slane %v7519, 1
      %v8609 = vsel %vm3224, %v8607, %v8608
      %v8674 = vadd.f32 %v6852, %v8516
      %v8675 = vadd.f32 %v6856, %v8515
      %v8676 = vadd.f32 %v6862, %v8519
      %v8677 = vadd.f32 %v6866, %v8518
      %v8678 = vadd.f32 %v6872, %v8522
      %v8679 = vadd.f32 %v6876, %v8521
      %v8680 = vadd.f32 %v6882, %v8525
      %v8681 = vadd.f32 %v6886, %v8524
      %v8682 = vadd.f32 %v6892, %v8528
      %v8683 = vadd.f32 %v6896, %v8527
      %v8684 = vadd.f32 %v6902, %v8531
      %v8685 = vadd.f32 %v6906, %v8530
      %v8686 = vadd.f32 %v6912, %v8534
      %v8687 = vadd.f32 %v6916, %v8533
      %v8688 = vadd.f32 %v6922, %v8537
      %v8689 = vadd.f32 %v6926, %v8536
      %v8690 = vadd.f32 %v6932, %v8540
      %v8691 = vadd.f32 %v6936, %v8539
      %v8692 = vadd.f32 %v6942, %v8543
      %v8693 = vadd.f32 %v6946, %v8542
      %v8694 = vadd.f32 %v6952, %v8546
      %v8695 = vadd.f32 %v6956, %v8545
      %v8696 = vadd.f32 %v6962, %v8549
      %v8697 = vadd.f32 %v6966, %v8548
      %v8698 = vadd.f32 %v6972, %v8552
      %v8699 = vadd.f32 %v6976, %v8551
      %v8700 = vadd.f32 %v6982, %v8555
      %v8701 = vadd.f32 %v6986, %v8554
      %v8702 = vadd.f32 %v6992, %v8558
      %v8703 = vadd.f32 %v6996, %v8557
      %v8704 = vadd.f32 %v7002, %v8561
      %v8705 = vadd.f32 %v7006, %v8560
      %v8706 = vadd.f32 %v7012, %v8564
      %v8707 = vadd.f32 %v7016, %v8563
      %v8708 = vadd.f32 %v7022, %v8567
      %v8709 = vadd.f32 %v7026, %v8566
      %v8710 = vadd.f32 %v7032, %v8570
      %v8711 = vadd.f32 %v7036, %v8569
      %v8712 = vadd.f32 %v7042, %v8573
      %v8713 = vadd.f32 %v7046, %v8572
      %v8714 = vadd.f32 %v7052, %v8576
      %v8715 = vadd.f32 %v7056, %v8575
      %v8716 = vadd.f32 %v7062, %v8579
      %v8717 = vadd.f32 %v7066, %v8578
      %v8718 = vadd.f32 %v7072, %v8582
      %v8719 = vadd.f32 %v7076, %v8581
      %v8720 = vadd.f32 %v7082, %v8585
      %v8721 = vadd.f32 %v7086, %v8584
      %v8722 = vadd.f32 %v7092, %v8588
      %v8723 = vadd.f32 %v7096, %v8587
      %v8724 = vadd.f32 %v7102, %v8591
      %v8725 = vadd.f32 %v7106, %v8590
      %v8726 = vadd.f32 %v7112, %v8594
      %v8727 = vadd.f32 %v7116, %v8593
      %v8728 = vadd.f32 %v7122, %v8597
      %v8729 = vadd.f32 %v7126, %v8596
      %v8730 = vadd.f32 %v7132, %v8600
      %v8731 = vadd.f32 %v7136, %v8599
      %v8732 = vadd.f32 %v7142, %v8603
      %v8733 = vadd.f32 %v7146, %v8602
      %v8734 = vadd.f32 %v7152, %v8606
      %v8735 = vadd.f32 %v7156, %v8605
      %v8736 = vadd.f32 %v7162, %v8609
      %v8737 = vadd.f32 %v7166, %v8608
      %v8802 = vrot.slane %v7558, 2
      %v8803 = vrot.slane %v7562, 2
      %v8804 = vsel %vm1058, %v8802, %v8803
      %v8805 = vrot.slane %v7568, 2
      %v8806 = vrot.slane %v7572, 2
      %v8807 = vsel %vm1058, %v8805, %v8806
      %v8808 = vrot.slane %v7578, 2
      %v8809 = vrot.slane %v7582, 2
      %v8810 = vsel %vm1058, %v8808, %v8809
      %v8811 = vrot.slane %v7588, 2
      %v8812 = vrot.slane %v7592, 2
      %v8813 = vsel %vm1058, %v8811, %v8812
      %v8814 = vrot.slane %v7598, 2
      %v8815 = vrot.slane %v7602, 2
      %v8816 = vsel %vm1058, %v8814, %v8815
      %v8817 = vrot.slane %v7608, 2
      %v8818 = vrot.slane %v7612, 2
      %v8819 = vsel %vm1058, %v8817, %v8818
      %v8820 = vrot.slane %v7618, 2
      %v8821 = vrot.slane %v7622, 2
      %v8822 = vsel %vm1058, %v8820, %v8821
      %v8823 = vrot.slane %v7628, 2
      %v8824 = vrot.slane %v7632, 2
      %v8825 = vsel %vm1058, %v8823, %v8824
      %v8826 = vrot.slane %v7638, 2
      %v8827 = vrot.slane %v7642, 2
      %v8828 = vsel %vm1058, %v8826, %v8827
      %v8829 = vrot.slane %v7648, 2
      %v8830 = vrot.slane %v7652, 2
      %v8831 = vsel %vm1058, %v8829, %v8830
      %v8832 = vrot.slane %v7658, 2
      %v8833 = vrot.slane %v7662, 2
      %v8834 = vsel %vm1058, %v8832, %v8833
      %v8835 = vrot.slane %v7668, 2
      %v8836 = vrot.slane %v7672, 2
      %v8837 = vsel %vm1058, %v8835, %v8836
      %v8838 = vrot.slane %v7678, 2
      %v8839 = vrot.slane %v7682, 2
      %v8840 = vsel %vm1058, %v8838, %v8839
      %v8841 = vrot.slane %v7688, 2
      %v8842 = vrot.slane %v7692, 2
      %v8843 = vsel %vm1058, %v8841, %v8842
      %v8844 = vrot.slane %v7698, 2
      %v8845 = vrot.slane %v7702, 2
      %v8846 = vsel %vm1058, %v8844, %v8845
      %v8847 = vrot.slane %v7708, 2
      %v8848 = vrot.slane %v7712, 2
      %v8849 = vsel %vm1058, %v8847, %v8848
      %v8850 = vrot.slane %v7718, 2
      %v8851 = vrot.slane %v7722, 2
      %v8852 = vsel %vm1058, %v8850, %v8851
      %v8853 = vrot.slane %v7728, 2
      %v8854 = vrot.slane %v7732, 2
      %v8855 = vsel %vm1058, %v8853, %v8854
      %v8856 = vrot.slane %v7738, 2
      %v8857 = vrot.slane %v7742, 2
      %v8858 = vsel %vm1058, %v8856, %v8857
      %v8859 = vrot.slane %v7748, 2
      %v8860 = vrot.slane %v7752, 2
      %v8861 = vsel %vm1058, %v8859, %v8860
      %v8862 = vrot.slane %v7758, 2
      %v8863 = vrot.slane %v7762, 2
      %v8864 = vsel %vm1058, %v8862, %v8863
      %v8865 = vrot.slane %v7768, 2
      %v8866 = vrot.slane %v7772, 2
      %v8867 = vsel %vm1058, %v8865, %v8866
      %v8868 = vrot.slane %v7778, 2
      %v8869 = vrot.slane %v7782, 2
      %v8870 = vsel %vm1058, %v8868, %v8869
      %v8871 = vrot.slane %v7788, 2
      %v8872 = vrot.slane %v7792, 2
      %v8873 = vsel %vm1058, %v8871, %v8872
      %v8874 = vrot.slane %v7798, 2
      %v8875 = vrot.slane %v7802, 2
      %v8876 = vsel %vm1058, %v8874, %v8875
      %v8877 = vrot.slane %v7808, 2
      %v8878 = vrot.slane %v7812, 2
      %v8879 = vsel %vm1058, %v8877, %v8878
      %v8880 = vrot.slane %v7818, 2
      %v8881 = vrot.slane %v7822, 2
      %v8882 = vsel %vm1058, %v8880, %v8881
      %v8883 = vrot.slane %v7828, 2
      %v8884 = vrot.slane %v7832, 2
      %v8885 = vsel %vm1058, %v8883, %v8884
      %v8886 = vrot.slane %v7838, 2
      %v8887 = vrot.slane %v7842, 2
      %v8888 = vsel %vm1058, %v8886, %v8887
      %v8889 = vrot.slane %v7848, 2
      %v8890 = vrot.slane %v7852, 2
      %v8891 = vsel %vm1058, %v8889, %v8890
      %v8892 = vrot.slane %v7858, 2
      %v8893 = vrot.slane %v7862, 2
      %v8894 = vsel %vm1058, %v8892, %v8893
      %v8895 = vrot.slane %v7868, 2
      %v8896 = vrot.slane %v7872, 2
      %v8897 = vsel %vm1058, %v8895, %v8896
      %v8962 = vadd.f32 %v8674, %v8804
      %v8963 = vadd.f32 %v8675, %v8803
      %v8964 = vadd.f32 %v8676, %v8807
      %v8965 = vadd.f32 %v8677, %v8806
      %v8966 = vadd.f32 %v8678, %v8810
      %v8967 = vadd.f32 %v8679, %v8809
      %v8968 = vadd.f32 %v8680, %v8813
      %v8969 = vadd.f32 %v8681, %v8812
      %v8970 = vadd.f32 %v8682, %v8816
      %v8971 = vadd.f32 %v8683, %v8815
      %v8972 = vadd.f32 %v8684, %v8819
      %v8973 = vadd.f32 %v8685, %v8818
      %v8974 = vadd.f32 %v8686, %v8822
      %v8975 = vadd.f32 %v8687, %v8821
      %v8976 = vadd.f32 %v8688, %v8825
      %v8977 = vadd.f32 %v8689, %v8824
      %v8978 = vadd.f32 %v8690, %v8828
      %v8979 = vadd.f32 %v8691, %v8827
      %v8980 = vadd.f32 %v8692, %v8831
      %v8981 = vadd.f32 %v8693, %v8830
      %v8982 = vadd.f32 %v8694, %v8834
      %v8983 = vadd.f32 %v8695, %v8833
      %v8984 = vadd.f32 %v8696, %v8837
      %v8985 = vadd.f32 %v8697, %v8836
      %v8986 = vadd.f32 %v8698, %v8840
      %v8987 = vadd.f32 %v8699, %v8839
      %v8988 = vadd.f32 %v8700, %v8843
      %v8989 = vadd.f32 %v8701, %v8842
      %v8990 = vadd.f32 %v8702, %v8846
      %v8991 = vadd.f32 %v8703, %v8845
      %v8992 = vadd.f32 %v8704, %v8849
      %v8993 = vadd.f32 %v8705, %v8848
      %v8994 = vadd.f32 %v8706, %v8852
      %v8995 = vadd.f32 %v8707, %v8851
      %v8996 = vadd.f32 %v8708, %v8855
      %v8997 = vadd.f32 %v8709, %v8854
      %v8998 = vadd.f32 %v8710, %v8858
      %v8999 = vadd.f32 %v8711, %v8857
      %v9000 = vadd.f32 %v8712, %v8861
      %v9001 = vadd.f32 %v8713, %v8860
      %v9002 = vadd.f32 %v8714, %v8864
      %v9003 = vadd.f32 %v8715, %v8863
      %v9004 = vadd.f32 %v8716, %v8867
      %v9005 = vadd.f32 %v8717, %v8866
      %v9006 = vadd.f32 %v8718, %v8870
      %v9007 = vadd.f32 %v8719, %v8869
      %v9008 = vadd.f32 %v8720, %v8873
      %v9009 = vadd.f32 %v8721, %v8872
      %v9010 = vadd.f32 %v8722, %v8876
      %v9011 = vadd.f32 %v8723, %v8875
      %v9012 = vadd.f32 %v8724, %v8879
      %v9013 = vadd.f32 %v8725, %v8878
      %v9014 = vadd.f32 %v8726, %v8882
      %v9015 = vadd.f32 %v8727, %v8881
      %v9016 = vadd.f32 %v8728, %v8885
      %v9017 = vadd.f32 %v8729, %v8884
      %v9018 = vadd.f32 %v8730, %v8888
      %v9019 = vadd.f32 %v8731, %v8887
      %v9020 = vadd.f32 %v8732, %v8891
      %v9021 = vadd.f32 %v8733, %v8890
      %v9022 = vadd.f32 %v8734, %v8894
      %v9023 = vadd.f32 %v8735, %v8893
      %v9024 = vadd.f32 %v8736, %v8897
      %v9025 = vadd.f32 %v8737, %v8896
      %v9026 = vmax.f32 %v8386, %v8962
      %v9027 = vmax.f32 %v8387, %v8963
      %v9028 = vmax.f32 %v8388, %v8964
      %v9029 = vmax.f32 %v8389, %v8965
      %v9030 = vmax.f32 %v8390, %v8966
      %v9031 = vmax.f32 %v8391, %v8967
      %v9032 = vmax.f32 %v8392, %v8968
      %v9033 = vmax.f32 %v8393, %v8969
      %v9034 = vmax.f32 %v8394, %v8970
      %v9035 = vmax.f32 %v8395, %v8971
      %v9036 = vmax.f32 %v8396, %v8972
      %v9037 = vmax.f32 %v8397, %v8973
      %v9038 = vmax.f32 %v8398, %v8974
      %v9039 = vmax.f32 %v8399, %v8975
      %v9040 = vmax.f32 %v8400, %v8976
      %v9041 = vmax.f32 %v8401, %v8977
      %v9042 = vmax.f32 %v8402, %v8978
      %v9043 = vmax.f32 %v8403, %v8979
      %v9044 = vmax.f32 %v8404, %v8980
      %v9045 = vmax.f32 %v8405, %v8981
      %v9046 = vmax.f32 %v8406, %v8982
      %v9047 = vmax.f32 %v8407, %v8983
      %v9048 = vmax.f32 %v8408, %v8984
      %v9049 = vmax.f32 %v8409, %v8985
      %v9050 = vmax.f32 %v8410, %v8986
      %v9051 = vmax.f32 %v8411, %v8987
      %v9052 = vmax.f32 %v8412, %v8988
      %v9053 = vmax.f32 %v8413, %v8989
      %v9054 = vmax.f32 %v8414, %v8990
      %v9055 = vmax.f32 %v8415, %v8991
      %v9056 = vmax.f32 %v8416, %v8992
      %v9057 = vmax.f32 %v8417, %v8993
      %v9058 = vmax.f32 %v8418, %v8994
      %v9059 = vmax.f32 %v8419, %v8995
      %v9060 = vmax.f32 %v8420, %v8996
      %v9061 = vmax.f32 %v8421, %v8997
      %v9062 = vmax.f32 %v8422, %v8998
      %v9063 = vmax.f32 %v8423, %v8999
      %v9064 = vmax.f32 %v8424, %v9000
      %v9065 = vmax.f32 %v8425, %v9001
      %v9066 = vmax.f32 %v8426, %v9002
      %v9067 = vmax.f32 %v8427, %v9003
      %v9068 = vmax.f32 %v8428, %v9004
      %v9069 = vmax.f32 %v8429, %v9005
      %v9070 = vmax.f32 %v8430, %v9006
      %v9071 = vmax.f32 %v8431, %v9007
      %v9072 = vmax.f32 %v8432, %v9008
      %v9073 = vmax.f32 %v8433, %v9009
      %v9074 = vmax.f32 %v8434, %v9010
      %v9075 = vmax.f32 %v8435, %v9011
      %v9076 = vmax.f32 %v8436, %v9012
      %v9077 = vmax.f32 %v8437, %v9013
      %v9078 = vmax.f32 %v8438, %v9014
      %v9079 = vmax.f32 %v8439, %v9015
      %v9080 = vmax.f32 %v8440, %v9016
      %v9081 = vmax.f32 %v8441, %v9017
      %v9082 = vmax.f32 %v8442, %v9018
      %v9083 = vmax.f32 %v8443, %v9019
      %v9084 = vmax.f32 %v8444, %v9020
      %v9085 = vmax.f32 %v8445, %v9021
      %v9086 = vmax.f32 %v8446, %v9022
      %v9087 = vmax.f32 %v8447, %v9023
      %v9088 = vmax.f32 %v8448, %v9024
      %v9089 = vmax.f32 %v8449, %v9025
      %9090 = vst.msk [vmem:[#allocation5] sm:$0xff] %vm5657, %v9026
      %9091 = vst.msk [vmem:[#allocation5 + $0x8] sm:$0x3f] %vm6307, %v9027
      %9092 = vst.msk [vmem:[#allocation5 + $0x10] sm:$0xff] %vm5657, %v9028
      %9093 = vst.msk [vmem:[#allocation5 + $0x18] sm:$0x3f] %vm6307, %v9029
      %9094 = vst.msk [vmem:[#allocation5 + $0x20] sm:$0xff] %vm5657, %v9030
      %9095 = vst.msk [vmem:[#allocation5 + $0x28] sm:$0x3f] %vm6307, %v9031
      %9096 = vst.msk [vmem:[#allocation5 + $0x30] sm:$0xff] %vm5657, %v9032
      %9097 = vst.msk [vmem:[#allocation5 + $0x38] sm:$0x3f] %vm6307, %v9033
      %9098 = vst.msk [vmem:[#allocation5 + $0x40] sm:$0xff] %vm5657, %v9034
      %9099 = vst.msk [vmem:[#allocation5 + $0x48] sm:$0x3f] %vm6307, %v9035
      %9100 = vst.msk [vmem:[#allocation5 + $0x50] sm:$0xff] %vm5657, %v9036
      %9101 = vst.msk [vmem:[#allocation5 + $0x58] sm:$0x3f] %vm6307, %v9037
      %9102 = vst.msk [vmem:[#allocation5 + $0x60] sm:$0xff] %vm5657, %v9038
      %9103 = vst.msk [vmem:[#allocation5 + $0x68] sm:$0x3f] %vm6307, %v9039
      %9104 = vst.msk [vmem:[#allocation5 + $0x70] sm:$0xff] %vm5657, %v9040
      %9105 = vst.msk [vmem:[#allocation5 + $0x78] sm:$0x3f] %vm6307, %v9041
      %9106 = vst.msk [vmem:[#allocation5 + $0x80] sm:$0xff] %vm5657, %v9042
      %9107 = vst.msk [vmem:[#allocation5 + $0x88] sm:$0x3f] %vm6307, %v9043
      %9108 = vst.msk [vmem:[#allocation5 + $0x90] sm:$0xff] %vm5657, %v9044
      %9109 = vst.msk [vmem:[#allocation5 + $0x98] sm:$0x3f] %vm6307, %v9045
      %9110 = vst.msk [vmem:[#allocation5 + $0xa0] sm:$0xff] %vm5657, %v9046
      %9111 = vst.msk [vmem:[#allocation5 + $0xa8] sm:$0x3f] %vm6307, %v9047
      %9112 = vst.msk [vmem:[#allocation5 + $0xb0] sm:$0xff] %vm5657, %v9048
      %9113 = vst.msk [vmem:[#allocation5 + $0xb8] sm:$0x3f] %vm6307, %v9049
      %9114 = vst.msk [vmem:[#allocation5 + $0xc0] sm:$0xff] %vm5657, %v9050
      %9115 = vst.msk [vmem:[#allocation5 + $0xc8] sm:$0x3f] %vm6307, %v9051
      %9116 = vst.msk [vmem:[#allocation5 + $0xd0] sm:$0xff] %vm5657, %v9052
      %9117 = vst.msk [vmem:[#allocation5 + $0xd8] sm:$0x3f] %vm6307, %v9053
      %9118 = vst.msk [vmem:[#allocation5 + $0xe0] sm:$0xff] %vm5657, %v9054
      %9119 = vst.msk [vmem:[#allocation5 + $0xe8] sm:$0x3f] %vm6307, %v9055
      %9120 = vst.msk [vmem:[#allocation5 + $0xf0] sm:$0xff] %vm5657, %v9056
      %9121 = vst.msk [vmem:[#allocation5 + $0xf8] sm:$0x3f] %vm6307, %v9057
      %9122 = vst.msk [vmem:[#allocation5 + $0x100] sm:$0xff] %vm5657, %v9058
      %9123 = vst.msk [vmem:[#allocation5 + $0x108] sm:$0x3f] %vm6307, %v9059
      %9124 = vst.msk [vmem:[#allocation5 + $0x110] sm:$0xff] %vm5657, %v9060
      %9125 = vst.msk [vmem:[#allocation5 + $0x118] sm:$0x3f] %vm6307, %v9061
      %9126 = vst.msk [vmem:[#allocation5 + $0x120] sm:$0xff] %vm5657, %v9062
      %9127 = vst.msk [vmem:[#allocation5 + $0x128] sm:$0x3f] %vm6307, %v9063
      %9128 = vst.msk [vmem:[#allocation5 + $0x130] sm:$0xff] %vm5657, %v9064
      %9129 = vst.msk [vmem:[#allocation5 + $0x138] sm:$0x3f] %vm6307, %v9065
      %9130 = vst.msk [vmem:[#allocation5 + $0x140] sm:$0xff] %vm5657, %v9066
      %9131 = vst.msk [vmem:[#allocation5 + $0x148] sm:$0x3f] %vm6307, %v9067
      %9132 = vst.msk [vmem:[#allocation5 + $0x150] sm:$0xff] %vm5657, %v9068
      %9133 = vst.msk [vmem:[#allocation5 + $0x158] sm:$0x3f] %vm6307, %v9069
      %9134 = vst.msk [vmem:[#allocation5 + $0x160] sm:$0xff] %vm5657, %v9070
      %9135 = vst.msk [vmem:[#allocation5 + $0x168] sm:$0x3f] %vm6307, %v9071
      %9136 = vst.msk [vmem:[#allocation5 + $0x170] sm:$0xff] %vm5657, %v9072
      %9137 = vst.msk [vmem:[#allocation5 + $0x178] sm:$0x3f] %vm6307, %v9073
      %9138 = vst.msk [vmem:[#allocation5 + $0x180] sm:$0xff] %vm5657, %v9074
      %9139 = vst.msk [vmem:[#allocation5 + $0x188] sm:$0x3f] %vm6307, %v9075
      %9140 = vst.msk [vmem:[#allocation5 + $0x190] sm:$0xff] %vm5657, %v9076
      %9141 = vst.msk [vmem:[#allocation5 + $0x198] sm:$0x3f] %vm6307, %v9077
      %9142 = vst.msk [vmem:[#allocation5 + $0x1a0] sm:$0xff] %vm5657, %v9078
      %9143 = vst.msk [vmem:[#allocation5 + $0x1a8] sm:$0x3f] %vm6307, %v9079
      %9144 = vst.msk [vmem:[#allocation5 + $0x1b0] sm:$0xff] %vm5657, %v9080
      %9145 = vst.msk [vmem:[#allocation5 + $0x1b8] sm:$0x3f] %vm6307, %v9081
      %9146 = vst.msk [vmem:[#allocation5 + $0x1c0] sm:$0xff] %vm5657, %v9082
      %9147 = vst.msk [vmem:[#allocation5 + $0x1c8] sm:$0x3f] %vm6307, %v9083
      %9148 = vst.msk [vmem:[#allocation5 + $0x1d0] sm:$0xff] %vm5657, %v9084
      %9149 = vst.msk [vmem:[#allocation5 + $0x1d8] sm:$0x3f] %vm6307, %v9085
      %9150 = vst.msk [vmem:[#allocation5 + $0x1e0] sm:$0xff] %vm5657, %v9086
      %9151 = vst.msk [vmem:[#allocation5 + $0x1e8] sm:$0x3f] %vm6307, %v9087
      %9152 = vst.msk [vmem:[#allocation5 + $0x1f0] sm:$0xff] %vm5657, %v9088
      %9153 = vst.msk [vmem:[#allocation5 + $0x1f8] sm:$0x3f] %vm6307, %v9089
      %v9154 = vld [vmem:[#allocation5] ss:$2 sm:$0x7f]
      %s9155 = scalar_lea.vmem [#allocation5], 16
      %v9156 = vld [vmem:[%s9155] ss:$2 sm:$0x7f]
      %s9157 = scalar_lea.vmem [#allocation5], 32
      %v9158 = vld [vmem:[%s9157] ss:$2 sm:$0x7f]
      %s9159 = scalar_lea.vmem [#allocation5], 48
      %v9160 = vld [vmem:[%s9159] ss:$2 sm:$0x7f]
      %s9161 = scalar_lea.vmem [#allocation5], 64
      %v9162 = vld [vmem:[%s9161] ss:$2 sm:$0x7f]
      %s9163 = scalar_lea.vmem [#allocation5], 80
      %v9164 = vld [vmem:[%s9163] ss:$2 sm:$0x7f]
      %s9165 = scalar_lea.vmem [#allocation5], 96
      %v9166 = vld [vmem:[%s9165] ss:$2 sm:$0x7f]
      %s9167 = scalar_lea.vmem [#allocation5], 112
      %v9168 = vld [vmem:[%s9167] ss:$2 sm:$0x7f]
      %s9169 = scalar_lea.vmem [#allocation5], 128
      %v9170 = vld [vmem:[%s9169] ss:$2 sm:$0x7f]
      %s9171 = scalar_lea.vmem [#allocation5], 144
      %v9172 = vld [vmem:[%s9171] ss:$2 sm:$0x7f]
      %s9173 = scalar_lea.vmem [#allocation5], 160
      %v9174 = vld [vmem:[%s9173] ss:$2 sm:$0x7f]
      %s9175 = scalar_lea.vmem [#allocation5], 176
      %v9176 = vld [vmem:[%s9175] ss:$2 sm:$0x7f]
      %s9177 = scalar_lea.vmem [#allocation5], 192
      %v9178 = vld [vmem:[%s9177] ss:$2 sm:$0x7f]
      %s9179 = scalar_lea.vmem [#allocation5], 208
      %v9180 = vld [vmem:[%s9179] ss:$2 sm:$0x7f]
      %s9181 = scalar_lea.vmem [#allocation5], 224
      %v9182 = vld [vmem:[%s9181] ss:$2 sm:$0x7f]
      %s9183 = scalar_lea.vmem [#allocation5], 240
      %v9184 = vld [vmem:[%s9183] ss:$2 sm:$0x7f]
      %s9185 = scalar_lea.vmem [#allocation5], 256
      %v9186 = vld [vmem:[%s9185] ss:$2 sm:$0x7f]
      %s9187 = scalar_lea.vmem [#allocation5], 272
      %v9188 = vld [vmem:[%s9187] ss:$2 sm:$0x7f]
      %s9189 = scalar_lea.vmem [#allocation5], 288
      %v9190 = vld [vmem:[%s9189] ss:$2 sm:$0x7f]
      %s9191 = scalar_lea.vmem [#allocation5], 304
      %v9192 = vld [vmem:[%s9191] ss:$2 sm:$0x7f]
      %s9193 = scalar_lea.vmem [#allocation5], 320
      %v9194 = vld [vmem:[%s9193] ss:$2 sm:$0x7f]
      %s9195 = scalar_lea.vmem [#allocation5], 336
      %v9196 = vld [vmem:[%s9195] ss:$2 sm:$0x7f]
      %s9197 = scalar_lea.vmem [#allocation5], 352
      %v9198 = vld [vmem:[%s9197] ss:$2 sm:$0x7f]
      %s9199 = scalar_lea.vmem [#allocation5], 368
      %v9200 = vld [vmem:[%s9199] ss:$2 sm:$0x7f]
      %s9201 = scalar_lea.vmem [#allocation5], 384
      %v9202 = vld [vmem:[%s9201] ss:$2 sm:$0x7f]
      %s9203 = scalar_lea.vmem [#allocation5], 400
      %v9204 = vld [vmem:[%s9203] ss:$2 sm:$0x7f]
      %s9205 = scalar_lea.vmem [#allocation5], 416
      %v9206 = vld [vmem:[%s9205] ss:$2 sm:$0x7f]
      %s9207 = scalar_lea.vmem [#allocation5], 432
      %v9208 = vld [vmem:[%s9207] ss:$2 sm:$0x7f]
      %s9209 = scalar_lea.vmem [#allocation5], 448
      %v9210 = vld [vmem:[%s9209] ss:$2 sm:$0x7f]
      %s9211 = scalar_lea.vmem [#allocation5], 464
      %v9212 = vld [vmem:[%s9211] ss:$2 sm:$0x7f]
      %s9213 = scalar_lea.vmem [#allocation5], 480
      %v9214 = vld [vmem:[%s9213] ss:$2 sm:$0x7f]
      %s9215 = scalar_lea.vmem [#allocation5], 496
      %v9216 = vld [vmem:[%s9215] ss:$2 sm:$0x7f]
      %s9217 = scalar_lea.vmem [#allocation5], 1
      %v9218 = vld [vmem:[%s9217] ss:$2 sm:$0x7f]
      %s9219 = scalar_lea.vmem [#allocation5], 17
      %v9220 = vld [vmem:[%s9219] ss:$2 sm:$0x7f]
      %s9221 = scalar_lea.vmem [#allocation5], 33
      %v9222 = vld [vmem:[%s9221] ss:$2 sm:$0x7f]
      %s9223 = scalar_lea.vmem [#allocation5], 49
      %v9224 = vld [vmem:[%s9223] ss:$2 sm:$0x7f]
      %s9225 = scalar_lea.vmem [#allocation5], 65
      %v9226 = vld [vmem:[%s9225] ss:$2 sm:$0x7f]
      %s9227 = scalar_lea.vmem [#allocation5], 81
      %v9228 = vld [vmem:[%s9227] ss:$2 sm:$0x7f]
      %s9229 = scalar_lea.vmem [#allocation5], 97
      %v9230 = vld [vmem:[%s9229] ss:$2 sm:$0x7f]
      %s9231 = scalar_lea.vmem [#allocation5], 113
      %v9232 = vld [vmem:[%s9231] ss:$2 sm:$0x7f]
      %s9233 = scalar_lea.vmem [#allocation5], 129
      %v9234 = vld [vmem:[%s9233] ss:$2 sm:$0x7f]
      %s9235 = scalar_lea.vmem [#allocation5], 145
      %v9236 = vld [vmem:[%s9235] ss:$2 sm:$0x7f]
      %s9237 = scalar_lea.vmem [#allocation5], 161
      %v9238 = vld [vmem:[%s9237] ss:$2 sm:$0x7f]
      %s9239 = scalar_lea.vmem [#allocation5], 177
      %v9240 = vld [vmem:[%s9239] ss:$2 sm:$0x7f]
      %s9241 = scalar_lea.vmem [#allocation5], 193
      %v9242 = vld [vmem:[%s9241] ss:$2 sm:$0x7f]
      %s9243 = scalar_lea.vmem [#allocation5], 209
      %v9244 = vld [vmem:[%s9243] ss:$2 sm:$0x7f]
      %s9245 = scalar_lea.vmem [#allocation5], 225
      %v9246 = vld [vmem:[%s9245] ss:$2 sm:$0x7f]
      %s9247 = scalar_lea.vmem [#allocation5], 241
      %v9248 = vld [vmem:[%s9247] ss:$2 sm:$0x7f]
      %s9249 = scalar_lea.vmem [#allocation5], 257
      %v9250 = vld [vmem:[%s9249] ss:$2 sm:$0x7f]
      %s9251 = scalar_lea.vmem [#allocation5], 273
      %v9252 = vld [vmem:[%s9251] ss:$2 sm:$0x7f]
      %s9253 = scalar_lea.vmem [#allocation5], 289
      %v9254 = vld [vmem:[%s9253] ss:$2 sm:$0x7f]
      %s9255 = scalar_lea.vmem [#allocation5], 305
      %v9256 = vld [vmem:[%s9255] ss:$2 sm:$0x7f]
      %s9257 = scalar_lea.vmem [#allocation5], 321
      %v9258 = vld [vmem:[%s9257] ss:$2 sm:$0x7f]
      %s9259 = scalar_lea.vmem [#allocation5], 337
      %v9260 = vld [vmem:[%s9259] ss:$2 sm:$0x7f]
      %s9261 = scalar_lea.vmem [#allocation5], 353
      %v9262 = vld [vmem:[%s9261] ss:$2 sm:$0x7f]
      %s9263 = scalar_lea.vmem [#allocation5], 369
      %v9264 = vld [vmem:[%s9263] ss:$2 sm:$0x7f]
      %s9265 = scalar_lea.vmem [#allocation5], 385
      %v9266 = vld [vmem:[%s9265] ss:$2 sm:$0x7f]
      %s9267 = scalar_lea.vmem [#allocation5], 401
      %v9268 = vld [vmem:[%s9267] ss:$2 sm:$0x7f]
      %s9269 = scalar_lea.vmem [#allocation5], 417
      %v9270 = vld [vmem:[%s9269] ss:$2 sm:$0x7f]
      %s9271 = scalar_lea.vmem [#allocation5], 433
      %v9272 = vld [vmem:[%s9271] ss:$2 sm:$0x7f]
      %s9273 = scalar_lea.vmem [#allocation5], 449
      %v9274 = vld [vmem:[%s9273] ss:$2 sm:$0x7f]
      %s9275 = scalar_lea.vmem [#allocation5], 465
      %v9276 = vld [vmem:[%s9275] ss:$2 sm:$0x7f]
      %s9277 = scalar_lea.vmem [#allocation5], 481
      %v9278 = vld [vmem:[%s9277] ss:$2 sm:$0x7f]
      %s9279 = scalar_lea.vmem [#allocation5], 497
      %v9280 = vld [vmem:[%s9279] ss:$2 sm:$0x7f]
      %v9281 = vmax.f32 %v9154, %v9218
      %v9282 = vmax.f32 %v9156, %v9220
      %v9283 = vmax.f32 %v9158, %v9222
      %v9284 = vmax.f32 %v9160, %v9224
      %v9285 = vmax.f32 %v9162, %v9226
      %v9286 = vmax.f32 %v9164, %v9228
      %v9287 = vmax.f32 %v9166, %v9230
      %v9288 = vmax.f32 %v9168, %v9232
      %v9289 = vmax.f32 %v9170, %v9234
      %v9290 = vmax.f32 %v9172, %v9236
      %v9291 = vmax.f32 %v9174, %v9238
      %v9292 = vmax.f32 %v9176, %v9240
      %v9293 = vmax.f32 %v9178, %v9242
      %v9294 = vmax.f32 %v9180, %v9244
      %v9295 = vmax.f32 %v9182, %v9246
      %v9296 = vmax.f32 %v9184, %v9248
      %v9297 = vmax.f32 %v9186, %v9250
      %v9298 = vmax.f32 %v9188, %v9252
      %v9299 = vmax.f32 %v9190, %v9254
      %v9300 = vmax.f32 %v9192, %v9256
      %v9301 = vmax.f32 %v9194, %v9258
      %v9302 = vmax.f32 %v9196, %v9260
      %v9303 = vmax.f32 %v9198, %v9262
      %v9304 = vmax.f32 %v9200, %v9264
      %v9305 = vmax.f32 %v9202, %v9266
      %v9306 = vmax.f32 %v9204, %v9268
      %v9307 = vmax.f32 %v9206, %v9270
      %v9308 = vmax.f32 %v9208, %v9272
      %v9309 = vmax.f32 %v9210, %v9274
      %v9310 = vmax.f32 %v9212, %v9276
      %v9311 = vmax.f32 %v9214, %v9278
      %v9312 = vmax.f32 %v9216, %v9280
      %v9313 = vld [vmem:[%s4] sm:$0x1]
      %v9315 = vlaneseq
      %v9316 = vshrl.u32 %v9315, 7
      %v9317 = vsub.s32 0, %v9316
      %v9318 = vrot.slane %v9313, %v9317
      %v9320 = vadd.f32 %v9281, %v9318
      %v9321 = vadd.f32 %v9282, %v9318
      %v9322 = vadd.f32 %v9283, %v9318
      %v9323 = vadd.f32 %v9284, %v9318
      %v9324 = vadd.f32 %v9285, %v9318
      %v9325 = vadd.f32 %v9286, %v9318
      %v9326 = vadd.f32 %v9287, %v9318
      %v9327 = vadd.f32 %v9288, %v9318
      %v9328 = vadd.f32 %v9289, %v9318
      %v9329 = vadd.f32 %v9290, %v9318
      %v9330 = vadd.f32 %v9291, %v9318
      %v9331 = vadd.f32 %v9292, %v9318
      %v9332 = vadd.f32 %v9293, %v9318
      %v9333 = vadd.f32 %v9294, %v9318
      %v9334 = vadd.f32 %v9295, %v9318
      %v9335 = vadd.f32 %v9296, %v9318
      %v9336 = vadd.f32 %v9297, %v9318
      %v9337 = vadd.f32 %v9298, %v9318
      %v9338 = vadd.f32 %v9299, %v9318
      %v9339 = vadd.f32 %v9300, %v9318
      %v9340 = vadd.f32 %v9301, %v9318
      %v9341 = vadd.f32 %v9302, %v9318
      %v9342 = vadd.f32 %v9303, %v9318
      %v9343 = vadd.f32 %v9304, %v9318
      %v9344 = vadd.f32 %v9305, %v9318
      %v9345 = vadd.f32 %v9306, %v9318
      %v9346 = vadd.f32 %v9307, %v9318
      %v9347 = vadd.f32 %v9308, %v9318
      %v9348 = vadd.f32 %v9309, %v9318
      %v9349 = vadd.f32 %v9310, %v9318
      %v9350 = vadd.f32 %v9311, %v9318
      %v9351 = vadd.f32 %v9312, %v9318
      %v9352 = vmax.f32 %v9320, 0.0
      %v9353 = vmax.f32 %v9321, 0.0
      %v9354 = vmax.f32 %v9322, 0.0
      %v9355 = vmax.f32 %v9323, 0.0
      %v9356 = vmax.f32 %v9324, 0.0
      %v9357 = vmax.f32 %v9325, 0.0
      %v9358 = vmax.f32 %v9326, 0.0
      %v9359 = vmax.f32 %v9327, 0.0
      %v9360 = vmax.f32 %v9328, 0.0
      %v9361 = vmax.f32 %v9329, 0.0
      %v9362 = vmax.f32 %v9330, 0.0
      %v9363 = vmax.f32 %v9331, 0.0
      %v9364 = vmax.f32 %v9332, 0.0
      %v9365 = vmax.f32 %v9333, 0.0
      %v9366 = vmax.f32 %v9334, 0.0
      %v9367 = vmax.f32 %v9335, 0.0
      %v9368 = vmax.f32 %v9336, 0.0
      %v9369 = vmax.f32 %v9337, 0.0
      %v9370 = vmax.f32 %v9338, 0.0
      %v9371 = vmax.f32 %v9339, 0.0
      %v9372 = vmax.f32 %v9340, 0.0
      %v9373 = vmax.f32 %v9341, 0.0
      %v9374 = vmax.f32 %v9342, 0.0
      %v9375 = vmax.f32 %v9343, 0.0
      %v9376 = vmax.f32 %v9344, 0.0
      %v9377 = vmax.f32 %v9345, 0.0
      %v9378 = vmax.f32 %v9346, 0.0
      %v9379 = vmax.f32 %v9347, 0.0
      %v9380 = vmax.f32 %v9348, 0.0
      %v9381 = vmax.f32 %v9349, 0.0
      %v9382 = vmax.f32 %v9350, 0.0
      %v9383 = vmax.f32 %v9351, 0.0
      %v9384 = vld [vmem:[%s5] sm:$0xff]
      %v9385 = vld [vmem:[%s5 + $0x8] sm:$0xff]
      %v9386 = vld [vmem:[%s5 + $0x10] sm:$0xff]
      %v9387 = vld [vmem:[%s5 + $0x18] sm:$0xff]
      %v9388 = vld [vmem:[%s5 + $0x20] sm:$0xff]
      %v9389 = vld [vmem:[%s5 + $0x28] sm:$0xff]
      %v9390 = vld [vmem:[%s5 + $0x30] sm:$0xff]
      %v9391 = vld [vmem:[%s5 + $0x38] sm:$0xff]
      %v9392 = vld [vmem:[%s5 + $0x40] sm:$0xff]
      %v9393 = vld [vmem:[%s5 + $0x48] sm:$0xff]
      %v9394 = vld [vmem:[%s5 + $0x50] sm:$0xff]
      %v9395 = vld [vmem:[%s5 + $0x58] sm:$0xff]
      %v9396 = vld [vmem:[%s5 + $0x60] sm:$0xff]
      %v9397 = vld [vmem:[%s5 + $0x68] sm:$0xff]
      %v9398 = vld [vmem:[%s5 + $0x70] sm:$0xff]
      %v9399 = vld [vmem:[%s5 + $0x78] sm:$0xff]
      %v9400 = vld [vmem:[%s5 + $0x80] sm:$0xff]
      %v9401 = vld [vmem:[%s5 + $0x88] sm:$0xff]
      %v9402 = vld [vmem:[%s5 + $0x90] sm:$0xff]
      %v9403 = vld [vmem:[%s5 + $0x98] sm:$0xff]
      %v9404 = vld [vmem:[%s5 + $0xa0] sm:$0xff]
      %v9405 = vld [vmem:[%s5 + $0xa8] sm:$0xff]
      %v9406 = vld [vmem:[%s5 + $0xb0] sm:$0xff]
      %v9407 = vld [vmem:[%s5 + $0xb8] sm:$0xff]
      %v9408 = vld [vmem:[%s5 + $0xc0] sm:$0xff]
      %v9409 = vld [vmem:[%s5 + $0xc8] sm:$0xff]
      %v9410 = vld [vmem:[%s5 + $0xd0] sm:$0xff]
      %v9411 = vld [vmem:[%s5 + $0xd8] sm:$0xff]
      %v9444 = vrot.slane %v9352, 1
      %vm9445 = vcmask 1041409
      %v9446 = vsel %vm9445, %v9353, %v9444
      %v9447 = vrot.slane %v9354, 7
      %vm9448 = vcmask 1042434
      %v9449 = vsel %vm9448, %v9447, %v9446
      %v9450 = vrot.slane %v9355, 6
      %vm9451 = vcmask 1043459
      %v9452 = vsel %vm9451, %v9450, %v9449
      %v9453 = vrot.slane %v9356, 5
      %vm9454 = vcmask 1044484
      %v9455 = vsel %vm9454, %v9453, %v9452
      %v9456 = vrot.slane %v9357, 4
      %vm9457 = vcmask 1045509
      %v9458 = vsel %vm9457, %v9456, %v9455
      %v9459 = vrot.slane %v9358, 3
      %vm9460 = vcmask 1046534
      %v9461 = vsel %vm9460, %v9459, %v9458
      %v9462 = vrot.slane %v9359, 2
      %vm9463 = vcmask 1047559
      %v9464 = vsel %vm9463, %v9462, %v9461
      %v9465 = vrot.slane %v9360, 1
      %v9466 = vsel %vm9445, %v9361, %v9465
      %v9467 = vrot.slane %v9362, 7
      %v9468 = vsel %vm9448, %v9467, %v9466
      %v9469 = vrot.slane %v9363, 6
      %v9470 = vsel %vm9451, %v9469, %v9468
      %v9471 = vrot.slane %v9364, 5
      %v9472 = vsel %vm9454, %v9471, %v9470
      %v9473 = vrot.slane %v9365, 4
      %v9474 = vsel %vm9457, %v9473, %v9472
      %v9475 = vrot.slane %v9366, 3
      %v9476 = vsel %vm9460, %v9475, %v9474
      %v9477 = vrot.slane %v9367, 2
      %v9478 = vsel %vm9463, %v9477, %v9476
      %v9479 = vrot.slane %v9368, 1
      %v9480 = vsel %vm9445, %v9369, %v9479
      %v9481 = vrot.slane %v9370, 7
      %v9482 = vsel %vm9448, %v9481, %v9480
      %v9483 = vrot.slane %v9371, 6
      %v9484 = vsel %vm9451, %v9483, %v9482
      %v9485 = vrot.slane %v9372, 5
      %v9486 = vsel %vm9454, %v9485, %v9484
      %v9487 = vrot.slane %v9373, 4
      %v9488 = vsel %vm9457, %v9487, %v9486
      %v9489 = vrot.slane %v9374, 3
      %v9490 = vsel %vm9460, %v9489, %v9488
      %v9491 = vrot.slane %v9375, 2
      %v9492 = vsel %vm9463, %v9491, %v9490
      %v9493 = vrot.slane %v9376, 1
      %v9494 = vsel %vm9445, %v9377, %v9493
      %v9495 = vrot.slane %v9378, 7
      %v9496 = vsel %vm9448, %v9495, %v9494
      %v9497 = vrot.slane %v9379, 6
      %v9498 = vsel %vm9451, %v9497, %v9496
      %v9499 = vrot.slane %v9380, 5
      %v9500 = vsel %vm9454, %v9499, %v9498
      %v9501 = vrot.slane %v9381, 4
      %v9502 = vsel %vm9457, %v9501, %v9500
      %v9503 = vrot.slane %v9382, 3
      %v9504 = vsel %vm9460, %v9503, %v9502
      %v9505 = vrot.slane %v9383, 2
      %v9506 = vsel %vm9463, %v9505, %v9504
      %v9507 = vsel %vm5657, %v9464, 0
      %v9509 = vsel %vm5657, %v9478, 0
      %v9511 = vsel %vm5657, %v9492, 0
      %v9513 = vsel %vm5657, %v9506, 0
      %9515 = vmatprep.subr.mxu0 0.0
      %9516 = vmatpush1.msra.mxu0 0.0
      %9517 = vmatprep.subr.mxu0 0.0
      %9518 = vmatpush1.msra.mxu0 0.0
      %9519 = vmatprep.subr.mxu0 0.0
      %9520 = vmatpush1.msra.mxu0 %v9411
      %9521 = vmatprep.subr.mxu0 0.0
      %9522 = vmatpush1.msra.mxu0 %v9410
      %9523 = vmatprep.subr.mxu0 0.0
      %9524 = vmatpush1.msra.mxu0 %v9409
      %9525 = vmatprep.subr.mxu0 0.0
      %9526 = vmatpush1.msra.mxu0 %v9408
      %9527 = vmatprep.subr.mxu0 0.0
      %9528 = vmatpush1.msra.mxu0 %v9407
      %9529 = vmatprep.subr.mxu0 0.0
      %9530 = vmatpush1.msra.mxu0 %v9406
      %9531 = vmatprep.subr.mxu0 0.0
      %9532 = vmatpush1.msra.mxu0 %v9405
      %9533 = vmatprep.subr.mxu0 0.0
      %9534 = vmatpush1.msra.mxu0 %v9404
      %9535 = vmatprep.subr.mxu0 0.0
      %9536 = vmatpush1.msra.mxu0 %v9403
      %9537 = vmatprep.subr.mxu0 0.0
      %9538 = vmatpush1.msra.mxu0 %v9402
      %9539 = vmatprep.subr.mxu0 0.0
      %9540 = vmatpush1.msra.mxu0 %v9401
      %9541 = vmatprep.subr.mxu0 0.0
      %9542 = vmatpush1.msra.mxu0 %v9400
      %9543 = vmatprep.subr.mxu0 0.0
      %9544 = vmatpush1.msra.mxu0 %v9399
      %9545 = vmatprep.subr.mxu0 0.0
      %9546 = vmatpush1.msra.mxu0 %v9398
      %9547 = vmatprep.subr.mxu0 0.0
      %9548 = vmatpush2.msra.mxu0 0.0
      %9549 = vmatprep.subr.mxu0 0.0
      %9550 = vmatpush2.msra.mxu0 0.0
      %9551 = vmatprep.subr.mxu0 0.0
      %9552 = vmatpush2.msra.mxu0 0.0
      %9553 = vmatprep.subr.mxu0 0.0
      %9554 = vmatpush2.msra.mxu0 0.0
      %9555 = vmatprep.subr.mxu0 0.0
      %9556 = vmatpush2.msra.mxu0 0.0
      %9557 = vmatprep.subr.mxu0 0.0
      %9558 = vmatpush2.msra.mxu0 0.0
      %9559 = vmatprep.subr.mxu0 0.0
      %9560 = vmatpush2.msra.mxu0 0.0
      %9561 = vmatprep.subr.mxu0 0.0
      %9562 = vmatpush2.msra.mxu0 0.0
      %9563 = vmatprep.subr.mxu0 0.0
      %9564 = vmatpush2.msra.mxu0 0.0
      %9565 = vmatprep.subr.mxu0 0.0
      %9566 = vmatpush2.msra.mxu0 0.0
      %9567 = vmatprep.subr.mxu0 0.0
      %9568 = vmatpush2.msra.mxu0 0.0
      %9569 = vmatprep.subr.mxu0 0.0
      %9570 = vmatpush2.msra.mxu0 0.0
      %9571 = vmatprep.subr.mxu0 0.0
      %9572 = vmatpush2.msra.mxu0 0.0
      %9573 = vmatprep.subr.mxu0 0.0
      %9574 = vmatpush2.msra.mxu0 0.0
      %9575 = vmatprep.subr.mxu0 0.0
      %9576 = vmatpush2.msra.mxu0 0.0
      %9577 = vmatprep.subr.mxu0 0.0
      %9578 = vmatpush2.msra.mxu0 0.0
      %9579 = vmatprep.mubr.f32.mxu0 0.0
      %9580 = vmatmul.mubr.f32.gmra.mxu0 %v9507
      %v9581 = vpop.f32.mrf.mxu0
      %v9582 = vadd.f32 0.0, %v9581
      %v9583 = vpop.f32.mrf.mxu0
      %9584 = vmatprep.mubr.f32.mxu0 0.0
      %9585 = vmatmul.mubr.f32.gmra.mxu0 %v9509
      %v9586 = vpop.f32.mrf.mxu0
      %v9587 = vadd.f32 0.0, %v9586
      %v9588 = vpop.f32.mrf.mxu0
      %9589 = vmatprep.mubr.f32.mxu0 0.0
      %9590 = vmatmul.mubr.f32.gmra.mxu0 %v9511
      %v9591 = vpop.f32.mrf.mxu0
      %v9592 = vadd.f32 0.0, %v9591
      %v9593 = vpop.f32.mrf.mxu0
      %9594 = vmatprep.mubr.f32.mxu0 0.0
      %9595 = vmatmul.mubr.f32.gmra.mxu0 %v9513
      %v9596 = vpop.f32.mrf.mxu0
      %v9597 = vadd.f32 0.0, %v9596
      %v9598 = vpop.f32.mrf.mxu0
      %9599 = vdwg.mxu0
      %v9600 = vrot.slane %v9353, 7
      %v9601 = vsel %vm9445, %v9600, %v9352
      %v9602 = vrot.slane %v9354, 6
      %v9603 = vsel %vm9448, %v9602, %v9601
      %v9604 = vrot.slane %v9355, 5
      %v9605 = vsel %vm9451, %v9604, %v9603
      %v9606 = vrot.slane %v9356, 4
      %v9607 = vsel %vm9454, %v9606, %v9605
      %v9608 = vrot.slane %v9357, 3
      %v9609 = vsel %vm9457, %v9608, %v9607
      %v9610 = vrot.slane %v9358, 2
      %v9611 = vsel %vm9460, %v9610, %v9609
      %v9612 = vrot.slane %v9359, 1
      %v9613 = vsel %vm9463, %v9612, %v9611
      %v9614 = vrot.slane %v9361, 7
      %v9615 = vsel %vm9445, %v9614, %v9360
      %v9616 = vrot.slane %v9362, 6
      %v9617 = vsel %vm9448, %v9616, %v9615
      %v9618 = vrot.slane %v9363, 5
      %v9619 = vsel %vm9451, %v9618, %v9617
      %v9620 = vrot.slane %v9364, 4
      %v9621 = vsel %vm9454, %v9620, %v9619
      %v9622 = vrot.slane %v9365, 3
      %v9623 = vsel %vm9457, %v9622, %v9621
      %v9624 = vrot.slane %v9366, 2
      %v9625 = vsel %vm9460, %v9624, %v9623
      %v9626 = vrot.slane %v9367, 1
      %v9627 = vsel %vm9463, %v9626, %v9625
      %v9628 = vrot.slane %v9369, 7
      %v9629 = vsel %vm9445, %v9628, %v9368
      %v9630 = vrot.slane %v9370, 6
      %v9631 = vsel %vm9448, %v9630, %v9629
      %v9632 = vrot.slane %v9371, 5
      %v9633 = vsel %vm9451, %v9632, %v9631
      %v9634 = vrot.slane %v9372, 4
      %v9635 = vsel %vm9454, %v9634, %v9633
      %v9636 = vrot.slane %v9373, 3
      %v9637 = vsel %vm9457, %v9636, %v9635
      %v9638 = vrot.slane %v9374, 2
      %v9639 = vsel %vm9460, %v9638, %v9637
      %v9640 = vrot.slane %v9375, 1
      %v9641 = vsel %vm9463, %v9640, %v9639
      %v9642 = vrot.slane %v9377, 7
      %v9643 = vsel %vm9445, %v9642, %v9376
      %v9644 = vrot.slane %v9378, 6
      %v9645 = vsel %vm9448, %v9644, %v9643
      %v9646 = vrot.slane %v9379, 5
      %v9647 = vsel %vm9451, %v9646, %v9645
      %v9648 = vrot.slane %v9380, 4
      %v9649 = vsel %vm9454, %v9648, %v9647
      %v9650 = vrot.slane %v9381, 3
      %v9651 = vsel %vm9457, %v9650, %v9649
      %v9652 = vrot.slane %v9382, 2
      %v9653 = vsel %vm9460, %v9652, %v9651
      %v9654 = vrot.slane %v9383, 1
      %v9655 = vsel %vm9463, %v9654, %v9653
      %v9656 = vsel %vm5657, %v9613, 0
      %v9658 = vsel %vm5657, %v9627, 0
      %v9660 = vsel %vm5657, %v9641, 0
      %v9662 = vsel %vm5657, %v9655, 0
      %9664 = vmatprep.subr.mxu0 0.0
      %9665 = vmatpush1.msra.mxu0 0.0
      %9666 = vmatprep.subr.mxu0 0.0
      %9667 = vmatpush1.msra.mxu0 0.0
      %9668 = vmatprep.subr.mxu0 0.0
      %9669 = vmatpush1.msra.mxu0 %v9397
      %9670 = vmatprep.subr.mxu0 0.0
      %9671 = vmatpush1.msra.mxu0 %v9396
      %9672 = vmatprep.subr.mxu0 0.0
      %9673 = vmatpush1.msra.mxu0 %v9395
      %9674 = vmatprep.subr.mxu0 0.0
      %9675 = vmatpush1.msra.mxu0 %v9394
      %9676 = vmatprep.subr.mxu0 0.0
      %9677 = vmatpush1.msra.mxu0 %v9393
      %9678 = vmatprep.subr.mxu0 0.0
      %9679 = vmatpush1.msra.mxu0 %v9392
      %9680 = vmatprep.subr.mxu0 0.0
      %9681 = vmatpush1.msra.mxu0 %v9391
      %9682 = vmatprep.subr.mxu0 0.0
      %9683 = vmatpush1.msra.mxu0 %v9390
      %9684 = vmatprep.subr.mxu0 0.0
      %9685 = vmatpush1.msra.mxu0 %v9389
      %9686 = vmatprep.subr.mxu0 0.0
      %9687 = vmatpush1.msra.mxu0 %v9388
      %9688 = vmatprep.subr.mxu0 0.0
      %9689 = vmatpush1.msra.mxu0 %v9387
      %9690 = vmatprep.subr.mxu0 0.0
      %9691 = vmatpush1.msra.mxu0 %v9386
      %9692 = vmatprep.subr.mxu0 0.0
      %9693 = vmatpush1.msra.mxu0 %v9385
      %9694 = vmatprep.subr.mxu0 0.0
      %9695 = vmatpush1.msra.mxu0 %v9384
      %9696 = vmatprep.subr.mxu0 0.0
      %9697 = vmatpush2.msra.mxu0 0.0
      %9698 = vmatprep.subr.mxu0 0.0
      %9699 = vmatpush2.msra.mxu0 0.0
      %9700 = vmatprep.subr.mxu0 0.0
      %9701 = vmatpush2.msra.mxu0 0.0
      %9702 = vmatprep.subr.mxu0 0.0
      %9703 = vmatpush2.msra.mxu0 0.0
      %9704 = vmatprep.subr.mxu0 0.0
      %9705 = vmatpush2.msra.mxu0 0.0
      %9706 = vmatprep.subr.mxu0 0.0
      %9707 = vmatpush2.msra.mxu0 0.0
      %9708 = vmatprep.subr.mxu0 0.0
      %9709 = vmatpush2.msra.mxu0 0.0
      %9710 = vmatprep.subr.mxu0 0.0
      %9711 = vmatpush2.msra.mxu0 0.0
      %9712 = vmatprep.subr.mxu0 0.0
      %9713 = vmatpush2.msra.mxu0 0.0
      %9714 = vmatprep.subr.mxu0 0.0
      %9715 = vmatpush2.msra.mxu0 0.0
      %9716 = vmatprep.subr.mxu0 0.0
      %9717 = vmatpush2.msra.mxu0 0.0
      %9718 = vmatprep.subr.mxu0 0.0
      %9719 = vmatpush2.msra.mxu0 0.0
      %9720 = vmatprep.subr.mxu0 0.0
      %9721 = vmatpush2.msra.mxu0 0.0
      %9722 = vmatprep.subr.mxu0 0.0
      %9723 = vmatpush2.msra.mxu0 0.0
      %9724 = vmatprep.subr.mxu0 0.0
      %9725 = vmatpush2.msra.mxu0 0.0
      %9726 = vmatprep.subr.mxu0 0.0
      %9727 = vmatpush2.msra.mxu0 0.0
      %9728 = vmatprep.mubr.f32.mxu0 0.0
      %9729 = vmatmul.mubr.f32.gmra.mxu0 %v9656
      %v9730 = vpop.f32.mrf.mxu0
      %v9731 = vadd.f32 %v9582, %v9730
      %v9732 = vpop.f32.mrf.mxu0
      %9733 = vmatprep.mubr.f32.mxu0 0.0
      %9734 = vmatmul.mubr.f32.gmra.mxu0 %v9658
      %v9735 = vpop.f32.mrf.mxu0
      %v9736 = vadd.f32 %v9587, %v9735
      %v9737 = vpop.f32.mrf.mxu0
      %9738 = vmatprep.mubr.f32.mxu0 0.0
      %9739 = vmatmul.mubr.f32.gmra.mxu0 %v9660
      %v9740 = vpop.f32.mrf.mxu0
      %v9741 = vadd.f32 %v9592, %v9740
      %v9742 = vpop.f32.mrf.mxu0
      %9743 = vmatprep.mubr.f32.mxu0 0.0
      %9744 = vmatmul.mubr.f32.gmra.mxu0 %v9662
      %v9745 = vpop.f32.mrf.mxu0
      %v9746 = vadd.f32 %v9597, %v9745
      %v9747 = vpop.f32.mrf.mxu0
      %9748 = vdwg.mxu0
      %v9749 = vld [vmem:[%s5 + $0xe0] sm:$0xff]
      %v9750 = vld [vmem:[%s5 + $0xe8] sm:$0xff]
      %v9751 = vld [vmem:[%s5 + $0xf0] sm:$0xff]
      %v9752 = vld [vmem:[%s5 + $0xf8] sm:$0xff]
      %v9753 = vld [vmem:[%s5 + $0x100] sm:$0xff]
      %v9754 = vld [vmem:[%s5 + $0x108] sm:$0xff]
      %v9755 = vld [vmem:[%s5 + $0x110] sm:$0xff]
      %v9756 = vld [vmem:[%s5 + $0x118] sm:$0xff]
      %v9757 = vld [vmem:[%s5 + $0x120] sm:$0xff]
      %v9758 = vld [vmem:[%s5 + $0x128] sm:$0xff]
      %v9759 = vld [vmem:[%s5 + $0x130] sm:$0xff]
      %v9760 = vld [vmem:[%s5 + $0x138] sm:$0xff]
      %v9761 = vld [vmem:[%s5 + $0x140] sm:$0xff]
      %v9762 = vld [vmem:[%s5 + $0x148] sm:$0xff]
      %v9763 = vrot.slane %v9352, 2
      %v9764 = vrot.slane %v9353, 1
      %v9765 = vsel %vm9445, %v9764, %v9763
      %v9766 = vsel %vm9448, %v9354, %v9765
      %v9767 = vrot.slane %v9355, 7
      %v9768 = vsel %vm9451, %v9767, %v9766
      %v9769 = vrot.slane %v9356, 6
      %v9770 = vsel %vm9454, %v9769, %v9768
      %v9771 = vrot.slane %v9357, 5
      %v9772 = vsel %vm9457, %v9771, %v9770
      %v9773 = vrot.slane %v9358, 4
      %v9774 = vsel %vm9460, %v9773, %v9772
      %v9775 = vrot.slane %v9359, 3
      %v9776 = vsel %vm9463, %v9775, %v9774
      %v9777 = vrot.slane %v9360, 2
      %v9778 = vrot.slane %v9361, 1
      %v9779 = vsel %vm9445, %v9778, %v9777
      %v9780 = vsel %vm9448, %v9362, %v9779
      %v9781 = vrot.slane %v9363, 7
      %v9782 = vsel %vm9451, %v9781, %v9780
      %v9783 = vrot.slane %v9364, 6
      %v9784 = vsel %vm9454, %v9783, %v9782
      %v9785 = vrot.slane %v9365, 5
      %v9786 = vsel %vm9457, %v9785, %v9784
      %v9787 = vrot.slane %v9366, 4
      %v9788 = vsel %vm9460, %v9787, %v9786
      %v9789 = vrot.slane %v9367, 3
      %v9790 = vsel %vm9463, %v9789, %v9788
      %v9791 = vrot.slane %v9368, 2
      %v9792 = vrot.slane %v9369, 1
      %v9793 = vsel %vm9445, %v9792, %v9791
      %v9794 = vsel %vm9448, %v9370, %v9793
      %v9795 = vrot.slane %v9371, 7
      %v9796 = vsel %vm9451, %v9795, %v9794
      %v9797 = vrot.slane %v9372, 6
      %v9798 = vsel %vm9454, %v9797, %v9796
      %v9799 = vrot.slane %v9373, 5
      %v9800 = vsel %vm9457, %v9799, %v9798
      %v9801 = vrot.slane %v9374, 4
      %v9802 = vsel %vm9460, %v9801, %v9800
      %v9803 = vrot.slane %v9375, 3
      %v9804 = vsel %vm9463, %v9803, %v9802
      %v9805 = vrot.slane %v9376, 2
      %v9806 = vrot.slane %v9377, 1
      %v9807 = vsel %vm9445, %v9806, %v9805
      %v9808 = vsel %vm9448, %v9378, %v9807
      %v9809 = vrot.slane %v9379, 7
      %v9810 = vsel %vm9451, %v9809, %v9808
      %v9811 = vrot.slane %v9380, 6
      %v9812 = vsel %vm9454, %v9811, %v9810
      %v9813 = vrot.slane %v9381, 5
      %v9814 = vsel %vm9457, %v9813, %v9812
      %v9815 = vrot.slane %v9382, 4
      %v9816 = vsel %vm9460, %v9815, %v9814
      %v9817 = vrot.slane %v9383, 3
      %v9818 = vsel %vm9463, %v9817, %v9816
      %v9819 = vsel %vm5657, %v9776, 0
      %v9821 = vsel %vm5657, %v9790, 0
      %v9823 = vsel %vm5657, %v9804, 0
      %v9825 = vsel %vm5657, %v9818, 0
      %9827 = vmatprep.subr.mxu0 0.0
      %9828 = vmatpush1.msra.mxu0 0.0
      %9829 = vmatprep.subr.mxu0 0.0
      %9830 = vmatpush1.msra.mxu0 0.0
      %9831 = vmatprep.subr.mxu0 0.0
      %9832 = vmatpush1.msra.mxu0 %v9762
      %9833 = vmatprep.subr.mxu0 0.0
      %9834 = vmatpush1.msra.mxu0 %v9761
      %9835 = vmatprep.subr.mxu0 0.0
      %9836 = vmatpush1.msra.mxu0 %v9760
      %9837 = vmatprep.subr.mxu0 0.0
      %9838 = vmatpush1.msra.mxu0 %v9759
      %9839 = vmatprep.subr.mxu0 0.0
      %9840 = vmatpush1.msra.mxu0 %v9758
      %9841 = vmatprep.subr.mxu0 0.0
      %9842 = vmatpush1.msra.mxu0 %v9757
      %9843 = vmatprep.subr.mxu0 0.0
      %9844 = vmatpush1.msra.mxu0 %v9756
      %9845 = vmatprep.subr.mxu0 0.0
      %9846 = vmatpush1.msra.mxu0 %v9755
      %9847 = vmatprep.subr.mxu0 0.0
      %9848 = vmatpush1.msra.mxu0 %v9754
      %9849 = vmatprep.subr.mxu0 0.0
      %9850 = vmatpush1.msra.mxu0 %v9753
      %9851 = vmatprep.subr.mxu0 0.0
      %9852 = vmatpush1.msra.mxu0 %v9752
      %9853 = vmatprep.subr.mxu0 0.0
      %9854 = vmatpush1.msra.mxu0 %v9751
      %9855 = vmatprep.subr.mxu0 0.0
      %9856 = vmatpush1.msra.mxu0 %v9750
      %9857 = vmatprep.subr.mxu0 0.0
      %9858 = vmatpush1.msra.mxu0 %v9749
      %9859 = vmatprep.subr.mxu0 0.0
      %9860 = vmatpush2.msra.mxu0 0.0
      %9861 = vmatprep.subr.mxu0 0.0
      %9862 = vmatpush2.msra.mxu0 0.0
      %9863 = vmatprep.subr.mxu0 0.0
      %9864 = vmatpush2.msra.mxu0 0.0
      %9865 = vmatprep.subr.mxu0 0.0
      %9866 = vmatpush2.msra.mxu0 0.0
      %9867 = vmatprep.subr.mxu0 0.0
      %9868 = vmatpush2.msra.mxu0 0.0
      %9869 = vmatprep.subr.mxu0 0.0
      %9870 = vmatpush2.msra.mxu0 0.0
      %9871 = vmatprep.subr.mxu0 0.0
      %9872 = vmatpush2.msra.mxu0 0.0
      %9873 = vmatprep.subr.mxu0 0.0
      %9874 = vmatpush2.msra.mxu0 0.0
      %9875 = vmatprep.subr.mxu0 0.0
      %9876 = vmatpush2.msra.mxu0 0.0
      %9877 = vmatprep.subr.mxu0 0.0
      %9878 = vmatpush2.msra.mxu0 0.0
      %9879 = vmatprep.subr.mxu0 0.0
      %9880 = vmatpush2.msra.mxu0 0.0
      %9881 = vmatprep.subr.mxu0 0.0
      %9882 = vmatpush2.msra.mxu0 0.0
      %9883 = vmatprep.subr.mxu0 0.0
      %9884 = vmatpush2.msra.mxu0 0.0
      %9885 = vmatprep.subr.mxu0 0.0
      %9886 = vmatpush2.msra.mxu0 0.0
      %9887 = vmatprep.subr.mxu0 0.0
      %9888 = vmatpush2.msra.mxu0 0.0
      %9889 = vmatprep.subr.mxu0 0.0
      %9890 = vmatpush2.msra.mxu0 0.0
      %9891 = vmatprep.mubr.f32.mxu0 0.0
      %9892 = vmatmul.mubr.f32.gmra.mxu0 %v9819
      %v9893 = vpop.f32.mrf.mxu0
      %v9894 = vadd.f32 0.0, %v9893
      %v9895 = vpop.f32.mrf.mxu0
      %9896 = vmatprep.mubr.f32.mxu0 0.0
      %9897 = vmatmul.mubr.f32.gmra.mxu0 %v9821
      %v9898 = vpop.f32.mrf.mxu0
      %v9899 = vadd.f32 0.0, %v9898
      %v9900 = vpop.f32.mrf.mxu0
      %9901 = vmatprep.mubr.f32.mxu0 0.0
      %9902 = vmatmul.mubr.f32.gmra.mxu0 %v9823
      %v9903 = vpop.f32.mrf.mxu0
      %v9904 = vadd.f32 0.0, %v9903
      %v9905 = vpop.f32.mrf.mxu0
      %9906 = vmatprep.mubr.f32.mxu0 0.0
      %9907 = vmatmul.mubr.f32.gmra.mxu0 %v9825
      %v9908 = vpop.f32.mrf.mxu0
      %v9909 = vadd.f32 0.0, %v9908
      %v9910 = vpop.f32.mrf.mxu0
      %9911 = vdwg.mxu0
      %v9912 = vadd.f32 %v9731, %v9894
      %v9913 = vadd.f32 %v9736, %v9899
      %v9914 = vadd.f32 %v9741, %v9904
      %v9915 = vadd.f32 %v9746, %v9909
      %v9916 = vld [vmem:[%s5 + $0x150] sm:$0xff]
      %v9917 = vld [vmem:[%s5 + $0x158] sm:$0xff]
      %v9918 = vld [vmem:[%s5 + $0x160] sm:$0xff]
      %v9919 = vld [vmem:[%s5 + $0x168] sm:$0xff]
      %v9920 = vld [vmem:[%s5 + $0x170] sm:$0xff]
      %v9921 = vld [vmem:[%s5 + $0x178] sm:$0xff]
      %v9922 = vld [vmem:[%s5 + $0x180] sm:$0xff]
      %v9923 = vld [vmem:[%s5 + $0x188] sm:$0xff]
      %v9924 = vld [vmem:[%s5 + $0x190] sm:$0xff]
      %v9925 = vld [vmem:[%s5 + $0x198] sm:$0xff]
      %v9926 = vld [vmem:[%s5 + $0x1a0] sm:$0xff]
      %v9927 = vld [vmem:[%s5 + $0x1a8] sm:$0xff]
      %v9928 = vld [vmem:[%s5 + $0x1b0] sm:$0xff]
      %v9929 = vld [vmem:[%s5 + $0x1b8] sm:$0xff]
      %v9930 = vrot.slane %v9352, 3
      %v9931 = vrot.slane %v9353, 2
      %v9932 = vsel %vm9445, %v9931, %v9930
      %v9933 = vrot.slane %v9354, 1
      %v9934 = vsel %vm9448, %v9933, %v9932
      %v9935 = vsel %vm9451, %v9355, %v9934
      %v9936 = vrot.slane %v9356, 7
      %v9937 = vsel %vm9454, %v9936, %v9935
      %v9938 = vrot.slane %v9357, 6
      %v9939 = vsel %vm9457, %v9938, %v9937
      %v9940 = vrot.slane %v9358, 5
      %v9941 = vsel %vm9460, %v9940, %v9939
      %v9942 = vrot.slane %v9359, 4
      %v9943 = vsel %vm9463, %v9942, %v9941
      %v9944 = vrot.slane %v9360, 3
      %v9945 = vrot.slane %v9361, 2
      %v9946 = vsel %vm9445, %v9945, %v9944
      %v9947 = vrot.slane %v9362, 1
      %v9948 = vsel %vm9448, %v9947, %v9946
      %v9949 = vsel %vm9451, %v9363, %v9948
      %v9950 = vrot.slane %v9364, 7
      %v9951 = vsel %vm9454, %v9950, %v9949
      %v9952 = vrot.slane %v9365, 6
      %v9953 = vsel %vm9457, %v9952, %v9951
      %v9954 = vrot.slane %v9366, 5
      %v9955 = vsel %vm9460, %v9954, %v9953
      %v9956 = vrot.slane %v9367, 4
      %v9957 = vsel %vm9463, %v9956, %v9955
      %v9958 = vrot.slane %v9368, 3
      %v9959 = vrot.slane %v9369, 2
      %v9960 = vsel %vm9445, %v9959, %v9958
      %v9961 = vrot.slane %v9370, 1
      %v9962 = vsel %vm9448, %v9961, %v9960
      %v9963 = vsel %vm9451, %v9371, %v9962
      %v9964 = vrot.slane %v9372, 7
      %v9965 = vsel %vm9454, %v9964, %v9963
      %v9966 = vrot.slane %v9373, 6
      %v9967 = vsel %vm9457, %v9966, %v9965
      %v9968 = vrot.slane %v9374, 5
      %v9969 = vsel %vm9460, %v9968, %v9967
      %v9970 = vrot.slane %v9375, 4
      %v9971 = vsel %vm9463, %v9970, %v9969
      %v9972 = vrot.slane %v9376, 3
      %v9973 = vrot.slane %v9377, 2
      %v9974 = vsel %vm9445, %v9973, %v9972
      %v9975 = vrot.slane %v9378, 1
      %v9976 = vsel %vm9448, %v9975, %v9974
      %v9977 = vsel %vm9451, %v9379, %v9976
      %v9978 = vrot.slane %v9380, 7
      %v9979 = vsel %vm9454, %v9978, %v9977
      %v9980 = vrot.slane %v9381, 6
      %v9981 = vsel %vm9457, %v9980, %v9979
      %v9982 = vrot.slane %v9382, 5
      %v9983 = vsel %vm9460, %v9982, %v9981
      %v9984 = vrot.slane %v9383, 4
      %v9985 = vsel %vm9463, %v9984, %v9983
      %v9986 = vsel %vm5657, %v9943, 0
      %v9988 = vsel %vm5657, %v9957, 0
      %v9990 = vsel %vm5657, %v9971, 0
      %v9992 = vsel %vm5657, %v9985, 0
      %9994 = vmatprep.subr.mxu0 0.0
      %9995 = vmatpush1.msra.mxu0 0.0
      %9996 = vmatprep.subr.mxu0 0.0
      %9997 = vmatpush1.msra.mxu0 0.0
      %9998 = vmatprep.subr.mxu0 0.0
      %9999 = vmatpush1.msra.mxu0 %v9929
      %10000 = vmatprep.subr.mxu0 0.0
      %10001 = vmatpush1.msra.mxu0 %v9928
      %10002 = vmatprep.subr.mxu0 0.0
      %10003 = vmatpush1.msra.mxu0 %v9927
      %10004 = vmatprep.subr.mxu0 0.0
      %10005 = vmatpush1.msra.mxu0 %v9926
      %10006 = vmatprep.subr.mxu0 0.0
      %10007 = vmatpush1.msra.mxu0 %v9925
      %10008 = vmatprep.subr.mxu0 0.0
      %10009 = vmatpush1.msra.mxu0 %v9924
      %10010 = vmatprep.subr.mxu0 0.0
      %10011 = vmatpush1.msra.mxu0 %v9923
      %10012 = vmatprep.subr.mxu0 0.0
      %10013 = vmatpush1.msra.mxu0 %v9922
      %10014 = vmatprep.subr.mxu0 0.0
      %10015 = vmatpush1.msra.mxu0 %v9921
      %10016 = vmatprep.subr.mxu0 0.0
      %10017 = vmatpush1.msra.mxu0 %v9920
      %10018 = vmatprep.subr.mxu0 0.0
      %10019 = vmatpush1.msra.mxu0 %v9919
      %10020 = vmatprep.subr.mxu0 0.0
      %10021 = vmatpush1.msra.mxu0 %v9918
      %10022 = vmatprep.subr.mxu0 0.0
      %10023 = vmatpush1.msra.mxu0 %v9917
      %10024 = vmatprep.subr.mxu0 0.0
      %10025 = vmatpush1.msra.mxu0 %v9916
      %10026 = vmatprep.subr.mxu0 0.0
      %10027 = vmatpush2.msra.mxu0 0.0
      %10028 = vmatprep.subr.mxu0 0.0
      %10029 = vmatpush2.msra.mxu0 0.0
      %10030 = vmatprep.subr.mxu0 0.0
      %10031 = vmatpush2.msra.mxu0 0.0
      %10032 = vmatprep.subr.mxu0 0.0
      %10033 = vmatpush2.msra.mxu0 0.0
      %10034 = vmatprep.subr.mxu0 0.0
      %10035 = vmatpush2.msra.mxu0 0.0
      %10036 = vmatprep.subr.mxu0 0.0
      %10037 = vmatpush2.msra.mxu0 0.0
      %10038 = vmatprep.subr.mxu0 0.0
      %10039 = vmatpush2.msra.mxu0 0.0
      %10040 = vmatprep.subr.mxu0 0.0
      %10041 = vmatpush2.msra.mxu0 0.0
      %10042 = vmatprep.subr.mxu0 0.0
      %10043 = vmatpush2.msra.mxu0 0.0
      %10044 = vmatprep.subr.mxu0 0.0
      %10045 = vmatpush2.msra.mxu0 0.0
      %10046 = vmatprep.subr.mxu0 0.0
      %10047 = vmatpush2.msra.mxu0 0.0
      %10048 = vmatprep.subr.mxu0 0.0
      %10049 = vmatpush2.msra.mxu0 0.0
      %10050 = vmatprep.subr.mxu0 0.0
      %10051 = vmatpush2.msra.mxu0 0.0
      %10052 = vmatprep.subr.mxu0 0.0
      %10053 = vmatpush2.msra.mxu0 0.0
      %10054 = vmatprep.subr.mxu0 0.0
      %10055 = vmatpush2.msra.mxu0 0.0
      %10056 = vmatprep.subr.mxu0 0.0
      %10057 = vmatpush2.msra.mxu0 0.0
      %10058 = vmatprep.mubr.f32.mxu0 0.0
      %10059 = vmatmul.mubr.f32.gmra.mxu0 %v9986
      %v10060 = vpop.f32.mrf.mxu0
      %v10061 = vadd.f32 0.0, %v10060
      %v10062 = vpop.f32.mrf.mxu0
      %10063 = vmatprep.mubr.f32.mxu0 0.0
      %10064 = vmatmul.mubr.f32.gmra.mxu0 %v9988
      %v10065 = vpop.f32.mrf.mxu0
      %v10066 = vadd.f32 0.0, %v10065
      %v10067 = vpop.f32.mrf.mxu0
      %10068 = vmatprep.mubr.f32.mxu0 0.0
      %10069 = vmatmul.mubr.f32.gmra.mxu0 %v9990
      %v10070 = vpop.f32.mrf.mxu0
      %v10071 = vadd.f32 0.0, %v10070
      %v10072 = vpop.f32.mrf.mxu0
      %10073 = vmatprep.mubr.f32.mxu0 0.0
      %10074 = vmatmul.mubr.f32.gmra.mxu0 %v9992
      %v10075 = vpop.f32.mrf.mxu0
      %v10076 = vadd.f32 0.0, %v10075
      %v10077 = vpop.f32.mrf.mxu0
      %10078 = vdwg.mxu0
      %v10079 = vadd.f32 %v9912, %v10061
      %v10080 = vadd.f32 %v9913, %v10066
      %v10081 = vadd.f32 %v9914, %v10071
      %v10082 = vadd.f32 %v9915, %v10076
      %v10083 = vld [vmem:[%s5 + $0x1c0] sm:$0xff]
      %v10084 = vld [vmem:[%s5 + $0x1c8] sm:$0xff]
      %v10085 = vld [vmem:[%s5 + $0x1d0] sm:$0xff]
      %v10086 = vld [vmem:[%s5 + $0x1d8] sm:$0xff]
      %v10087 = vld [vmem:[%s5 + $0x1e0] sm:$0xff]
      %v10088 = vld [vmem:[%s5 + $0x1e8] sm:$0xff]
      %v10089 = vld [vmem:[%s5 + $0x1f0] sm:$0xff]
      %v10090 = vld [vmem:[%s5 + $0x1f8] sm:$0xff]
      %v10091 = vld [vmem:[%s5 + $0x200] sm:$0xff]
      %v10092 = vld [vmem:[%s5 + $0x208] sm:$0xff]
      %v10093 = vld [vmem:[%s5 + $0x210] sm:$0xff]
      %v10094 = vld [vmem:[%s5 + $0x218] sm:$0xff]
      %v10095 = vld [vmem:[%s5 + $0x220] sm:$0xff]
      %v10096 = vld [vmem:[%s5 + $0x228] sm:$0xff]
      %v10097 = vrot.slane %v9352, 4
      %v10098 = vrot.slane %v9353, 3
      %v10099 = vsel %vm9445, %v10098, %v10097
      %v10100 = vrot.slane %v9354, 2
      %v10101 = vsel %vm9448, %v10100, %v10099
      %v10102 = vrot.slane %v9355, 1
      %v10103 = vsel %vm9451, %v10102, %v10101
      %v10104 = vsel %vm9454, %v9356, %v10103
      %v10105 = vrot.slane %v9357, 7
      %v10106 = vsel %vm9457, %v10105, %v10104
      %v10107 = vrot.slane %v9358, 6
      %v10108 = vsel %vm9460, %v10107, %v10106
      %v10109 = vrot.slane %v9359, 5
      %v10110 = vsel %vm9463, %v10109, %v10108
      %v10111 = vrot.slane %v9360, 4
      %v10112 = vrot.slane %v9361, 3
      %v10113 = vsel %vm9445, %v10112, %v10111
      %v10114 = vrot.slane %v9362, 2
      %v10115 = vsel %vm9448, %v10114, %v10113
      %v10116 = vrot.slane %v9363, 1
      %v10117 = vsel %vm9451, %v10116, %v10115
      %v10118 = vsel %vm9454, %v9364, %v10117
      %v10119 = vrot.slane %v9365, 7
      %v10120 = vsel %vm9457, %v10119, %v10118
      %v10121 = vrot.slane %v9366, 6
      %v10122 = vsel %vm9460, %v10121, %v10120
      %v10123 = vrot.slane %v9367, 5
      %v10124 = vsel %vm9463, %v10123, %v10122
      %v10125 = vrot.slane %v9368, 4
      %v10126 = vrot.slane %v9369, 3
      %v10127 = vsel %vm9445, %v10126, %v10125
      %v10128 = vrot.slane %v9370, 2
      %v10129 = vsel %vm9448, %v10128, %v10127
      %v10130 = vrot.slane %v9371, 1
      %v10131 = vsel %vm9451, %v10130, %v10129
      %v10132 = vsel %vm9454, %v9372, %v10131
      %v10133 = vrot.slane %v9373, 7
      %v10134 = vsel %vm9457, %v10133, %v10132
      %v10135 = vrot.slane %v9374, 6
      %v10136 = vsel %vm9460, %v10135, %v10134
      %v10137 = vrot.slane %v9375, 5
      %v10138 = vsel %vm9463, %v10137, %v10136
      %v10139 = vrot.slane %v9376, 4
      %v10140 = vrot.slane %v9377, 3
      %v10141 = vsel %vm9445, %v10140, %v10139
      %v10142 = vrot.slane %v9378, 2
      %v10143 = vsel %vm9448, %v10142, %v10141
      %v10144 = vrot.slane %v9379, 1
      %v10145 = vsel %vm9451, %v10144, %v10143
      %v10146 = vsel %vm9454, %v9380, %v10145
      %v10147 = vrot.slane %v9381, 7
      %v10148 = vsel %vm9457, %v10147, %v10146
      %v10149 = vrot.slane %v9382, 6
      %v10150 = vsel %vm9460, %v10149, %v10148
      %v10151 = vrot.slane %v9383, 5
      %v10152 = vsel %vm9463, %v10151, %v10150
      %v10153 = vsel %vm5657, %v10110, 0
      %v10155 = vsel %vm5657, %v10124, 0
      %v10157 = vsel %vm5657, %v10138, 0
      %v10159 = vsel %vm5657, %v10152, 0
      %10161 = vmatprep.subr.mxu0 0.0
      %10162 = vmatpush1.msra.mxu0 0.0
      %10163 = vmatprep.subr.mxu0 0.0
      %10164 = vmatpush1.msra.mxu0 0.0
      %10165 = vmatprep.subr.mxu0 0.0
      %10166 = vmatpush1.msra.mxu0 %v10096
      %10167 = vmatprep.subr.mxu0 0.0
      %10168 = vmatpush1.msra.mxu0 %v10095
      %10169 = vmatprep.subr.mxu0 0.0
      %10170 = vmatpush1.msra.mxu0 %v10094
      %10171 = vmatprep.subr.mxu0 0.0
      %10172 = vmatpush1.msra.mxu0 %v10093
      %10173 = vmatprep.subr.mxu0 0.0
      %10174 = vmatpush1.msra.mxu0 %v10092
      %10175 = vmatprep.subr.mxu0 0.0
      %10176 = vmatpush1.msra.mxu0 %v10091
      %10177 = vmatprep.subr.mxu0 0.0
      %10178 = vmatpush1.msra.mxu0 %v10090
      %10179 = vmatprep.subr.mxu0 0.0
      %10180 = vmatpush1.msra.mxu0 %v10089
      %10181 = vmatprep.subr.mxu0 0.0
      %10182 = vmatpush1.msra.mxu0 %v10088
      %10183 = vmatprep.subr.mxu0 0.0
      %10184 = vmatpush1.msra.mxu0 %v10087
      %10185 = vmatprep.subr.mxu0 0.0
      %10186 = vmatpush1.msra.mxu0 %v10086
      %10187 = vmatprep.subr.mxu0 0.0
      %10188 = vmatpush1.msra.mxu0 %v10085
      %10189 = vmatprep.subr.mxu0 0.0
      %10190 = vmatpush1.msra.mxu0 %v10084
      %10191 = vmatprep.subr.mxu0 0.0
      %10192 = vmatpush1.msra.mxu0 %v10083
      %10193 = vmatprep.subr.mxu0 0.0
      %10194 = vmatpush2.msra.mxu0 0.0
      %10195 = vmatprep.subr.mxu0 0.0
      %10196 = vmatpush2.msra.mxu0 0.0
      %10197 = vmatprep.subr.mxu0 0.0
      %10198 = vmatpush2.msra.mxu0 0.0
      %10199 = vmatprep.subr.mxu0 0.0
      %10200 = vmatpush2.msra.mxu0 0.0
      %10201 = vmatprep.subr.mxu0 0.0
      %10202 = vmatpush2.msra.mxu0 0.0
      %10203 = vmatprep.subr.mxu0 0.0
      %10204 = vmatpush2.msra.mxu0 0.0
      %10205 = vmatprep.subr.mxu0 0.0
      %10206 = vmatpush2.msra.mxu0 0.0
      %10207 = vmatprep.subr.mxu0 0.0
      %10208 = vmatpush2.msra.mxu0 0.0
      %10209 = vmatprep.subr.mxu0 0.0
      %10210 = vmatpush2.msra.mxu0 0.0
      %10211 = vmatprep.subr.mxu0 0.0
      %10212 = vmatpush2.msra.mxu0 0.0
      %10213 = vmatprep.subr.mxu0 0.0
      %10214 = vmatpush2.msra.mxu0 0.0
      %10215 = vmatprep.subr.mxu0 0.0
      %10216 = vmatpush2.msra.mxu0 0.0
      %10217 = vmatprep.subr.mxu0 0.0
      %10218 = vmatpush2.msra.mxu0 0.0
      %10219 = vmatprep.subr.mxu0 0.0
      %10220 = vmatpush2.msra.mxu0 0.0
      %10221 = vmatprep.subr.mxu0 0.0
      %10222 = vmatpush2.msra.mxu0 0.0
      %10223 = vmatprep.subr.mxu0 0.0
      %10224 = vmatpush2.msra.mxu0 0.0
      %10225 = vmatprep.mubr.f32.mxu0 0.0
      %10226 = vmatmul.mubr.f32.gmra.mxu0 %v10153
      %v10227 = vpop.f32.mrf.mxu0
      %v10228 = vadd.f32 0.0, %v10227
      %v10229 = vpop.f32.mrf.mxu0
      %10230 = vmatprep.mubr.f32.mxu0 0.0
      %10231 = vmatmul.mubr.f32.gmra.mxu0 %v10155
      %v10232 = vpop.f32.mrf.mxu0
      %v10233 = vadd.f32 0.0, %v10232
      %v10234 = vpop.f32.mrf.mxu0
      %10235 = vmatprep.mubr.f32.mxu0 0.0
      %10236 = vmatmul.mubr.f32.gmra.mxu0 %v10157
      %v10237 = vpop.f32.mrf.mxu0
      %v10238 = vadd.f32 0.0, %v10237
      %v10239 = vpop.f32.mrf.mxu0
      %10240 = vmatprep.mubr.f32.mxu0 0.0
      %10241 = vmatmul.mubr.f32.gmra.mxu0 %v10159
      %v10242 = vpop.f32.mrf.mxu0
      %v10243 = vadd.f32 0.0, %v10242
      %v10244 = vpop.f32.mrf.mxu0
      %10245 = vdwg.mxu0
      %v10246 = vadd.f32 %v10079, %v10228
      %v10247 = vadd.f32 %v10080, %v10233
      %v10248 = vadd.f32 %v10081, %v10238
      %v10249 = vadd.f32 %v10082, %v10243
      %v10250 = vld [vmem:[%s5 + $0x230] sm:$0xff]
      %v10251 = vld [vmem:[%s5 + $0x238] sm:$0xff]
      %v10252 = vld [vmem:[%s5 + $0x240] sm:$0xff]
      %v10253 = vld [vmem:[%s5 + $0x248] sm:$0xff]
      %v10254 = vld [vmem:[%s5 + $0x250] sm:$0xff]
      %v10255 = vld [vmem:[%s5 + $0x258] sm:$0xff]
      %v10256 = vld [vmem:[%s5 + $0x260] sm:$0xff]
      %v10257 = vld [vmem:[%s5 + $0x268] sm:$0xff]
      %v10258 = vld [vmem:[%s5 + $0x270] sm:$0xff]
      %v10259 = vld [vmem:[%s5 + $0x278] sm:$0xff]
      %v10260 = vld [vmem:[%s5 + $0x280] sm:$0xff]
      %v10261 = vld [vmem:[%s5 + $0x288] sm:$0xff]
      %v10262 = vld [vmem:[%s5 + $0x290] sm:$0xff]
      %v10263 = vld [vmem:[%s5 + $0x298] sm:$0xff]
      %v10264 = vrot.slane %v9352, 5
      %v10265 = vrot.slane %v9353, 4
      %v10266 = vsel %vm9445, %v10265, %v10264
      %v10267 = vrot.slane %v9354, 3
      %v10268 = vsel %vm9448, %v10267, %v10266
      %v10269 = vrot.slane %v9355, 2
      %v10270 = vsel %vm9451, %v10269, %v10268
      %v10271 = vrot.slane %v9356, 1
      %v10272 = vsel %vm9454, %v10271, %v10270
      %v10273 = vsel %vm9457, %v9357, %v10272
      %v10274 = vrot.slane %v9358, 7
      %v10275 = vsel %vm9460, %v10274, %v10273
      %v10276 = vrot.slane %v9359, 6
      %v10277 = vsel %vm9463, %v10276, %v10275
      %v10278 = vrot.slane %v9360, 5
      %v10279 = vrot.slane %v9361, 4
      %v10280 = vsel %vm9445, %v10279, %v10278
      %v10281 = vrot.slane %v9362, 3
      %v10282 = vsel %vm9448, %v10281, %v10280
      %v10283 = vrot.slane %v9363, 2
      %v10284 = vsel %vm9451, %v10283, %v10282
      %v10285 = vrot.slane %v9364, 1
      %v10286 = vsel %vm9454, %v10285, %v10284
      %v10287 = vsel %vm9457, %v9365, %v10286
      %v10288 = vrot.slane %v9366, 7
      %v10289 = vsel %vm9460, %v10288, %v10287
      %v10290 = vrot.slane %v9367, 6
      %v10291 = vsel %vm9463, %v10290, %v10289
      %v10292 = vrot.slane %v9368, 5
      %v10293 = vrot.slane %v9369, 4
      %v10294 = vsel %vm9445, %v10293, %v10292
      %v10295 = vrot.slane %v9370, 3
      %v10296 = vsel %vm9448, %v10295, %v10294
      %v10297 = vrot.slane %v9371, 2
      %v10298 = vsel %vm9451, %v10297, %v10296
      %v10299 = vrot.slane %v9372, 1
      %v10300 = vsel %vm9454, %v10299, %v10298
      %v10301 = vsel %vm9457, %v9373, %v10300
      %v10302 = vrot.slane %v9374, 7
      %v10303 = vsel %vm9460, %v10302, %v10301
      %v10304 = vrot.slane %v9375, 6
      %v10305 = vsel %vm9463, %v10304, %v10303
      %v10306 = vrot.slane %v9376, 5
      %v10307 = vrot.slane %v9377, 4
      %v10308 = vsel %vm9445, %v10307, %v10306
      %v10309 = vrot.slane %v9378, 3
      %v10310 = vsel %vm9448, %v10309, %v10308
      %v10311 = vrot.slane %v9379, 2
      %v10312 = vsel %vm9451, %v10311, %v10310
      %v10313 = vrot.slane %v9380, 1
      %v10314 = vsel %vm9454, %v10313, %v10312
      %v10315 = vsel %vm9457, %v9381, %v10314
      %v10316 = vrot.slane %v9382, 7
      %v10317 = vsel %vm9460, %v10316, %v10315
      %v10318 = vrot.slane %v9383, 6
      %v10319 = vsel %vm9463, %v10318, %v10317
      %v10320 = vsel %vm5657, %v10277, 0
      %v10322 = vsel %vm5657, %v10291, 0
      %v10324 = vsel %vm5657, %v10305, 0
      %v10326 = vsel %vm5657, %v10319, 0
      %10328 = vmatprep.subr.mxu0 0.0
      %10329 = vmatpush1.msra.mxu0 0.0
      %10330 = vmatprep.subr.mxu0 0.0
      %10331 = vmatpush1.msra.mxu0 0.0
      %10332 = vmatprep.subr.mxu0 0.0
      %10333 = vmatpush1.msra.mxu0 %v10263
      %10334 = vmatprep.subr.mxu0 0.0
      %10335 = vmatpush1.msra.mxu0 %v10262
      %10336 = vmatprep.subr.mxu0 0.0
      %10337 = vmatpush1.msra.mxu0 %v10261
      %10338 = vmatprep.subr.mxu0 0.0
      %10339 = vmatpush1.msra.mxu0 %v10260
      %10340 = vmatprep.subr.mxu0 0.0
      %10341 = vmatpush1.msra.mxu0 %v10259
      %10342 = vmatprep.subr.mxu0 0.0
      %10343 = vmatpush1.msra.mxu0 %v10258
      %10344 = vmatprep.subr.mxu0 0.0
      %10345 = vmatpush1.msra.mxu0 %v10257
      %10346 = vmatprep.subr.mxu0 0.0
      %10347 = vmatpush1.msra.mxu0 %v10256
      %10348 = vmatprep.subr.mxu0 0.0
      %10349 = vmatpush1.msra.mxu0 %v10255
      %10350 = vmatprep.subr.mxu0 0.0
      %10351 = vmatpush1.msra.mxu0 %v10254
      %10352 = vmatprep.subr.mxu0 0.0
      %10353 = vmatpush1.msra.mxu0 %v10253
      %10354 = vmatprep.subr.mxu0 0.0
      %10355 = vmatpush1.msra.mxu0 %v10252
      %10356 = vmatprep.subr.mxu0 0.0
      %10357 = vmatpush1.msra.mxu0 %v10251
      %10358 = vmatprep.subr.mxu0 0.0
      %10359 = vmatpush1.msra.mxu0 %v10250
      %10360 = vmatprep.subr.mxu0 0.0
      %10361 = vmatpush2.msra.mxu0 0.0
      %10362 = vmatprep.subr.mxu0 0.0
      %10363 = vmatpush2.msra.mxu0 0.0
      %10364 = vmatprep.subr.mxu0 0.0
      %10365 = vmatpush2.msra.mxu0 0.0
      %10366 = vmatprep.subr.mxu0 0.0
      %10367 = vmatpush2.msra.mxu0 0.0
      %10368 = vmatprep.subr.mxu0 0.0
      %10369 = vmatpush2.msra.mxu0 0.0
      %10370 = vmatprep.subr.mxu0 0.0
      %10371 = vmatpush2.msra.mxu0 0.0
      %10372 = vmatprep.subr.mxu0 0.0
      %10373 = vmatpush2.msra.mxu0 0.0
      %10374 = vmatprep.subr.mxu0 0.0
      %10375 = vmatpush2.msra.mxu0 0.0
      %10376 = vmatprep.subr.mxu0 0.0
      %10377 = vmatpush2.msra.mxu0 0.0
      %10378 = vmatprep.subr.mxu0 0.0
      %10379 = vmatpush2.msra.mxu0 0.0
      %10380 = vmatprep.subr.mxu0 0.0
      %10381 = vmatpush2.msra.mxu0 0.0
      %10382 = vmatprep.subr.mxu0 0.0
      %10383 = vmatpush2.msra.mxu0 0.0
      %10384 = vmatprep.subr.mxu0 0.0
      %10385 = vmatpush2.msra.mxu0 0.0
      %10386 = vmatprep.subr.mxu0 0.0
      %10387 = vmatpush2.msra.mxu0 0.0
      %10388 = vmatprep.subr.mxu0 0.0
      %10389 = vmatpush2.msra.mxu0 0.0
      %10390 = vmatprep.subr.mxu0 0.0
      %10391 = vmatpush2.msra.mxu0 0.0
      %10392 = vmatprep.mubr.f32.mxu0 0.0
      %10393 = vmatmul.mubr.f32.gmra.mxu0 %v10320
      %v10394 = vpop.f32.mrf.mxu0
      %v10395 = vadd.f32 0.0, %v10394
      %v10396 = vpop.f32.mrf.mxu0
      %10397 = vmatprep.mubr.f32.mxu0 0.0
      %10398 = vmatmul.mubr.f32.gmra.mxu0 %v10322
      %v10399 = vpop.f32.mrf.mxu0
      %v10400 = vadd.f32 0.0, %v10399
      %v10401 = vpop.f32.mrf.mxu0
      %10402 = vmatprep.mubr.f32.mxu0 0.0
      %10403 = vmatmul.mubr.f32.gmra.mxu0 %v10324
      %v10404 = vpop.f32.mrf.mxu0
      %v10405 = vadd.f32 0.0, %v10404
      %v10406 = vpop.f32.mrf.mxu0
      %10407 = vmatprep.mubr.f32.mxu0 0.0
      %10408 = vmatmul.mubr.f32.gmra.mxu0 %v10326
      %v10409 = vpop.f32.mrf.mxu0
      %v10410 = vadd.f32 0.0, %v10409
      %v10411 = vpop.f32.mrf.mxu0
      %10412 = vdwg.mxu0
      %v10413 = vadd.f32 %v10246, %v10395
      %v10414 = vadd.f32 %v10247, %v10400
      %v10415 = vadd.f32 %v10248, %v10405
      %v10416 = vadd.f32 %v10249, %v10410
      %v10417 = vld [vmem:[%s5 + $0x2a0] sm:$0xff]
      %v10418 = vld [vmem:[%s5 + $0x2a8] sm:$0xff]
      %v10419 = vld [vmem:[%s5 + $0x2b0] sm:$0xff]
      %v10420 = vld [vmem:[%s5 + $0x2b8] sm:$0xff]
      %v10421 = vld [vmem:[%s5 + $0x2c0] sm:$0xff]
      %v10422 = vld [vmem:[%s5 + $0x2c8] sm:$0xff]
      %v10423 = vld [vmem:[%s5 + $0x2d0] sm:$0xff]
      %v10424 = vld [vmem:[%s5 + $0x2d8] sm:$0xff]
      %v10425 = vld [vmem:[%s5 + $0x2e0] sm:$0xff]
      %v10426 = vld [vmem:[%s5 + $0x2e8] sm:$0xff]
      %v10427 = vld [vmem:[%s5 + $0x2f0] sm:$0xff]
      %v10428 = vld [vmem:[%s5 + $0x2f8] sm:$0xff]
      %v10429 = vld [vmem:[%s5 + $0x300] sm:$0xff]
      %v10430 = vld [vmem:[%s5 + $0x308] sm:$0xff]
      %v10431 = vrot.slane %v9352, 6
      %v10432 = vrot.slane %v9353, 5
      %v10433 = vsel %vm9445, %v10432, %v10431
      %v10434 = vrot.slane %v9354, 4
      %v10435 = vsel %vm9448, %v10434, %v10433
      %v10436 = vrot.slane %v9355, 3
      %v10437 = vsel %vm9451, %v10436, %v10435
      %v10438 = vrot.slane %v9356, 2
      %v10439 = vsel %vm9454, %v10438, %v10437
      %v10440 = vrot.slane %v9357, 1
      %v10441 = vsel %vm9457, %v10440, %v10439
      %v10442 = vsel %vm9460, %v9358, %v10441
      %v10443 = vrot.slane %v9359, 7
      %v10444 = vsel %vm9463, %v10443, %v10442
      %v10445 = vrot.slane %v9360, 6
      %v10446 = vrot.slane %v9361, 5
      %v10447 = vsel %vm9445, %v10446, %v10445
      %v10448 = vrot.slane %v9362, 4
      %v10449 = vsel %vm9448, %v10448, %v10447
      %v10450 = vrot.slane %v9363, 3
      %v10451 = vsel %vm9451, %v10450, %v10449
      %v10452 = vrot.slane %v9364, 2
      %v10453 = vsel %vm9454, %v10452, %v10451
      %v10454 = vrot.slane %v9365, 1
      %v10455 = vsel %vm9457, %v10454, %v10453
      %v10456 = vsel %vm9460, %v9366, %v10455
      %v10457 = vrot.slane %v9367, 7
      %v10458 = vsel %vm9463, %v10457, %v10456
      %v10459 = vrot.slane %v9368, 6
      %v10460 = vrot.slane %v9369, 5
      %v10461 = vsel %vm9445, %v10460, %v10459
      %v10462 = vrot.slane %v9370, 4
      %v10463 = vsel %vm9448, %v10462, %v10461
      %v10464 = vrot.slane %v9371, 3
      %v10465 = vsel %vm9451, %v10464, %v10463
      %v10466 = vrot.slane %v9372, 2
      %v10467 = vsel %vm9454, %v10466, %v10465
      %v10468 = vrot.slane %v9373, 1
      %v10469 = vsel %vm9457, %v10468, %v10467
      %v10470 = vsel %vm9460, %v9374, %v10469
      %v10471 = vrot.slane %v9375, 7
      %v10472 = vsel %vm9463, %v10471, %v10470
      %v10473 = vrot.slane %v9376, 6
      %v10474 = vrot.slane %v9377, 5
      %v10475 = vsel %vm9445, %v10474, %v10473
      %v10476 = vrot.slane %v9378, 4
      %v10477 = vsel %vm9448, %v10476, %v10475
      %v10478 = vrot.slane %v9379, 3
      %v10479 = vsel %vm9451, %v10478, %v10477
      %v10480 = vrot.slane %v9380, 2
      %v10481 = vsel %vm9454, %v10480, %v10479
      %v10482 = vrot.slane %v9381, 1
      %v10483 = vsel %vm9457, %v10482, %v10481
      %v10484 = vsel %vm9460, %v9382, %v10483
      %v10485 = vrot.slane %v9383, 7
      %v10486 = vsel %vm9463, %v10485, %v10484
      %v10487 = vsel %vm5657, %v10444, 0
      %v10489 = vsel %vm5657, %v10458, 0
      %v10491 = vsel %vm5657, %v10472, 0
      %v10493 = vsel %vm5657, %v10486, 0
      %10495 = vmatprep.subr.mxu0 0.0
      %10496 = vmatpush1.msra.mxu0 0.0
      %10497 = vmatprep.subr.mxu0 0.0
      %10498 = vmatpush1.msra.mxu0 0.0
      %10499 = vmatprep.subr.mxu0 0.0
      %10500 = vmatpush1.msra.mxu0 %v10430
      %10501 = vmatprep.subr.mxu0 0.0
      %10502 = vmatpush1.msra.mxu0 %v10429
      %10503 = vmatprep.subr.mxu0 0.0
      %10504 = vmatpush1.msra.mxu0 %v10428
      %10505 = vmatprep.subr.mxu0 0.0
      %10506 = vmatpush1.msra.mxu0 %v10427
      %10507 = vmatprep.subr.mxu0 0.0
      %10508 = vmatpush1.msra.mxu0 %v10426
      %10509 = vmatprep.subr.mxu0 0.0
      %10510 = vmatpush1.msra.mxu0 %v10425
      %10511 = vmatprep.subr.mxu0 0.0
      %10512 = vmatpush1.msra.mxu0 %v10424
      %10513 = vmatprep.subr.mxu0 0.0
      %10514 = vmatpush1.msra.mxu0 %v10423
      %10515 = vmatprep.subr.mxu0 0.0
      %10516 = vmatpush1.msra.mxu0 %v10422
      %10517 = vmatprep.subr.mxu0 0.0
      %10518 = vmatpush1.msra.mxu0 %v10421
      %10519 = vmatprep.subr.mxu0 0.0
      %10520 = vmatpush1.msra.mxu0 %v10420
      %10521 = vmatprep.subr.mxu0 0.0
      %10522 = vmatpush1.msra.mxu0 %v10419
      %10523 = vmatprep.subr.mxu0 0.0
      %10524 = vmatpush1.msra.mxu0 %v10418
      %10525 = vmatprep.subr.mxu0 0.0
      %10526 = vmatpush1.msra.mxu0 %v10417
      %10527 = vmatprep.subr.mxu0 0.0
      %10528 = vmatpush2.msra.mxu0 0.0
      %10529 = vmatprep.subr.mxu0 0.0
      %10530 = vmatpush2.msra.mxu0 0.0
      %10531 = vmatprep.subr.mxu0 0.0
      %10532 = vmatpush2.msra.mxu0 0.0
      %10533 = vmatprep.subr.mxu0 0.0
      %10534 = vmatpush2.msra.mxu0 0.0
      %10535 = vmatprep.subr.mxu0 0.0
      %10536 = vmatpush2.msra.mxu0 0.0
      %10537 = vmatprep.subr.mxu0 0.0
      %10538 = vmatpush2.msra.mxu0 0.0
      %10539 = vmatprep.subr.mxu0 0.0
      %10540 = vmatpush2.msra.mxu0 0.0
      %10541 = vmatprep.subr.mxu0 0.0
      %10542 = vmatpush2.msra.mxu0 0.0
      %10543 = vmatprep.subr.mxu0 0.0
      %10544 = vmatpush2.msra.mxu0 0.0
      %10545 = vmatprep.subr.mxu0 0.0
      %10546 = vmatpush2.msra.mxu0 0.0
      %10547 = vmatprep.subr.mxu0 0.0
      %10548 = vmatpush2.msra.mxu0 0.0
      %10549 = vmatprep.subr.mxu0 0.0
      %10550 = vmatpush2.msra.mxu0 0.0
      %10551 = vmatprep.subr.mxu0 0.0
      %10552 = vmatpush2.msra.mxu0 0.0
      %10553 = vmatprep.subr.mxu0 0.0
      %10554 = vmatpush2.msra.mxu0 0.0
      %10555 = vmatprep.subr.mxu0 0.0
      %10556 = vmatpush2.msra.mxu0 0.0
      %10557 = vmatprep.subr.mxu0 0.0
      %10558 = vmatpush2.msra.mxu0 0.0
      %10559 = vmatprep.mubr.f32.mxu0 0.0
      %10560 = vmatmul.mubr.f32.gmra.mxu0 %v10487
      %v10561 = vpop.f32.mrf.mxu0
      %v10562 = vadd.f32 0.0, %v10561
      %v10563 = vpop.f32.mrf.mxu0
      %10564 = vmatprep.mubr.f32.mxu0 0.0
      %10565 = vmatmul.mubr.f32.gmra.mxu0 %v10489
      %v10566 = vpop.f32.mrf.mxu0
      %v10567 = vadd.f32 0.0, %v10566
      %v10568 = vpop.f32.mrf.mxu0
      %10569 = vmatprep.mubr.f32.mxu0 0.0
      %10570 = vmatmul.mubr.f32.gmra.mxu0 %v10491
      %v10571 = vpop.f32.mrf.mxu0
      %v10572 = vadd.f32 0.0, %v10571
      %v10573 = vpop.f32.mrf.mxu0
      %10574 = vmatprep.mubr.f32.mxu0 0.0
      %10575 = vmatmul.mubr.f32.gmra.mxu0 %v10493
      %v10576 = vpop.f32.mrf.mxu0
      %v10577 = vadd.f32 0.0, %v10576
      %v10578 = vpop.f32.mrf.mxu0
      %10579 = vdwg.mxu0
      %v10580 = vadd.f32 %v10413, %v10562
      %v10581 = vadd.f32 %v10414, %v10567
      %v10582 = vadd.f32 %v10415, %v10572
      %v10583 = vadd.f32 %v10416, %v10577
      %v10584 = vld [vmem:[%s6] sm:$0x1]
      %v10586 = vlaneseq
      %v10587 = vshrl.u32 %v10586, 7
      %v10588 = vsub.s32 0, %v10587
      %v10589 = vrot.slane %v10584, %v10588
      %v10591 = vadd.f32 %v10580, %v10589
      %v10592 = vadd.f32 %v10581, %v10589
      %v10593 = vadd.f32 %v10582, %v10589
      %v10594 = vadd.f32 %v10583, %v10589
      %v10599 = vcombine.high %v10591, %v10591
      %v10601 = vunpack.c.l.s4 1966171168
      %v10602 = vunpack.c.0.s8 %v10601
      %v10603 = vlaneseq
      %v10604 = vshrl.u32 %v10603, 7
      %v10605 = vsub.s32 %v10602, %v10604
      %v10606 = vrot.slane %v10591, %v10605
      %v10608 = vunpack.c.l.s4 1966171168
      %v10609 = vunpack.c.0.s8 %v10608
      %v10610 = vlaneseq
      %v10611 = vshrl.u32 %v10610, 7
      %v10612 = vsub.s32 %v10609, %v10611
      %v10613 = vrot.slane %v10599, %v10612
      %v10614 = vcombine.high %v10606, %v10606
      %v10615 = vcombine.high %v10613, %v10613
      %v10617 = vunpack.c.l.s4 1966171168
      %v10618 = vunpack.c.0.s8 %v10617
      %v10619 = vlaneseq
      %v10620 = vshrl.u32 %v10619, 7
      %v10621 = vsub.s32 %v10618, %v10620
      %v10622 = vrot.slane %v10606, %v10621
      %v10624 = vunpack.c.l.s4 1966171168
      %v10625 = vunpack.c.0.s8 %v10624
      %v10626 = vlaneseq
      %v10627 = vshrl.u32 %v10626, 7
      %v10628 = vsub.s32 %v10625, %v10627
      %v10629 = vrot.slane %v10613, %v10628
      %v10631 = vunpack.c.l.s4 1966171168
      %v10632 = vunpack.c.0.s8 %v10631
      %v10633 = vlaneseq
      %v10634 = vshrl.u32 %v10633, 7
      %v10635 = vsub.s32 %v10632, %v10634
      %v10636 = vrot.slane %v10614, %v10635
      %v10638 = vunpack.c.l.s4 1966171168
      %v10639 = vunpack.c.0.s8 %v10638
      %v10640 = vlaneseq
      %v10641 = vshrl.u32 %v10640, 7
      %v10642 = vsub.s32 %v10639, %v10641
      %v10643 = vrot.slane %v10615, %v10642
      %v10644 = vcombine.high %v10622, %v10622
      %v10645 = vcombine.high %v10629, %v10629
      %v10646 = vcombine.high %v10636, %v10636
      %v10647 = vcombine.high %v10643, %v10643
      %v10648 = vcombine.high %v10592, %v10592
      %v10650 = vunpack.c.l.s4 1966171168
      %v10651 = vunpack.c.0.s8 %v10650
      %v10652 = vlaneseq
      %v10653 = vshrl.u32 %v10652, 7
      %v10654 = vsub.s32 %v10651, %v10653
      %v10655 = vrot.slane %v10592, %v10654
      %v10657 = vunpack.c.l.s4 1966171168
      %v10658 = vunpack.c.0.s8 %v10657
      %v10659 = vlaneseq
      %v10660 = vshrl.u32 %v10659, 7
      %v10661 = vsub.s32 %v10658, %v10660
      %v10662 = vrot.slane %v10648, %v10661
      %v10663 = vcombine.high %v10655, %v10655
      %v10664 = vcombine.high %v10662, %v10662
      %v10666 = vunpack.c.l.s4 1966171168
      %v10667 = vunpack.c.0.s8 %v10666
      %v10668 = vlaneseq
      %v10669 = vshrl.u32 %v10668, 7
      %v10670 = vsub.s32 %v10667, %v10669
      %v10671 = vrot.slane %v10655, %v10670
      %v10673 = vunpack.c.l.s4 1966171168
      %v10674 = vunpack.c.0.s8 %v10673
      %v10675 = vlaneseq
      %v10676 = vshrl.u32 %v10675, 7
      %v10677 = vsub.s32 %v10674, %v10676
      %v10678 = vrot.slane %v10662, %v10677
      %v10680 = vunpack.c.l.s4 1966171168
      %v10681 = vunpack.c.0.s8 %v10680
      %v10682 = vlaneseq
      %v10683 = vshrl.u32 %v10682, 7
      %v10684 = vsub.s32 %v10681, %v10683
      %v10685 = vrot.slane %v10663, %v10684
      %v10687 = vunpack.c.l.s4 1966171168
      %v10688 = vunpack.c.0.s8 %v10687
      %v10689 = vlaneseq
      %v10690 = vshrl.u32 %v10689, 7
      %v10691 = vsub.s32 %v10688, %v10690
      %v10692 = vrot.slane %v10664, %v10691
      %v10693 = vcombine.high %v10671, %v10671
      %v10694 = vcombine.high %v10678, %v10678
      %v10695 = vcombine.high %v10685, %v10685
      %v10696 = vcombine.high %v10692, %v10692
      %v10697 = vcombine.high %v10593, %v10593
      %v10699 = vunpack.c.l.s4 1966171168
      %v10700 = vunpack.c.0.s8 %v10699
      %v10701 = vlaneseq
      %v10702 = vshrl.u32 %v10701, 7
      %v10703 = vsub.s32 %v10700, %v10702
      %v10704 = vrot.slane %v10593, %v10703
      %v10706 = vunpack.c.l.s4 1966171168
      %v10707 = vunpack.c.0.s8 %v10706
      %v10708 = vlaneseq
      %v10709 = vshrl.u32 %v10708, 7
      %v10710 = vsub.s32 %v10707, %v10709
      %v10711 = vrot.slane %v10697, %v10710
      %v10712 = vcombine.high %v10704, %v10704
      %v10713 = vcombine.high %v10711, %v10711
      %v10715 = vunpack.c.l.s4 1966171168
      %v10716 = vunpack.c.0.s8 %v10715
      %v10717 = vlaneseq
      %v10718 = vshrl.u32 %v10717, 7
      %v10719 = vsub.s32 %v10716, %v10718
      %v10720 = vrot.slane %v10704, %v10719
      %v10722 = vunpack.c.l.s4 1966171168
      %v10723 = vunpack.c.0.s8 %v10722
      %v10724 = vlaneseq
      %v10725 = vshrl.u32 %v10724, 7
      %v10726 = vsub.s32 %v10723, %v10725
      %v10727 = vrot.slane %v10711, %v10726
      %v10729 = vunpack.c.l.s4 1966171168
      %v10730 = vunpack.c.0.s8 %v10729
      %v10731 = vlaneseq
      %v10732 = vshrl.u32 %v10731, 7
      %v10733 = vsub.s32 %v10730, %v10732
      %v10734 = vrot.slane %v10712, %v10733
      %v10736 = vunpack.c.l.s4 1966171168
      %v10737 = vunpack.c.0.s8 %v10736
      %v10738 = vlaneseq
      %v10739 = vshrl.u32 %v10738, 7
      %v10740 = vsub.s32 %v10737, %v10739
      %v10741 = vrot.slane %v10713, %v10740
      %v10742 = vcombine.high %v10720, %v10720
      %v10743 = vcombine.high %v10727, %v10727
      %v10744 = vcombine.high %v10734, %v10734
      %v10745 = vcombine.high %v10741, %v10741
      %v10746 = vcombine.high %v10594, %v10594
      %v10748 = vunpack.c.l.s4 1966171168
      %v10749 = vunpack.c.0.s8 %v10748
      %v10750 = vlaneseq
      %v10751 = vshrl.u32 %v10750, 7
      %v10752 = vsub.s32 %v10749, %v10751
      %v10753 = vrot.slane %v10594, %v10752
      %v10755 = vunpack.c.l.s4 1966171168
      %v10756 = vunpack.c.0.s8 %v10755
      %v10757 = vlaneseq
      %v10758 = vshrl.u32 %v10757, 7
      %v10759 = vsub.s32 %v10756, %v10758
      %v10760 = vrot.slane %v10746, %v10759
      %v10761 = vcombine.high %v10753, %v10753
      %v10762 = vcombine.high %v10760, %v10760
      %v10764 = vunpack.c.l.s4 1966171168
      %v10765 = vunpack.c.0.s8 %v10764
      %v10766 = vlaneseq
      %v10767 = vshrl.u32 %v10766, 7
      %v10768 = vsub.s32 %v10765, %v10767
      %v10769 = vrot.slane %v10753, %v10768
      %v10771 = vunpack.c.l.s4 1966171168
      %v10772 = vunpack.c.0.s8 %v10771
      %v10773 = vlaneseq
      %v10774 = vshrl.u32 %v10773, 7
      %v10775 = vsub.s32 %v10772, %v10774
      %v10776 = vrot.slane %v10760, %v10775
      %v10778 = vunpack.c.l.s4 1966171168
      %v10779 = vunpack.c.0.s8 %v10778
      %v10780 = vlaneseq
      %v10781 = vshrl.u32 %v10780, 7
      %v10782 = vsub.s32 %v10779, %v10781
      %v10783 = vrot.slane %v10761, %v10782
      %v10785 = vunpack.c.l.s4 1966171168
      %v10786 = vunpack.c.0.s8 %v10785
      %v10787 = vlaneseq
      %v10788 = vshrl.u32 %v10787, 7
      %v10789 = vsub.s32 %v10786, %v10788
      %v10790 = vrot.slane %v10762, %v10789
      %v10791 = vcombine.high %v10769, %v10769
      %v10792 = vcombine.high %v10776, %v10776
      %v10793 = vcombine.high %v10783, %v10783
      %v10794 = vcombine.high %v10790, %v10790
      %vm10827 = vcmask 73728
      %10828 = vst.msk [vmem:[%s281] sm:$0x1] %vm10827, %v10622
      %10829 = vst.msk [vmem:[%s281 + $0x1] sm:$0x1] %vm10827, %v10636
      %10830 = vst.msk [vmem:[%s281 + $0x2] sm:$0x1] %vm10827, %v10644
      %10831 = vst.msk [vmem:[%s281 + $0x3] sm:$0x1] %vm10827, %v10646
      %10832 = vst.msk [vmem:[%s281 + $0x4] sm:$0x1] %vm10827, %v10629
      %10833 = vst.msk [vmem:[%s281 + $0x5] sm:$0x1] %vm10827, %v10643
      %10834 = vst.msk [vmem:[%s281 + $0x6] sm:$0x1] %vm10827, %v10645
      %10835 = vst.msk [vmem:[%s281 + $0x7] sm:$0x1] %vm10827, %v10647
      %10836 = vst.msk [vmem:[%s281 + $0x8] sm:$0x1] %vm10827, %v10671
      %10837 = vst.msk [vmem:[%s281 + $0x9] sm:$0x1] %vm10827, %v10685
      %10838 = vst.msk [vmem:[%s281 + $0xa] sm:$0x1] %vm10827, %v10693
      %10839 = vst.msk [vmem:[%s281 + $0xb] sm:$0x1] %vm10827, %v10695
      %10840 = vst.msk [vmem:[%s281 + $0xc] sm:$0x1] %vm10827, %v10678
      %10841 = vst.msk [vmem:[%s281 + $0xd] sm:$0x1] %vm10827, %v10692
      %10842 = vst.msk [vmem:[%s281 + $0xe] sm:$0x1] %vm10827, %v10694
      %10843 = vst.msk [vmem:[%s281 + $0xf] sm:$0x1] %vm10827, %v10696
      %10844 = vst.msk [vmem:[%s281 + $0x10] sm:$0x1] %vm10827, %v10720
      %10845 = vst.msk [vmem:[%s281 + $0x11] sm:$0x1] %vm10827, %v10734
      %10846 = vst.msk [vmem:[%s281 + $0x12] sm:$0x1] %vm10827, %v10742
      %10847 = vst.msk [vmem:[%s281 + $0x13] sm:$0x1] %vm10827, %v10744
      %10848 = vst.msk [vmem:[%s281 + $0x14] sm:$0x1] %vm10827, %v10727
      %10849 = vst.msk [vmem:[%s281 + $0x15] sm:$0x1] %vm10827, %v10741
      %10850 = vst.msk [vmem:[%s281 + $0x16] sm:$0x1] %vm10827, %v10743
      %10851 = vst.msk [vmem:[%s281 + $0x17] sm:$0x1] %vm10827, %v10745
      %10852 = vst.msk [vmem:[%s281 + $0x18] sm:$0x1] %vm10827, %v10769
      %10853 = vst.msk [vmem:[%s281 + $0x19] sm:$0x1] %vm10827, %v10783
      %10854 = vst.msk [vmem:[%s281 + $0x1a] sm:$0x1] %vm10827, %v10791
      %10855 = vst.msk [vmem:[%s281 + $0x1b] sm:$0x1] %vm10827, %v10793
      %10856 = vst.msk [vmem:[%s281 + $0x1c] sm:$0x1] %vm10827, %v10776
      %10857 = vst.msk [vmem:[%s281 + $0x1d] sm:$0x1] %vm10827, %v10790
      %10858 = vst.msk [vmem:[%s281 + $0x1e] sm:$0x1] %vm10827, %v10792
      %10859 = vst.msk [vmem:[%s281 + $0x1f] sm:$0x1] %vm10827, %v10794
      %s10860 = smul.u32 32, %s18
      %p10861 = scmp.lt.s32.totalorder %s10860, 63
      %s10862 = scalar_select %p10861, %s10860, 63
      %s10863 = scalar_lea.vmem %s7, %s10862
      // Predicated region
      $region49: #{cnn_forward.1} parent=47 // pred_check
        %p10864 = pneg %p188
      $region50: #{cnn_forward.1} parent=47 // pred_check_branch
        %10866 = sbr.rel (%p10864) target = $region52
      $region51: #{cnn_forward.1} parent=47 // pred_region
        %s10867 = smul.u32 32, %s18
      $region52: #{cnn_forward.1} parent=47 // pred_fallthru
        _
    $region48: #{cnn_forward.1} parent=5 // pred_fallthru
      _
    %p10868 = scmp.le.s32.totalorder 2, %s13
    // Predicated region
    $region53: #{cnn_forward.1} parent=5 // pred_check
      %p10869 = pneg %p10868
    $region54: #{cnn_forward.1} parent=5 // pred_check_branch
      %10871 = sbr.rel (%p10869) target = $region56
    $region55: #{cnn_forward.1} parent=5 // pred_region
      %s10872 = ssub.s32 %s13, 2
      // Predicated region
      $region57: #{cnn_forward.1} parent=55 // pred_check
        %p10873 = pneg %p194
      $region58: #{cnn_forward.1} parent=55 // pred_check_branch
        %10875 = sbr.rel (%p10873) target = $region60
      $region59: #{cnn_forward.1} parent=55 // pred_region
        %s10876 = smul.u32 32, %s19
        %p10877 = scmp.lt.s32.totalorder %s10876, 63
        %s10878 = scalar_select %p10877, %s10876, 63
        %s10879 = scalar_lea.vmem %s7, %s10878
      $region60: #{cnn_forward.1} parent=55 // pred_fallthru
        _
    $region56: #{cnn_forward.1} parent=5 // pred_fallthru
      _
  $region6: #{cnn_forward.1} parent=0 // loop_footer
    %s17 = sadd.s32 1, %s13
  $region7: #{cnn_forward.1} parent=0 // loop_footer_branch
    %12 = sbr.rel target = $region3
  $region8: #{cnn_forward.1} parent=0 // loop_exit
    _

</llo_original>
